<compile_context>
chip_gen: v6e
topology: v6e:2x2x1
jax: 0.10.0
libtpu: 0.0.40
codegen_flags: <defaults>
</compile_context>

<pallas_src>
import math
import functools

import jax
import jax.numpy as jnp
from jax.experimental import pallas as pl
from jax.experimental.pallas import tpu as pltpu

# ----------------------------- model config ---------------------------------
D_MODEL = 32
N_HEAD = 4
NUM_LAYERS = 2
DIM_FF = 2048          # nn.TransformerDecoderLayer default
LN_EPS = 1e-5
HEAD_DIM = D_MODEL // N_HEAD
NEG_INF = -1e9


# ------------------------------ kernel helpers --------------------------------
def _layernorm(y, w, b):
    # y: (S, D); w, b: (1, D)
    mu = jnp.mean(y, axis=-1, keepdims=True)
    var = jnp.mean((y - mu) ** 2, axis=-1, keepdims=True)
    return (y - mu) * jax.lax.rsqrt(var + LN_EPS) * w + b


def _dot_t(a, b):
    """a @ b.T without materializing a transpose (contract the last dims)."""
    return jax.lax.dot_general(a, b, (((1,), (1,)), ((), ())),
                               preferred_element_type=jnp.float32)


def _attention(q, k, v, w_out, add_mask, n_head, scale):
    """Multi-head attention core with the output projection folded into the
    per-head loop (no concatenate, no transposes).

    q: (S, D) f32, k/v: (T, D) f32.
    w_out: (D, D) bf16, pre-transposed (rows = attn-output feat, cols = model feat).
    add_mask: (S, T) additive f32 mask, or None.
    Returns (S, D) f32; the output-projection bias is NOT added here.
    """
    d = q.shape[-1]
    dh = d // n_head
    qb = q.astype(jnp.bfloat16)
    kb = k.astype(jnp.bfloat16)
    vb = v.astype(jnp.bfloat16)
    out = None
    for h in range(n_head):
        sl = slice(h * dh, (h + 1) * dh)
        s = _dot_t(qb[:, sl], kb[:, sl]) * scale               # (S, T) f32
        if add_mask is not None:
            s = s + add_mask
        s = s - jnp.max(s, axis=-1, keepdims=True)
        e = jnp.exp(s)
        p = e * pl.reciprocal(jnp.sum(e, axis=-1, keepdims=True), approx=True)
        oh = jnp.dot(p.astype(jnp.bfloat16), vb[:, sl],
                     preferred_element_type=jnp.float32)        # (S, dh)
        contrib = jnp.dot(oh.astype(jnp.bfloat16), w_out[sl, :],
                          preferred_element_type=jnp.float32)   # (S, D)
        out = contrib if out is None else out + contrib
    return out


# ------------------------------ fused kernel ----------------------------------
def fused_decoder_kernel(
    x_ref, mem_ref, mask_ref,
    sa_w_in, sa_b_in, sa_w_out, sa_b_out,
    ca_w_q, ca_b_q, ca_w_kv, ca_b_kv, ca_w_out, ca_b_out,
    l1_w, l1_b, l2_w, l2_b,
    n1_w, n1_b, n2_w, n2_b, n3_w, n3_b,
    o_ref,
    *, n_head, num_layers,
):
    x = x_ref[0]              # (S, D) f32
    mem = mem_ref[0]          # (M, D) f32
    self_mask = mask_ref[0]   # (S, S) f32 additive (causal + key padding)

    d = x.shape[-1]
    scale = 1.0 / math.sqrt(d // n_head)
    mem_bf = mem.astype(jnp.bfloat16)   # hoisted: shared by every layer's cross-attn

    for l in range(num_layers):         # static unroll over fused layers
        # ---- self attention block (post-norm) ----
        xb = x.astype(jnp.bfloat16)
        qkv = jnp.dot(xb, sa_w_in[l], preferred_element_type=jnp.float32) + sa_b_in[l]
        sa = _attention(qkv[:, :d], qkv[:, d:2 * d], qkv[:, 2 * d:],
                        sa_w_out[l], self_mask, n_head, scale)
        sa = sa + sa_b_out[l]
        x = _layernorm(x + sa, n1_w[l], n1_b[l])

        # ---- cross attention over memory (no memory mask) ----
        xb = x.astype(jnp.bfloat16)
        q = jnp.dot(xb, ca_w_q[l], preferred_element_type=jnp.float32) + ca_b_q[l]
        kv = jnp.dot(mem_bf, ca_w_kv[l], preferred_element_type=jnp.float32) + ca_b_kv[l]
        ca = _attention(q, kv[:, :d], kv[:, d:], ca_w_out[l], None, n_head, scale)
        ca = ca + ca_b_out[l]
        x = _layernorm(x + ca, n2_w[l], n2_b[l])

        # ---- feed-forward block (ReLU) ----
        xb = x.astype(jnp.bfloat16)
        h = jnp.dot(xb, l1_w[l], preferred_element_type=jnp.float32) + l1_b[l]
        h = jnp.maximum(h, 0.0).astype(jnp.bfloat16)
        ff = _dot_t(h, l2_w[l]) + l2_b[l]       # l2_w kept (D, F): contract last dims
        x = _layernorm(x + ff, n3_w[l], n3_b[l])

    o_ref[0] = x.astype(o_ref.dtype)


# ------------------------------ wrapper --------------------------------------
def decoder_forward(tgt, tgt_key_padding_mask, memory, kernel_params):
    """Pallas equivalent of Decoder.forward (eval mode, no dropout).

    tgt: (B, S, D) f32; tgt_key_padding_mask: (B, S) bool (True = ignore);
    memory: (B, M, D) f32.  One pallas_call executes all layers; grid=(B,)
    is "parallel" so batch elements can shard across v7x's two TensorCores.
    """
    B, S, D = tgt.shape
    _, M, _ = memory.shape

    # Hoisted mask construction: causal + key-padding combined wrapper-side.
    col = jnp.arange(S)[None, :]
    row = jnp.arange(S)[:, None]
    causal = jnp.where(col > row, NEG_INF, 0.0).astype(jnp.float32)          # (S, S)
    pad = jnp.where(tgt_key_padding_mask, NEG_INF, 0.0).astype(jnp.float32)  # (B, S)
    self_mask = causal[None, :, :] + pad[:, None, :]                         # (B, S, S)

    data_specs = [
        pl.BlockSpec((1, S, D), lambda b: (b, 0, 0)),
        pl.BlockSpec((1, M, D), lambda b: (b, 0, 0)),
        pl.BlockSpec((1, S, S), lambda b: (b, 0, 0)),
    ]
    # Weights: full-array blocks, same tile for every grid step (stay resident).
    weight_specs = [
        pl.BlockSpec(w.shape, functools.partial(lambda b, nd: (0,) * nd, nd=w.ndim))
        for w in kernel_params
    ]

    kernel = functools.partial(fused_decoder_kernel,
                               n_head=N_HEAD, num_layers=NUM_LAYERS)
    return pl.pallas_call(
        kernel,
        out_shape=jax.ShapeDtypeStruct((B, S, D), jnp.float32),
        grid=(B,),
        in_specs=data_specs + weight_specs,
        out_specs=pl.BlockSpec((1, S, D), lambda b: (b, 0, 0)),
        compiler_params=pltpu.CompilerParams(
            dimension_semantics=("parallel",),
        ),
    )(tgt, memory, self_mask, *kernel_params)


# ------------------------- parameter construction -----------------------------
def init_layer_params(key, d_model, dim_ff):
    """Deterministic synthetic weights in PyTorch (out_features, in_features) layout."""
    ks = jax.random.split(key, 8)
    scl = 0.02
    f32 = jnp.float32
    return dict(
        sa_in_w=jax.random.normal(ks[0], (3 * d_model, d_model), f32) * scl,
        sa_in_b=jax.random.normal(ks[1], (3 * d_model,), f32) * scl,
        sa_out_w=jax.random.normal(ks[2], (d_model, d_model), f32) * scl,
        sa_out_b=jnp.zeros((d_model,), f32),
        ca_in_w=jax.random.normal(ks[3], (3 * d_model, d_model), f32) * scl,
        ca_in_b=jax.random.normal(ks[4], (3 * d_model,), f32) * scl,
        ca_out_w=jax.random.normal(ks[5], (d_model, d_model), f32) * scl,
        ca_out_b=jnp.zeros((d_model,), f32),
        lin1_w=jax.random.normal(ks[6], (dim_ff, d_model), f32) * scl,
        lin1_b=jnp.zeros((dim_ff,), f32),
        lin2_w=jax.random.normal(ks[7], (d_model, dim_ff), f32) * scl,
        lin2_b=jnp.zeros((d_model,), f32),
        n1_w=jnp.ones((d_model,), f32), n1_b=jnp.zeros((d_model,), f32),
        n2_w=jnp.ones((d_model,), f32), n2_b=jnp.zeros((d_model,), f32),
        n3_w=jnp.ones((d_model,), f32), n3_b=jnp.zeros((d_model,), f32),
    )


def pack_params(torch_layers):
    """Re-orient PyTorch-layout weights for the kernel (done once, wrapper-side):
    matmul weights pre-transposed to (in, out) and cast to bf16 (linear2 is kept
    (d_model, dim_ff) and contracted on its last dim so the 2048-wide axis stays
    lane-dense); biases / LayerNorm params stay f32; per-layer tensors are
    stacked on a leading layer axis so both layers ride in one pallas_call."""
    bf16 = jnp.bfloat16
    d = D_MODEL

    def stack(fn):
        return jnp.stack([fn(p) for p in torch_layers])

    return (
        stack(lambda p: p["sa_in_w"].T.astype(bf16)),       # (L, D, 3D)
        stack(lambda p: p["sa_in_b"].reshape(1, -1)),        # (L, 1, 3D)
        stack(lambda p: p["sa_out_w"].T.astype(bf16)),       # (L, D, D)
        stack(lambda p: p["sa_out_b"].reshape(1, -1)),       # (L, 1, D)
        stack(lambda p: p["ca_in_w"][:d].T.astype(bf16)),    # (L, D, D)   q proj
        stack(lambda p: p["ca_in_b"][:d].reshape(1, -1)),    # (L, 1, D)
        stack(lambda p: p["ca_in_w"][d:].T.astype(bf16)),    # (L, D, 2D)  packed kv
        stack(lambda p: p["ca_in_b"][d:].reshape(1, -1)),    # (L, 1, 2D)
        stack(lambda p: p["ca_out_w"].T.astype(bf16)),       # (L, D, D)
        stack(lambda p: p["ca_out_b"].reshape(1, -1)),       # (L, 1, D)
        stack(lambda p: p["lin1_w"].T.astype(bf16)),         # (L, D, F) lane-dense
        stack(lambda p: p["lin1_b"].reshape(1, -1)),         # (L, 1, F)
        stack(lambda p: p["lin2_w"].astype(bf16)),           # (L, D, F) lane-dense
        stack(lambda p: p["lin2_b"].reshape(1, -1)),         # (L, 1, D)
        stack(lambda p: p["n1_w"].reshape(1, -1)),
        stack(lambda p: p["n1_b"].reshape(1, -1)),
        stack(lambda p: p["n2_w"].reshape(1, -1)),
        stack(lambda p: p["n2_b"].reshape(1, -1)),
        stack(lambda p: p["n3_w"].reshape(1, -1)),
        stack(lambda p: p["n3_b"].reshape(1, -1)),
    )


# ------------------------ pure-JAX f32 reference ------------------------------
def reference_forward(tgt, tgt_key_padding_mask, memory, torch_layers):
    B, S, D = tgt.shape
    col = jnp.arange(S)[None, :]
    row = jnp.arange(S)[:, None]
    causal = jnp.where(col > row, NEG_INF, 0.0).astype(jnp.float32)
    pad = jnp.where(tgt_key_padding_mask, NEG_INF, 0.0).astype(jnp.float32)
    self_mask = causal[None] + pad[:, None, :]            # (B, S, S)

    def mha(q_in, kv_in, in_w, in_b, out_w, out_b, mask):
        d = q_in.shape[-1]
        dh = d // N_HEAD
        q = q_in @ in_w[:d].T + in_b[:d]
        k = kv_in @ in_w[d:2 * d].T + in_b[d:2 * d]
        v = kv_in @ in_w[2 * d:].T + in_b[2 * d:]

        def split(t):
            return t.reshape(t.shape[0], t.shape[1], N_HEAD, dh).transpose(0, 2, 1, 3)

        q, k, v = split(q), split(k), split(v)
        s = q @ k.transpose(0, 1, 3, 2) / math.sqrt(dh)
        if mask is not None:
            s = s + mask[:, None]
        p = jax.nn.softmax(s, axis=-1)
        o = (p @ v).transpose(0, 2, 1, 3).reshape(q_in.shape[0], -1, d)
        return o @ out_w.T + out_b

    def ln(y, w, b):
        mu = y.mean(-1, keepdims=True)
        var = ((y - mu) ** 2).mean(-1, keepdims=True)
        return (y - mu) * jax.lax.rsqrt(var + LN_EPS) * w + b

    x = tgt
    for p in torch_layers:
        sa = mha(x, x, p["sa_in_w"], p["sa_in_b"], p["sa_out_w"], p["sa_out_b"], self_mask)
        x = ln(x + sa, p["n1_w"], p["n1_b"])
        ca = mha(x, memory, p["ca_in_w"], p["ca_in_b"], p["ca_out_w"], p["ca_out_b"], None)
        x = ln(x + ca, p["n2_w"], p["n2_b"])
        h = jnp.maximum(x @ p["lin1_w"].T + p["lin1_b"], 0.0)
        ff = h @ p["lin2_w"].T + p["lin2_b"]
        x = ln(x + ff, p["n3_w"], p["n3_b"])
    return x


# ------------------------------ main ------------------------------------------
if __name__ == "__main__":
    key = jax.random.PRNGKey(0)
    k_tgt, k_mem, k_params = jax.random.split(key, 3)

    B, S, M = 2, 8, 8
    tgt = jax.random.normal(k_tgt, (B, S, D_MODEL), jnp.float32)
    memory = jax.random.normal(k_mem, (B, M, D_MODEL), jnp.float32)
    # mark the last two positions of batch element 1 as padded
    tgt_key_padding_mask = jnp.zeros((B, S), dtype=bool).at[1, -2:].set(True)

    layer_keys = jax.random.split(k_params, NUM_LAYERS)
    torch_layers = [init_layer_params(lk, D_MODEL, DIM_FF) for lk in layer_keys]
    kernel_params = pack_params(torch_layers)

    out = decoder_forward(tgt, tgt_key_padding_mask, memory, kernel_params)
    out = jax.block_until_ready(out)

    ref = reference_forward(tgt, tgt_key_padding_mask, memory, torch_layers)
    assert out.shape == (B, S, D_MODEL)
    assert bool(jnp.all(jnp.isfinite(out)))
    max_err = float(jnp.max(jnp.abs(out - ref)))
    assert max_err < 0.2, f"kernel/reference mismatch, max abs err = {max_err}"
    print("KERNEL_OK")
</pallas_src>

<mosaic_0001>
module attributes {stable_mosaic.version = 11 : i64} {
  func.func @fused_decoder_kernel(%arg0: i32, %arg1: memref<1x8x32xf32, #tpu.memory_space<vmem>>, %arg2: memref<1x8x32xf32, #tpu.memory_space<vmem>>, %arg3: memref<1x8x8xf32, #tpu.memory_space<vmem>>, %arg4: memref<2x32x96xbf16, #tpu.memory_space<vmem>>, %arg5: memref<2x1x96xf32, #tpu.memory_space<vmem>>, %arg6: memref<2x32x32xbf16, #tpu.memory_space<vmem>>, %arg7: memref<2x1x32xf32, #tpu.memory_space<vmem>>, %arg8: memref<2x32x32xbf16, #tpu.memory_space<vmem>>, %arg9: memref<2x1x32xf32, #tpu.memory_space<vmem>>, %arg10: memref<2x32x64xbf16, #tpu.memory_space<vmem>>, %arg11: memref<2x1x64xf32, #tpu.memory_space<vmem>>, %arg12: memref<2x32x32xbf16, #tpu.memory_space<vmem>>, %arg13: memref<2x1x32xf32, #tpu.memory_space<vmem>>, %arg14: memref<2x32x2048xbf16, #tpu.memory_space<vmem>>, %arg15: memref<2x1x2048xf32, #tpu.memory_space<vmem>>, %arg16: memref<2x32x2048xbf16, #tpu.memory_space<vmem>>, %arg17: memref<2x1x32xf32, #tpu.memory_space<vmem>>, %arg18: memref<2x1x32xf32, #tpu.memory_space<vmem>>, %arg19: memref<2x1x32xf32, #tpu.memory_space<vmem>>, %arg20: memref<2x1x32xf32, #tpu.memory_space<vmem>>, %arg21: memref<2x1x32xf32, #tpu.memory_space<vmem>>, %arg22: memref<2x1x32xf32, #tpu.memory_space<vmem>>, %arg23: memref<2x1x32xf32, #tpu.memory_space<vmem>>, %arg24: memref<1x8x32xf32, #tpu.memory_space<vmem>>) attributes {dimension_semantics = [#tpu.dimension_semantics<parallel>], iteration_bounds = array<i64: 2>, scalar_prefetch = 0 : i64, scratch_operands = 0 : i64, tpu.core_type = #tpu.core_type<tc>, window_params = [{transform_indices = @transform_0, window_bounds = array<i64: 1, 8, 32>}, {transform_indices = @transform_1, window_bounds = array<i64: 1, 8, 32>}, {transform_indices = @transform_2, window_bounds = array<i64: 1, 8, 8>}, {pipeline_mode = #tpu.pipeline_mode<synchronous>, transform_indices = @transform_3, window_bounds = array<i64: 2, 32, 96>}, {pipeline_mode = #tpu.pipeline_mode<synchronous>, transform_indices = @transform_4, window_bounds = array<i64: 2, 1, 96>}, {pipeline_mode = #tpu.pipeline_mode<synchronous>, transform_indices = @transform_5, window_bounds = array<i64: 2, 32, 32>}, {pipeline_mode = #tpu.pipeline_mode<synchronous>, transform_indices = @transform_6, window_bounds = array<i64: 2, 1, 32>}, {pipeline_mode = #tpu.pipeline_mode<synchronous>, transform_indices = @transform_7, window_bounds = array<i64: 2, 32, 32>}, {pipeline_mode = #tpu.pipeline_mode<synchronous>, transform_indices = @transform_8, window_bounds = array<i64: 2, 1, 32>}, {pipeline_mode = #tpu.pipeline_mode<synchronous>, transform_indices = @transform_9, window_bounds = array<i64: 2, 32, 64>}, {pipeline_mode = #tpu.pipeline_mode<synchronous>, transform_indices = @transform_10, window_bounds = array<i64: 2, 1, 64>}, {pipeline_mode = #tpu.pipeline_mode<synchronous>, transform_indices = @transform_11, window_bounds = array<i64: 2, 32, 32>}, {pipeline_mode = #tpu.pipeline_mode<synchronous>, transform_indices = @transform_12, window_bounds = array<i64: 2, 1, 32>}, {pipeline_mode = #tpu.pipeline_mode<synchronous>, transform_indices = @transform_13, window_bounds = array<i64: 2, 32, 2048>}, {pipeline_mode = #tpu.pipeline_mode<synchronous>, transform_indices = @transform_14, window_bounds = array<i64: 2, 1, 2048>}, {pipeline_mode = #tpu.pipeline_mode<synchronous>, transform_indices = @transform_15, window_bounds = array<i64: 2, 32, 2048>}, {pipeline_mode = #tpu.pipeline_mode<synchronous>, transform_indices = @transform_16, window_bounds = array<i64: 2, 1, 32>}, {pipeline_mode = #tpu.pipeline_mode<synchronous>, transform_indices = @transform_17, window_bounds = array<i64: 2, 1, 32>}, {pipeline_mode = #tpu.pipeline_mode<synchronous>, transform_indices = @transform_18, window_bounds = array<i64: 2, 1, 32>}, {pipeline_mode = #tpu.pipeline_mode<synchronous>, transform_indices = @transform_19, window_bounds = array<i64: 2, 1, 32>}, {pipeline_mode = #tpu.pipeline_mode<synchronous>, transform_indices = @transform_20, window_bounds = array<i64: 2, 1, 32>}, {pipeline_mode = #tpu.pipeline_mode<synchronous>, transform_indices = @transform_21, window_bounds = array<i64: 2, 1, 32>}, {pipeline_mode = #tpu.pipeline_mode<synchronous>, transform_indices = @transform_22, window_bounds = array<i64: 2, 1, 32>}, {transform_indices = @transform_23, window_bounds = array<i64: 1, 8, 32>}]} {
    %c0 = arith.constant 0 : index
    %c0_0 = arith.constant 0 : index
    %c0_1 = arith.constant 0 : index
    %0 = vector.load %arg1[%c0, %c0_0, %c0_1] : memref<1x8x32xf32, #tpu.memory_space<vmem>>, vector<1x8x32xf32>
    %1 = vector.shape_cast %0 : vector<1x8x32xf32> to vector<8x32xf32>
    %c0_2 = arith.constant 0 : index
    %c0_3 = arith.constant 0 : index
    %c0_4 = arith.constant 0 : index
    %2 = vector.load %arg2[%c0_2, %c0_3, %c0_4] : memref<1x8x32xf32, #tpu.memory_space<vmem>>, vector<1x8x32xf32>
    %3 = vector.shape_cast %2 : vector<1x8x32xf32> to vector<8x32xf32>
    %c0_5 = arith.constant 0 : index
    %c0_6 = arith.constant 0 : index
    %c0_7 = arith.constant 0 : index
    %4 = vector.load %arg3[%c0_5, %c0_6, %c0_7] : memref<1x8x8xf32, #tpu.memory_space<vmem>>, vector<1x8x8xf32>
    %5 = vector.shape_cast %4 : vector<1x8x8xf32> to vector<8x8xf32>
    %6 = arith.truncf %3 : vector<8x32xf32> to vector<8x32xbf16>
    %7 = arith.truncf %1 : vector<8x32xf32> to vector<8x32xbf16>
    %c0_8 = arith.constant 0 : index
    %c0_9 = arith.constant 0 : index
    %c0_10 = arith.constant 0 : index
    %8 = vector.load %arg4[%c0_8, %c0_9, %c0_10] : memref<2x32x96xbf16, #tpu.memory_space<vmem>>, vector<1x32x96xbf16>
    %9 = vector.shape_cast %8 : vector<1x32x96xbf16> to vector<32x96xbf16>
    %cst = arith.constant dense<0.000000e+00> : vector<8x96xf32>
    %10 = tpu.matmul %7, %9, %cst {dimension_numbers = #tpu.dot_dimension_numbers<[1], [0], [0], [1], [0, 0, 1, 1], [], []>} : vector<8x32xbf16>, vector<32x96xbf16>, vector<8x96xf32> -> vector<8x96xf32>
    %c0_11 = arith.constant 0 : index
    %c0_12 = arith.constant 0 : index
    %c0_13 = arith.constant 0 : index
    %11 = vector.load %arg5[%c0_11, %c0_12, %c0_13] : memref<2x1x96xf32, #tpu.memory_space<vmem>>, vector<1x1x96xf32>
    %12 = vector.shape_cast %11 : vector<1x1x96xf32> to vector<1x96xf32>
    %13 = vector.broadcast %12 : vector<1x96xf32> to vector<8x96xf32>
    %14 = arith.addf %10, %13 : vector<8x96xf32>
    %15 = vector.extract_strided_slice %14 {offsets = [0, 0], sizes = [8, 32], strides = [1, 1]} : vector<8x96xf32> to vector<8x32xf32>
    %16 = vector.extract_strided_slice %14 {offsets = [0, 32], sizes = [8, 32], strides = [1, 1]} : vector<8x96xf32> to vector<8x32xf32>
    %17 = vector.extract_strided_slice %14 {offsets = [0, 64], sizes = [8, 32], strides = [1, 1]} : vector<8x96xf32> to vector<8x32xf32>
    %c0_14 = arith.constant 0 : index
    %c0_15 = arith.constant 0 : index
    %c0_16 = arith.constant 0 : index
    %18 = vector.load %arg6[%c0_14, %c0_15, %c0_16] : memref<2x32x32xbf16, #tpu.memory_space<vmem>>, vector<1x32x32xbf16>
    %19 = vector.shape_cast %18 : vector<1x32x32xbf16> to vector<32x32xbf16>
    %20 = arith.truncf %15 : vector<8x32xf32> to vector<8x32xbf16>
    %21 = arith.truncf %16 : vector<8x32xf32> to vector<8x32xbf16>
    %22 = arith.truncf %17 : vector<8x32xf32> to vector<8x32xbf16>
    %23 = vector.extract_strided_slice %20 {offsets = [0, 0], sizes = [8, 8], strides = [1, 1]} : vector<8x32xbf16> to vector<8x8xbf16>
    %24 = vector.extract_strided_slice %21 {offsets = [0, 0], sizes = [8, 8], strides = [1, 1]} : vector<8x32xbf16> to vector<8x8xbf16>
    %cst_17 = arith.constant dense<0.000000e+00> : vector<8x8xf32>
    %25 = tpu.matmul %23, %24, %cst_17 {dimension_numbers = #tpu.dot_dimension_numbers<[1], [1], [0], [0], [0, 0, 1, 0], [], []>} : vector<8x8xbf16>, vector<8x8xbf16>, vector<8x8xf32> -> vector<8x8xf32>
    %cst_18 = arith.constant 0.353553385 : f32
    %26 = vector.broadcast %cst_18 : f32 to vector<8x8xf32>
    %27 = arith.mulf %25, %26 : vector<8x8xf32>
    %28 = arith.addf %27, %5 : vector<8x8xf32>
    %cst_19 = arith.constant dense<0xFF800000> : vector<8xf32>
    %29 = vector.multi_reduction <maximumf>, %28, %cst_19 [1] : vector<8x8xf32> to vector<8xf32>
    %30 = vector.shape_cast %29 : vector<8xf32> to vector<8x1xf32>
    %31 = vector.broadcast %30 : vector<8x1xf32> to vector<8x8xf32>
    %32 = arith.subf %28, %31 : vector<8x8xf32>
    %33 = math.exp %32 : vector<8x8xf32>
    %cst_20 = arith.constant dense<0.000000e+00> : vector<8xf32>
    %34 = vector.multi_reduction <add>, %33, %cst_20 [1] : vector<8x8xf32> to vector<8xf32>
    %35 = vector.shape_cast %34 : vector<8xf32> to vector<8x1xf32>
    %36 = tpu.reciprocal %35 {approx = true} : vector<8x1xf32> -> vector<8x1xf32>
    %37 = vector.broadcast %36 : vector<8x1xf32> to vector<8x8xf32>
    %38 = arith.mulf %33, %37 : vector<8x8xf32>
    %39 = arith.truncf %38 : vector<8x8xf32> to vector<8x8xbf16>
    %40 = vector.extract_strided_slice %22 {offsets = [0, 0], sizes = [8, 8], strides = [1, 1]} : vector<8x32xbf16> to vector<8x8xbf16>
    %cst_21 = arith.constant dense<0.000000e+00> : vector<8x8xf32>
    %41 = tpu.matmul %39, %40, %cst_21 {dimension_numbers = #tpu.dot_dimension_numbers<[1], [0], [0], [1], [0, 0, 1, 1], [], []>} : vector<8x8xbf16>, vector<8x8xbf16>, vector<8x8xf32> -> vector<8x8xf32>
    %42 = arith.truncf %41 : vector<8x8xf32> to vector<8x8xbf16>
    %43 = vector.extract_strided_slice %19 {offsets = [0, 0], sizes = [8, 32], strides = [1, 1]} : vector<32x32xbf16> to vector<8x32xbf16>
    %cst_22 = arith.constant dense<0.000000e+00> : vector<8x32xf32>
    %44 = tpu.matmul %42, %43, %cst_22 {dimension_numbers = #tpu.dot_dimension_numbers<[1], [0], [0], [1], [0, 0, 1, 1], [], []>} : vector<8x8xbf16>, vector<8x32xbf16>, vector<8x32xf32> -> vector<8x32xf32>
    %45 = vector.extract_strided_slice %20 {offsets = [0, 8], sizes = [8, 8], strides = [1, 1]} : vector<8x32xbf16> to vector<8x8xbf16>
    %46 = vector.extract_strided_slice %21 {offsets = [0, 8], sizes = [8, 8], strides = [1, 1]} : vector<8x32xbf16> to vector<8x8xbf16>
    %cst_23 = arith.constant dense<0.000000e+00> : vector<8x8xf32>
    %47 = tpu.matmul %45, %46, %cst_23 {dimension_numbers = #tpu.dot_dimension_numbers<[1], [1], [0], [0], [0, 0, 1, 0], [], []>} : vector<8x8xbf16>, vector<8x8xbf16>, vector<8x8xf32> -> vector<8x8xf32>
    %cst_24 = arith.constant 0.353553385 : f32
    %48 = vector.broadcast %cst_24 : f32 to vector<8x8xf32>
    %49 = arith.mulf %47, %48 : vector<8x8xf32>
    %50 = arith.addf %49, %5 : vector<8x8xf32>
    %cst_25 = arith.constant dense<0xFF800000> : vector<8xf32>
    %51 = vector.multi_reduction <maximumf>, %50, %cst_25 [1] : vector<8x8xf32> to vector<8xf32>
    %52 = vector.shape_cast %51 : vector<8xf32> to vector<8x1xf32>
    %53 = vector.broadcast %52 : vector<8x1xf32> to vector<8x8xf32>
    %54 = arith.subf %50, %53 : vector<8x8xf32>
    %55 = math.exp %54 : vector<8x8xf32>
    %cst_26 = arith.constant dense<0.000000e+00> : vector<8xf32>
    %56 = vector.multi_reduction <add>, %55, %cst_26 [1] : vector<8x8xf32> to vector<8xf32>
    %57 = vector.shape_cast %56 : vector<8xf32> to vector<8x1xf32>
    %58 = tpu.reciprocal %57 {approx = true} : vector<8x1xf32> -> vector<8x1xf32>
    %59 = vector.broadcast %58 : vector<8x1xf32> to vector<8x8xf32>
    %60 = arith.mulf %55, %59 : vector<8x8xf32>
    %61 = arith.truncf %60 : vector<8x8xf32> to vector<8x8xbf16>
    %62 = vector.extract_strided_slice %22 {offsets = [0, 8], sizes = [8, 8], strides = [1, 1]} : vector<8x32xbf16> to vector<8x8xbf16>
    %cst_27 = arith.constant dense<0.000000e+00> : vector<8x8xf32>
    %63 = tpu.matmul %61, %62, %cst_27 {dimension_numbers = #tpu.dot_dimension_numbers<[1], [0], [0], [1], [0, 0, 1, 1], [], []>} : vector<8x8xbf16>, vector<8x8xbf16>, vector<8x8xf32> -> vector<8x8xf32>
    %64 = arith.truncf %63 : vector<8x8xf32> to vector<8x8xbf16>
    %65 = vector.extract_strided_slice %19 {offsets = [8, 0], sizes = [8, 32], strides = [1, 1]} : vector<32x32xbf16> to vector<8x32xbf16>
    %cst_28 = arith.constant dense<0.000000e+00> : vector<8x32xf32>
    %66 = tpu.matmul %64, %65, %cst_28 {dimension_numbers = #tpu.dot_dimension_numbers<[1], [0], [0], [1], [0, 0, 1, 1], [], []>} : vector<8x8xbf16>, vector<8x32xbf16>, vector<8x32xf32> -> vector<8x32xf32>
    %67 = arith.addf %44, %66 : vector<8x32xf32>
    %68 = vector.extract_strided_slice %20 {offsets = [0, 16], sizes = [8, 8], strides = [1, 1]} : vector<8x32xbf16> to vector<8x8xbf16>
    %69 = vector.extract_strided_slice %21 {offsets = [0, 16], sizes = [8, 8], strides = [1, 1]} : vector<8x32xbf16> to vector<8x8xbf16>
    %cst_29 = arith.constant dense<0.000000e+00> : vector<8x8xf32>
    %70 = tpu.matmul %68, %69, %cst_29 {dimension_numbers = #tpu.dot_dimension_numbers<[1], [1], [0], [0], [0, 0, 1, 0], [], []>} : vector<8x8xbf16>, vector<8x8xbf16>, vector<8x8xf32> -> vector<8x8xf32>
    %cst_30 = arith.constant 0.353553385 : f32
    %71 = vector.broadcast %cst_30 : f32 to vector<8x8xf32>
    %72 = arith.mulf %70, %71 : vector<8x8xf32>
    %73 = arith.addf %72, %5 : vector<8x8xf32>
    %cst_31 = arith.constant dense<0xFF800000> : vector<8xf32>
    %74 = vector.multi_reduction <maximumf>, %73, %cst_31 [1] : vector<8x8xf32> to vector<8xf32>
    %75 = vector.shape_cast %74 : vector<8xf32> to vector<8x1xf32>
    %76 = vector.broadcast %75 : vector<8x1xf32> to vector<8x8xf32>
    %77 = arith.subf %73, %76 : vector<8x8xf32>
    %78 = math.exp %77 : vector<8x8xf32>
    %cst_32 = arith.constant dense<0.000000e+00> : vector<8xf32>
    %79 = vector.multi_reduction <add>, %78, %cst_32 [1] : vector<8x8xf32> to vector<8xf32>
    %80 = vector.shape_cast %79 : vector<8xf32> to vector<8x1xf32>
    %81 = tpu.reciprocal %80 {approx = true} : vector<8x1xf32> -> vector<8x1xf32>
    %82 = vector.broadcast %81 : vector<8x1xf32> to vector<8x8xf32>
    %83 = arith.mulf %78, %82 : vector<8x8xf32>
    %84 = arith.truncf %83 : vector<8x8xf32> to vector<8x8xbf16>
    %85 = vector.extract_strided_slice %22 {offsets = [0, 16], sizes = [8, 8], strides = [1, 1]} : vector<8x32xbf16> to vector<8x8xbf16>
    %cst_33 = arith.constant dense<0.000000e+00> : vector<8x8xf32>
    %86 = tpu.matmul %84, %85, %cst_33 {dimension_numbers = #tpu.dot_dimension_numbers<[1], [0], [0], [1], [0, 0, 1, 1], [], []>} : vector<8x8xbf16>, vector<8x8xbf16>, vector<8x8xf32> -> vector<8x8xf32>
    %87 = arith.truncf %86 : vector<8x8xf32> to vector<8x8xbf16>
    %88 = vector.extract_strided_slice %19 {offsets = [16, 0], sizes = [8, 32], strides = [1, 1]} : vector<32x32xbf16> to vector<8x32xbf16>
    %cst_34 = arith.constant dense<0.000000e+00> : vector<8x32xf32>
    %89 = tpu.matmul %87, %88, %cst_34 {dimension_numbers = #tpu.dot_dimension_numbers<[1], [0], [0], [1], [0, 0, 1, 1], [], []>} : vector<8x8xbf16>, vector<8x32xbf16>, vector<8x32xf32> -> vector<8x32xf32>
    %90 = arith.addf %67, %89 : vector<8x32xf32>
    %91 = vector.extract_strided_slice %20 {offsets = [0, 24], sizes = [8, 8], strides = [1, 1]} : vector<8x32xbf16> to vector<8x8xbf16>
    %92 = vector.extract_strided_slice %21 {offsets = [0, 24], sizes = [8, 8], strides = [1, 1]} : vector<8x32xbf16> to vector<8x8xbf16>
    %cst_35 = arith.constant dense<0.000000e+00> : vector<8x8xf32>
    %93 = tpu.matmul %91, %92, %cst_35 {dimension_numbers = #tpu.dot_dimension_numbers<[1], [1], [0], [0], [0, 0, 1, 0], [], []>} : vector<8x8xbf16>, vector<8x8xbf16>, vector<8x8xf32> -> vector<8x8xf32>
    %cst_36 = arith.constant 0.353553385 : f32
    %94 = vector.broadcast %cst_36 : f32 to vector<8x8xf32>
    %95 = arith.mulf %93, %94 : vector<8x8xf32>
    %96 = arith.addf %95, %5 : vector<8x8xf32>
    %cst_37 = arith.constant dense<0xFF800000> : vector<8xf32>
    %97 = vector.multi_reduction <maximumf>, %96, %cst_37 [1] : vector<8x8xf32> to vector<8xf32>
    %98 = vector.shape_cast %97 : vector<8xf32> to vector<8x1xf32>
    %99 = vector.broadcast %98 : vector<8x1xf32> to vector<8x8xf32>
    %100 = arith.subf %96, %99 : vector<8x8xf32>
    %101 = math.exp %100 : vector<8x8xf32>
    %cst_38 = arith.constant dense<0.000000e+00> : vector<8xf32>
    %102 = vector.multi_reduction <add>, %101, %cst_38 [1] : vector<8x8xf32> to vector<8xf32>
    %103 = vector.shape_cast %102 : vector<8xf32> to vector<8x1xf32>
    %104 = tpu.reciprocal %103 {approx = true} : vector<8x1xf32> -> vector<8x1xf32>
    %105 = vector.broadcast %104 : vector<8x1xf32> to vector<8x8xf32>
    %106 = arith.mulf %101, %105 : vector<8x8xf32>
    %107 = arith.truncf %106 : vector<8x8xf32> to vector<8x8xbf16>
    %108 = vector.extract_strided_slice %22 {offsets = [0, 24], sizes = [8, 8], strides = [1, 1]} : vector<8x32xbf16> to vector<8x8xbf16>
    %cst_39 = arith.constant dense<0.000000e+00> : vector<8x8xf32>
    %109 = tpu.matmul %107, %108, %cst_39 {dimension_numbers = #tpu.dot_dimension_numbers<[1], [0], [0], [1], [0, 0, 1, 1], [], []>} : vector<8x8xbf16>, vector<8x8xbf16>, vector<8x8xf32> -> vector<8x8xf32>
    %110 = arith.truncf %109 : vector<8x8xf32> to vector<8x8xbf16>
    %111 = vector.extract_strided_slice %19 {offsets = [24, 0], sizes = [8, 32], strides = [1, 1]} : vector<32x32xbf16> to vector<8x32xbf16>
    %cst_40 = arith.constant dense<0.000000e+00> : vector<8x32xf32>
    %112 = tpu.matmul %110, %111, %cst_40 {dimension_numbers = #tpu.dot_dimension_numbers<[1], [0], [0], [1], [0, 0, 1, 1], [], []>} : vector<8x8xbf16>, vector<8x32xbf16>, vector<8x32xf32> -> vector<8x32xf32>
    %113 = arith.addf %90, %112 : vector<8x32xf32>
    %c0_41 = arith.constant 0 : index
    %c0_42 = arith.constant 0 : index
    %c0_43 = arith.constant 0 : index
    %114 = vector.load %arg7[%c0_41, %c0_42, %c0_43] : memref<2x1x32xf32, #tpu.memory_space<vmem>>, vector<1x1x32xf32>
    %115 = vector.shape_cast %114 : vector<1x1x32xf32> to vector<1x32xf32>
    %116 = vector.broadcast %115 : vector<1x32xf32> to vector<8x32xf32>
    %117 = arith.addf %113, %116 : vector<8x32xf32>
    %118 = arith.addf %1, %117 : vector<8x32xf32>
    %c0_44 = arith.constant 0 : index
    %c0_45 = arith.constant 0 : index
    %c0_46 = arith.constant 0 : index
    %119 = vector.load %arg18[%c0_44, %c0_45, %c0_46] : memref<2x1x32xf32, #tpu.memory_space<vmem>>, vector<1x1x32xf32>
    %120 = vector.shape_cast %119 : vector<1x1x32xf32> to vector<1x32xf32>
    %c0_47 = arith.constant 0 : index
    %c0_48 = arith.constant 0 : index
    %c0_49 = arith.constant 0 : index
    %121 = vector.load %arg19[%c0_47, %c0_48, %c0_49] : memref<2x1x32xf32, #tpu.memory_space<vmem>>, vector<1x1x32xf32>
    %122 = vector.shape_cast %121 : vector<1x1x32xf32> to vector<1x32xf32>
    %cst_50 = arith.constant dense<0.000000e+00> : vector<8xf32>
    %123 = vector.multi_reduction <add>, %118, %cst_50 [1] : vector<8x32xf32> to vector<8xf32>
    %124 = vector.shape_cast %123 : vector<8xf32> to vector<8x1xf32>
    %cst_51 = arith.constant 3.200000e+01 : f32
    %125 = vector.broadcast %cst_51 : f32 to vector<8x1xf32>
    %126 = arith.divf %124, %125 : vector<8x1xf32>
    %127 = vector.broadcast %126 : vector<8x1xf32> to vector<8x32xf32>
    %128 = arith.subf %118, %127 : vector<8x32xf32>
    %129 = arith.mulf %128, %128 : vector<8x32xf32>
    %cst_52 = arith.constant dense<0.000000e+00> : vector<8xf32>
    %130 = vector.multi_reduction <add>, %129, %cst_52 [1] : vector<8x32xf32> to vector<8xf32>
    %131 = vector.shape_cast %130 : vector<8xf32> to vector<8x1xf32>
    %cst_53 = arith.constant 3.200000e+01 : f32
    %132 = vector.broadcast %cst_53 : f32 to vector<8x1xf32>
    %133 = arith.divf %131, %132 : vector<8x1xf32>
    %134 = vector.broadcast %126 : vector<8x1xf32> to vector<8x32xf32>
    %135 = arith.subf %118, %134 : vector<8x32xf32>
    %cst_54 = arith.constant 9.99999974E-6 : f32
    %136 = vector.broadcast %cst_54 : f32 to vector<8x1xf32>
    %137 = arith.addf %133, %136 : vector<8x1xf32>
    %138 = math.rsqrt %137 : vector<8x1xf32>
    %139 = vector.broadcast %138 : vector<8x1xf32> to vector<8x32xf32>
    %140 = arith.mulf %135, %139 : vector<8x32xf32>
    %141 = vector.broadcast %120 : vector<1x32xf32> to vector<8x32xf32>
    %142 = arith.mulf %140, %141 : vector<8x32xf32>
    %143 = vector.broadcast %122 : vector<1x32xf32> to vector<8x32xf32>
    %144 = arith.addf %142, %143 : vector<8x32xf32>
    %145 = arith.truncf %144 : vector<8x32xf32> to vector<8x32xbf16>
    %c0_55 = arith.constant 0 : index
    %c0_56 = arith.constant 0 : index
    %c0_57 = arith.constant 0 : index
    %146 = vector.load %arg8[%c0_55, %c0_56, %c0_57] : memref<2x32x32xbf16, #tpu.memory_space<vmem>>, vector<1x32x32xbf16>
    %147 = vector.shape_cast %146 : vector<1x32x32xbf16> to vector<32x32xbf16>
    %cst_58 = arith.constant dense<0.000000e+00> : vector<8x32xf32>
    %148 = tpu.matmul %145, %147, %cst_58 {dimension_numbers = #tpu.dot_dimension_numbers<[1], [0], [0], [1], [0, 0, 1, 1], [], []>} : vector<8x32xbf16>, vector<32x32xbf16>, vector<8x32xf32> -> vector<8x32xf32>
    %c0_59 = arith.constant 0 : index
    %c0_60 = arith.constant 0 : index
    %c0_61 = arith.constant 0 : index
    %149 = vector.load %arg9[%c0_59, %c0_60, %c0_61] : memref<2x1x32xf32, #tpu.memory_space<vmem>>, vector<1x1x32xf32>
    %150 = vector.shape_cast %149 : vector<1x1x32xf32> to vector<1x32xf32>
    %151 = vector.broadcast %150 : vector<1x32xf32> to vector<8x32xf32>
    %152 = arith.addf %148, %151 : vector<8x32xf32>
    %c0_62 = arith.constant 0 : index
    %c0_63 = arith.constant 0 : index
    %c0_64 = arith.constant 0 : index
    %153 = vector.load %arg10[%c0_62, %c0_63, %c0_64] : memref<2x32x64xbf16, #tpu.memory_space<vmem>>, vector<1x32x64xbf16>
    %154 = vector.shape_cast %153 : vector<1x32x64xbf16> to vector<32x64xbf16>
    %cst_65 = arith.constant dense<0.000000e+00> : vector<8x64xf32>
    %155 = tpu.matmul %6, %154, %cst_65 {dimension_numbers = #tpu.dot_dimension_numbers<[1], [0], [0], [1], [0, 0, 1, 1], [], []>} : vector<8x32xbf16>, vector<32x64xbf16>, vector<8x64xf32> -> vector<8x64xf32>
    %c0_66 = arith.constant 0 : index
    %c0_67 = arith.constant 0 : index
    %c0_68 = arith.constant 0 : index
    %156 = vector.load %arg11[%c0_66, %c0_67, %c0_68] : memref<2x1x64xf32, #tpu.memory_space<vmem>>, vector<1x1x64xf32>
    %157 = vector.shape_cast %156 : vector<1x1x64xf32> to vector<1x64xf32>
    %158 = vector.broadcast %157 : vector<1x64xf32> to vector<8x64xf32>
    %159 = arith.addf %155, %158 : vector<8x64xf32>
    %160 = vector.extract_strided_slice %159 {offsets = [0, 0], sizes = [8, 32], strides = [1, 1]} : vector<8x64xf32> to vector<8x32xf32>
    %161 = vector.extract_strided_slice %159 {offsets = [0, 32], sizes = [8, 32], strides = [1, 1]} : vector<8x64xf32> to vector<8x32xf32>
    %c0_69 = arith.constant 0 : index
    %c0_70 = arith.constant 0 : index
    %c0_71 = arith.constant 0 : index
    %162 = vector.load %arg12[%c0_69, %c0_70, %c0_71] : memref<2x32x32xbf16, #tpu.memory_space<vmem>>, vector<1x32x32xbf16>
    %163 = vector.shape_cast %162 : vector<1x32x32xbf16> to vector<32x32xbf16>
    %164 = arith.truncf %152 : vector<8x32xf32> to vector<8x32xbf16>
    %165 = arith.truncf %160 : vector<8x32xf32> to vector<8x32xbf16>
    %166 = arith.truncf %161 : vector<8x32xf32> to vector<8x32xbf16>
    %167 = vector.extract_strided_slice %164 {offsets = [0, 0], sizes = [8, 8], strides = [1, 1]} : vector<8x32xbf16> to vector<8x8xbf16>
    %168 = vector.extract_strided_slice %165 {offsets = [0, 0], sizes = [8, 8], strides = [1, 1]} : vector<8x32xbf16> to vector<8x8xbf16>
    %cst_72 = arith.constant dense<0.000000e+00> : vector<8x8xf32>
    %169 = tpu.matmul %167, %168, %cst_72 {dimension_numbers = #tpu.dot_dimension_numbers<[1], [1], [0], [0], [0, 0, 1, 0], [], []>} : vector<8x8xbf16>, vector<8x8xbf16>, vector<8x8xf32> -> vector<8x8xf32>
    %cst_73 = arith.constant 0.353553385 : f32
    %170 = vector.broadcast %cst_73 : f32 to vector<8x8xf32>
    %171 = arith.mulf %169, %170 : vector<8x8xf32>
    %cst_74 = arith.constant dense<0xFF800000> : vector<8xf32>
    %172 = vector.multi_reduction <maximumf>, %171, %cst_74 [1] : vector<8x8xf32> to vector<8xf32>
    %173 = vector.shape_cast %172 : vector<8xf32> to vector<8x1xf32>
    %174 = vector.broadcast %173 : vector<8x1xf32> to vector<8x8xf32>
    %175 = arith.subf %171, %174 : vector<8x8xf32>
    %176 = math.exp %175 : vector<8x8xf32>
    %cst_75 = arith.constant dense<0.000000e+00> : vector<8xf32>
    %177 = vector.multi_reduction <add>, %176, %cst_75 [1] : vector<8x8xf32> to vector<8xf32>
    %178 = vector.shape_cast %177 : vector<8xf32> to vector<8x1xf32>
    %179 = tpu.reciprocal %178 {approx = true} : vector<8x1xf32> -> vector<8x1xf32>
    %180 = vector.broadcast %179 : vector<8x1xf32> to vector<8x8xf32>
    %181 = arith.mulf %176, %180 : vector<8x8xf32>
    %182 = arith.truncf %181 : vector<8x8xf32> to vector<8x8xbf16>
    %183 = vector.extract_strided_slice %166 {offsets = [0, 0], sizes = [8, 8], strides = [1, 1]} : vector<8x32xbf16> to vector<8x8xbf16>
    %cst_76 = arith.constant dense<0.000000e+00> : vector<8x8xf32>
    %184 = tpu.matmul %182, %183, %cst_76 {dimension_numbers = #tpu.dot_dimension_numbers<[1], [0], [0], [1], [0, 0, 1, 1], [], []>} : vector<8x8xbf16>, vector<8x8xbf16>, vector<8x8xf32> -> vector<8x8xf32>
    %185 = arith.truncf %184 : vector<8x8xf32> to vector<8x8xbf16>
    %186 = vector.extract_strided_slice %163 {offsets = [0, 0], sizes = [8, 32], strides = [1, 1]} : vector<32x32xbf16> to vector<8x32xbf16>
    %cst_77 = arith.constant dense<0.000000e+00> : vector<8x32xf32>
    %187 = tpu.matmul %185, %186, %cst_77 {dimension_numbers = #tpu.dot_dimension_numbers<[1], [0], [0], [1], [0, 0, 1, 1], [], []>} : vector<8x8xbf16>, vector<8x32xbf16>, vector<8x32xf32> -> vector<8x32xf32>
    %188 = vector.extract_strided_slice %164 {offsets = [0, 8], sizes = [8, 8], strides = [1, 1]} : vector<8x32xbf16> to vector<8x8xbf16>
    %189 = vector.extract_strided_slice %165 {offsets = [0, 8], sizes = [8, 8], strides = [1, 1]} : vector<8x32xbf16> to vector<8x8xbf16>
    %cst_78 = arith.constant dense<0.000000e+00> : vector<8x8xf32>
    %190 = tpu.matmul %188, %189, %cst_78 {dimension_numbers = #tpu.dot_dimension_numbers<[1], [1], [0], [0], [0, 0, 1, 0], [], []>} : vector<8x8xbf16>, vector<8x8xbf16>, vector<8x8xf32> -> vector<8x8xf32>
    %cst_79 = arith.constant 0.353553385 : f32
    %191 = vector.broadcast %cst_79 : f32 to vector<8x8xf32>
    %192 = arith.mulf %190, %191 : vector<8x8xf32>
    %cst_80 = arith.constant dense<0xFF800000> : vector<8xf32>
    %193 = vector.multi_reduction <maximumf>, %192, %cst_80 [1] : vector<8x8xf32> to vector<8xf32>
    %194 = vector.shape_cast %193 : vector<8xf32> to vector<8x1xf32>
    %195 = vector.broadcast %194 : vector<8x1xf32> to vector<8x8xf32>
    %196 = arith.subf %192, %195 : vector<8x8xf32>
    %197 = math.exp %196 : vector<8x8xf32>
    %cst_81 = arith.constant dense<0.000000e+00> : vector<8xf32>
    %198 = vector.multi_reduction <add>, %197, %cst_81 [1] : vector<8x8xf32> to vector<8xf32>
    %199 = vector.shape_cast %198 : vector<8xf32> to vector<8x1xf32>
    %200 = tpu.reciprocal %199 {approx = true} : vector<8x1xf32> -> vector<8x1xf32>
    %201 = vector.broadcast %200 : vector<8x1xf32> to vector<8x8xf32>
    %202 = arith.mulf %197, %201 : vector<8x8xf32>
    %203 = arith.truncf %202 : vector<8x8xf32> to vector<8x8xbf16>
    %204 = vector.extract_strided_slice %166 {offsets = [0, 8], sizes = [8, 8], strides = [1, 1]} : vector<8x32xbf16> to vector<8x8xbf16>
    %cst_82 = arith.constant dense<0.000000e+00> : vector<8x8xf32>
    %205 = tpu.matmul %203, %204, %cst_82 {dimension_numbers = #tpu.dot_dimension_numbers<[1], [0], [0], [1], [0, 0, 1, 1], [], []>} : vector<8x8xbf16>, vector<8x8xbf16>, vector<8x8xf32> -> vector<8x8xf32>
    %206 = arith.truncf %205 : vector<8x8xf32> to vector<8x8xbf16>
    %207 = vector.extract_strided_slice %163 {offsets = [8, 0], sizes = [8, 32], strides = [1, 1]} : vector<32x32xbf16> to vector<8x32xbf16>
    %cst_83 = arith.constant dense<0.000000e+00> : vector<8x32xf32>
    %208 = tpu.matmul %206, %207, %cst_83 {dimension_numbers = #tpu.dot_dimension_numbers<[1], [0], [0], [1], [0, 0, 1, 1], [], []>} : vector<8x8xbf16>, vector<8x32xbf16>, vector<8x32xf32> -> vector<8x32xf32>
    %209 = arith.addf %187, %208 : vector<8x32xf32>
    %210 = vector.extract_strided_slice %164 {offsets = [0, 16], sizes = [8, 8], strides = [1, 1]} : vector<8x32xbf16> to vector<8x8xbf16>
    %211 = vector.extract_strided_slice %165 {offsets = [0, 16], sizes = [8, 8], strides = [1, 1]} : vector<8x32xbf16> to vector<8x8xbf16>
    %cst_84 = arith.constant dense<0.000000e+00> : vector<8x8xf32>
    %212 = tpu.matmul %210, %211, %cst_84 {dimension_numbers = #tpu.dot_dimension_numbers<[1], [1], [0], [0], [0, 0, 1, 0], [], []>} : vector<8x8xbf16>, vector<8x8xbf16>, vector<8x8xf32> -> vector<8x8xf32>
    %cst_85 = arith.constant 0.353553385 : f32
    %213 = vector.broadcast %cst_85 : f32 to vector<8x8xf32>
    %214 = arith.mulf %212, %213 : vector<8x8xf32>
    %cst_86 = arith.constant dense<0xFF800000> : vector<8xf32>
    %215 = vector.multi_reduction <maximumf>, %214, %cst_86 [1] : vector<8x8xf32> to vector<8xf32>
    %216 = vector.shape_cast %215 : vector<8xf32> to vector<8x1xf32>
    %217 = vector.broadcast %216 : vector<8x1xf32> to vector<8x8xf32>
    %218 = arith.subf %214, %217 : vector<8x8xf32>
    %219 = math.exp %218 : vector<8x8xf32>
    %cst_87 = arith.constant dense<0.000000e+00> : vector<8xf32>
    %220 = vector.multi_reduction <add>, %219, %cst_87 [1] : vector<8x8xf32> to vector<8xf32>
    %221 = vector.shape_cast %220 : vector<8xf32> to vector<8x1xf32>
    %222 = tpu.reciprocal %221 {approx = true} : vector<8x1xf32> -> vector<8x1xf32>
    %223 = vector.broadcast %222 : vector<8x1xf32> to vector<8x8xf32>
    %224 = arith.mulf %219, %223 : vector<8x8xf32>
    %225 = arith.truncf %224 : vector<8x8xf32> to vector<8x8xbf16>
    %226 = vector.extract_strided_slice %166 {offsets = [0, 16], sizes = [8, 8], strides = [1, 1]} : vector<8x32xbf16> to vector<8x8xbf16>
    %cst_88 = arith.constant dense<0.000000e+00> : vector<8x8xf32>
    %227 = tpu.matmul %225, %226, %cst_88 {dimension_numbers = #tpu.dot_dimension_numbers<[1], [0], [0], [1], [0, 0, 1, 1], [], []>} : vector<8x8xbf16>, vector<8x8xbf16>, vector<8x8xf32> -> vector<8x8xf32>
    %228 = arith.truncf %227 : vector<8x8xf32> to vector<8x8xbf16>
    %229 = vector.extract_strided_slice %163 {offsets = [16, 0], sizes = [8, 32], strides = [1, 1]} : vector<32x32xbf16> to vector<8x32xbf16>
    %cst_89 = arith.constant dense<0.000000e+00> : vector<8x32xf32>
    %230 = tpu.matmul %228, %229, %cst_89 {dimension_numbers = #tpu.dot_dimension_numbers<[1], [0], [0], [1], [0, 0, 1, 1], [], []>} : vector<8x8xbf16>, vector<8x32xbf16>, vector<8x32xf32> -> vector<8x32xf32>
    %231 = arith.addf %209, %230 : vector<8x32xf32>
    %232 = vector.extract_strided_slice %164 {offsets = [0, 24], sizes = [8, 8], strides = [1, 1]} : vector<8x32xbf16> to vector<8x8xbf16>
    %233 = vector.extract_strided_slice %165 {offsets = [0, 24], sizes = [8, 8], strides = [1, 1]} : vector<8x32xbf16> to vector<8x8xbf16>
    %cst_90 = arith.constant dense<0.000000e+00> : vector<8x8xf32>
    %234 = tpu.matmul %232, %233, %cst_90 {dimension_numbers = #tpu.dot_dimension_numbers<[1], [1], [0], [0], [0, 0, 1, 0], [], []>} : vector<8x8xbf16>, vector<8x8xbf16>, vector<8x8xf32> -> vector<8x8xf32>
    %cst_91 = arith.constant 0.353553385 : f32
    %235 = vector.broadcast %cst_91 : f32 to vector<8x8xf32>
    %236 = arith.mulf %234, %235 : vector<8x8xf32>
    %cst_92 = arith.constant dense<0xFF800000> : vector<8xf32>
    %237 = vector.multi_reduction <maximumf>, %236, %cst_92 [1] : vector<8x8xf32> to vector<8xf32>
    %238 = vector.shape_cast %237 : vector<8xf32> to vector<8x1xf32>
    %239 = vector.broadcast %238 : vector<8x1xf32> to vector<8x8xf32>
    %240 = arith.subf %236, %239 : vector<8x8xf32>
    %241 = math.exp %240 : vector<8x8xf32>
    %cst_93 = arith.constant dense<0.000000e+00> : vector<8xf32>
    %242 = vector.multi_reduction <add>, %241, %cst_93 [1] : vector<8x8xf32> to vector<8xf32>
    %243 = vector.shape_cast %242 : vector<8xf32> to vector<8x1xf32>
    %244 = tpu.reciprocal %243 {approx = true} : vector<8x1xf32> -> vector<8x1xf32>
    %245 = vector.broadcast %244 : vector<8x1xf32> to vector<8x8xf32>
    %246 = arith.mulf %241, %245 : vector<8x8xf32>
    %247 = arith.truncf %246 : vector<8x8xf32> to vector<8x8xbf16>
    %248 = vector.extract_strided_slice %166 {offsets = [0, 24], sizes = [8, 8], strides = [1, 1]} : vector<8x32xbf16> to vector<8x8xbf16>
    %cst_94 = arith.constant dense<0.000000e+00> : vector<8x8xf32>
    %249 = tpu.matmul %247, %248, %cst_94 {dimension_numbers = #tpu.dot_dimension_numbers<[1], [0], [0], [1], [0, 0, 1, 1], [], []>} : vector<8x8xbf16>, vector<8x8xbf16>, vector<8x8xf32> -> vector<8x8xf32>
    %250 = arith.truncf %249 : vector<8x8xf32> to vector<8x8xbf16>
    %251 = vector.extract_strided_slice %163 {offsets = [24, 0], sizes = [8, 32], strides = [1, 1]} : vector<32x32xbf16> to vector<8x32xbf16>
    %cst_95 = arith.constant dense<0.000000e+00> : vector<8x32xf32>
    %252 = tpu.matmul %250, %251, %cst_95 {dimension_numbers = #tpu.dot_dimension_numbers<[1], [0], [0], [1], [0, 0, 1, 1], [], []>} : vector<8x8xbf16>, vector<8x32xbf16>, vector<8x32xf32> -> vector<8x32xf32>
    %253 = arith.addf %231, %252 : vector<8x32xf32>
    %c0_96 = arith.constant 0 : index
    %c0_97 = arith.constant 0 : index
    %c0_98 = arith.constant 0 : index
    %254 = vector.load %arg13[%c0_96, %c0_97, %c0_98] : memref<2x1x32xf32, #tpu.memory_space<vmem>>, vector<1x1x32xf32>
    %255 = vector.shape_cast %254 : vector<1x1x32xf32> to vector<1x32xf32>
    %256 = vector.broadcast %255 : vector<1x32xf32> to vector<8x32xf32>
    %257 = arith.addf %253, %256 : vector<8x32xf32>
    %258 = arith.addf %144, %257 : vector<8x32xf32>
    %c0_99 = arith.constant 0 : index
    %c0_100 = arith.constant 0 : index
    %c0_101 = arith.constant 0 : index
    %259 = vector.load %arg20[%c0_99, %c0_100, %c0_101] : memref<2x1x32xf32, #tpu.memory_space<vmem>>, vector<1x1x32xf32>
    %260 = vector.shape_cast %259 : vector<1x1x32xf32> to vector<1x32xf32>
    %c0_102 = arith.constant 0 : index
    %c0_103 = arith.constant 0 : index
    %c0_104 = arith.constant 0 : index
    %261 = vector.load %arg21[%c0_102, %c0_103, %c0_104] : memref<2x1x32xf32, #tpu.memory_space<vmem>>, vector<1x1x32xf32>
    %262 = vector.shape_cast %261 : vector<1x1x32xf32> to vector<1x32xf32>
    %cst_105 = arith.constant dense<0.000000e+00> : vector<8xf32>
    %263 = vector.multi_reduction <add>, %258, %cst_105 [1] : vector<8x32xf32> to vector<8xf32>
    %264 = vector.shape_cast %263 : vector<8xf32> to vector<8x1xf32>
    %cst_106 = arith.constant 3.200000e+01 : f32
    %265 = vector.broadcast %cst_106 : f32 to vector<8x1xf32>
    %266 = arith.divf %264, %265 : vector<8x1xf32>
    %267 = vector.broadcast %266 : vector<8x1xf32> to vector<8x32xf32>
    %268 = arith.subf %258, %267 : vector<8x32xf32>
    %269 = arith.mulf %268, %268 : vector<8x32xf32>
    %cst_107 = arith.constant dense<0.000000e+00> : vector<8xf32>
    %270 = vector.multi_reduction <add>, %269, %cst_107 [1] : vector<8x32xf32> to vector<8xf32>
    %271 = vector.shape_cast %270 : vector<8xf32> to vector<8x1xf32>
    %cst_108 = arith.constant 3.200000e+01 : f32
    %272 = vector.broadcast %cst_108 : f32 to vector<8x1xf32>
    %273 = arith.divf %271, %272 : vector<8x1xf32>
    %274 = vector.broadcast %266 : vector<8x1xf32> to vector<8x32xf32>
    %275 = arith.subf %258, %274 : vector<8x32xf32>
    %cst_109 = arith.constant 9.99999974E-6 : f32
    %276 = vector.broadcast %cst_109 : f32 to vector<8x1xf32>
    %277 = arith.addf %273, %276 : vector<8x1xf32>
    %278 = math.rsqrt %277 : vector<8x1xf32>
    %279 = vector.broadcast %278 : vector<8x1xf32> to vector<8x32xf32>
    %280 = arith.mulf %275, %279 : vector<8x32xf32>
    %281 = vector.broadcast %260 : vector<1x32xf32> to vector<8x32xf32>
    %282 = arith.mulf %280, %281 : vector<8x32xf32>
    %283 = vector.broadcast %262 : vector<1x32xf32> to vector<8x32xf32>
    %284 = arith.addf %282, %283 : vector<8x32xf32>
    %285 = arith.truncf %284 : vector<8x32xf32> to vector<8x32xbf16>
    %c0_110 = arith.constant 0 : index
    %c0_111 = arith.constant 0 : index
    %c0_112 = arith.constant 0 : index
    %286 = vector.load %arg14[%c0_110, %c0_111, %c0_112] : memref<2x32x2048xbf16, #tpu.memory_space<vmem>>, vector<1x32x2048xbf16>
    %287 = vector.shape_cast %286 : vector<1x32x2048xbf16> to vector<32x2048xbf16>
    %cst_113 = arith.constant dense<0.000000e+00> : vector<8x2048xf32>
    %288 = tpu.matmul %285, %287, %cst_113 {dimension_numbers = #tpu.dot_dimension_numbers<[1], [0], [0], [1], [0, 0, 1, 1], [], []>} : vector<8x32xbf16>, vector<32x2048xbf16>, vector<8x2048xf32> -> vector<8x2048xf32>
    %c0_114 = arith.constant 0 : index
    %c0_115 = arith.constant 0 : index
    %c0_116 = arith.constant 0 : index
    %289 = vector.load %arg15[%c0_114, %c0_115, %c0_116] : memref<2x1x2048xf32, #tpu.memory_space<vmem>>, vector<1x1x2048xf32>
    %290 = vector.shape_cast %289 : vector<1x1x2048xf32> to vector<1x2048xf32>
    %291 = vector.broadcast %290 : vector<1x2048xf32> to vector<8x2048xf32>
    %292 = arith.addf %288, %291 : vector<8x2048xf32>
    %cst_117 = arith.constant 0.000000e+00 : f32
    %293 = vector.broadcast %cst_117 : f32 to vector<8x2048xf32>
    %294 = arith.maximumf %292, %293 : vector<8x2048xf32>
    %295 = arith.truncf %294 : vector<8x2048xf32> to vector<8x2048xbf16>
    %c0_118 = arith.constant 0 : index
    %c0_119 = arith.constant 0 : index
    %c0_120 = arith.constant 0 : index
    %296 = vector.load %arg16[%c0_118, %c0_119, %c0_120] : memref<2x32x2048xbf16, #tpu.memory_space<vmem>>, vector<1x32x2048xbf16>
    %297 = vector.shape_cast %296 : vector<1x32x2048xbf16> to vector<32x2048xbf16>
    %cst_121 = arith.constant dense<0.000000e+00> : vector<8x32xf32>
    %298 = tpu.matmul %295, %297, %cst_121 {dimension_numbers = #tpu.dot_dimension_numbers<[1], [1], [0], [0], [0, 0, 1, 0], [], []>} : vector<8x2048xbf16>, vector<32x2048xbf16>, vector<8x32xf32> -> vector<8x32xf32>
    %c0_122 = arith.constant 0 : index
    %c0_123 = arith.constant 0 : index
    %c0_124 = arith.constant 0 : index
    %299 = vector.load %arg17[%c0_122, %c0_123, %c0_124] : memref<2x1x32xf32, #tpu.memory_space<vmem>>, vector<1x1x32xf32>
    %300 = vector.shape_cast %299 : vector<1x1x32xf32> to vector<1x32xf32>
    %301 = vector.broadcast %300 : vector<1x32xf32> to vector<8x32xf32>
    %302 = arith.addf %298, %301 : vector<8x32xf32>
    %303 = arith.addf %284, %302 : vector<8x32xf32>
    %c0_125 = arith.constant 0 : index
    %c0_126 = arith.constant 0 : index
    %c0_127 = arith.constant 0 : index
    %304 = vector.load %arg22[%c0_125, %c0_126, %c0_127] : memref<2x1x32xf32, #tpu.memory_space<vmem>>, vector<1x1x32xf32>
    %305 = vector.shape_cast %304 : vector<1x1x32xf32> to vector<1x32xf32>
    %c0_128 = arith.constant 0 : index
    %c0_129 = arith.constant 0 : index
    %c0_130 = arith.constant 0 : index
    %306 = vector.load %arg23[%c0_128, %c0_129, %c0_130] : memref<2x1x32xf32, #tpu.memory_space<vmem>>, vector<1x1x32xf32>
    %307 = vector.shape_cast %306 : vector<1x1x32xf32> to vector<1x32xf32>
    %cst_131 = arith.constant dense<0.000000e+00> : vector<8xf32>
    %308 = vector.multi_reduction <add>, %303, %cst_131 [1] : vector<8x32xf32> to vector<8xf32>
    %309 = vector.shape_cast %308 : vector<8xf32> to vector<8x1xf32>
    %cst_132 = arith.constant 3.200000e+01 : f32
    %310 = vector.broadcast %cst_132 : f32 to vector<8x1xf32>
    %311 = arith.divf %309, %310 : vector<8x1xf32>
    %312 = vector.broadcast %311 : vector<8x1xf32> to vector<8x32xf32>
    %313 = arith.subf %303, %312 : vector<8x32xf32>
    %314 = arith.mulf %313, %313 : vector<8x32xf32>
    %cst_133 = arith.constant dense<0.000000e+00> : vector<8xf32>
    %315 = vector.multi_reduction <add>, %314, %cst_133 [1] : vector<8x32xf32> to vector<8xf32>
    %316 = vector.shape_cast %315 : vector<8xf32> to vector<8x1xf32>
    %cst_134 = arith.constant 3.200000e+01 : f32
    %317 = vector.broadcast %cst_134 : f32 to vector<8x1xf32>
    %318 = arith.divf %316, %317 : vector<8x1xf32>
    %319 = vector.broadcast %311 : vector<8x1xf32> to vector<8x32xf32>
    %320 = arith.subf %303, %319 : vector<8x32xf32>
    %cst_135 = arith.constant 9.99999974E-6 : f32
    %321 = vector.broadcast %cst_135 : f32 to vector<8x1xf32>
    %322 = arith.addf %318, %321 : vector<8x1xf32>
    %323 = math.rsqrt %322 : vector<8x1xf32>
    %324 = vector.broadcast %323 : vector<8x1xf32> to vector<8x32xf32>
    %325 = arith.mulf %320, %324 : vector<8x32xf32>
    %326 = vector.broadcast %305 : vector<1x32xf32> to vector<8x32xf32>
    %327 = arith.mulf %325, %326 : vector<8x32xf32>
    %328 = vector.broadcast %307 : vector<1x32xf32> to vector<8x32xf32>
    %329 = arith.addf %327, %328 : vector<8x32xf32>
    %330 = arith.truncf %329 : vector<8x32xf32> to vector<8x32xbf16>
    %c1 = arith.constant 1 : index
    %c0_136 = arith.constant 0 : index
    %c0_137 = arith.constant 0 : index
    %331 = vector.load %arg4[%c1, %c0_136, %c0_137] : memref<2x32x96xbf16, #tpu.memory_space<vmem>>, vector<1x32x96xbf16>
    %332 = vector.shape_cast %331 : vector<1x32x96xbf16> to vector<32x96xbf16>
    %cst_138 = arith.constant dense<0.000000e+00> : vector<8x96xf32>
    %333 = tpu.matmul %330, %332, %cst_138 {dimension_numbers = #tpu.dot_dimension_numbers<[1], [0], [0], [1], [0, 0, 1, 1], [], []>} : vector<8x32xbf16>, vector<32x96xbf16>, vector<8x96xf32> -> vector<8x96xf32>
    %c1_139 = arith.constant 1 : index
    %c0_140 = arith.constant 0 : index
    %c0_141 = arith.constant 0 : index
    %334 = vector.load %arg5[%c1_139, %c0_140, %c0_141] : memref<2x1x96xf32, #tpu.memory_space<vmem>>, vector<1x1x96xf32>
    %335 = vector.shape_cast %334 : vector<1x1x96xf32> to vector<1x96xf32>
    %336 = vector.broadcast %335 : vector<1x96xf32> to vector<8x96xf32>
    %337 = arith.addf %333, %336 : vector<8x96xf32>
    %338 = vector.extract_strided_slice %337 {offsets = [0, 0], sizes = [8, 32], strides = [1, 1]} : vector<8x96xf32> to vector<8x32xf32>
    %339 = vector.extract_strided_slice %337 {offsets = [0, 32], sizes = [8, 32], strides = [1, 1]} : vector<8x96xf32> to vector<8x32xf32>
    %340 = vector.extract_strided_slice %337 {offsets = [0, 64], sizes = [8, 32], strides = [1, 1]} : vector<8x96xf32> to vector<8x32xf32>
    %c1_142 = arith.constant 1 : index
    %c0_143 = arith.constant 0 : index
    %c0_144 = arith.constant 0 : index
    %341 = vector.load %arg6[%c1_142, %c0_143, %c0_144] : memref<2x32x32xbf16, #tpu.memory_space<vmem>>, vector<1x32x32xbf16>
    %342 = vector.shape_cast %341 : vector<1x32x32xbf16> to vector<32x32xbf16>
    %343 = arith.truncf %338 : vector<8x32xf32> to vector<8x32xbf16>
    %344 = arith.truncf %339 : vector<8x32xf32> to vector<8x32xbf16>
    %345 = arith.truncf %340 : vector<8x32xf32> to vector<8x32xbf16>
    %346 = vector.extract_strided_slice %343 {offsets = [0, 0], sizes = [8, 8], strides = [1, 1]} : vector<8x32xbf16> to vector<8x8xbf16>
    %347 = vector.extract_strided_slice %344 {offsets = [0, 0], sizes = [8, 8], strides = [1, 1]} : vector<8x32xbf16> to vector<8x8xbf16>
    %cst_145 = arith.constant dense<0.000000e+00> : vector<8x8xf32>
    %348 = tpu.matmul %346, %347, %cst_145 {dimension_numbers = #tpu.dot_dimension_numbers<[1], [1], [0], [0], [0, 0, 1, 0], [], []>} : vector<8x8xbf16>, vector<8x8xbf16>, vector<8x8xf32> -> vector<8x8xf32>
    %cst_146 = arith.constant 0.353553385 : f32
    %349 = vector.broadcast %cst_146 : f32 to vector<8x8xf32>
    %350 = arith.mulf %348, %349 : vector<8x8xf32>
    %351 = arith.addf %350, %5 : vector<8x8xf32>
    %cst_147 = arith.constant dense<0xFF800000> : vector<8xf32>
    %352 = vector.multi_reduction <maximumf>, %351, %cst_147 [1] : vector<8x8xf32> to vector<8xf32>
    %353 = vector.shape_cast %352 : vector<8xf32> to vector<8x1xf32>
    %354 = vector.broadcast %353 : vector<8x1xf32> to vector<8x8xf32>
    %355 = arith.subf %351, %354 : vector<8x8xf32>
    %356 = math.exp %355 : vector<8x8xf32>
    %cst_148 = arith.constant dense<0.000000e+00> : vector<8xf32>
    %357 = vector.multi_reduction <add>, %356, %cst_148 [1] : vector<8x8xf32> to vector<8xf32>
    %358 = vector.shape_cast %357 : vector<8xf32> to vector<8x1xf32>
    %359 = tpu.reciprocal %358 {approx = true} : vector<8x1xf32> -> vector<8x1xf32>
    %360 = vector.broadcast %359 : vector<8x1xf32> to vector<8x8xf32>
    %361 = arith.mulf %356, %360 : vector<8x8xf32>
    %362 = arith.truncf %361 : vector<8x8xf32> to vector<8x8xbf16>
    %363 = vector.extract_strided_slice %345 {offsets = [0, 0], sizes = [8, 8], strides = [1, 1]} : vector<8x32xbf16> to vector<8x8xbf16>
    %cst_149 = arith.constant dense<0.000000e+00> : vector<8x8xf32>
    %364 = tpu.matmul %362, %363, %cst_149 {dimension_numbers = #tpu.dot_dimension_numbers<[1], [0], [0], [1], [0, 0, 1, 1], [], []>} : vector<8x8xbf16>, vector<8x8xbf16>, vector<8x8xf32> -> vector<8x8xf32>
    %365 = arith.truncf %364 : vector<8x8xf32> to vector<8x8xbf16>
    %366 = vector.extract_strided_slice %342 {offsets = [0, 0], sizes = [8, 32], strides = [1, 1]} : vector<32x32xbf16> to vector<8x32xbf16>
    %cst_150 = arith.constant dense<0.000000e+00> : vector<8x32xf32>
    %367 = tpu.matmul %365, %366, %cst_150 {dimension_numbers = #tpu.dot_dimension_numbers<[1], [0], [0], [1], [0, 0, 1, 1], [], []>} : vector<8x8xbf16>, vector<8x32xbf16>, vector<8x32xf32> -> vector<8x32xf32>
    %368 = vector.extract_strided_slice %343 {offsets = [0, 8], sizes = [8, 8], strides = [1, 1]} : vector<8x32xbf16> to vector<8x8xbf16>
    %369 = vector.extract_strided_slice %344 {offsets = [0, 8], sizes = [8, 8], strides = [1, 1]} : vector<8x32xbf16> to vector<8x8xbf16>
    %cst_151 = arith.constant dense<0.000000e+00> : vector<8x8xf32>
    %370 = tpu.matmul %368, %369, %cst_151 {dimension_numbers = #tpu.dot_dimension_numbers<[1], [1], [0], [0], [0, 0, 1, 0], [], []>} : vector<8x8xbf16>, vector<8x8xbf16>, vector<8x8xf32> -> vector<8x8xf32>
    %cst_152 = arith.constant 0.353553385 : f32
    %371 = vector.broadcast %cst_152 : f32 to vector<8x8xf32>
    %372 = arith.mulf %370, %371 : vector<8x8xf32>
    %373 = arith.addf %372, %5 : vector<8x8xf32>
    %cst_153 = arith.constant dense<0xFF800000> : vector<8xf32>
    %374 = vector.multi_reduction <maximumf>, %373, %cst_153 [1] : vector<8x8xf32> to vector<8xf32>
    %375 = vector.shape_cast %374 : vector<8xf32> to vector<8x1xf32>
    %376 = vector.broadcast %375 : vector<8x1xf32> to vector<8x8xf32>
    %377 = arith.subf %373, %376 : vector<8x8xf32>
    %378 = math.exp %377 : vector<8x8xf32>
    %cst_154 = arith.constant dense<0.000000e+00> : vector<8xf32>
    %379 = vector.multi_reduction <add>, %378, %cst_154 [1] : vector<8x8xf32> to vector<8xf32>
    %380 = vector.shape_cast %379 : vector<8xf32> to vector<8x1xf32>
    %381 = tpu.reciprocal %380 {approx = true} : vector<8x1xf32> -> vector<8x1xf32>
    %382 = vector.broadcast %381 : vector<8x1xf32> to vector<8x8xf32>
    %383 = arith.mulf %378, %382 : vector<8x8xf32>
    %384 = arith.truncf %383 : vector<8x8xf32> to vector<8x8xbf16>
    %385 = vector.extract_strided_slice %345 {offsets = [0, 8], sizes = [8, 8], strides = [1, 1]} : vector<8x32xbf16> to vector<8x8xbf16>
    %cst_155 = arith.constant dense<0.000000e+00> : vector<8x8xf32>
    %386 = tpu.matmul %384, %385, %cst_155 {dimension_numbers = #tpu.dot_dimension_numbers<[1], [0], [0], [1], [0, 0, 1, 1], [], []>} : vector<8x8xbf16>, vector<8x8xbf16>, vector<8x8xf32> -> vector<8x8xf32>
    %387 = arith.truncf %386 : vector<8x8xf32> to vector<8x8xbf16>
    %388 = vector.extract_strided_slice %342 {offsets = [8, 0], sizes = [8, 32], strides = [1, 1]} : vector<32x32xbf16> to vector<8x32xbf16>
    %cst_156 = arith.constant dense<0.000000e+00> : vector<8x32xf32>
    %389 = tpu.matmul %387, %388, %cst_156 {dimension_numbers = #tpu.dot_dimension_numbers<[1], [0], [0], [1], [0, 0, 1, 1], [], []>} : vector<8x8xbf16>, vector<8x32xbf16>, vector<8x32xf32> -> vector<8x32xf32>
    %390 = arith.addf %367, %389 : vector<8x32xf32>
    %391 = vector.extract_strided_slice %343 {offsets = [0, 16], sizes = [8, 8], strides = [1, 1]} : vector<8x32xbf16> to vector<8x8xbf16>
    %392 = vector.extract_strided_slice %344 {offsets = [0, 16], sizes = [8, 8], strides = [1, 1]} : vector<8x32xbf16> to vector<8x8xbf16>
    %cst_157 = arith.constant dense<0.000000e+00> : vector<8x8xf32>
    %393 = tpu.matmul %391, %392, %cst_157 {dimension_numbers = #tpu.dot_dimension_numbers<[1], [1], [0], [0], [0, 0, 1, 0], [], []>} : vector<8x8xbf16>, vector<8x8xbf16>, vector<8x8xf32> -> vector<8x8xf32>
    %cst_158 = arith.constant 0.353553385 : f32
    %394 = vector.broadcast %cst_158 : f32 to vector<8x8xf32>
    %395 = arith.mulf %393, %394 : vector<8x8xf32>
    %396 = arith.addf %395, %5 : vector<8x8xf32>
    %cst_159 = arith.constant dense<0xFF800000> : vector<8xf32>
    %397 = vector.multi_reduction <maximumf>, %396, %cst_159 [1] : vector<8x8xf32> to vector<8xf32>
    %398 = vector.shape_cast %397 : vector<8xf32> to vector<8x1xf32>
    %399 = vector.broadcast %398 : vector<8x1xf32> to vector<8x8xf32>
    %400 = arith.subf %396, %399 : vector<8x8xf32>
    %401 = math.exp %400 : vector<8x8xf32>
    %cst_160 = arith.constant dense<0.000000e+00> : vector<8xf32>
    %402 = vector.multi_reduction <add>, %401, %cst_160 [1] : vector<8x8xf32> to vector<8xf32>
    %403 = vector.shape_cast %402 : vector<8xf32> to vector<8x1xf32>
    %404 = tpu.reciprocal %403 {approx = true} : vector<8x1xf32> -> vector<8x1xf32>
    %405 = vector.broadcast %404 : vector<8x1xf32> to vector<8x8xf32>
    %406 = arith.mulf %401, %405 : vector<8x8xf32>
    %407 = arith.truncf %406 : vector<8x8xf32> to vector<8x8xbf16>
    %408 = vector.extract_strided_slice %345 {offsets = [0, 16], sizes = [8, 8], strides = [1, 1]} : vector<8x32xbf16> to vector<8x8xbf16>
    %cst_161 = arith.constant dense<0.000000e+00> : vector<8x8xf32>
    %409 = tpu.matmul %407, %408, %cst_161 {dimension_numbers = #tpu.dot_dimension_numbers<[1], [0], [0], [1], [0, 0, 1, 1], [], []>} : vector<8x8xbf16>, vector<8x8xbf16>, vector<8x8xf32> -> vector<8x8xf32>
    %410 = arith.truncf %409 : vector<8x8xf32> to vector<8x8xbf16>
    %411 = vector.extract_strided_slice %342 {offsets = [16, 0], sizes = [8, 32], strides = [1, 1]} : vector<32x32xbf16> to vector<8x32xbf16>
    %cst_162 = arith.constant dense<0.000000e+00> : vector<8x32xf32>
    %412 = tpu.matmul %410, %411, %cst_162 {dimension_numbers = #tpu.dot_dimension_numbers<[1], [0], [0], [1], [0, 0, 1, 1], [], []>} : vector<8x8xbf16>, vector<8x32xbf16>, vector<8x32xf32> -> vector<8x32xf32>
    %413 = arith.addf %390, %412 : vector<8x32xf32>
    %414 = vector.extract_strided_slice %343 {offsets = [0, 24], sizes = [8, 8], strides = [1, 1]} : vector<8x32xbf16> to vector<8x8xbf16>
    %415 = vector.extract_strided_slice %344 {offsets = [0, 24], sizes = [8, 8], strides = [1, 1]} : vector<8x32xbf16> to vector<8x8xbf16>
    %cst_163 = arith.constant dense<0.000000e+00> : vector<8x8xf32>
    %416 = tpu.matmul %414, %415, %cst_163 {dimension_numbers = #tpu.dot_dimension_numbers<[1], [1], [0], [0], [0, 0, 1, 0], [], []>} : vector<8x8xbf16>, vector<8x8xbf16>, vector<8x8xf32> -> vector<8x8xf32>
    %cst_164 = arith.constant 0.353553385 : f32
    %417 = vector.broadcast %cst_164 : f32 to vector<8x8xf32>
    %418 = arith.mulf %416, %417 : vector<8x8xf32>
    %419 = arith.addf %418, %5 : vector<8x8xf32>
    %cst_165 = arith.constant dense<0xFF800000> : vector<8xf32>
    %420 = vector.multi_reduction <maximumf>, %419, %cst_165 [1] : vector<8x8xf32> to vector<8xf32>
    %421 = vector.shape_cast %420 : vector<8xf32> to vector<8x1xf32>
    %422 = vector.broadcast %421 : vector<8x1xf32> to vector<8x8xf32>
    %423 = arith.subf %419, %422 : vector<8x8xf32>
    %424 = math.exp %423 : vector<8x8xf32>
    %cst_166 = arith.constant dense<0.000000e+00> : vector<8xf32>
    %425 = vector.multi_reduction <add>, %424, %cst_166 [1] : vector<8x8xf32> to vector<8xf32>
    %426 = vector.shape_cast %425 : vector<8xf32> to vector<8x1xf32>
    %427 = tpu.reciprocal %426 {approx = true} : vector<8x1xf32> -> vector<8x1xf32>
    %428 = vector.broadcast %427 : vector<8x1xf32> to vector<8x8xf32>
    %429 = arith.mulf %424, %428 : vector<8x8xf32>
    %430 = arith.truncf %429 : vector<8x8xf32> to vector<8x8xbf16>
    %431 = vector.extract_strided_slice %345 {offsets = [0, 24], sizes = [8, 8], strides = [1, 1]} : vector<8x32xbf16> to vector<8x8xbf16>
    %cst_167 = arith.constant dense<0.000000e+00> : vector<8x8xf32>
    %432 = tpu.matmul %430, %431, %cst_167 {dimension_numbers = #tpu.dot_dimension_numbers<[1], [0], [0], [1], [0, 0, 1, 1], [], []>} : vector<8x8xbf16>, vector<8x8xbf16>, vector<8x8xf32> -> vector<8x8xf32>
    %433 = arith.truncf %432 : vector<8x8xf32> to vector<8x8xbf16>
    %434 = vector.extract_strided_slice %342 {offsets = [24, 0], sizes = [8, 32], strides = [1, 1]} : vector<32x32xbf16> to vector<8x32xbf16>
    %cst_168 = arith.constant dense<0.000000e+00> : vector<8x32xf32>
    %435 = tpu.matmul %433, %434, %cst_168 {dimension_numbers = #tpu.dot_dimension_numbers<[1], [0], [0], [1], [0, 0, 1, 1], [], []>} : vector<8x8xbf16>, vector<8x32xbf16>, vector<8x32xf32> -> vector<8x32xf32>
    %436 = arith.addf %413, %435 : vector<8x32xf32>
    %c1_169 = arith.constant 1 : index
    %c0_170 = arith.constant 0 : index
    %c0_171 = arith.constant 0 : index
    %437 = vector.load %arg7[%c1_169, %c0_170, %c0_171] : memref<2x1x32xf32, #tpu.memory_space<vmem>>, vector<1x1x32xf32>
    %438 = vector.shape_cast %437 : vector<1x1x32xf32> to vector<1x32xf32>
    %439 = vector.broadcast %438 : vector<1x32xf32> to vector<8x32xf32>
    %440 = arith.addf %436, %439 : vector<8x32xf32>
    %441 = arith.addf %329, %440 : vector<8x32xf32>
    %c1_172 = arith.constant 1 : index
    %c0_173 = arith.constant 0 : index
    %c0_174 = arith.constant 0 : index
    %442 = vector.load %arg18[%c1_172, %c0_173, %c0_174] : memref<2x1x32xf32, #tpu.memory_space<vmem>>, vector<1x1x32xf32>
    %443 = vector.shape_cast %442 : vector<1x1x32xf32> to vector<1x32xf32>
    %c1_175 = arith.constant 1 : index
    %c0_176 = arith.constant 0 : index
    %c0_177 = arith.constant 0 : index
    %444 = vector.load %arg19[%c1_175, %c0_176, %c0_177] : memref<2x1x32xf32, #tpu.memory_space<vmem>>, vector<1x1x32xf32>
    %445 = vector.shape_cast %444 : vector<1x1x32xf32> to vector<1x32xf32>
    %cst_178 = arith.constant dense<0.000000e+00> : vector<8xf32>
    %446 = vector.multi_reduction <add>, %441, %cst_178 [1] : vector<8x32xf32> to vector<8xf32>
    %447 = vector.shape_cast %446 : vector<8xf32> to vector<8x1xf32>
    %cst_179 = arith.constant 3.200000e+01 : f32
    %448 = vector.broadcast %cst_179 : f32 to vector<8x1xf32>
    %449 = arith.divf %447, %448 : vector<8x1xf32>
    %450 = vector.broadcast %449 : vector<8x1xf32> to vector<8x32xf32>
    %451 = arith.subf %441, %450 : vector<8x32xf32>
    %452 = arith.mulf %451, %451 : vector<8x32xf32>
    %cst_180 = arith.constant dense<0.000000e+00> : vector<8xf32>
    %453 = vector.multi_reduction <add>, %452, %cst_180 [1] : vector<8x32xf32> to vector<8xf32>
    %454 = vector.shape_cast %453 : vector<8xf32> to vector<8x1xf32>
    %cst_181 = arith.constant 3.200000e+01 : f32
    %455 = vector.broadcast %cst_181 : f32 to vector<8x1xf32>
    %456 = arith.divf %454, %455 : vector<8x1xf32>
    %457 = vector.broadcast %449 : vector<8x1xf32> to vector<8x32xf32>
    %458 = arith.subf %441, %457 : vector<8x32xf32>
    %cst_182 = arith.constant 9.99999974E-6 : f32
    %459 = vector.broadcast %cst_182 : f32 to vector<8x1xf32>
    %460 = arith.addf %456, %459 : vector<8x1xf32>
    %461 = math.rsqrt %460 : vector<8x1xf32>
    %462 = vector.broadcast %461 : vector<8x1xf32> to vector<8x32xf32>
    %463 = arith.mulf %458, %462 : vector<8x32xf32>
    %464 = vector.broadcast %443 : vector<1x32xf32> to vector<8x32xf32>
    %465 = arith.mulf %463, %464 : vector<8x32xf32>
    %466 = vector.broadcast %445 : vector<1x32xf32> to vector<8x32xf32>
    %467 = arith.addf %465, %466 : vector<8x32xf32>
    %468 = arith.truncf %467 : vector<8x32xf32> to vector<8x32xbf16>
    %c1_183 = arith.constant 1 : index
    %c0_184 = arith.constant 0 : index
    %c0_185 = arith.constant 0 : index
    %469 = vector.load %arg8[%c1_183, %c0_184, %c0_185] : memref<2x32x32xbf16, #tpu.memory_space<vmem>>, vector<1x32x32xbf16>
    %470 = vector.shape_cast %469 : vector<1x32x32xbf16> to vector<32x32xbf16>
    %cst_186 = arith.constant dense<0.000000e+00> : vector<8x32xf32>
    %471 = tpu.matmul %468, %470, %cst_186 {dimension_numbers = #tpu.dot_dimension_numbers<[1], [0], [0], [1], [0, 0, 1, 1], [], []>} : vector<8x32xbf16>, vector<32x32xbf16>, vector<8x32xf32> -> vector<8x32xf32>
    %c1_187 = arith.constant 1 : index
    %c0_188 = arith.constant 0 : index
    %c0_189 = arith.constant 0 : index
    %472 = vector.load %arg9[%c1_187, %c0_188, %c0_189] : memref<2x1x32xf32, #tpu.memory_space<vmem>>, vector<1x1x32xf32>
    %473 = vector.shape_cast %472 : vector<1x1x32xf32> to vector<1x32xf32>
    %474 = vector.broadcast %473 : vector<1x32xf32> to vector<8x32xf32>
    %475 = arith.addf %471, %474 : vector<8x32xf32>
    %c1_190 = arith.constant 1 : index
    %c0_191 = arith.constant 0 : index
    %c0_192 = arith.constant 0 : index
    %476 = vector.load %arg10[%c1_190, %c0_191, %c0_192] : memref<2x32x64xbf16, #tpu.memory_space<vmem>>, vector<1x32x64xbf16>
    %477 = vector.shape_cast %476 : vector<1x32x64xbf16> to vector<32x64xbf16>
    %cst_193 = arith.constant dense<0.000000e+00> : vector<8x64xf32>
    %478 = tpu.matmul %6, %477, %cst_193 {dimension_numbers = #tpu.dot_dimension_numbers<[1], [0], [0], [1], [0, 0, 1, 1], [], []>} : vector<8x32xbf16>, vector<32x64xbf16>, vector<8x64xf32> -> vector<8x64xf32>
    %c1_194 = arith.constant 1 : index
    %c0_195 = arith.constant 0 : index
    %c0_196 = arith.constant 0 : index
    %479 = vector.load %arg11[%c1_194, %c0_195, %c0_196] : memref<2x1x64xf32, #tpu.memory_space<vmem>>, vector<1x1x64xf32>
    %480 = vector.shape_cast %479 : vector<1x1x64xf32> to vector<1x64xf32>
    %481 = vector.broadcast %480 : vector<1x64xf32> to vector<8x64xf32>
    %482 = arith.addf %478, %481 : vector<8x64xf32>
    %483 = vector.extract_strided_slice %482 {offsets = [0, 0], sizes = [8, 32], strides = [1, 1]} : vector<8x64xf32> to vector<8x32xf32>
    %484 = vector.extract_strided_slice %482 {offsets = [0, 32], sizes = [8, 32], strides = [1, 1]} : vector<8x64xf32> to vector<8x32xf32>
    %c1_197 = arith.constant 1 : index
    %c0_198 = arith.constant 0 : index
    %c0_199 = arith.constant 0 : index
    %485 = vector.load %arg12[%c1_197, %c0_198, %c0_199] : memref<2x32x32xbf16, #tpu.memory_space<vmem>>, vector<1x32x32xbf16>
    %486 = vector.shape_cast %485 : vector<1x32x32xbf16> to vector<32x32xbf16>
    %487 = arith.truncf %475 : vector<8x32xf32> to vector<8x32xbf16>
    %488 = arith.truncf %483 : vector<8x32xf32> to vector<8x32xbf16>
    %489 = arith.truncf %484 : vector<8x32xf32> to vector<8x32xbf16>
    %490 = vector.extract_strided_slice %487 {offsets = [0, 0], sizes = [8, 8], strides = [1, 1]} : vector<8x32xbf16> to vector<8x8xbf16>
    %491 = vector.extract_strided_slice %488 {offsets = [0, 0], sizes = [8, 8], strides = [1, 1]} : vector<8x32xbf16> to vector<8x8xbf16>
    %cst_200 = arith.constant dense<0.000000e+00> : vector<8x8xf32>
    %492 = tpu.matmul %490, %491, %cst_200 {dimension_numbers = #tpu.dot_dimension_numbers<[1], [1], [0], [0], [0, 0, 1, 0], [], []>} : vector<8x8xbf16>, vector<8x8xbf16>, vector<8x8xf32> -> vector<8x8xf32>
    %cst_201 = arith.constant 0.353553385 : f32
    %493 = vector.broadcast %cst_201 : f32 to vector<8x8xf32>
    %494 = arith.mulf %492, %493 : vector<8x8xf32>
    %cst_202 = arith.constant dense<0xFF800000> : vector<8xf32>
    %495 = vector.multi_reduction <maximumf>, %494, %cst_202 [1] : vector<8x8xf32> to vector<8xf32>
    %496 = vector.shape_cast %495 : vector<8xf32> to vector<8x1xf32>
    %497 = vector.broadcast %496 : vector<8x1xf32> to vector<8x8xf32>
    %498 = arith.subf %494, %497 : vector<8x8xf32>
    %499 = math.exp %498 : vector<8x8xf32>
    %cst_203 = arith.constant dense<0.000000e+00> : vector<8xf32>
    %500 = vector.multi_reduction <add>, %499, %cst_203 [1] : vector<8x8xf32> to vector<8xf32>
    %501 = vector.shape_cast %500 : vector<8xf32> to vector<8x1xf32>
    %502 = tpu.reciprocal %501 {approx = true} : vector<8x1xf32> -> vector<8x1xf32>
    %503 = vector.broadcast %502 : vector<8x1xf32> to vector<8x8xf32>
    %504 = arith.mulf %499, %503 : vector<8x8xf32>
    %505 = arith.truncf %504 : vector<8x8xf32> to vector<8x8xbf16>
    %506 = vector.extract_strided_slice %489 {offsets = [0, 0], sizes = [8, 8], strides = [1, 1]} : vector<8x32xbf16> to vector<8x8xbf16>
    %cst_204 = arith.constant dense<0.000000e+00> : vector<8x8xf32>
    %507 = tpu.matmul %505, %506, %cst_204 {dimension_numbers = #tpu.dot_dimension_numbers<[1], [0], [0], [1], [0, 0, 1, 1], [], []>} : vector<8x8xbf16>, vector<8x8xbf16>, vector<8x8xf32> -> vector<8x8xf32>
    %508 = arith.truncf %507 : vector<8x8xf32> to vector<8x8xbf16>
    %509 = vector.extract_strided_slice %486 {offsets = [0, 0], sizes = [8, 32], strides = [1, 1]} : vector<32x32xbf16> to vector<8x32xbf16>
    %cst_205 = arith.constant dense<0.000000e+00> : vector<8x32xf32>
    %510 = tpu.matmul %508, %509, %cst_205 {dimension_numbers = #tpu.dot_dimension_numbers<[1], [0], [0], [1], [0, 0, 1, 1], [], []>} : vector<8x8xbf16>, vector<8x32xbf16>, vector<8x32xf32> -> vector<8x32xf32>
    %511 = vector.extract_strided_slice %487 {offsets = [0, 8], sizes = [8, 8], strides = [1, 1]} : vector<8x32xbf16> to vector<8x8xbf16>
    %512 = vector.extract_strided_slice %488 {offsets = [0, 8], sizes = [8, 8], strides = [1, 1]} : vector<8x32xbf16> to vector<8x8xbf16>
    %cst_206 = arith.constant dense<0.000000e+00> : vector<8x8xf32>
    %513 = tpu.matmul %511, %512, %cst_206 {dimension_numbers = #tpu.dot_dimension_numbers<[1], [1], [0], [0], [0, 0, 1, 0], [], []>} : vector<8x8xbf16>, vector<8x8xbf16>, vector<8x8xf32> -> vector<8x8xf32>
    %cst_207 = arith.constant 0.353553385 : f32
    %514 = vector.broadcast %cst_207 : f32 to vector<8x8xf32>
    %515 = arith.mulf %513, %514 : vector<8x8xf32>
    %cst_208 = arith.constant dense<0xFF800000> : vector<8xf32>
    %516 = vector.multi_reduction <maximumf>, %515, %cst_208 [1] : vector<8x8xf32> to vector<8xf32>
    %517 = vector.shape_cast %516 : vector<8xf32> to vector<8x1xf32>
    %518 = vector.broadcast %517 : vector<8x1xf32> to vector<8x8xf32>
    %519 = arith.subf %515, %518 : vector<8x8xf32>
    %520 = math.exp %519 : vector<8x8xf32>
    %cst_209 = arith.constant dense<0.000000e+00> : vector<8xf32>
    %521 = vector.multi_reduction <add>, %520, %cst_209 [1] : vector<8x8xf32> to vector<8xf32>
    %522 = vector.shape_cast %521 : vector<8xf32> to vector<8x1xf32>
    %523 = tpu.reciprocal %522 {approx = true} : vector<8x1xf32> -> vector<8x1xf32>
    %524 = vector.broadcast %523 : vector<8x1xf32> to vector<8x8xf32>
    %525 = arith.mulf %520, %524 : vector<8x8xf32>
    %526 = arith.truncf %525 : vector<8x8xf32> to vector<8x8xbf16>
    %527 = vector.extract_strided_slice %489 {offsets = [0, 8], sizes = [8, 8], strides = [1, 1]} : vector<8x32xbf16> to vector<8x8xbf16>
    %cst_210 = arith.constant dense<0.000000e+00> : vector<8x8xf32>
    %528 = tpu.matmul %526, %527, %cst_210 {dimension_numbers = #tpu.dot_dimension_numbers<[1], [0], [0], [1], [0, 0, 1, 1], [], []>} : vector<8x8xbf16>, vector<8x8xbf16>, vector<8x8xf32> -> vector<8x8xf32>
    %529 = arith.truncf %528 : vector<8x8xf32> to vector<8x8xbf16>
    %530 = vector.extract_strided_slice %486 {offsets = [8, 0], sizes = [8, 32], strides = [1, 1]} : vector<32x32xbf16> to vector<8x32xbf16>
    %cst_211 = arith.constant dense<0.000000e+00> : vector<8x32xf32>
    %531 = tpu.matmul %529, %530, %cst_211 {dimension_numbers = #tpu.dot_dimension_numbers<[1], [0], [0], [1], [0, 0, 1, 1], [], []>} : vector<8x8xbf16>, vector<8x32xbf16>, vector<8x32xf32> -> vector<8x32xf32>
    %532 = arith.addf %510, %531 : vector<8x32xf32>
    %533 = vector.extract_strided_slice %487 {offsets = [0, 16], sizes = [8, 8], strides = [1, 1]} : vector<8x32xbf16> to vector<8x8xbf16>
    %534 = vector.extract_strided_slice %488 {offsets = [0, 16], sizes = [8, 8], strides = [1, 1]} : vector<8x32xbf16> to vector<8x8xbf16>
    %cst_212 = arith.constant dense<0.000000e+00> : vector<8x8xf32>
    %535 = tpu.matmul %533, %534, %cst_212 {dimension_numbers = #tpu.dot_dimension_numbers<[1], [1], [0], [0], [0, 0, 1, 0], [], []>} : vector<8x8xbf16>, vector<8x8xbf16>, vector<8x8xf32> -> vector<8x8xf32>
    %cst_213 = arith.constant 0.353553385 : f32
    %536 = vector.broadcast %cst_213 : f32 to vector<8x8xf32>
    %537 = arith.mulf %535, %536 : vector<8x8xf32>
    %cst_214 = arith.constant dense<0xFF800000> : vector<8xf32>
    %538 = vector.multi_reduction <maximumf>, %537, %cst_214 [1] : vector<8x8xf32> to vector<8xf32>
    %539 = vector.shape_cast %538 : vector<8xf32> to vector<8x1xf32>
    %540 = vector.broadcast %539 : vector<8x1xf32> to vector<8x8xf32>
    %541 = arith.subf %537, %540 : vector<8x8xf32>
    %542 = math.exp %541 : vector<8x8xf32>
    %cst_215 = arith.constant dense<0.000000e+00> : vector<8xf32>
    %543 = vector.multi_reduction <add>, %542, %cst_215 [1] : vector<8x8xf32> to vector<8xf32>
    %544 = vector.shape_cast %543 : vector<8xf32> to vector<8x1xf32>
    %545 = tpu.reciprocal %544 {approx = true} : vector<8x1xf32> -> vector<8x1xf32>
    %546 = vector.broadcast %545 : vector<8x1xf32> to vector<8x8xf32>
    %547 = arith.mulf %542, %546 : vector<8x8xf32>
    %548 = arith.truncf %547 : vector<8x8xf32> to vector<8x8xbf16>
    %549 = vector.extract_strided_slice %489 {offsets = [0, 16], sizes = [8, 8], strides = [1, 1]} : vector<8x32xbf16> to vector<8x8xbf16>
    %cst_216 = arith.constant dense<0.000000e+00> : vector<8x8xf32>
    %550 = tpu.matmul %548, %549, %cst_216 {dimension_numbers = #tpu.dot_dimension_numbers<[1], [0], [0], [1], [0, 0, 1, 1], [], []>} : vector<8x8xbf16>, vector<8x8xbf16>, vector<8x8xf32> -> vector<8x8xf32>
    %551 = arith.truncf %550 : vector<8x8xf32> to vector<8x8xbf16>
    %552 = vector.extract_strided_slice %486 {offsets = [16, 0], sizes = [8, 32], strides = [1, 1]} : vector<32x32xbf16> to vector<8x32xbf16>
    %cst_217 = arith.constant dense<0.000000e+00> : vector<8x32xf32>
    %553 = tpu.matmul %551, %552, %cst_217 {dimension_numbers = #tpu.dot_dimension_numbers<[1], [0], [0], [1], [0, 0, 1, 1], [], []>} : vector<8x8xbf16>, vector<8x32xbf16>, vector<8x32xf32> -> vector<8x32xf32>
    %554 = arith.addf %532, %553 : vector<8x32xf32>
    %555 = vector.extract_strided_slice %487 {offsets = [0, 24], sizes = [8, 8], strides = [1, 1]} : vector<8x32xbf16> to vector<8x8xbf16>
    %556 = vector.extract_strided_slice %488 {offsets = [0, 24], sizes = [8, 8], strides = [1, 1]} : vector<8x32xbf16> to vector<8x8xbf16>
    %cst_218 = arith.constant dense<0.000000e+00> : vector<8x8xf32>
    %557 = tpu.matmul %555, %556, %cst_218 {dimension_numbers = #tpu.dot_dimension_numbers<[1], [1], [0], [0], [0, 0, 1, 0], [], []>} : vector<8x8xbf16>, vector<8x8xbf16>, vector<8x8xf32> -> vector<8x8xf32>
    %cst_219 = arith.constant 0.353553385 : f32
    %558 = vector.broadcast %cst_219 : f32 to vector<8x8xf32>
    %559 = arith.mulf %557, %558 : vector<8x8xf32>
    %cst_220 = arith.constant dense<0xFF800000> : vector<8xf32>
    %560 = vector.multi_reduction <maximumf>, %559, %cst_220 [1] : vector<8x8xf32> to vector<8xf32>
    %561 = vector.shape_cast %560 : vector<8xf32> to vector<8x1xf32>
    %562 = vector.broadcast %561 : vector<8x1xf32> to vector<8x8xf32>
    %563 = arith.subf %559, %562 : vector<8x8xf32>
    %564 = math.exp %563 : vector<8x8xf32>
    %cst_221 = arith.constant dense<0.000000e+00> : vector<8xf32>
    %565 = vector.multi_reduction <add>, %564, %cst_221 [1] : vector<8x8xf32> to vector<8xf32>
    %566 = vector.shape_cast %565 : vector<8xf32> to vector<8x1xf32>
    %567 = tpu.reciprocal %566 {approx = true} : vector<8x1xf32> -> vector<8x1xf32>
    %568 = vector.broadcast %567 : vector<8x1xf32> to vector<8x8xf32>
    %569 = arith.mulf %564, %568 : vector<8x8xf32>
    %570 = arith.truncf %569 : vector<8x8xf32> to vector<8x8xbf16>
    %571 = vector.extract_strided_slice %489 {offsets = [0, 24], sizes = [8, 8], strides = [1, 1]} : vector<8x32xbf16> to vector<8x8xbf16>
    %cst_222 = arith.constant dense<0.000000e+00> : vector<8x8xf32>
    %572 = tpu.matmul %570, %571, %cst_222 {dimension_numbers = #tpu.dot_dimension_numbers<[1], [0], [0], [1], [0, 0, 1, 1], [], []>} : vector<8x8xbf16>, vector<8x8xbf16>, vector<8x8xf32> -> vector<8x8xf32>
    %573 = arith.truncf %572 : vector<8x8xf32> to vector<8x8xbf16>
    %574 = vector.extract_strided_slice %486 {offsets = [24, 0], sizes = [8, 32], strides = [1, 1]} : vector<32x32xbf16> to vector<8x32xbf16>
    %cst_223 = arith.constant dense<0.000000e+00> : vector<8x32xf32>
    %575 = tpu.matmul %573, %574, %cst_223 {dimension_numbers = #tpu.dot_dimension_numbers<[1], [0], [0], [1], [0, 0, 1, 1], [], []>} : vector<8x8xbf16>, vector<8x32xbf16>, vector<8x32xf32> -> vector<8x32xf32>
    %576 = arith.addf %554, %575 : vector<8x32xf32>
    %c1_224 = arith.constant 1 : index
    %c0_225 = arith.constant 0 : index
    %c0_226 = arith.constant 0 : index
    %577 = vector.load %arg13[%c1_224, %c0_225, %c0_226] : memref<2x1x32xf32, #tpu.memory_space<vmem>>, vector<1x1x32xf32>
    %578 = vector.shape_cast %577 : vector<1x1x32xf32> to vector<1x32xf32>
    %579 = vector.broadcast %578 : vector<1x32xf32> to vector<8x32xf32>
    %580 = arith.addf %576, %579 : vector<8x32xf32>
    %581 = arith.addf %467, %580 : vector<8x32xf32>
    %c1_227 = arith.constant 1 : index
    %c0_228 = arith.constant 0 : index
    %c0_229 = arith.constant 0 : index
    %582 = vector.load %arg20[%c1_227, %c0_228, %c0_229] : memref<2x1x32xf32, #tpu.memory_space<vmem>>, vector<1x1x32xf32>
    %583 = vector.shape_cast %582 : vector<1x1x32xf32> to vector<1x32xf32>
    %c1_230 = arith.constant 1 : index
    %c0_231 = arith.constant 0 : index
    %c0_232 = arith.constant 0 : index
    %584 = vector.load %arg21[%c1_230, %c0_231, %c0_232] : memref<2x1x32xf32, #tpu.memory_space<vmem>>, vector<1x1x32xf32>
    %585 = vector.shape_cast %584 : vector<1x1x32xf32> to vector<1x32xf32>
    %cst_233 = arith.constant dense<0.000000e+00> : vector<8xf32>
    %586 = vector.multi_reduction <add>, %581, %cst_233 [1] : vector<8x32xf32> to vector<8xf32>
    %587 = vector.shape_cast %586 : vector<8xf32> to vector<8x1xf32>
    %cst_234 = arith.constant 3.200000e+01 : f32
    %588 = vector.broadcast %cst_234 : f32 to vector<8x1xf32>
    %589 = arith.divf %587, %588 : vector<8x1xf32>
    %590 = vector.broadcast %589 : vector<8x1xf32> to vector<8x32xf32>
    %591 = arith.subf %581, %590 : vector<8x32xf32>
    %592 = arith.mulf %591, %591 : vector<8x32xf32>
    %cst_235 = arith.constant dense<0.000000e+00> : vector<8xf32>
    %593 = vector.multi_reduction <add>, %592, %cst_235 [1] : vector<8x32xf32> to vector<8xf32>
    %594 = vector.shape_cast %593 : vector<8xf32> to vector<8x1xf32>
    %cst_236 = arith.constant 3.200000e+01 : f32
    %595 = vector.broadcast %cst_236 : f32 to vector<8x1xf32>
    %596 = arith.divf %594, %595 : vector<8x1xf32>
    %597 = vector.broadcast %589 : vector<8x1xf32> to vector<8x32xf32>
    %598 = arith.subf %581, %597 : vector<8x32xf32>
    %cst_237 = arith.constant 9.99999974E-6 : f32
    %599 = vector.broadcast %cst_237 : f32 to vector<8x1xf32>
    %600 = arith.addf %596, %599 : vector<8x1xf32>
    %601 = math.rsqrt %600 : vector<8x1xf32>
    %602 = vector.broadcast %601 : vector<8x1xf32> to vector<8x32xf32>
    %603 = arith.mulf %598, %602 : vector<8x32xf32>
    %604 = vector.broadcast %583 : vector<1x32xf32> to vector<8x32xf32>
    %605 = arith.mulf %603, %604 : vector<8x32xf32>
    %606 = vector.broadcast %585 : vector<1x32xf32> to vector<8x32xf32>
    %607 = arith.addf %605, %606 : vector<8x32xf32>
    %608 = arith.truncf %607 : vector<8x32xf32> to vector<8x32xbf16>
    %c1_238 = arith.constant 1 : index
    %c0_239 = arith.constant 0 : index
    %c0_240 = arith.constant 0 : index
    %609 = vector.load %arg14[%c1_238, %c0_239, %c0_240] : memref<2x32x2048xbf16, #tpu.memory_space<vmem>>, vector<1x32x2048xbf16>
    %610 = vector.shape_cast %609 : vector<1x32x2048xbf16> to vector<32x2048xbf16>
    %cst_241 = arith.constant dense<0.000000e+00> : vector<8x2048xf32>
    %611 = tpu.matmul %608, %610, %cst_241 {dimension_numbers = #tpu.dot_dimension_numbers<[1], [0], [0], [1], [0, 0, 1, 1], [], []>} : vector<8x32xbf16>, vector<32x2048xbf16>, vector<8x2048xf32> -> vector<8x2048xf32>
    %c1_242 = arith.constant 1 : index
    %c0_243 = arith.constant 0 : index
    %c0_244 = arith.constant 0 : index
    %612 = vector.load %arg15[%c1_242, %c0_243, %c0_244] : memref<2x1x2048xf32, #tpu.memory_space<vmem>>, vector<1x1x2048xf32>
    %613 = vector.shape_cast %612 : vector<1x1x2048xf32> to vector<1x2048xf32>
    %614 = vector.broadcast %613 : vector<1x2048xf32> to vector<8x2048xf32>
    %615 = arith.addf %611, %614 : vector<8x2048xf32>
    %cst_245 = arith.constant 0.000000e+00 : f32
    %616 = vector.broadcast %cst_245 : f32 to vector<8x2048xf32>
    %617 = arith.maximumf %615, %616 : vector<8x2048xf32>
    %618 = arith.truncf %617 : vector<8x2048xf32> to vector<8x2048xbf16>
    %c1_246 = arith.constant 1 : index
    %c0_247 = arith.constant 0 : index
    %c0_248 = arith.constant 0 : index
    %619 = vector.load %arg16[%c1_246, %c0_247, %c0_248] : memref<2x32x2048xbf16, #tpu.memory_space<vmem>>, vector<1x32x2048xbf16>
    %620 = vector.shape_cast %619 : vector<1x32x2048xbf16> to vector<32x2048xbf16>
    %cst_249 = arith.constant dense<0.000000e+00> : vector<8x32xf32>
    %621 = tpu.matmul %618, %620, %cst_249 {dimension_numbers = #tpu.dot_dimension_numbers<[1], [1], [0], [0], [0, 0, 1, 0], [], []>} : vector<8x2048xbf16>, vector<32x2048xbf16>, vector<8x32xf32> -> vector<8x32xf32>
    %c1_250 = arith.constant 1 : index
    %c0_251 = arith.constant 0 : index
    %c0_252 = arith.constant 0 : index
    %622 = vector.load %arg17[%c1_250, %c0_251, %c0_252] : memref<2x1x32xf32, #tpu.memory_space<vmem>>, vector<1x1x32xf32>
    %623 = vector.shape_cast %622 : vector<1x1x32xf32> to vector<1x32xf32>
    %624 = vector.broadcast %623 : vector<1x32xf32> to vector<8x32xf32>
    %625 = arith.addf %621, %624 : vector<8x32xf32>
    %626 = arith.addf %607, %625 : vector<8x32xf32>
    %c1_253 = arith.constant 1 : index
    %c0_254 = arith.constant 0 : index
    %c0_255 = arith.constant 0 : index
    %627 = vector.load %arg22[%c1_253, %c0_254, %c0_255] : memref<2x1x32xf32, #tpu.memory_space<vmem>>, vector<1x1x32xf32>
    %628 = vector.shape_cast %627 : vector<1x1x32xf32> to vector<1x32xf32>
    %c1_256 = arith.constant 1 : index
    %c0_257 = arith.constant 0 : index
    %c0_258 = arith.constant 0 : index
    %629 = vector.load %arg23[%c1_256, %c0_257, %c0_258] : memref<2x1x32xf32, #tpu.memory_space<vmem>>, vector<1x1x32xf32>
    %630 = vector.shape_cast %629 : vector<1x1x32xf32> to vector<1x32xf32>
    %cst_259 = arith.constant dense<0.000000e+00> : vector<8xf32>
    %631 = vector.multi_reduction <add>, %626, %cst_259 [1] : vector<8x32xf32> to vector<8xf32>
    %632 = vector.shape_cast %631 : vector<8xf32> to vector<8x1xf32>
    %cst_260 = arith.constant 3.200000e+01 : f32
    %633 = vector.broadcast %cst_260 : f32 to vector<8x1xf32>
    %634 = arith.divf %632, %633 : vector<8x1xf32>
    %635 = vector.broadcast %634 : vector<8x1xf32> to vector<8x32xf32>
    %636 = arith.subf %626, %635 : vector<8x32xf32>
    %637 = arith.mulf %636, %636 : vector<8x32xf32>
    %cst_261 = arith.constant dense<0.000000e+00> : vector<8xf32>
    %638 = vector.multi_reduction <add>, %637, %cst_261 [1] : vector<8x32xf32> to vector<8xf32>
    %639 = vector.shape_cast %638 : vector<8xf32> to vector<8x1xf32>
    %cst_262 = arith.constant 3.200000e+01 : f32
    %640 = vector.broadcast %cst_262 : f32 to vector<8x1xf32>
    %641 = arith.divf %639, %640 : vector<8x1xf32>
    %642 = vector.broadcast %634 : vector<8x1xf32> to vector<8x32xf32>
    %643 = arith.subf %626, %642 : vector<8x32xf32>
    %cst_263 = arith.constant 9.99999974E-6 : f32
    %644 = vector.broadcast %cst_263 : f32 to vector<8x1xf32>
    %645 = arith.addf %641, %644 : vector<8x1xf32>
    %646 = math.rsqrt %645 : vector<8x1xf32>
    %647 = vector.broadcast %646 : vector<8x1xf32> to vector<8x32xf32>
    %648 = arith.mulf %643, %647 : vector<8x32xf32>
    %649 = vector.broadcast %628 : vector<1x32xf32> to vector<8x32xf32>
    %650 = arith.mulf %648, %649 : vector<8x32xf32>
    %651 = vector.broadcast %630 : vector<1x32xf32> to vector<8x32xf32>
    %652 = arith.addf %650, %651 : vector<8x32xf32>
    %c0_264 = arith.constant 0 : index
    %c0_265 = arith.constant 0 : index
    %c0_266 = arith.constant 0 : index
    %653 = vector.load %arg24[%c0_264, %c0_265, %c0_266] : memref<1x8x32xf32, #tpu.memory_space<vmem>>, vector<1x8x32xf32>
    %654 = vector.shape_cast %653 : vector<1x8x32xf32> to vector<8x32xf32>
    %655 = vector.shape_cast %652 : vector<8x32xf32> to vector<1x8x32xf32>
    tpu.vector_store %arg24[%c0_264, %c0_265, %c0_266], %655 {strides = array<i32>} : memref<1x8x32xf32, #tpu.memory_space<vmem>>, vector<1x8x32xf32>,
    return
  }
  func.func @transform_0(%arg0: i32) -> (i32, i32, i32) {
    %c0_i32 = arith.constant 0 : i32
    %c0_i32_0 = arith.constant 0 : i32
    %c0_i32_1 = arith.constant 0 : i32
    return %arg0, %c0_i32, %c0_i32_0 : i32, i32, i32
  }
  func.func @transform_1(%arg0: i32) -> (i32, i32, i32) {
    %c0_i32 = arith.constant 0 : i32
    %c0_i32_0 = arith.constant 0 : i32
    %c0_i32_1 = arith.constant 0 : i32
    return %arg0, %c0_i32, %c0_i32_0 : i32, i32, i32
  }
  func.func @transform_2(%arg0: i32) -> (i32, i32, i32) {
    %c0_i32 = arith.constant 0 : i32
    %c0_i32_0 = arith.constant 0 : i32
    %c0_i32_1 = arith.constant 0 : i32
    return %arg0, %c0_i32, %c0_i32_0 : i32, i32, i32
  }
  func.func @transform_3(%arg0: i32) -> (i32, i32, i32) {
    %c0_i32 = arith.constant 0 : i32
    %c0_i32_0 = arith.constant 0 : i32
    %c0_i32_1 = arith.constant 0 : i32
    %c0_i32_2 = arith.constant 0 : i32
    return %c0_i32, %c0_i32_0, %c0_i32_1 : i32, i32, i32
  }
  func.func @transform_4(%arg0: i32) -> (i32, i32, i32) {
    %c0_i32 = arith.constant 0 : i32
    %c0_i32_0 = arith.constant 0 : i32
    %c0_i32_1 = arith.constant 0 : i32
    %c0_i32_2 = arith.constant 0 : i32
    return %c0_i32, %c0_i32_0, %c0_i32_1 : i32, i32, i32
  }
  func.func @transform_5(%arg0: i32) -> (i32, i32, i32) {
    %c0_i32 = arith.constant 0 : i32
    %c0_i32_0 = arith.constant 0 : i32
    %c0_i32_1 = arith.constant 0 : i32
    %c0_i32_2 = arith.constant 0 : i32
    return %c0_i32, %c0_i32_0, %c0_i32_1 : i32, i32, i32
  }
  func.func @transform_6(%arg0: i32) -> (i32, i32, i32) {
    %c0_i32 = arith.constant 0 : i32
    %c0_i32_0 = arith.constant 0 : i32
    %c0_i32_1 = arith.constant 0 : i32
    %c0_i32_2 = arith.constant 0 : i32
    return %c0_i32, %c0_i32_0, %c0_i32_1 : i32, i32, i32
  }
  func.func @transform_7(%arg0: i32) -> (i32, i32, i32) {
    %c0_i32 = arith.constant 0 : i32
    %c0_i32_0 = arith.constant 0 : i32
    %c0_i32_1 = arith.constant 0 : i32
    %c0_i32_2 = arith.constant 0 : i32
    return %c0_i32, %c0_i32_0, %c0_i32_1 : i32, i32, i32
  }
  func.func @transform_8(%arg0: i32) -> (i32, i32, i32) {
    %c0_i32 = arith.constant 0 : i32
    %c0_i32_0 = arith.constant 0 : i32
    %c0_i32_1 = arith.constant 0 : i32
    %c0_i32_2 = arith.constant 0 : i32
    return %c0_i32, %c0_i32_0, %c0_i32_1 : i32, i32, i32
  }
  func.func @transform_9(%arg0: i32) -> (i32, i32, i32) {
    %c0_i32 = arith.constant 0 : i32
    %c0_i32_0 = arith.constant 0 : i32
    %c0_i32_1 = arith.constant 0 : i32
    %c0_i32_2 = arith.constant 0 : i32
    return %c0_i32, %c0_i32_0, %c0_i32_1 : i32, i32, i32
  }
  func.func @transform_10(%arg0: i32) -> (i32, i32, i32) {
    %c0_i32 = arith.constant 0 : i32
    %c0_i32_0 = arith.constant 0 : i32
    %c0_i32_1 = arith.constant 0 : i32
    %c0_i32_2 = arith.constant 0 : i32
    return %c0_i32, %c0_i32_0, %c0_i32_1 : i32, i32, i32
  }
  func.func @transform_11(%arg0: i32) -> (i32, i32, i32) {
    %c0_i32 = arith.constant 0 : i32
    %c0_i32_0 = arith.constant 0 : i32
    %c0_i32_1 = arith.constant 0 : i32
    %c0_i32_2 = arith.constant 0 : i32
    return %c0_i32, %c0_i32_0, %c0_i32_1 : i32, i32, i32
  }
  func.func @transform_12(%arg0: i32) -> (i32, i32, i32) {
    %c0_i32 = arith.constant 0 : i32
    %c0_i32_0 = arith.constant 0 : i32
    %c0_i32_1 = arith.constant 0 : i32
    %c0_i32_2 = arith.constant 0 : i32
    return %c0_i32, %c0_i32_0, %c0_i32_1 : i32, i32, i32
  }
  func.func @transform_13(%arg0: i32) -> (i32, i32, i32) {
    %c0_i32 = arith.constant 0 : i32
    %c0_i32_0 = arith.constant 0 : i32
    %c0_i32_1 = arith.constant 0 : i32
    %c0_i32_2 = arith.constant 0 : i32
    return %c0_i32, %c0_i32_0, %c0_i32_1 : i32, i32, i32
  }
  func.func @transform_14(%arg0: i32) -> (i32, i32, i32) {
    %c0_i32 = arith.constant 0 : i32
    %c0_i32_0 = arith.constant 0 : i32
    %c0_i32_1 = arith.constant 0 : i32
    %c0_i32_2 = arith.constant 0 : i32
    return %c0_i32, %c0_i32_0, %c0_i32_1 : i32, i32, i32
  }
  func.func @transform_15(%arg0: i32) -> (i32, i32, i32) {
    %c0_i32 = arith.constant 0 : i32
    %c0_i32_0 = arith.constant 0 : i32
    %c0_i32_1 = arith.constant 0 : i32
    %c0_i32_2 = arith.constant 0 : i32
    return %c0_i32, %c0_i32_0, %c0_i32_1 : i32, i32, i32
  }
  func.func @transform_16(%arg0: i32) -> (i32, i32, i32) {
    %c0_i32 = arith.constant 0 : i32
    %c0_i32_0 = arith.constant 0 : i32
    %c0_i32_1 = arith.constant 0 : i32
    %c0_i32_2 = arith.constant 0 : i32
    return %c0_i32, %c0_i32_0, %c0_i32_1 : i32, i32, i32
  }
  func.func @transform_17(%arg0: i32) -> (i32, i32, i32) {
    %c0_i32 = arith.constant 0 : i32
    %c0_i32_0 = arith.constant 0 : i32
    %c0_i32_1 = arith.constant 0 : i32
    %c0_i32_2 = arith.constant 0 : i32
    return %c0_i32, %c0_i32_0, %c0_i32_1 : i32, i32, i32
  }
  func.func @transform_18(%arg0: i32) -> (i32, i32, i32) {
    %c0_i32 = arith.constant 0 : i32
    %c0_i32_0 = arith.constant 0 : i32
    %c0_i32_1 = arith.constant 0 : i32
    %c0_i32_2 = arith.constant 0 : i32
    return %c0_i32, %c0_i32_0, %c0_i32_1 : i32, i32, i32
  }
  func.func @transform_19(%arg0: i32) -> (i32, i32, i32) {
    %c0_i32 = arith.constant 0 : i32
    %c0_i32_0 = arith.constant 0 : i32
    %c0_i32_1 = arith.constant 0 : i32
    %c0_i32_2 = arith.constant 0 : i32
    return %c0_i32, %c0_i32_0, %c0_i32_1 : i32, i32, i32
  }
  func.func @transform_20(%arg0: i32) -> (i32, i32, i32) {
    %c0_i32 = arith.constant 0 : i32
    %c0_i32_0 = arith.constant 0 : i32
    %c0_i32_1 = arith.constant 0 : i32
    %c0_i32_2 = arith.constant 0 : i32
    return %c0_i32, %c0_i32_0, %c0_i32_1 : i32, i32, i32
  }
  func.func @transform_21(%arg0: i32) -> (i32, i32, i32) {
    %c0_i32 = arith.constant 0 : i32
    %c0_i32_0 = arith.constant 0 : i32
    %c0_i32_1 = arith.constant 0 : i32
    %c0_i32_2 = arith.constant 0 : i32
    return %c0_i32, %c0_i32_0, %c0_i32_1 : i32, i32, i32
  }
  func.func @transform_22(%arg0: i32) -> (i32, i32, i32) {
    %c0_i32 = arith.constant 0 : i32
    %c0_i32_0 = arith.constant 0 : i32
    %c0_i32_1 = arith.constant 0 : i32
    %c0_i32_2 = arith.constant 0 : i32
    return %c0_i32, %c0_i32_0, %c0_i32_1 : i32, i32, i32
  }
  func.func @transform_23(%arg0: i32) -> (i32, i32, i32) {
    %c0_i32 = arith.constant 0 : i32
    %c0_i32_0 = arith.constant 0 : i32
    %c0_i32_1 = arith.constant 0 : i32
    return %arg0, %c0_i32, %c0_i32_0 : i32, i32, i32
  }
}

</mosaic_0001>

<llo_original>
// kernel: tpu_custom_call.1
$region0: #{tpu_custom_call.1}
  #allocation0 [shape = 'u32[]', space=smem, size = 0x4, offset = 0x4, fixed_abs, tag = 'smem constant byte address 0x4 - core index']
  #allocation1 [shape = 'u32[144,128]{1,0:T(1,128)}', space=vmem, size = 0x12000, scoped, tag = 'internal scratch']
  %s0 = inlined_call_operand.hbm [shape: f32[2,8,32], index: 0, kind: input, shape index: {}]
  %s1 = inlined_call_operand.hbm [shape: f32[2,8,32], index: 1, kind: input, shape index: {}]
  %s2 = inlined_call_operand.hbm [shape: f32[2,8,8], index: 2, kind: input, shape index: {}]
  %s3 = inlined_call_operand.hbm [shape: bf16[2,32,96], index: 3, kind: input, shape index: {}]
  %s4 = inlined_call_operand.vmem [shape: f32[2,1,96], index: 4, kind: input, shape index: {}]
  %s5 = inlined_call_operand.hbm [shape: bf16[2,32,32], index: 5, kind: input, shape index: {}]
  %s6 = inlined_call_operand.vmem [shape: f32[2,1,32], index: 6, kind: input, shape index: {}]
  %s7 = inlined_call_operand.hbm [shape: bf16[2,32,32], index: 7, kind: input, shape index: {}]
  %s8 = inlined_call_operand.vmem [shape: f32[2,1,32], index: 8, kind: input, shape index: {}]
  %s9 = inlined_call_operand.hbm [shape: bf16[2,32,64], index: 9, kind: input, shape index: {}]
  %s10 = inlined_call_operand.vmem [shape: f32[2,1,64], index: 10, kind: input, shape index: {}]
  %s11 = inlined_call_operand.hbm [shape: bf16[2,32,32], index: 11, kind: input, shape index: {}]
  %s12 = inlined_call_operand.vmem [shape: f32[2,1,32], index: 12, kind: input, shape index: {}]
  %s13 = inlined_call_operand.hbm [shape: bf16[2,32,2048], index: 13, kind: input, shape index: {}]
  %s14 = inlined_call_operand.hbm [shape: f32[2,1,2048], index: 14, kind: input, shape index: {}]
  %s15 = inlined_call_operand.hbm [shape: bf16[2,32,2048], index: 15, kind: input, shape index: {}]
  %s16 = inlined_call_operand.vmem [shape: f32[2,1,32], index: 16, kind: input, shape index: {}]
  %s17 = inlined_call_operand.vmem [shape: f32[2,1,32], index: 17, kind: input, shape index: {}]
  %s18 = inlined_call_operand.vmem [shape: f32[2,1,32], index: 18, kind: input, shape index: {}]
  %s19 = inlined_call_operand.vmem [shape: f32[2,1,32], index: 19, kind: input, shape index: {}]
  %s20 = inlined_call_operand.vmem [shape: f32[2,1,32], index: 20, kind: input, shape index: {}]
  %s21 = inlined_call_operand.vmem [shape: f32[2,1,32], index: 21, kind: input, shape index: {}]
  %s22 = inlined_call_operand.vmem [shape: f32[2,1,32], index: 22, kind: input, shape index: {}]
  %s23 = inlined_call_operand.hbm [shape: f32[2,8,32], index: 23, kind: output, shape index: {}]
  %s24 = sld [smem:[#allocation0]]
  $region169: #{tpu_custom_call.1} parent=0
    _
  %s26 = ssub.s32 1, %s24
  %s27 = scalar_select 0, %s26, %s24
  $region1: #{tpu_custom_call.1} parent=0
    #allocation2 [shape = 'u8[8192]{0}', space=vmem, size = 0x2000, scoped, tag = 'input window, operand 0']
    #allocation3 [shape = 's32[2]{0}', space=sflag, size = 0x8, scoped, tag = 'scoped memory for tpu_custom_call.1']
    #allocation4 [shape = 's32[2]{0}', space=sflag, size = 0x8, scoped, tag = 'scoped memory for tpu_custom_call.1']
    #allocation5 [shape = 'u8[8192]{0}', space=vmem, size = 0x2000, scoped, tag = 'input window, operand 1']
    #allocation6 [shape = 's32[2]{0}', space=sflag, size = 0x8, scoped, tag = 'scoped memory for tpu_custom_call.1']
    #allocation7 [shape = 'u8[8192]{0}', space=vmem, size = 0x2000, scoped, tag = 'input window, operand 2']
    #allocation8 [shape = 'u8[16384]{0}', space=vmem, size = 0x4000, scoped, tag = 'input window, operand 3, single buffered']
    #allocation9 [shape = 's32[1]{0}', space=sflag, size = 0x4, scoped, tag = 'scoped memory for tpu_custom_call.1']
    #allocation10 [shape = 'u8[16384]{0}', space=vmem, size = 0x4000, scoped, tag = 'input window, operand 5, single buffered']
    #allocation11 [shape = 'u8[16384]{0}', space=vmem, size = 0x4000, scoped, tag = 'input window, operand 7, single buffered']
    #allocation12 [shape = 's32[1]{0}', space=sflag, size = 0x4, scoped, tag = 'scoped memory for tpu_custom_call.1']
    #allocation13 [shape = 'u8[16384]{0}', space=vmem, size = 0x4000, scoped, tag = 'input window, operand 9, single buffered']
    #allocation14 [shape = 'u8[16384]{0}', space=vmem, size = 0x4000, scoped, tag = 'input window, operand 11, single buffered']
    #allocation15 [shape = 's32[1]{0}', space=sflag, size = 0x4, scoped, tag = 'scoped memory for tpu_custom_call.1']
    #allocation16 [shape = 'u8[262144]{0}', space=vmem, size = 0x40000, scoped, tag = 'input window, operand 13, single buffered']
    #allocation17 [shape = 'u8[16384]{0}', space=vmem, size = 0x4000, scoped, tag = 'input window, operand 14, single buffered']
    #allocation18 [shape = 's32[1]{0}', space=sflag, size = 0x4, scoped, tag = 'scoped memory for tpu_custom_call.1']
    #allocation19 [shape = 'u8[262144]{0}', space=vmem, size = 0x40000, scoped, tag = 'input window, operand 15, single buffered']
    #allocation20 [shape = 'u8[8192]{0}', space=vmem, size = 0x2000, scoped, tag = 'output window, operand 0']
    %28 = vsyncpa [#allocation3], 0
    %s29 = scalar_lea.sflag [#allocation3], 1
    %30 = vsyncpa %s29, 0
    %31 = vsyncpa [#allocation6], 0
    %s32 = scalar_lea.sflag [#allocation6], 1
    %33 = vsyncpa %s32, 0
    %34 = vsyncpa [#allocation9], 0
    %35 = vsyncpa [#allocation12], 0
    %36 = vsyncpa [#allocation15], 0
    %37 = vsyncpa [#allocation18], 0
    %38 = vsyncpa [#allocation4], 0
    %s39 = scalar_lea.sflag [#allocation4], 1
    %40 = vsyncpa %s39, 0
    loop: start=0, step=1, limit=4
    $region2: #{tpu_custom_call.1} parent=1 // loop_pre_header
      _
    $region3: #{tpu_custom_call.1} parent=1 // loop_header
      %s42 = sphi 0, %s46
      %p43 = scmp.ge.s32.totalorder %s42, 4
      %s52 = sphi 0, %s54
      %s55 = sphi 0, %s52
      %s56 = sphi 0, %s55
      %s72 = sphi 0, %s56
      %s78 = sphi 0, %s80
      %s81 = sphi 0, %s78
      %s82 = sphi 0, %s81
      %s98 = sphi 0, %s82
      %s104 = sphi 0, %s106
      %s107 = sphi 0, %s104
      %s108 = sphi 0, %s107
      %s124 = sphi 0, %s108
      %s128 = sphi 0, %s128
      %s130 = sphi 0, %s128
      %s131 = sphi 0, %s130
      %s145 = sphi 0, %s131
      %s149 = sphi 0, %s149
      %s151 = sphi 0, %s149
      %s152 = sphi 0, %s151
      %s166 = sphi 0, %s152
      %s170 = sphi 0, %s170
      %s172 = sphi 0, %s170
      %s173 = sphi 0, %s172
      %s187 = sphi 0, %s173
      %s191 = sphi 0, %s191
      %s193 = sphi 0, %s191
      %s194 = sphi 0, %s193
      %s208 = sphi 0, %s194
      %s212 = sphi 0, %s212
      %s214 = sphi 0, %s212
      %s215 = sphi 0, %s214
      %s229 = sphi 0, %s215
      %s233 = sphi 0, %s233
      %s235 = sphi 0, %s233
      %s236 = sphi 0, %s235
      %s250 = sphi 0, %s236
      %s254 = sphi 0, %s254
      %s256 = sphi 0, %s254
      %s257 = sphi 0, %s256
      %s271 = sphi 0, %s257
      %s275 = sphi 0, %s275
      %s277 = sphi 0, %s275
      %s278 = sphi 0, %s277
      %s292 = sphi 0, %s278
      %s296 = sphi 0, %s296
      %s298 = sphi 0, %s296
      %s299 = sphi 0, %s298
      %s313 = sphi 0, %s299
      %s317 = sphi 0, %s317
      %s319 = sphi 0, %s317
      %s320 = sphi 0, %s319
      %s334 = sphi 0, %s320
      %s338 = sphi 0, %s338
      %s340 = sphi 0, %s338
      %s341 = sphi 0, %s340
      %s355 = sphi 0, %s341
      %s359 = sphi 0, %s359
      %s361 = sphi 0, %s359
      %s362 = sphi 0, %s361
      %s376 = sphi 0, %s362
      %s380 = sphi 0, %s380
      %s382 = sphi 0, %s380
      %s383 = sphi 0, %s382
      %s397 = sphi 0, %s383
      %s401 = sphi 0, %s401
      %s403 = sphi 0, %s401
      %s404 = sphi 0, %s403
      %s418 = sphi 0, %s404
      %s422 = sphi 0, %s422
      %s424 = sphi 0, %s422
      %s425 = sphi 0, %s424
      %s439 = sphi 0, %s425
      %s443 = sphi 0, %s443
      %s445 = sphi 0, %s443
      %s446 = sphi 0, %s445
      %s460 = sphi 0, %s446
      %s464 = sphi 0, %s464
      %s466 = sphi 0, %s464
      %s467 = sphi 0, %s466
      %s481 = sphi 0, %s467
      %s485 = sphi 0, %s485
      %s487 = sphi 0, %s485
      %s488 = sphi 0, %s487
      %s502 = sphi 0, %s488
      %s506 = sphi 0, %s506
      %s508 = sphi 0, %s506
      %s509 = sphi 0, %s508
      %s523 = sphi 0, %s509
      %s527 = sphi 0, %s527
      %s529 = sphi 0, %s527
      %s530 = sphi 0, %s529
      %s544 = sphi 0, %s530
      %s550 = sphi 0, %s552
      %s553 = sphi 0, %s550
      %s554 = sphi 0, %s553
      %s570 = sphi 0, %s554
    $region4: #{tpu_custom_call.1} parent=1 // loop_header_branch
      %45 = sbr.rel (%p43) target = $region8
    $region5: #{tpu_custom_call.1} parent=1 // loop_body
      %s47 = ssub.s32 %s42, 1
      %s48 = ssub.s32 %s42, 2
      %s49 = sadd.s32 %s42, 1
      %s50 = ssub.s32 %s42, %s49
      %p51 = scmp.eq.s32.totalorder %s50, 0
      %s53 = sadd.s32 %s52, 1
      %s54 = scalar_select %p51, %s52, %s53
      %p57 = pneg %p51
      %p58 = scmp.eq.s32.totalorder %s42, 1
      %p59 = por %p57, %p58
      %p60 = scmp.ne.s32.totalorder %s52, %s55
      %p61 = scmp.eq.s32.totalorder %s42, 0
      %p62 = por %p60, %p61
      %p63 = scmp.ne.s32.totalorder %s52, %s55
      %p64 = scmp.eq.s32.totalorder %s47, 1
      %p65 = por %p63, %p64
      %p66 = scmp.ne.s32.totalorder %s55, %s56
      %p67 = scmp.eq.s32.totalorder %s47, 0
      %p68 = por %p66, %p67
      %p69 = scmp.ne.s32.totalorder %s55, %s56
      %p70 = scmp.eq.s32.totalorder %s48, 1
      %p71 = por %p69, %p70
      %p73 = scmp.ne.s32.totalorder %s56, %s72
      %p74 = scmp.eq.s32.totalorder %s48, 0
      %p75 = por %p73, %p74
      %s76 = ssub.s32 %s42, %s49
      %p77 = scmp.eq.s32.totalorder %s76, 0
      %s79 = sadd.s32 %s78, 1
      %s80 = scalar_select %p77, %s78, %s79
      %p83 = pneg %p77
      %p84 = scmp.eq.s32.totalorder %s42, 1
      %p85 = por %p83, %p84
      %p86 = scmp.ne.s32.totalorder %s78, %s81
      %p87 = scmp.eq.s32.totalorder %s42, 0
      %p88 = por %p86, %p87
      %p89 = scmp.ne.s32.totalorder %s78, %s81
      %p90 = scmp.eq.s32.totalorder %s47, 1
      %p91 = por %p89, %p90
      %p92 = scmp.ne.s32.totalorder %s81, %s82
      %p93 = scmp.eq.s32.totalorder %s47, 0
      %p94 = por %p92, %p93
      %p95 = scmp.ne.s32.totalorder %s81, %s82
      %p96 = scmp.eq.s32.totalorder %s48, 1
      %p97 = por %p95, %p96
      %p99 = scmp.ne.s32.totalorder %s82, %s98
      %p100 = scmp.eq.s32.totalorder %s48, 0
      %p101 = por %p99, %p100
      %s102 = ssub.s32 %s42, %s49
      %p103 = scmp.eq.s32.totalorder %s102, 0
      %s105 = sadd.s32 %s104, 1
      %s106 = scalar_select %p103, %s104, %s105
      %p109 = pneg %p103
      %p110 = scmp.eq.s32.totalorder %s42, 1
      %p111 = por %p109, %p110
      %p112 = scmp.ne.s32.totalorder %s104, %s107
      %p113 = scmp.eq.s32.totalorder %s42, 0
      %p114 = por %p112, %p113
      %p115 = scmp.ne.s32.totalorder %s104, %s107
      %p116 = scmp.eq.s32.totalorder %s47, 1
      %p117 = por %p115, %p116
      %p118 = scmp.ne.s32.totalorder %s107, %s108
      %p119 = scmp.eq.s32.totalorder %s47, 0
      %p120 = por %p118, %p119
      %p121 = scmp.ne.s32.totalorder %s107, %s108
      %p122 = scmp.eq.s32.totalorder %s48, 1
      %p123 = por %p121, %p122
      %p125 = scmp.ne.s32.totalorder %s108, %s124
      %p126 = scmp.eq.s32.totalorder %s48, 0
      %p127 = por %p125, %p126
      %s129 = sadd.s32 %s128, 1
      %p132 = scmp.eq.s32.totalorder %s42, 1
      %p133 = scmp.ne.s32.totalorder %s128, %s130
      %p134 = scmp.eq.s32.totalorder %s42, 0
      %p135 = por %p133, %p134
      %p136 = scmp.ne.s32.totalorder %s128, %s130
      %p137 = scmp.eq.s32.totalorder %s47, 1
      %p138 = por %p136, %p137
      %p139 = scmp.ne.s32.totalorder %s130, %s131
      %p140 = scmp.eq.s32.totalorder %s47, 0
      %p141 = por %p139, %p140
      %p142 = scmp.ne.s32.totalorder %s130, %s131
      %p143 = scmp.eq.s32.totalorder %s48, 1
      %p144 = por %p142, %p143
      %p146 = scmp.ne.s32.totalorder %s131, %s145
      %p147 = scmp.eq.s32.totalorder %s48, 0
      %p148 = por %p146, %p147
      %s150 = sadd.s32 %s149, 1
      %p153 = scmp.eq.s32.totalorder %s42, 1
      %p154 = scmp.ne.s32.totalorder %s149, %s151
      %p155 = scmp.eq.s32.totalorder %s42, 0
      %p156 = por %p154, %p155
      %p157 = scmp.ne.s32.totalorder %s149, %s151
      %p158 = scmp.eq.s32.totalorder %s47, 1
      %p159 = por %p157, %p158
      %p160 = scmp.ne.s32.totalorder %s151, %s152
      %p161 = scmp.eq.s32.totalorder %s47, 0
      %p162 = por %p160, %p161
      %p163 = scmp.ne.s32.totalorder %s151, %s152
      %p164 = scmp.eq.s32.totalorder %s48, 1
      %p165 = por %p163, %p164
      %p167 = scmp.ne.s32.totalorder %s152, %s166
      %p168 = scmp.eq.s32.totalorder %s48, 0
      %p169 = por %p167, %p168
      %s171 = sadd.s32 %s170, 1
      %p174 = scmp.eq.s32.totalorder %s42, 1
      %p175 = scmp.ne.s32.totalorder %s170, %s172
      %p176 = scmp.eq.s32.totalorder %s42, 0
      %p177 = por %p175, %p176
      %p178 = scmp.ne.s32.totalorder %s170, %s172
      %p179 = scmp.eq.s32.totalorder %s47, 1
      %p180 = por %p178, %p179
      %p181 = scmp.ne.s32.totalorder %s172, %s173
      %p182 = scmp.eq.s32.totalorder %s47, 0
      %p183 = por %p181, %p182
      %p184 = scmp.ne.s32.totalorder %s172, %s173
      %p185 = scmp.eq.s32.totalorder %s48, 1
      %p186 = por %p184, %p185
      %p188 = scmp.ne.s32.totalorder %s173, %s187
      %p189 = scmp.eq.s32.totalorder %s48, 0
      %p190 = por %p188, %p189
      %s192 = sadd.s32 %s191, 1
      %p195 = scmp.eq.s32.totalorder %s42, 1
      %p196 = scmp.ne.s32.totalorder %s191, %s193
      %p197 = scmp.eq.s32.totalorder %s42, 0
      %p198 = por %p196, %p197
      %p199 = scmp.ne.s32.totalorder %s191, %s193
      %p200 = scmp.eq.s32.totalorder %s47, 1
      %p201 = por %p199, %p200
      %p202 = scmp.ne.s32.totalorder %s193, %s194
      %p203 = scmp.eq.s32.totalorder %s47, 0
      %p204 = por %p202, %p203
      %p205 = scmp.ne.s32.totalorder %s193, %s194
      %p206 = scmp.eq.s32.totalorder %s48, 1
      %p207 = por %p205, %p206
      %p209 = scmp.ne.s32.totalorder %s194, %s208
      %p210 = scmp.eq.s32.totalorder %s48, 0
      %p211 = por %p209, %p210
      %s213 = sadd.s32 %s212, 1
      %p216 = scmp.eq.s32.totalorder %s42, 1
      %p217 = scmp.ne.s32.totalorder %s212, %s214
      %p218 = scmp.eq.s32.totalorder %s42, 0
      %p219 = por %p217, %p218
      %p220 = scmp.ne.s32.totalorder %s212, %s214
      %p221 = scmp.eq.s32.totalorder %s47, 1
      %p222 = por %p220, %p221
      %p223 = scmp.ne.s32.totalorder %s214, %s215
      %p224 = scmp.eq.s32.totalorder %s47, 0
      %p225 = por %p223, %p224
      %p226 = scmp.ne.s32.totalorder %s214, %s215
      %p227 = scmp.eq.s32.totalorder %s48, 1
      %p228 = por %p226, %p227
      %p230 = scmp.ne.s32.totalorder %s215, %s229
      %p231 = scmp.eq.s32.totalorder %s48, 0
      %p232 = por %p230, %p231
      %s234 = sadd.s32 %s233, 1
      %p237 = scmp.eq.s32.totalorder %s42, 1
      %p238 = scmp.ne.s32.totalorder %s233, %s235
      %p239 = scmp.eq.s32.totalorder %s42, 0
      %p240 = por %p238, %p239
      %p241 = scmp.ne.s32.totalorder %s233, %s235
      %p242 = scmp.eq.s32.totalorder %s47, 1
      %p243 = por %p241, %p242
      %p244 = scmp.ne.s32.totalorder %s235, %s236
      %p245 = scmp.eq.s32.totalorder %s47, 0
      %p246 = por %p244, %p245
      %p247 = scmp.ne.s32.totalorder %s235, %s236
      %p248 = scmp.eq.s32.totalorder %s48, 1
      %p249 = por %p247, %p248
      %p251 = scmp.ne.s32.totalorder %s236, %s250
      %p252 = scmp.eq.s32.totalorder %s48, 0
      %p253 = por %p251, %p252
      %s255 = sadd.s32 %s254, 1
      %p258 = scmp.eq.s32.totalorder %s42, 1
      %p259 = scmp.ne.s32.totalorder %s254, %s256
      %p260 = scmp.eq.s32.totalorder %s42, 0
      %p261 = por %p259, %p260
      %p262 = scmp.ne.s32.totalorder %s254, %s256
      %p263 = scmp.eq.s32.totalorder %s47, 1
      %p264 = por %p262, %p263
      %p265 = scmp.ne.s32.totalorder %s256, %s257
      %p266 = scmp.eq.s32.totalorder %s47, 0
      %p267 = por %p265, %p266
      %p268 = scmp.ne.s32.totalorder %s256, %s257
      %p269 = scmp.eq.s32.totalorder %s48, 1
      %p270 = por %p268, %p269
      %p272 = scmp.ne.s32.totalorder %s257, %s271
      %p273 = scmp.eq.s32.totalorder %s48, 0
      %p274 = por %p272, %p273
      %s276 = sadd.s32 %s275, 1
      %p279 = scmp.eq.s32.totalorder %s42, 1
      %p280 = scmp.ne.s32.totalorder %s275, %s277
      %p281 = scmp.eq.s32.totalorder %s42, 0
      %p282 = por %p280, %p281
      %p283 = scmp.ne.s32.totalorder %s275, %s277
      %p284 = scmp.eq.s32.totalorder %s47, 1
      %p285 = por %p283, %p284
      %p286 = scmp.ne.s32.totalorder %s277, %s278
      %p287 = scmp.eq.s32.totalorder %s47, 0
      %p288 = por %p286, %p287
      %p289 = scmp.ne.s32.totalorder %s277, %s278
      %p290 = scmp.eq.s32.totalorder %s48, 1
      %p291 = por %p289, %p290
      %p293 = scmp.ne.s32.totalorder %s278, %s292
      %p294 = scmp.eq.s32.totalorder %s48, 0
      %p295 = por %p293, %p294
      %s297 = sadd.s32 %s296, 1
      %p300 = scmp.eq.s32.totalorder %s42, 1
      %p301 = scmp.ne.s32.totalorder %s296, %s298
      %p302 = scmp.eq.s32.totalorder %s42, 0
      %p303 = por %p301, %p302
      %p304 = scmp.ne.s32.totalorder %s296, %s298
      %p305 = scmp.eq.s32.totalorder %s47, 1
      %p306 = por %p304, %p305
      %p307 = scmp.ne.s32.totalorder %s298, %s299
      %p308 = scmp.eq.s32.totalorder %s47, 0
      %p309 = por %p307, %p308
      %p310 = scmp.ne.s32.totalorder %s298, %s299
      %p311 = scmp.eq.s32.totalorder %s48, 1
      %p312 = por %p310, %p311
      %p314 = scmp.ne.s32.totalorder %s299, %s313
      %p315 = scmp.eq.s32.totalorder %s48, 0
      %p316 = por %p314, %p315
      %s318 = sadd.s32 %s317, 1
      %p321 = scmp.eq.s32.totalorder %s42, 1
      %p322 = scmp.ne.s32.totalorder %s317, %s319
      %p323 = scmp.eq.s32.totalorder %s42, 0
      %p324 = por %p322, %p323
      %p325 = scmp.ne.s32.totalorder %s317, %s319
      %p326 = scmp.eq.s32.totalorder %s47, 1
      %p327 = por %p325, %p326
      %p328 = scmp.ne.s32.totalorder %s319, %s320
      %p329 = scmp.eq.s32.totalorder %s47, 0
      %p330 = por %p328, %p329
      %p331 = scmp.ne.s32.totalorder %s319, %s320
      %p332 = scmp.eq.s32.totalorder %s48, 1
      %p333 = por %p331, %p332
      %p335 = scmp.ne.s32.totalorder %s320, %s334
      %p336 = scmp.eq.s32.totalorder %s48, 0
      %p337 = por %p335, %p336
      %s339 = sadd.s32 %s338, 1
      %p342 = scmp.eq.s32.totalorder %s42, 1
      %p343 = scmp.ne.s32.totalorder %s338, %s340
      %p344 = scmp.eq.s32.totalorder %s42, 0
      %p345 = por %p343, %p344
      %p346 = scmp.ne.s32.totalorder %s338, %s340
      %p347 = scmp.eq.s32.totalorder %s47, 1
      %p348 = por %p346, %p347
      %p349 = scmp.ne.s32.totalorder %s340, %s341
      %p350 = scmp.eq.s32.totalorder %s47, 0
      %p351 = por %p349, %p350
      %p352 = scmp.ne.s32.totalorder %s340, %s341
      %p353 = scmp.eq.s32.totalorder %s48, 1
      %p354 = por %p352, %p353
      %p356 = scmp.ne.s32.totalorder %s341, %s355
      %p357 = scmp.eq.s32.totalorder %s48, 0
      %p358 = por %p356, %p357
      %s360 = sadd.s32 %s359, 1
      %p363 = scmp.eq.s32.totalorder %s42, 1
      %p364 = scmp.ne.s32.totalorder %s359, %s361
      %p365 = scmp.eq.s32.totalorder %s42, 0
      %p366 = por %p364, %p365
      %p367 = scmp.ne.s32.totalorder %s359, %s361
      %p368 = scmp.eq.s32.totalorder %s47, 1
      %p369 = por %p367, %p368
      %p370 = scmp.ne.s32.totalorder %s361, %s362
      %p371 = scmp.eq.s32.totalorder %s47, 0
      %p372 = por %p370, %p371
      %p373 = scmp.ne.s32.totalorder %s361, %s362
      %p374 = scmp.eq.s32.totalorder %s48, 1
      %p375 = por %p373, %p374
      %p377 = scmp.ne.s32.totalorder %s362, %s376
      %p378 = scmp.eq.s32.totalorder %s48, 0
      %p379 = por %p377, %p378
      %s381 = sadd.s32 %s380, 1
      %p384 = scmp.eq.s32.totalorder %s42, 1
      %p385 = scmp.ne.s32.totalorder %s380, %s382
      %p386 = scmp.eq.s32.totalorder %s42, 0
      %p387 = por %p385, %p386
      %p388 = scmp.ne.s32.totalorder %s380, %s382
      %p389 = scmp.eq.s32.totalorder %s47, 1
      %p390 = por %p388, %p389
      %p391 = scmp.ne.s32.totalorder %s382, %s383
      %p392 = scmp.eq.s32.totalorder %s47, 0
      %p393 = por %p391, %p392
      %p394 = scmp.ne.s32.totalorder %s382, %s383
      %p395 = scmp.eq.s32.totalorder %s48, 1
      %p396 = por %p394, %p395
      %p398 = scmp.ne.s32.totalorder %s383, %s397
      %p399 = scmp.eq.s32.totalorder %s48, 0
      %p400 = por %p398, %p399
      %s402 = sadd.s32 %s401, 1
      %p405 = scmp.eq.s32.totalorder %s42, 1
      %p406 = scmp.ne.s32.totalorder %s401, %s403
      %p407 = scmp.eq.s32.totalorder %s42, 0
      %p408 = por %p406, %p407
      %p409 = scmp.ne.s32.totalorder %s401, %s403
      %p410 = scmp.eq.s32.totalorder %s47, 1
      %p411 = por %p409, %p410
      %p412 = scmp.ne.s32.totalorder %s403, %s404
      %p413 = scmp.eq.s32.totalorder %s47, 0
      %p414 = por %p412, %p413
      %p415 = scmp.ne.s32.totalorder %s403, %s404
      %p416 = scmp.eq.s32.totalorder %s48, 1
      %p417 = por %p415, %p416
      %p419 = scmp.ne.s32.totalorder %s404, %s418
      %p420 = scmp.eq.s32.totalorder %s48, 0
      %p421 = por %p419, %p420
      %s423 = sadd.s32 %s422, 1
      %p426 = scmp.eq.s32.totalorder %s42, 1
      %p427 = scmp.ne.s32.totalorder %s422, %s424
      %p428 = scmp.eq.s32.totalorder %s42, 0
      %p429 = por %p427, %p428
      %p430 = scmp.ne.s32.totalorder %s422, %s424
      %p431 = scmp.eq.s32.totalorder %s47, 1
      %p432 = por %p430, %p431
      %p433 = scmp.ne.s32.totalorder %s424, %s425
      %p434 = scmp.eq.s32.totalorder %s47, 0
      %p435 = por %p433, %p434
      %p436 = scmp.ne.s32.totalorder %s424, %s425
      %p437 = scmp.eq.s32.totalorder %s48, 1
      %p438 = por %p436, %p437
      %p440 = scmp.ne.s32.totalorder %s425, %s439
      %p441 = scmp.eq.s32.totalorder %s48, 0
      %p442 = por %p440, %p441
      %s444 = sadd.s32 %s443, 1
      %p447 = scmp.eq.s32.totalorder %s42, 1
      %p448 = scmp.ne.s32.totalorder %s443, %s445
      %p449 = scmp.eq.s32.totalorder %s42, 0
      %p450 = por %p448, %p449
      %p451 = scmp.ne.s32.totalorder %s443, %s445
      %p452 = scmp.eq.s32.totalorder %s47, 1
      %p453 = por %p451, %p452
      %p454 = scmp.ne.s32.totalorder %s445, %s446
      %p455 = scmp.eq.s32.totalorder %s47, 0
      %p456 = por %p454, %p455
      %p457 = scmp.ne.s32.totalorder %s445, %s446
      %p458 = scmp.eq.s32.totalorder %s48, 1
      %p459 = por %p457, %p458
      %p461 = scmp.ne.s32.totalorder %s446, %s460
      %p462 = scmp.eq.s32.totalorder %s48, 0
      %p463 = por %p461, %p462
      %s465 = sadd.s32 %s464, 1
      %p468 = scmp.eq.s32.totalorder %s42, 1
      %p469 = scmp.ne.s32.totalorder %s464, %s466
      %p470 = scmp.eq.s32.totalorder %s42, 0
      %p471 = por %p469, %p470
      %p472 = scmp.ne.s32.totalorder %s464, %s466
      %p473 = scmp.eq.s32.totalorder %s47, 1
      %p474 = por %p472, %p473
      %p475 = scmp.ne.s32.totalorder %s466, %s467
      %p476 = scmp.eq.s32.totalorder %s47, 0
      %p477 = por %p475, %p476
      %p478 = scmp.ne.s32.totalorder %s466, %s467
      %p479 = scmp.eq.s32.totalorder %s48, 1
      %p480 = por %p478, %p479
      %p482 = scmp.ne.s32.totalorder %s467, %s481
      %p483 = scmp.eq.s32.totalorder %s48, 0
      %p484 = por %p482, %p483
      %s486 = sadd.s32 %s485, 1
      %p489 = scmp.eq.s32.totalorder %s42, 1
      %p490 = scmp.ne.s32.totalorder %s485, %s487
      %p491 = scmp.eq.s32.totalorder %s42, 0
      %p492 = por %p490, %p491
      %p493 = scmp.ne.s32.totalorder %s485, %s487
      %p494 = scmp.eq.s32.totalorder %s47, 1
      %p495 = por %p493, %p494
      %p496 = scmp.ne.s32.totalorder %s487, %s488
      %p497 = scmp.eq.s32.totalorder %s47, 0
      %p498 = por %p496, %p497
      %p499 = scmp.ne.s32.totalorder %s487, %s488
      %p500 = scmp.eq.s32.totalorder %s48, 1
      %p501 = por %p499, %p500
      %p503 = scmp.ne.s32.totalorder %s488, %s502
      %p504 = scmp.eq.s32.totalorder %s48, 0
      %p505 = por %p503, %p504
      %s507 = sadd.s32 %s506, 1
      %p510 = scmp.eq.s32.totalorder %s42, 1
      %p511 = scmp.ne.s32.totalorder %s506, %s508
      %p512 = scmp.eq.s32.totalorder %s42, 0
      %p513 = por %p511, %p512
      %p514 = scmp.ne.s32.totalorder %s506, %s508
      %p515 = scmp.eq.s32.totalorder %s47, 1
      %p516 = por %p514, %p515
      %p517 = scmp.ne.s32.totalorder %s508, %s509
      %p518 = scmp.eq.s32.totalorder %s47, 0
      %p519 = por %p517, %p518
      %p520 = scmp.ne.s32.totalorder %s508, %s509
      %p521 = scmp.eq.s32.totalorder %s48, 1
      %p522 = por %p520, %p521
      %p524 = scmp.ne.s32.totalorder %s509, %s523
      %p525 = scmp.eq.s32.totalorder %s48, 0
      %p526 = por %p524, %p525
      %s528 = sadd.s32 %s527, 1
      %p531 = scmp.eq.s32.totalorder %s42, 1
      %p532 = scmp.ne.s32.totalorder %s527, %s529
      %p533 = scmp.eq.s32.totalorder %s42, 0
      %p534 = por %p532, %p533
      %p535 = scmp.ne.s32.totalorder %s527, %s529
      %p536 = scmp.eq.s32.totalorder %s47, 1
      %p537 = por %p535, %p536
      %p538 = scmp.ne.s32.totalorder %s529, %s530
      %p539 = scmp.eq.s32.totalorder %s47, 0
      %p540 = por %p538, %p539
      %p541 = scmp.ne.s32.totalorder %s529, %s530
      %p542 = scmp.eq.s32.totalorder %s48, 1
      %p543 = por %p541, %p542
      %p545 = scmp.ne.s32.totalorder %s530, %s544
      %p546 = scmp.eq.s32.totalorder %s48, 0
      %p547 = por %p545, %p546
      %s548 = ssub.s32 %s42, %s49
      %p549 = scmp.eq.s32.totalorder %s548, 0
      %s551 = sadd.s32 %s550, 1
      %s552 = scalar_select %p549, %s550, %s551
      %p555 = pneg %p549
      %p556 = scmp.eq.s32.totalorder %s42, 1
      %p557 = por %p555, %p556
      %p558 = scmp.ne.s32.totalorder %s550, %s553
      %p559 = scmp.eq.s32.totalorder %s42, 0
      %p560 = por %p558, %p559
      %p561 = scmp.ne.s32.totalorder %s550, %s553
      %p562 = scmp.eq.s32.totalorder %s47, 1
      %p563 = por %p561, %p562
      %p564 = scmp.ne.s32.totalorder %s553, %s554
      %p565 = scmp.eq.s32.totalorder %s47, 0
      %p566 = por %p564, %p565
      %p567 = scmp.ne.s32.totalorder %s553, %s554
      %p568 = scmp.eq.s32.totalorder %s48, 1
      %p569 = por %p567, %p568
      %p571 = scmp.ne.s32.totalorder %s554, %s570
      %p572 = scmp.eq.s32.totalorder %s48, 0
      %p573 = por %p571, %p572
      %p574 = scmp.le.s32.totalorder 1, %s42
      %p575 = scmp.lt.s32.totalorder %s42, 3
      %p576 = pnand %p574, %p575
      %p577 = pneg %p576
      // Predicated region
      $region9: #{tpu_custom_call.1} parent=5 // pred_check
        _
      $region10: #{tpu_custom_call.1} parent=5 // pred_check_branch
        %579 = sbr.rel (%p576) target = $region12
      $region11: #{tpu_custom_call.1} parent=5 // pred_region
        %s580 = ssub.s32 %s42, 1
        // Predicated region
        $region13: #{tpu_custom_call.1} parent=11 // pred_check
          %p581 = pneg %p141
        $region14: #{tpu_custom_call.1} parent=11 // pred_check_branch
          %583 = sbr.rel (%p581) target = $region16
        $region15: #{tpu_custom_call.1} parent=11 // pred_region
          %s585 = ssub.s32 512, 512
          %586 = vsyncadd [#allocation9], %s585
          %s587 = sshll.u32 [#allocation8], 4
          %s588 = int_to_ptr.vmem [resolvable:$true] %s587
          %593 = dma.hbm_to_vmem [thread:$0]  %s3, 512, %s588, [#allocation9], 64, 64, 4
        $region16: #{tpu_custom_call.1} parent=11 // pred_fallthru
          _
        // Predicated region
        $region17: #{tpu_custom_call.1} parent=11 // pred_check
          %p594 = pneg %p162
        $region18: #{tpu_custom_call.1} parent=11 // pred_check_branch
          %596 = sbr.rel (%p594) target = $region20
        $region19: #{tpu_custom_call.1} parent=11 // pred_region
          _
        $region20: #{tpu_custom_call.1} parent=11 // pred_fallthru
          _
        // Predicated region
        $region21: #{tpu_custom_call.1} parent=11 // pred_check
          %p597 = pneg %p183
        $region22: #{tpu_custom_call.1} parent=11 // pred_check_branch
          %599 = sbr.rel (%p597) target = $region24
        $region23: #{tpu_custom_call.1} parent=11 // pred_region
          %s601 = ssub.s32 512, 512
          %602 = vsyncadd [#allocation9], %s601
          %s603 = sshll.u32 [#allocation10], 4
          %s604 = int_to_ptr.vmem [resolvable:$true] %s603
          %609 = dma.hbm_to_vmem [thread:$0]  %s5, 512, %s604, [#allocation9], 64, 64, 4
        $region24: #{tpu_custom_call.1} parent=11 // pred_fallthru
          _
        // Predicated region
        $region25: #{tpu_custom_call.1} parent=11 // pred_check
          %p610 = pneg %p204
        $region26: #{tpu_custom_call.1} parent=11 // pred_check_branch
          %612 = sbr.rel (%p610) target = $region28
        $region27: #{tpu_custom_call.1} parent=11 // pred_region
          _
        $region28: #{tpu_custom_call.1} parent=11 // pred_fallthru
          _
        // Predicated region
        $region29: #{tpu_custom_call.1} parent=11 // pred_check
          %p613 = pneg %p225
        $region30: #{tpu_custom_call.1} parent=11 // pred_check_branch
          %615 = sbr.rel (%p613) target = $region32
        $region31: #{tpu_custom_call.1} parent=11 // pred_region
          %s617 = ssub.s32 512, 512
          %618 = vsyncadd [#allocation12], %s617
          %s619 = sshll.u32 [#allocation11], 4
          %s620 = int_to_ptr.vmem [resolvable:$true] %s619
          %625 = dma.hbm_to_vmem [thread:$0]  %s7, 512, %s620, [#allocation12], 64, 64, 4
        $region32: #{tpu_custom_call.1} parent=11 // pred_fallthru
          _
        // Predicated region
        $region33: #{tpu_custom_call.1} parent=11 // pred_check
          %p626 = pneg %p246
        $region34: #{tpu_custom_call.1} parent=11 // pred_check_branch
          %628 = sbr.rel (%p626) target = $region36
        $region35: #{tpu_custom_call.1} parent=11 // pred_region
          _
        $region36: #{tpu_custom_call.1} parent=11 // pred_fallthru
          _
        // Predicated region
        $region37: #{tpu_custom_call.1} parent=11 // pred_check
          %p629 = pneg %p267
        $region38: #{tpu_custom_call.1} parent=11 // pred_check_branch
          %631 = sbr.rel (%p629) target = $region40
        $region39: #{tpu_custom_call.1} parent=11 // pred_region
          %s633 = ssub.s32 512, 512
          %634 = vsyncadd [#allocation12], %s633
          %s635 = sshll.u32 [#allocation13], 4
          %s636 = int_to_ptr.vmem [resolvable:$true] %s635
          %641 = dma.hbm_to_vmem [thread:$0]  %s9, 512, %s636, [#allocation12], 64, 64, 4
        $region40: #{tpu_custom_call.1} parent=11 // pred_fallthru
          _
        // Predicated region
        $region41: #{tpu_custom_call.1} parent=11 // pred_check
          %p642 = pneg %p288
        $region42: #{tpu_custom_call.1} parent=11 // pred_check_branch
          %644 = sbr.rel (%p642) target = $region44
        $region43: #{tpu_custom_call.1} parent=11 // pred_region
          _
        $region44: #{tpu_custom_call.1} parent=11 // pred_fallthru
          _
        // Predicated region
        $region45: #{tpu_custom_call.1} parent=11 // pred_check
          %p645 = pneg %p309
        $region46: #{tpu_custom_call.1} parent=11 // pred_check_branch
          %647 = sbr.rel (%p645) target = $region48
        $region47: #{tpu_custom_call.1} parent=11 // pred_region
          %s649 = ssub.s32 512, 512
          %650 = vsyncadd [#allocation15], %s649
          %s651 = sshll.u32 [#allocation14], 4
          %s652 = int_to_ptr.vmem [resolvable:$true] %s651
          %657 = dma.hbm_to_vmem [thread:$0]  %s11, 512, %s652, [#allocation15], 64, 64, 4
        $region48: #{tpu_custom_call.1} parent=11 // pred_fallthru
          _
        // Predicated region
        $region49: #{tpu_custom_call.1} parent=11 // pred_check
          %p658 = pneg %p330
        $region50: #{tpu_custom_call.1} parent=11 // pred_check_branch
          %660 = sbr.rel (%p658) target = $region52
        $region51: #{tpu_custom_call.1} parent=11 // pred_region
          _
        $region52: #{tpu_custom_call.1} parent=11 // pred_fallthru
          _
        // Predicated region
        $region53: #{tpu_custom_call.1} parent=11 // pred_check
          %p661 = pneg %p351
        $region54: #{tpu_custom_call.1} parent=11 // pred_check_branch
          %663 = sbr.rel (%p661) target = $region56
        $region55: #{tpu_custom_call.1} parent=11 // pred_region
          %s665 = ssub.s32 8192, 8192
          %666 = vsyncadd [#allocation15], %s665
          %s667 = sshll.u32 [#allocation16], 4
          %s668 = int_to_ptr.vmem [resolvable:$true] %s667
          %673 = dma.hbm_to_vmem [thread:$0]  %s13, 8192, %s668, [#allocation15], 1024, 1024, 64
        $region56: #{tpu_custom_call.1} parent=11 // pred_fallthru
          _
        // Predicated region
        $region57: #{tpu_custom_call.1} parent=11 // pred_check
          %p674 = pneg %p372
        $region58: #{tpu_custom_call.1} parent=11 // pred_check_branch
          %676 = sbr.rel (%p674) target = $region60
        $region59: #{tpu_custom_call.1} parent=11 // pred_region
          %s678 = ssub.s32 512, 512
          %679 = vsyncadd [#allocation18], %s678
          %s680 = sshll.u32 [#allocation17], 4
          %s681 = int_to_ptr.vmem [resolvable:$true] %s680
          %686 = dma.hbm_to_vmem [thread:$0]  %s14, 512, %s681, [#allocation18], 256, 256, 16
        $region60: #{tpu_custom_call.1} parent=11 // pred_fallthru
          _
        // Predicated region
        $region61: #{tpu_custom_call.1} parent=11 // pred_check
          %p687 = pneg %p393
        $region62: #{tpu_custom_call.1} parent=11 // pred_check_branch
          %689 = sbr.rel (%p687) target = $region64
        $region63: #{tpu_custom_call.1} parent=11 // pred_region
          %s691 = ssub.s32 8192, 8192
          %692 = vsyncadd [#allocation18], %s691
          %s693 = sshll.u32 [#allocation19], 4
          %s694 = int_to_ptr.vmem [resolvable:$true] %s693
          %699 = dma.hbm_to_vmem [thread:$0]  %s15, 8192, %s694, [#allocation18], 1024, 1024, 64
        $region64: #{tpu_custom_call.1} parent=11 // pred_fallthru
          _
        // Predicated region
        $region65: #{tpu_custom_call.1} parent=11 // pred_check
          %p700 = pneg %p414
        $region66: #{tpu_custom_call.1} parent=11 // pred_check_branch
          %702 = sbr.rel (%p700) target = $region68
        $region67: #{tpu_custom_call.1} parent=11 // pred_region
          _
        $region68: #{tpu_custom_call.1} parent=11 // pred_fallthru
          _
        // Predicated region
        $region69: #{tpu_custom_call.1} parent=11 // pred_check
          %p703 = pneg %p435
        $region70: #{tpu_custom_call.1} parent=11 // pred_check_branch
          %705 = sbr.rel (%p703) target = $region72
        $region71: #{tpu_custom_call.1} parent=11 // pred_region
          _
        $region72: #{tpu_custom_call.1} parent=11 // pred_fallthru
          _
        // Predicated region
        $region73: #{tpu_custom_call.1} parent=11 // pred_check
          %p706 = pneg %p456
        $region74: #{tpu_custom_call.1} parent=11 // pred_check_branch
          %708 = sbr.rel (%p706) target = $region76
        $region75: #{tpu_custom_call.1} parent=11 // pred_region
          _
        $region76: #{tpu_custom_call.1} parent=11 // pred_fallthru
          _
        // Predicated region
        $region77: #{tpu_custom_call.1} parent=11 // pred_check
          %p709 = pneg %p477
        $region78: #{tpu_custom_call.1} parent=11 // pred_check_branch
          %711 = sbr.rel (%p709) target = $region80
        $region79: #{tpu_custom_call.1} parent=11 // pred_region
          _
        $region80: #{tpu_custom_call.1} parent=11 // pred_fallthru
          _
        // Predicated region
        $region81: #{tpu_custom_call.1} parent=11 // pred_check
          %p712 = pneg %p498
        $region82: #{tpu_custom_call.1} parent=11 // pred_check_branch
          %714 = sbr.rel (%p712) target = $region84
        $region83: #{tpu_custom_call.1} parent=11 // pred_region
          _
        $region84: #{tpu_custom_call.1} parent=11 // pred_fallthru
          _
        // Predicated region
        $region85: #{tpu_custom_call.1} parent=11 // pred_check
          %p715 = pneg %p519
        $region86: #{tpu_custom_call.1} parent=11 // pred_check_branch
          %717 = sbr.rel (%p715) target = $region88
        $region87: #{tpu_custom_call.1} parent=11 // pred_region
          _
        $region88: #{tpu_custom_call.1} parent=11 // pred_fallthru
          _
        // Predicated region
        $region89: #{tpu_custom_call.1} parent=11 // pred_check
          %p718 = pneg %p540
        $region90: #{tpu_custom_call.1} parent=11 // pred_check_branch
          %720 = sbr.rel (%p718) target = $region92
        $region91: #{tpu_custom_call.1} parent=11 // pred_region
          _
        $region92: #{tpu_custom_call.1} parent=11 // pred_fallthru
          _
      $region12: #{tpu_custom_call.1} parent=5 // pred_fallthru
        _
      %p721 = scmp.lt.s32.totalorder %s42, 2
      // Predicated region
      $region93: #{tpu_custom_call.1} parent=5 // pred_check
        %p722 = pneg %p721
      $region94: #{tpu_custom_call.1} parent=5 // pred_check_branch
        %724 = sbr.rel (%p722) target = $region96
      $region95: #{tpu_custom_call.1} parent=5 // pred_region
        // Predicated region
        $region97: #{tpu_custom_call.1} parent=95 // pred_check
          %p725 = pneg %p62
        $region98: #{tpu_custom_call.1} parent=95 // pred_check_branch
          %727 = sbr.rel (%p725) target = $region100
        $region99: #{tpu_custom_call.1} parent=95 // pred_region
          %s728 = sand.u32 %s52, 1
          %s729 = scalar_lea.sflag [#allocation3], %s728
          %s730 = sand.u32 %s52, 1
          %s731 = smul.addr %s730, 8
          %s732 = scalar_lea.vmem [#allocation2], %s731
          %s734 = ssub.s32 128, 128
          %735 = vsyncadd %s729, %s734
          %s736 = smul.addr %s42, 128
          %s737 = scalar_lea.hbm %s0, %s736
          %s739 = sshll.u32 %s732, 4
          %s740 = int_to_ptr.vmem [resolvable:$true] %s739
          %742 = dma.hbm_to_vmem [thread:$0]  %s737, 128, %s740, %s729
        $region100: #{tpu_custom_call.1} parent=95 // pred_fallthru
          _
        // Predicated region
        $region101: #{tpu_custom_call.1} parent=95 // pred_check
          %p743 = pneg %p88
        $region102: #{tpu_custom_call.1} parent=95 // pred_check_branch
          %745 = sbr.rel (%p743) target = $region104
        $region103: #{tpu_custom_call.1} parent=95 // pred_region
          %s746 = sand.u32 %s42, 1
          %s747 = scalar_lea.sflag [#allocation6], %s746
          %s748 = sand.u32 %s78, 1
          %s749 = smul.addr %s748, 8
          %s750 = scalar_lea.vmem [#allocation5], %s749
          %s752 = ssub.s32 128, 128
          %753 = vsyncadd %s747, %s752
          %s754 = smul.addr %s42, 128
          %s755 = scalar_lea.hbm %s1, %s754
          %s757 = sshll.u32 %s750, 4
          %s758 = int_to_ptr.vmem [resolvable:$true] %s757
          %760 = dma.hbm_to_vmem [thread:$0]  %s755, 128, %s758, %s747
        $region104: #{tpu_custom_call.1} parent=95 // pred_fallthru
          _
        // Predicated region
        $region105: #{tpu_custom_call.1} parent=95 // pred_check
          %p761 = pneg %p114
        $region106: #{tpu_custom_call.1} parent=95 // pred_check_branch
          %763 = sbr.rel (%p761) target = $region108
        $region107: #{tpu_custom_call.1} parent=95 // pred_region
          %s764 = sand.u32 %s42, 1
          %s765 = scalar_lea.sflag [#allocation6], %s764
          %s766 = sand.u32 %s104, 1
          %s767 = smul.addr %s766, 8
          %s768 = scalar_lea.vmem [#allocation7], %s767
          %s770 = ssub.s32 128, 128
          %771 = vsyncadd %s765, %s770
          %s772 = smul.addr %s42, 128
          %s773 = scalar_lea.hbm %s2, %s772
          %s775 = sshll.u32 %s768, 4
          %s776 = int_to_ptr.vmem [resolvable:$true] %s775
          %778 = dma.hbm_to_vmem [thread:$0]  %s773, 128, %s776, %s765
        $region108: #{tpu_custom_call.1} parent=95 // pred_fallthru
          _
      $region96: #{tpu_custom_call.1} parent=5 // pred_fallthru
        _
      %p779 = scmp.le.s32.totalorder 1, %s42
      %p780 = scmp.lt.s32.totalorder %s42, 3
      %p781 = pnand %p779, %p780
      %p782 = pneg %p781
      // Predicated region
      $region109: #{tpu_custom_call.1} parent=5 // pred_check
        _
      $region110: #{tpu_custom_call.1} parent=5 // pred_check_branch
        %784 = sbr.rel (%p781) target = $region112
      $region111: #{tpu_custom_call.1} parent=5 // pred_region
        %s785 = ssub.s32 %s42, 1
        %s786 = sand.u32 %s55, 1
        %s787 = scalar_lea.sflag [#allocation3], %s786
        %s788 = sand.u32 %s55, 1
        %s789 = smul.addr %s788, 8
        %s790 = scalar_lea.vmem [#allocation2], %s789
        // Predicated region
        $region113: #{tpu_custom_call.1} parent=111 // pred_check
          %p791 = pneg %p68
        $region114: #{tpu_custom_call.1} parent=111 // pred_check_branch
          %793 = sbr.rel (%p791) target = $region116
        $region115: #{tpu_custom_call.1} parent=111 // pred_region
          %794 = dma.done %s787, 128
        $region116: #{tpu_custom_call.1} parent=111 // pred_fallthru
          _
        %s795 = sand.u32 %s47, 1
        %s796 = scalar_lea.sflag [#allocation6], %s795
        %s797 = sand.u32 %s81, 1
        %s798 = smul.addr %s797, 8
        %s799 = scalar_lea.vmem [#allocation5], %s798
        // Predicated region
        $region117: #{tpu_custom_call.1} parent=111 // pred_check
          %p800 = pneg %p94
        $region118: #{tpu_custom_call.1} parent=111 // pred_check_branch
          %802 = sbr.rel (%p800) target = $region120
        $region119: #{tpu_custom_call.1} parent=111 // pred_region
          %803 = dma.done %s796, 128
        $region120: #{tpu_custom_call.1} parent=111 // pred_fallthru
          _
        %s804 = sand.u32 %s47, 1
        %s805 = scalar_lea.sflag [#allocation6], %s804
        %s806 = sand.u32 %s107, 1
        %s807 = smul.addr %s806, 8
        %s808 = scalar_lea.vmem [#allocation7], %s807
        // Predicated region
        $region121: #{tpu_custom_call.1} parent=111 // pred_check
          %p809 = pneg %p120
        $region122: #{tpu_custom_call.1} parent=111 // pred_check_branch
          %811 = sbr.rel (%p809) target = $region124
        $region123: #{tpu_custom_call.1} parent=111 // pred_region
          %812 = dma.done %s805, 128
        $region124: #{tpu_custom_call.1} parent=111 // pred_fallthru
          _
        // Predicated region
        $region125: #{tpu_custom_call.1} parent=111 // pred_check
          %p813 = pneg %p141
        $region126: #{tpu_custom_call.1} parent=111 // pred_check_branch
          %815 = sbr.rel (%p813) target = $region128
        $region127: #{tpu_custom_call.1} parent=111 // pred_region
          %816 = dma.done [#allocation9], 512
        $region128: #{tpu_custom_call.1} parent=111 // pred_fallthru
          _
        // Predicated region
        $region129: #{tpu_custom_call.1} parent=111 // pred_check
          %p817 = pneg %p183
        $region130: #{tpu_custom_call.1} parent=111 // pred_check_branch
          %819 = sbr.rel (%p817) target = $region132
        $region131: #{tpu_custom_call.1} parent=111 // pred_region
          %820 = dma.done [#allocation9], 512
        $region132: #{tpu_custom_call.1} parent=111 // pred_fallthru
          _
        // Predicated region
        $region133: #{tpu_custom_call.1} parent=111 // pred_check
          %p821 = pneg %p225
        $region134: #{tpu_custom_call.1} parent=111 // pred_check_branch
          %823 = sbr.rel (%p821) target = $region136
        $region135: #{tpu_custom_call.1} parent=111 // pred_region
          %824 = dma.done [#allocation12], 512
        $region136: #{tpu_custom_call.1} parent=111 // pred_fallthru
          _
        // Predicated region
        $region137: #{tpu_custom_call.1} parent=111 // pred_check
          %p825 = pneg %p267
        $region138: #{tpu_custom_call.1} parent=111 // pred_check_branch
          %827 = sbr.rel (%p825) target = $region140
        $region139: #{tpu_custom_call.1} parent=111 // pred_region
          %828 = dma.done [#allocation12], 512
        $region140: #{tpu_custom_call.1} parent=111 // pred_fallthru
          _
        // Predicated region
        $region141: #{tpu_custom_call.1} parent=111 // pred_check
          %p829 = pneg %p309
        $region142: #{tpu_custom_call.1} parent=111 // pred_check_branch
          %831 = sbr.rel (%p829) target = $region144
        $region143: #{tpu_custom_call.1} parent=111 // pred_region
          %832 = dma.done [#allocation15], 512
        $region144: #{tpu_custom_call.1} parent=111 // pred_fallthru
          _
        // Predicated region
        $region145: #{tpu_custom_call.1} parent=111 // pred_check
          %p833 = pneg %p351
        $region146: #{tpu_custom_call.1} parent=111 // pred_check_branch
          %835 = sbr.rel (%p833) target = $region148
        $region147: #{tpu_custom_call.1} parent=111 // pred_region
          %836 = dma.done [#allocation15], 8192
        $region148: #{tpu_custom_call.1} parent=111 // pred_fallthru
          _
        // Predicated region
        $region149: #{tpu_custom_call.1} parent=111 // pred_check
          %p837 = pneg %p372
        $region150: #{tpu_custom_call.1} parent=111 // pred_check_branch
          %839 = sbr.rel (%p837) target = $region152
        $region151: #{tpu_custom_call.1} parent=111 // pred_region
          %840 = dma.done [#allocation18], 512
        $region152: #{tpu_custom_call.1} parent=111 // pred_fallthru
          _
        // Predicated region
        $region153: #{tpu_custom_call.1} parent=111 // pred_check
          %p841 = pneg %p393
        $region154: #{tpu_custom_call.1} parent=111 // pred_check_branch
          %843 = sbr.rel (%p841) target = $region156
        $region155: #{tpu_custom_call.1} parent=111 // pred_region
          %844 = dma.done [#allocation18], 8192
        $region156: #{tpu_custom_call.1} parent=111 // pred_fallthru
          _
        %s845 = sand.u32 %s55, 1
        %s846 = scalar_lea.sflag [#allocation3], %s845
        %s847 = sand.u32 %s55, 1
        %s848 = smul.addr %s847, 8
        %s849 = scalar_lea.vmem [#allocation2], %s848
        %p850 = pneg %p68
        %p851 = pneg %p65
        %s852 = sand.u32 %s47, 1
        %s853 = scalar_lea.sflag [#allocation6], %s852
        %s854 = sand.u32 %s81, 1
        %s855 = smul.addr %s854, 8
        %s856 = scalar_lea.vmem [#allocation5], %s855
        %p857 = pneg %p94
        %p858 = pneg %p91
        %s859 = sand.u32 %s47, 1
        %s860 = scalar_lea.sflag [#allocation6], %s859
        %s861 = sand.u32 %s107, 1
        %s862 = smul.addr %s861, 8
        %s863 = scalar_lea.vmem [#allocation7], %s862
        %p864 = pneg %p120
        %p865 = pneg %p117
        %p866 = pneg %p141
        %p867 = pneg %p138
        %p868 = pneg %p162
        %p869 = pneg %p159
        %p870 = pneg %p183
        %p871 = pneg %p180
        %p872 = pneg %p204
        %p873 = pneg %p201
        %p874 = pneg %p225
        %p875 = pneg %p222
        %p876 = pneg %p246
        %p877 = pneg %p243
        %p878 = pneg %p267
        %p879 = pneg %p264
        %p880 = pneg %p288
        %p881 = pneg %p285
        %p882 = pneg %p309
        %p883 = pneg %p306
        %p884 = pneg %p330
        %p885 = pneg %p327
        %p886 = pneg %p351
        %p887 = pneg %p348
        %p888 = pneg %p372
        %p889 = pneg %p369
        %p890 = pneg %p393
        %p891 = pneg %p390
        %p892 = pneg %p414
        %p893 = pneg %p411
        %p894 = pneg %p435
        %p895 = pneg %p432
        %p896 = pneg %p456
        %p897 = pneg %p453
        %p898 = pneg %p477
        %p899 = pneg %p474
        %p900 = pneg %p498
        %p901 = pneg %p495
        %p902 = pneg %p519
        %p903 = pneg %p516
        %p904 = pneg %p540
        %p905 = pneg %p537
        %p906 = pneg %p566
        %p907 = pneg %p563
        %s908 = sand.u32 %s553, 1
        %s909 = scalar_lea.sflag [#allocation4], %s908
        %s910 = sand.u32 %s553, 1
        %s911 = smul.addr %s910, 8
        %s912 = scalar_lea.vmem [#allocation20], %s911
        %v914 = vld [vmem:[%s790] sm:$0xff]
        %v915 = vld [vmem:[%s799] sm:$0xff]
        %v916 = vld [vmem:[%s808] sm:$0xff]
        %v917 = vpack.c.bf16 %v915, %v915
        %v918 = vpack.c.bf16 %v914, %v914
        %v919 = vld [vmem:[#allocation8] sm:$0xf]
        %v920 = vld [vmem:[#allocation8 + $0x4] sm:$0xf]
        %v921 = vld [vmem:[#allocation8 + $0x8] sm:$0xf]
        %v922 = vld [vmem:[#allocation8 + $0xc] sm:$0xf]
        %v923 = vld [vmem:[%s4] sm:$0x1]
        %v925 = vlaneseq
        %v926 = vshrl.u32 %v925, 7
        %v927 = vsub.s32 0, %v926
        %v928 = vrot.slane %v923, %v927
        %v934 = vunpack.c.l.b16 %v919
        %v935 = vunpack.c.l.b16 %v920
        %v936 = vunpack.c.l.b16 %v921
        %v937 = vunpack.c.l.b16 %v922
        %v938 = vpack.c.b16 %v935, %v934
        %v939 = vpack.c.b16 %v937, %v936
        %vm942 = vcmask 261120
        %v944 = vsel %vm942, %v918, 0
        %946 = vmatprep.subr.bf16.mxu0 0
        %947 = vmatpush1.bf16.msra.mxu0 0
        %948 = vmatprep.subr.bf16.mxu0 0
        %949 = vmatpush1.bf16.msra.mxu0 0
        %950 = vmatprep.subr.bf16.mxu0 0
        %951 = vmatpush1.bf16.msra.mxu0 0
        %952 = vmatprep.subr.bf16.mxu0 0
        %953 = vmatpush1.bf16.msra.mxu0 0
        %954 = vmatprep.subr.bf16.mxu0 0
        %955 = vmatpush1.bf16.msra.mxu0 0
        %956 = vmatprep.subr.bf16.mxu0 0
        %957 = vmatpush1.bf16.msra.mxu0 0
        %958 = vmatprep.subr.bf16.mxu0 0
        %959 = vmatpush1.bf16.msra.mxu0 %v939
        %960 = vmatprep.subr.bf16.mxu0 0
        %961 = vmatpush1.bf16.msra.mxu0 %v938
        %962 = vmatprep.subr.bf16.mxu0 0
        %963 = vmatpush2.bf16.msra.mxu0 0
        %964 = vmatprep.subr.bf16.mxu0 0
        %965 = vmatpush2.bf16.msra.mxu0 0
        %966 = vmatprep.subr.bf16.mxu0 0
        %967 = vmatpush2.bf16.msra.mxu0 0
        %968 = vmatprep.subr.bf16.mxu0 0
        %969 = vmatpush2.bf16.msra.mxu0 0
        %970 = vmatprep.subr.bf16.mxu0 0
        %971 = vmatpush2.bf16.msra.mxu0 0
        %972 = vmatprep.subr.bf16.mxu0 0
        %973 = vmatpush2.bf16.msra.mxu0 0
        %974 = vmatprep.subr.bf16.mxu0 0
        %975 = vmatpush2.bf16.msra.mxu0 0
        %976 = vmatprep.subr.bf16.mxu0 0
        %977 = vmatpush2.bf16.msra.mxu0 0
        %978 = vmatprep.mubr.bf16.mxu0 0
        %979 = vmatmul.mubr.bf16.gmra.mxu0 %v944
        %v980 = vpop.f32.mrf.mxu0
        %v981 = vadd.f32 %v928, %v980
        %v982 = vpop.f32.mrf.mxu0
        %v983 = vpop.f32.mrf.mxu0
        %v984 = vpop.f32.mrf.mxu0
        %985 = vdwg.mxu0
        %v986 = vld [vmem:[#allocation10] sm:$0xf]
        %v987 = vld [vmem:[#allocation10 + $0x4] sm:$0xf]
        %v988 = vld [vmem:[#allocation10 + $0x8] sm:$0xf]
        %v989 = vld [vmem:[#allocation10 + $0xc] sm:$0xf]
        %v990 = vpack.c.bf16 %v981, %v981
        %992 = vrot.lane.b32.xlu0 %v990, 96
        %v993 = vpop.permute.xlu0 %992
        %vm994 = vcmask 64512
        %v996 = vsel %vm994, %v990, 0
        %v999 = vsel %vm994, %v993, 0
        %1001 = vmatprep.subr.bf16.mxu0 0
        %1002 = vmatpush1.bf16.xpose.msra.mxu0 0
        %1003 = vmatprep.subr.bf16.mxu0 0
        %1004 = vmatpush1.bf16.xpose.msra.mxu0 0
        %1005 = vmatprep.subr.bf16.mxu0 0
        %1006 = vmatpush1.bf16.xpose.msra.mxu0 0
        %1007 = vmatprep.subr.bf16.mxu0 0
        %1008 = vmatpush1.bf16.xpose.msra.mxu0 0
        %1009 = vmatprep.subr.bf16.mxu0 0
        %1010 = vmatpush1.bf16.xpose.msra.mxu0 0
        %1011 = vmatprep.subr.bf16.mxu0 0
        %1012 = vmatpush1.bf16.xpose.msra.mxu0 0
        %1013 = vmatprep.subr.bf16.mxu0 0
        %1014 = vmatpush1.bf16.xpose.msra.mxu0 0
        %1015 = vmatprep.subr.bf16.mxu0 0
        %1016 = vmatpush1.bf16.xpose.msra.mxu0 %v999
        %1017 = vmatprep.subr.bf16.mxu0 0
        %1018 = vmatpush2.bf16.xpose.msra.mxu0 0
        %1019 = vmatprep.subr.bf16.mxu0 0
        %1020 = vmatpush2.bf16.xpose.msra.mxu0 0
        %1021 = vmatprep.subr.bf16.mxu0 0
        %1022 = vmatpush2.bf16.xpose.msra.mxu0 0
        %1023 = vmatprep.subr.bf16.mxu0 0
        %1024 = vmatpush2.bf16.xpose.msra.mxu0 0
        %1025 = vmatprep.subr.bf16.mxu0 0
        %1026 = vmatpush2.bf16.xpose.msra.mxu0 0
        %1027 = vmatprep.subr.bf16.mxu0 0
        %1028 = vmatpush2.bf16.xpose.msra.mxu0 0
        %1029 = vmatprep.subr.bf16.mxu0 0
        %1030 = vmatpush2.bf16.xpose.msra.mxu0 0
        %1031 = vmatprep.subr.bf16.mxu0 0
        %1032 = vmatpush2.bf16.xpose.msra.mxu0 0
        %1033 = vmatprep.mubr.bf16.mxu0 0
        %1034 = vmatmul.mubr.bf16.gmra.mxu0 %v996
        %v1035 = vpop.f32.mrf.mxu0
        %v1036 = vadd.f32 0.0, %v1035
        %v1037 = vpop.f32.mrf.mxu0
        %v1038 = vpop.f32.mrf.mxu0
        %v1039 = vpop.f32.mrf.mxu0
        %1040 = vdwg.mxu0
        %v1041 = vmul.f32 %v1036, 0.35355338
        %v1042 = vadd.f32 %v1041, %v916
        %v1043 = vsel %vm994, %v1042, -inf
        %1044 = vmax.xlane.f32.xlu0 %v1043
        %v1045 = vpop.xlane.xlu0 %1044
        %v1046 = vsub.f32 %v1042, %v1045
        %v1047 = vmul.f32 %v1046, 1.442695
        %v1048 = vpow.pop %v1047
        %v1049 = vsel %vm994, %v1048, 0.0
        %1050 = vadd.xlane.f32.xlu0 %v1049
        %v1051 = vpop.xlane.xlu0 %1050
        %v1052 = vrcp.pop %v1051
        %v1053 = vmul.f32 %v1048, %v1052
        %v1054 = vpack.c.bf16 %v1053, %v1053
        %1055 = vrot.lane.b32.xlu0 %v990, 64
        %v1056 = vpop.permute.xlu0 %1055
        %v1058 = vsel %vm994, %v1054, 0
        %vm1060 = vcmask 1043456
        %v1062 = vsel %vm1060, %v1056, 0
        %1064 = vmatprep.subr.bf16.mxu0 0
        %1065 = vmatpush1.bf16.msra.mxu0 0
        %1066 = vmatprep.subr.bf16.mxu0 0
        %1067 = vmatpush1.bf16.msra.mxu0 0
        %1068 = vmatprep.subr.bf16.mxu0 0
        %1069 = vmatpush1.bf16.msra.mxu0 0
        %1070 = vmatprep.subr.bf16.mxu0 0
        %1071 = vmatpush1.bf16.msra.mxu0 0
        %1072 = vmatprep.subr.bf16.mxu0 0
        %1073 = vmatpush1.bf16.msra.mxu0 0
        %1074 = vmatprep.subr.bf16.mxu0 0
        %1075 = vmatpush1.bf16.msra.mxu0 0
        %1076 = vmatprep.subr.bf16.mxu0 0
        %1077 = vmatpush1.bf16.msra.mxu0 0
        %1078 = vmatprep.subr.bf16.mxu0 0
        %1079 = vmatpush1.bf16.msra.mxu0 %v1062
        %1080 = vmatprep.subr.bf16.mxu0 0
        %1081 = vmatpush2.bf16.msra.mxu0 0
        %1082 = vmatprep.subr.bf16.mxu0 0
        %1083 = vmatpush2.bf16.msra.mxu0 0
        %1084 = vmatprep.subr.bf16.mxu0 0
        %1085 = vmatpush2.bf16.msra.mxu0 0
        %1086 = vmatprep.subr.bf16.mxu0 0
        %1087 = vmatpush2.bf16.msra.mxu0 0
        %1088 = vmatprep.subr.bf16.mxu0 0
        %1089 = vmatpush2.bf16.msra.mxu0 0
        %1090 = vmatprep.subr.bf16.mxu0 0
        %1091 = vmatpush2.bf16.msra.mxu0 0
        %1092 = vmatprep.subr.bf16.mxu0 0
        %1093 = vmatpush2.bf16.msra.mxu0 0
        %1094 = vmatprep.subr.bf16.mxu0 0
        %1095 = vmatpush2.bf16.msra.mxu0 0
        %1096 = vmatprep.mubr.bf16.mxu0 0
        %1097 = vmatmul.mubr.bf16.gmra.mxu0 %v1058
        %v1098 = vpop.f32.mrf.mxu0
        %v1099 = vadd.f32 0.0, %v1098
        %v1100 = vpop.f32.mrf.mxu0
        %v1101 = vpop.f32.mrf.mxu0
        %v1102 = vpop.f32.mrf.mxu0
        %1103 = vdwg.mxu0
        %v1104 = vpack.c.bf16 %v1099, %v1099
        %1105 = vrot.lane.b32.xlu0 %v990, 120
        %v1106 = vpop.permute.xlu0 %1105
        %1107 = vrot.lane.b32.xlu0 %v990, 88
        %v1108 = vpop.permute.xlu0 %1107
        %v1110 = vsel %vm994, %v1106, 0
        %v1113 = vsel %vm994, %v1108, 0
        %1115 = vmatprep.subr.bf16.mxu0 0
        %1116 = vmatpush1.bf16.xpose.msra.mxu0 0
        %1117 = vmatprep.subr.bf16.mxu0 0
        %1118 = vmatpush1.bf16.xpose.msra.mxu0 0
        %1119 = vmatprep.subr.bf16.mxu0 0
        %1120 = vmatpush1.bf16.xpose.msra.mxu0 0
        %1121 = vmatprep.subr.bf16.mxu0 0
        %1122 = vmatpush1.bf16.xpose.msra.mxu0 0
        %1123 = vmatprep.subr.bf16.mxu0 0
        %1124 = vmatpush1.bf16.xpose.msra.mxu0 0
        %1125 = vmatprep.subr.bf16.mxu0 0
        %1126 = vmatpush1.bf16.xpose.msra.mxu0 0
        %1127 = vmatprep.subr.bf16.mxu0 0
        %1128 = vmatpush1.bf16.xpose.msra.mxu0 0
        %1129 = vmatprep.subr.bf16.mxu0 0
        %1130 = vmatpush1.bf16.xpose.msra.mxu0 %v1113
        %1131 = vmatprep.subr.bf16.mxu0 0
        %1132 = vmatpush2.bf16.xpose.msra.mxu0 0
        %1133 = vmatprep.subr.bf16.mxu0 0
        %1134 = vmatpush2.bf16.xpose.msra.mxu0 0
        %1135 = vmatprep.subr.bf16.mxu0 0
        %1136 = vmatpush2.bf16.xpose.msra.mxu0 0
        %1137 = vmatprep.subr.bf16.mxu0 0
        %1138 = vmatpush2.bf16.xpose.msra.mxu0 0
        %1139 = vmatprep.subr.bf16.mxu0 0
        %1140 = vmatpush2.bf16.xpose.msra.mxu0 0
        %1141 = vmatprep.subr.bf16.mxu0 0
        %1142 = vmatpush2.bf16.xpose.msra.mxu0 0
        %1143 = vmatprep.subr.bf16.mxu0 0
        %1144 = vmatpush2.bf16.xpose.msra.mxu0 0
        %1145 = vmatprep.subr.bf16.mxu0 0
        %1146 = vmatpush2.bf16.xpose.msra.mxu0 0
        %1147 = vmatprep.mubr.bf16.mxu0 0
        %1148 = vmatmul.mubr.bf16.gmra.mxu0 %v1110
        %v1149 = vpop.f32.mrf.mxu0
        %v1150 = vadd.f32 0.0, %v1149
        %v1151 = vpop.f32.mrf.mxu0
        %v1152 = vpop.f32.mrf.mxu0
        %v1153 = vpop.f32.mrf.mxu0
        %1154 = vdwg.mxu0
        %v1155 = vmul.f32 %v1150, 0.35355338
        %v1156 = vadd.f32 %v1155, %v916
        %v1157 = vsel %vm994, %v1156, -inf
        %1158 = vmax.xlane.f32.xlu0 %v1157
        %v1159 = vpop.xlane.xlu0 %1158
        %v1160 = vsub.f32 %v1156, %v1159
        %v1161 = vmul.f32 %v1160, 1.442695
        %v1162 = vpow.pop %v1161
        %v1163 = vsel %vm994, %v1162, 0.0
        %1164 = vadd.xlane.f32.xlu0 %v1163
        %v1165 = vpop.xlane.xlu0 %1164
        %v1166 = vrcp.pop %v1165
        %v1167 = vmul.f32 %v1162, %v1166
        %v1168 = vpack.c.bf16 %v1167, %v1167
        %1169 = vrot.lane.b32.xlu0 %v990, 56
        %v1170 = vpop.permute.xlu0 %1169
        %v1172 = vsel %vm994, %v1168, 0
        %v1175 = vsel %vm1060, %v1170, 0
        %1177 = vmatprep.subr.bf16.mxu0 0
        %1178 = vmatpush1.bf16.msra.mxu0 0
        %1179 = vmatprep.subr.bf16.mxu0 0
        %1180 = vmatpush1.bf16.msra.mxu0 0
        %1181 = vmatprep.subr.bf16.mxu0 0
        %1182 = vmatpush1.bf16.msra.mxu0 0
        %1183 = vmatprep.subr.bf16.mxu0 0
        %1184 = vmatpush1.bf16.msra.mxu0 0
        %1185 = vmatprep.subr.bf16.mxu0 0
        %1186 = vmatpush1.bf16.msra.mxu0 0
        %1187 = vmatprep.subr.bf16.mxu0 0
        %1188 = vmatpush1.bf16.msra.mxu0 0
        %1189 = vmatprep.subr.bf16.mxu0 0
        %1190 = vmatpush1.bf16.msra.mxu0 0
        %1191 = vmatprep.subr.bf16.mxu0 0
        %1192 = vmatpush1.bf16.msra.mxu0 %v1175
        %1193 = vmatprep.subr.bf16.mxu0 0
        %1194 = vmatpush2.bf16.msra.mxu0 0
        %1195 = vmatprep.subr.bf16.mxu0 0
        %1196 = vmatpush2.bf16.msra.mxu0 0
        %1197 = vmatprep.subr.bf16.mxu0 0
        %1198 = vmatpush2.bf16.msra.mxu0 0
        %1199 = vmatprep.subr.bf16.mxu0 0
        %1200 = vmatpush2.bf16.msra.mxu0 0
        %1201 = vmatprep.subr.bf16.mxu0 0
        %1202 = vmatpush2.bf16.msra.mxu0 0
        %1203 = vmatprep.subr.bf16.mxu0 0
        %1204 = vmatpush2.bf16.msra.mxu0 0
        %1205 = vmatprep.subr.bf16.mxu0 0
        %1206 = vmatpush2.bf16.msra.mxu0 0
        %1207 = vmatprep.subr.bf16.mxu0 0
        %1208 = vmatpush2.bf16.msra.mxu0 0
        %1209 = vmatprep.mubr.bf16.mxu0 0
        %1210 = vmatmul.mubr.bf16.gmra.mxu0 %v1172
        %v1211 = vpop.f32.mrf.mxu0
        %v1212 = vadd.f32 0.0, %v1211
        %v1213 = vpop.f32.mrf.mxu0
        %v1214 = vpop.f32.mrf.mxu0
        %v1215 = vpop.f32.mrf.mxu0
        %1216 = vdwg.mxu0
        %v1217 = vpack.c.bf16 %v1212, %v1212
        %v1219 = vsel %vm994, %v1217, 0
        %v1222 = vsel %vm1060, %v987, 0
        %1224 = vmatprep.subr.bf16.mxu0 0
        %1225 = vmatpush1.bf16.msra.mxu0 0
        %1226 = vmatprep.subr.bf16.mxu0 0
        %1227 = vmatpush1.bf16.msra.mxu0 0
        %1228 = vmatprep.subr.bf16.mxu0 0
        %1229 = vmatpush1.bf16.msra.mxu0 0
        %1230 = vmatprep.subr.bf16.mxu0 0
        %1231 = vmatpush1.bf16.msra.mxu0 0
        %1232 = vmatprep.subr.bf16.mxu0 0
        %1233 = vmatpush1.bf16.msra.mxu0 0
        %1234 = vmatprep.subr.bf16.mxu0 0
        %1235 = vmatpush1.bf16.msra.mxu0 0
        %1236 = vmatprep.subr.bf16.mxu0 0
        %1237 = vmatpush1.bf16.msra.mxu0 0
        %1238 = vmatprep.subr.bf16.mxu0 0
        %1239 = vmatpush1.bf16.msra.mxu0 %v1222
        %1240 = vmatprep.subr.bf16.mxu0 0
        %1241 = vmatpush2.bf16.msra.mxu0 0
        %1242 = vmatprep.subr.bf16.mxu0 0
        %1243 = vmatpush2.bf16.msra.mxu0 0
        %1244 = vmatprep.subr.bf16.mxu0 0
        %1245 = vmatpush2.bf16.msra.mxu0 0
        %1246 = vmatprep.subr.bf16.mxu0 0
        %1247 = vmatpush2.bf16.msra.mxu0 0
        %1248 = vmatprep.subr.bf16.mxu0 0
        %1249 = vmatpush2.bf16.msra.mxu0 0
        %1250 = vmatprep.subr.bf16.mxu0 0
        %1251 = vmatpush2.bf16.msra.mxu0 0
        %1252 = vmatprep.subr.bf16.mxu0 0
        %1253 = vmatpush2.bf16.msra.mxu0 0
        %1254 = vmatprep.subr.bf16.mxu0 0
        %1255 = vmatpush2.bf16.msra.mxu0 0
        %1256 = vmatprep.mubr.bf16.mxu0 0
        %1257 = vmatmul.mubr.bf16.gmra.mxu0 %v1219
        %v1258 = vpop.f32.mrf.mxu0
        %v1259 = vadd.f32 0.0, %v1258
        %v1260 = vpop.f32.mrf.mxu0
        %v1261 = vpop.f32.mrf.mxu0
        %v1262 = vpop.f32.mrf.mxu0
        %1263 = vdwg.mxu0
        %v1265 = vsel %vm994, %v1104, 0
        %v1268 = vsel %vm1060, %v986, 0
        %1270 = vmatprep.subr.bf16.mxu0 0
        %1271 = vmatpush1.bf16.msra.mxu0 0
        %1272 = vmatprep.subr.bf16.mxu0 0
        %1273 = vmatpush1.bf16.msra.mxu0 0
        %1274 = vmatprep.subr.bf16.mxu0 0
        %1275 = vmatpush1.bf16.msra.mxu0 0
        %1276 = vmatprep.subr.bf16.mxu0 0
        %1277 = vmatpush1.bf16.msra.mxu0 0
        %1278 = vmatprep.subr.bf16.mxu0 0
        %1279 = vmatpush1.bf16.msra.mxu0 0
        %1280 = vmatprep.subr.bf16.mxu0 0
        %1281 = vmatpush1.bf16.msra.mxu0 0
        %1282 = vmatprep.subr.bf16.mxu0 0
        %1283 = vmatpush1.bf16.msra.mxu0 0
        %1284 = vmatprep.subr.bf16.mxu0 0
        %1285 = vmatpush1.bf16.msra.mxu0 %v1268
        %1286 = vmatprep.subr.bf16.mxu0 0
        %1287 = vmatpush2.bf16.msra.mxu0 0
        %1288 = vmatprep.subr.bf16.mxu0 0
        %1289 = vmatpush2.bf16.msra.mxu0 0
        %1290 = vmatprep.subr.bf16.mxu0 0
        %1291 = vmatpush2.bf16.msra.mxu0 0
        %1292 = vmatprep.subr.bf16.mxu0 0
        %1293 = vmatpush2.bf16.msra.mxu0 0
        %1294 = vmatprep.subr.bf16.mxu0 0
        %1295 = vmatpush2.bf16.msra.mxu0 0
        %1296 = vmatprep.subr.bf16.mxu0 0
        %1297 = vmatpush2.bf16.msra.mxu0 0
        %1298 = vmatprep.subr.bf16.mxu0 0
        %1299 = vmatpush2.bf16.msra.mxu0 0
        %1300 = vmatprep.subr.bf16.mxu0 0
        %1301 = vmatpush2.bf16.msra.mxu0 0
        %1302 = vmatprep.mubr.bf16.mxu0 0
        %1303 = vmatmul.mubr.bf16.gmra.mxu0 %v1265
        %v1304 = vpop.f32.mrf.mxu0
        %v1305 = vadd.f32 %v1259, %v1304
        %v1306 = vpop.f32.mrf.mxu0
        %v1307 = vpop.f32.mrf.mxu0
        %v1308 = vpop.f32.mrf.mxu0
        %1309 = vdwg.mxu0
        %1310 = vrot.lane.b32.xlu0 %v990, 112
        %v1311 = vpop.permute.xlu0 %1310
        %1312 = vrot.lane.b32.xlu0 %v990, 80
        %v1313 = vpop.permute.xlu0 %1312
        %v1315 = vsel %vm994, %v1311, 0
        %v1318 = vsel %vm994, %v1313, 0
        %1320 = vmatprep.subr.bf16.mxu0 0
        %1321 = vmatpush1.bf16.xpose.msra.mxu0 0
        %1322 = vmatprep.subr.bf16.mxu0 0
        %1323 = vmatpush1.bf16.xpose.msra.mxu0 0
        %1324 = vmatprep.subr.bf16.mxu0 0
        %1325 = vmatpush1.bf16.xpose.msra.mxu0 0
        %1326 = vmatprep.subr.bf16.mxu0 0
        %1327 = vmatpush1.bf16.xpose.msra.mxu0 0
        %1328 = vmatprep.subr.bf16.mxu0 0
        %1329 = vmatpush1.bf16.xpose.msra.mxu0 0
        %1330 = vmatprep.subr.bf16.mxu0 0
        %1331 = vmatpush1.bf16.xpose.msra.mxu0 0
        %1332 = vmatprep.subr.bf16.mxu0 0
        %1333 = vmatpush1.bf16.xpose.msra.mxu0 0
        %1334 = vmatprep.subr.bf16.mxu0 0
        %1335 = vmatpush1.bf16.xpose.msra.mxu0 %v1318
        %1336 = vmatprep.subr.bf16.mxu0 0
        %1337 = vmatpush2.bf16.xpose.msra.mxu0 0
        %1338 = vmatprep.subr.bf16.mxu0 0
        %1339 = vmatpush2.bf16.xpose.msra.mxu0 0
        %1340 = vmatprep.subr.bf16.mxu0 0
        %1341 = vmatpush2.bf16.xpose.msra.mxu0 0
        %1342 = vmatprep.subr.bf16.mxu0 0
        %1343 = vmatpush2.bf16.xpose.msra.mxu0 0
        %1344 = vmatprep.subr.bf16.mxu0 0
        %1345 = vmatpush2.bf16.xpose.msra.mxu0 0
        %1346 = vmatprep.subr.bf16.mxu0 0
        %1347 = vmatpush2.bf16.xpose.msra.mxu0 0
        %1348 = vmatprep.subr.bf16.mxu0 0
        %1349 = vmatpush2.bf16.xpose.msra.mxu0 0
        %1350 = vmatprep.subr.bf16.mxu0 0
        %1351 = vmatpush2.bf16.xpose.msra.mxu0 0
        %1352 = vmatprep.mubr.bf16.mxu0 0
        %1353 = vmatmul.mubr.bf16.gmra.mxu0 %v1315
        %v1354 = vpop.f32.mrf.mxu0
        %v1355 = vadd.f32 0.0, %v1354
        %v1356 = vpop.f32.mrf.mxu0
        %v1357 = vpop.f32.mrf.mxu0
        %v1358 = vpop.f32.mrf.mxu0
        %1359 = vdwg.mxu0
        %v1360 = vmul.f32 %v1355, 0.35355338
        %v1361 = vadd.f32 %v1360, %v916
        %v1362 = vsel %vm994, %v1361, -inf
        %1363 = vmax.xlane.f32.xlu0 %v1362
        %v1364 = vpop.xlane.xlu0 %1363
        %v1365 = vsub.f32 %v1361, %v1364
        %v1366 = vmul.f32 %v1365, 1.442695
        %v1367 = vpow.pop %v1366
        %v1368 = vsel %vm994, %v1367, 0.0
        %1369 = vadd.xlane.f32.xlu0 %v1368
        %v1370 = vpop.xlane.xlu0 %1369
        %v1371 = vrcp.pop %v1370
        %v1372 = vmul.f32 %v1367, %v1371
        %v1373 = vpack.c.bf16 %v1372, %v1372
        %1374 = vrot.lane.b32.xlu0 %v990, 48
        %v1375 = vpop.permute.xlu0 %1374
        %v1377 = vsel %vm994, %v1373, 0
        %v1380 = vsel %vm1060, %v1375, 0
        %1382 = vmatprep.subr.bf16.mxu0 0
        %1383 = vmatpush1.bf16.msra.mxu0 0
        %1384 = vmatprep.subr.bf16.mxu0 0
        %1385 = vmatpush1.bf16.msra.mxu0 0
        %1386 = vmatprep.subr.bf16.mxu0 0
        %1387 = vmatpush1.bf16.msra.mxu0 0
        %1388 = vmatprep.subr.bf16.mxu0 0
        %1389 = vmatpush1.bf16.msra.mxu0 0
        %1390 = vmatprep.subr.bf16.mxu0 0
        %1391 = vmatpush1.bf16.msra.mxu0 0
        %1392 = vmatprep.subr.bf16.mxu0 0
        %1393 = vmatpush1.bf16.msra.mxu0 0
        %1394 = vmatprep.subr.bf16.mxu0 0
        %1395 = vmatpush1.bf16.msra.mxu0 0
        %1396 = vmatprep.subr.bf16.mxu0 0
        %1397 = vmatpush1.bf16.msra.mxu0 %v1380
        %1398 = vmatprep.subr.bf16.mxu0 0
        %1399 = vmatpush2.bf16.msra.mxu0 0
        %1400 = vmatprep.subr.bf16.mxu0 0
        %1401 = vmatpush2.bf16.msra.mxu0 0
        %1402 = vmatprep.subr.bf16.mxu0 0
        %1403 = vmatpush2.bf16.msra.mxu0 0
        %1404 = vmatprep.subr.bf16.mxu0 0
        %1405 = vmatpush2.bf16.msra.mxu0 0
        %1406 = vmatprep.subr.bf16.mxu0 0
        %1407 = vmatpush2.bf16.msra.mxu0 0
        %1408 = vmatprep.subr.bf16.mxu0 0
        %1409 = vmatpush2.bf16.msra.mxu0 0
        %1410 = vmatprep.subr.bf16.mxu0 0
        %1411 = vmatpush2.bf16.msra.mxu0 0
        %1412 = vmatprep.subr.bf16.mxu0 0
        %1413 = vmatpush2.bf16.msra.mxu0 0
        %1414 = vmatprep.mubr.bf16.mxu0 0
        %1415 = vmatmul.mubr.bf16.gmra.mxu0 %v1377
        %v1416 = vpop.f32.mrf.mxu0
        %v1417 = vadd.f32 0.0, %v1416
        %v1418 = vpop.f32.mrf.mxu0
        %v1419 = vpop.f32.mrf.mxu0
        %v1420 = vpop.f32.mrf.mxu0
        %1421 = vdwg.mxu0
        %v1422 = vpack.c.bf16 %v1417, %v1417
        %v1424 = vsel %vm994, %v1422, 0
        %v1427 = vsel %vm1060, %v988, 0
        %1429 = vmatprep.subr.bf16.mxu0 0
        %1430 = vmatpush1.bf16.msra.mxu0 0
        %1431 = vmatprep.subr.bf16.mxu0 0
        %1432 = vmatpush1.bf16.msra.mxu0 0
        %1433 = vmatprep.subr.bf16.mxu0 0
        %1434 = vmatpush1.bf16.msra.mxu0 0
        %1435 = vmatprep.subr.bf16.mxu0 0
        %1436 = vmatpush1.bf16.msra.mxu0 0
        %1437 = vmatprep.subr.bf16.mxu0 0
        %1438 = vmatpush1.bf16.msra.mxu0 0
        %1439 = vmatprep.subr.bf16.mxu0 0
        %1440 = vmatpush1.bf16.msra.mxu0 0
        %1441 = vmatprep.subr.bf16.mxu0 0
        %1442 = vmatpush1.bf16.msra.mxu0 0
        %1443 = vmatprep.subr.bf16.mxu0 0
        %1444 = vmatpush1.bf16.msra.mxu0 %v1427
        %1445 = vmatprep.subr.bf16.mxu0 0
        %1446 = vmatpush2.bf16.msra.mxu0 0
        %1447 = vmatprep.subr.bf16.mxu0 0
        %1448 = vmatpush2.bf16.msra.mxu0 0
        %1449 = vmatprep.subr.bf16.mxu0 0
        %1450 = vmatpush2.bf16.msra.mxu0 0
        %1451 = vmatprep.subr.bf16.mxu0 0
        %1452 = vmatpush2.bf16.msra.mxu0 0
        %1453 = vmatprep.subr.bf16.mxu0 0
        %1454 = vmatpush2.bf16.msra.mxu0 0
        %1455 = vmatprep.subr.bf16.mxu0 0
        %1456 = vmatpush2.bf16.msra.mxu0 0
        %1457 = vmatprep.subr.bf16.mxu0 0
        %1458 = vmatpush2.bf16.msra.mxu0 0
        %1459 = vmatprep.subr.bf16.mxu0 0
        %1460 = vmatpush2.bf16.msra.mxu0 0
        %1461 = vmatprep.mubr.bf16.mxu0 0
        %1462 = vmatmul.mubr.bf16.gmra.mxu0 %v1424
        %v1463 = vpop.f32.mrf.mxu0
        %v1464 = vadd.f32 0.0, %v1463
        %v1465 = vpop.f32.mrf.mxu0
        %v1466 = vpop.f32.mrf.mxu0
        %v1467 = vpop.f32.mrf.mxu0
        %1468 = vdwg.mxu0
        %v1469 = vadd.f32 %v1305, %v1464
        %1470 = vrot.lane.b32.xlu0 %v990, 104
        %v1471 = vpop.permute.xlu0 %1470
        %1472 = vrot.lane.b32.xlu0 %v990, 72
        %v1473 = vpop.permute.xlu0 %1472
        %v1475 = vsel %vm994, %v1471, 0
        %v1478 = vsel %vm994, %v1473, 0
        %1480 = vmatprep.subr.bf16.mxu0 0
        %1481 = vmatpush1.bf16.xpose.msra.mxu0 0
        %1482 = vmatprep.subr.bf16.mxu0 0
        %1483 = vmatpush1.bf16.xpose.msra.mxu0 0
        %1484 = vmatprep.subr.bf16.mxu0 0
        %1485 = vmatpush1.bf16.xpose.msra.mxu0 0
        %1486 = vmatprep.subr.bf16.mxu0 0
        %1487 = vmatpush1.bf16.xpose.msra.mxu0 0
        %1488 = vmatprep.subr.bf16.mxu0 0
        %1489 = vmatpush1.bf16.xpose.msra.mxu0 0
        %1490 = vmatprep.subr.bf16.mxu0 0
        %1491 = vmatpush1.bf16.xpose.msra.mxu0 0
        %1492 = vmatprep.subr.bf16.mxu0 0
        %1493 = vmatpush1.bf16.xpose.msra.mxu0 0
        %1494 = vmatprep.subr.bf16.mxu0 0
        %1495 = vmatpush1.bf16.xpose.msra.mxu0 %v1478
        %1496 = vmatprep.subr.bf16.mxu0 0
        %1497 = vmatpush2.bf16.xpose.msra.mxu0 0
        %1498 = vmatprep.subr.bf16.mxu0 0
        %1499 = vmatpush2.bf16.xpose.msra.mxu0 0
        %1500 = vmatprep.subr.bf16.mxu0 0
        %1501 = vmatpush2.bf16.xpose.msra.mxu0 0
        %1502 = vmatprep.subr.bf16.mxu0 0
        %1503 = vmatpush2.bf16.xpose.msra.mxu0 0
        %1504 = vmatprep.subr.bf16.mxu0 0
        %1505 = vmatpush2.bf16.xpose.msra.mxu0 0
        %1506 = vmatprep.subr.bf16.mxu0 0
        %1507 = vmatpush2.bf16.xpose.msra.mxu0 0
        %1508 = vmatprep.subr.bf16.mxu0 0
        %1509 = vmatpush2.bf16.xpose.msra.mxu0 0
        %1510 = vmatprep.subr.bf16.mxu0 0
        %1511 = vmatpush2.bf16.xpose.msra.mxu0 0
        %1512 = vmatprep.mubr.bf16.mxu0 0
        %1513 = vmatmul.mubr.bf16.gmra.mxu0 %v1475
        %v1514 = vpop.f32.mrf.mxu0
        %v1515 = vadd.f32 0.0, %v1514
        %v1516 = vpop.f32.mrf.mxu0
        %v1517 = vpop.f32.mrf.mxu0
        %v1518 = vpop.f32.mrf.mxu0
        %1519 = vdwg.mxu0
        %v1520 = vmul.f32 %v1515, 0.35355338
        %v1521 = vadd.f32 %v1520, %v916
        %v1522 = vsel %vm994, %v1521, -inf
        %1523 = vmax.xlane.f32.xlu0 %v1522
        %v1524 = vpop.xlane.xlu0 %1523
        %v1525 = vsub.f32 %v1521, %v1524
        %v1526 = vmul.f32 %v1525, 1.442695
        %v1527 = vpow.pop %v1526
        %v1528 = vsel %vm994, %v1527, 0.0
        %1529 = vadd.xlane.f32.xlu0 %v1528
        %v1530 = vpop.xlane.xlu0 %1529
        %v1531 = vrcp.pop %v1530
        %v1532 = vmul.f32 %v1527, %v1531
        %v1533 = vpack.c.bf16 %v1532, %v1532
        %1534 = vrot.lane.b32.xlu0 %v990, 40
        %v1535 = vpop.permute.xlu0 %1534
        %v1537 = vsel %vm994, %v1533, 0
        %v1540 = vsel %vm1060, %v1535, 0
        %1542 = vmatprep.subr.bf16.mxu0 0
        %1543 = vmatpush1.bf16.msra.mxu0 0
        %1544 = vmatprep.subr.bf16.mxu0 0
        %1545 = vmatpush1.bf16.msra.mxu0 0
        %1546 = vmatprep.subr.bf16.mxu0 0
        %1547 = vmatpush1.bf16.msra.mxu0 0
        %1548 = vmatprep.subr.bf16.mxu0 0
        %1549 = vmatpush1.bf16.msra.mxu0 0
        %1550 = vmatprep.subr.bf16.mxu0 0
        %1551 = vmatpush1.bf16.msra.mxu0 0
        %1552 = vmatprep.subr.bf16.mxu0 0
        %1553 = vmatpush1.bf16.msra.mxu0 0
        %1554 = vmatprep.subr.bf16.mxu0 0
        %1555 = vmatpush1.bf16.msra.mxu0 0
        %1556 = vmatprep.subr.bf16.mxu0 0
        %1557 = vmatpush1.bf16.msra.mxu0 %v1540
        %1558 = vmatprep.subr.bf16.mxu0 0
        %1559 = vmatpush2.bf16.msra.mxu0 0
        %1560 = vmatprep.subr.bf16.mxu0 0
        %1561 = vmatpush2.bf16.msra.mxu0 0
        %1562 = vmatprep.subr.bf16.mxu0 0
        %1563 = vmatpush2.bf16.msra.mxu0 0
        %1564 = vmatprep.subr.bf16.mxu0 0
        %1565 = vmatpush2.bf16.msra.mxu0 0
        %1566 = vmatprep.subr.bf16.mxu0 0
        %1567 = vmatpush2.bf16.msra.mxu0 0
        %1568 = vmatprep.subr.bf16.mxu0 0
        %1569 = vmatpush2.bf16.msra.mxu0 0
        %1570 = vmatprep.subr.bf16.mxu0 0
        %1571 = vmatpush2.bf16.msra.mxu0 0
        %1572 = vmatprep.subr.bf16.mxu0 0
        %1573 = vmatpush2.bf16.msra.mxu0 0
        %1574 = vmatprep.mubr.bf16.mxu0 0
        %1575 = vmatmul.mubr.bf16.gmra.mxu0 %v1537
        %v1576 = vpop.f32.mrf.mxu0
        %v1577 = vadd.f32 0.0, %v1576
        %v1578 = vpop.f32.mrf.mxu0
        %v1579 = vpop.f32.mrf.mxu0
        %v1580 = vpop.f32.mrf.mxu0
        %1581 = vdwg.mxu0
        %v1582 = vpack.c.bf16 %v1577, %v1577
        %v1584 = vsel %vm994, %v1582, 0
        %v1587 = vsel %vm1060, %v989, 0
        %1589 = vmatprep.subr.bf16.mxu0 0
        %1590 = vmatpush1.bf16.msra.mxu0 0
        %1591 = vmatprep.subr.bf16.mxu0 0
        %1592 = vmatpush1.bf16.msra.mxu0 0
        %1593 = vmatprep.subr.bf16.mxu0 0
        %1594 = vmatpush1.bf16.msra.mxu0 0
        %1595 = vmatprep.subr.bf16.mxu0 0
        %1596 = vmatpush1.bf16.msra.mxu0 0
        %1597 = vmatprep.subr.bf16.mxu0 0
        %1598 = vmatpush1.bf16.msra.mxu0 0
        %1599 = vmatprep.subr.bf16.mxu0 0
        %1600 = vmatpush1.bf16.msra.mxu0 0
        %1601 = vmatprep.subr.bf16.mxu0 0
        %1602 = vmatpush1.bf16.msra.mxu0 0
        %1603 = vmatprep.subr.bf16.mxu0 0
        %1604 = vmatpush1.bf16.msra.mxu0 %v1587
        %1605 = vmatprep.subr.bf16.mxu0 0
        %1606 = vmatpush2.bf16.msra.mxu0 0
        %1607 = vmatprep.subr.bf16.mxu0 0
        %1608 = vmatpush2.bf16.msra.mxu0 0
        %1609 = vmatprep.subr.bf16.mxu0 0
        %1610 = vmatpush2.bf16.msra.mxu0 0
        %1611 = vmatprep.subr.bf16.mxu0 0
        %1612 = vmatpush2.bf16.msra.mxu0 0
        %1613 = vmatprep.subr.bf16.mxu0 0
        %1614 = vmatpush2.bf16.msra.mxu0 0
        %1615 = vmatprep.subr.bf16.mxu0 0
        %1616 = vmatpush2.bf16.msra.mxu0 0
        %1617 = vmatprep.subr.bf16.mxu0 0
        %1618 = vmatpush2.bf16.msra.mxu0 0
        %1619 = vmatprep.subr.bf16.mxu0 0
        %1620 = vmatpush2.bf16.msra.mxu0 0
        %1621 = vmatprep.mubr.bf16.mxu0 0
        %1622 = vmatmul.mubr.bf16.gmra.mxu0 %v1584
        %v1623 = vpop.f32.mrf.mxu0
        %v1624 = vadd.f32 0.0, %v1623
        %v1625 = vpop.f32.mrf.mxu0
        %v1626 = vpop.f32.mrf.mxu0
        %v1627 = vpop.f32.mrf.mxu0
        %1628 = vdwg.mxu0
        %v1629 = vadd.f32 %v1469, %v1624
        %v1630 = vld [vmem:[%s6] sm:$0x1]
        %v1632 = vlaneseq
        %v1633 = vshrl.u32 %v1632, 7
        %v1634 = vsub.s32 0, %v1633
        %v1635 = vrot.slane %v1630, %v1634
        %v1637 = vadd.f32 %v1629, %v1635
        %v1638 = vadd.f32 %v914, %v1637
        %v1639 = vld [vmem:[%s17] sm:$0x1]
        %v1640 = vld [vmem:[%s18] sm:$0x1]
        %v1641 = vsel %vm942, %v1638, 0.0
        %1642 = vadd.xlane.f32.xlu0 %v1641
        %v1643 = vpop.xlane.xlu0 %1642
        %v1644 = vrcp.pop 32.0
        %v1645 = vmul.f32 %v1643, %v1644
        %v1646 = vsub.f32 %v1638, %v1645
        %v1647 = vmul.f32 %v1646, %v1646
        %v1648 = vsel %vm942, %v1647, 0.0
        %1649 = vadd.xlane.f32.xlu0 %v1648
        %v1650 = vpop.xlane.xlu0 %1649
        %v1651 = vmul.f32 %v1650, %v1644
        %v1652 = vadd.f32 %v1651, 1e-05
        %v1653 = vrsqrt.pop %v1652
        %v1654 = vmul.f32 %v1646, %v1653
        %v1656 = vlaneseq
        %v1657 = vshrl.u32 %v1656, 7
        %v1658 = vsub.s32 0, %v1657
        %v1659 = vrot.slane %v1639, %v1658
        %v1661 = vmul.f32 %v1654, %v1659
        %v1663 = vlaneseq
        %v1664 = vshrl.u32 %v1663, 7
        %v1665 = vsub.s32 0, %v1664
        %v1666 = vrot.slane %v1640, %v1665
        %v1668 = vadd.f32 %v1661, %v1666
        %v1669 = vpack.c.bf16 %v1668, %v1668
        %v1670 = vld [vmem:[#allocation11] sm:$0xf]
        %v1671 = vld [vmem:[#allocation11 + $0x4] sm:$0xf]
        %v1672 = vld [vmem:[#allocation11 + $0x8] sm:$0xf]
        %v1673 = vld [vmem:[#allocation11 + $0xc] sm:$0xf]
        %v1674 = vld [vmem:[%s8] sm:$0x1]
        %v1676 = vlaneseq
        %v1677 = vshrl.u32 %v1676, 7
        %v1678 = vsub.s32 0, %v1677
        %v1679 = vrot.slane %v1674, %v1678
        %v1685 = vunpack.c.l.b16 %v1670
        %v1686 = vunpack.c.l.b16 %v1671
        %v1687 = vunpack.c.l.b16 %v1672
        %v1688 = vunpack.c.l.b16 %v1673
        %v1689 = vpack.c.b16 %v1686, %v1685
        %v1690 = vpack.c.b16 %v1688, %v1687
        %v1694 = vsel %vm942, %v1669, 0
        %1696 = vmatprep.subr.bf16.mxu0 0
        %1697 = vmatpush1.bf16.msra.mxu0 0
        %1698 = vmatprep.subr.bf16.mxu0 0
        %1699 = vmatpush1.bf16.msra.mxu0 0
        %1700 = vmatprep.subr.bf16.mxu0 0
        %1701 = vmatpush1.bf16.msra.mxu0 0
        %1702 = vmatprep.subr.bf16.mxu0 0
        %1703 = vmatpush1.bf16.msra.mxu0 0
        %1704 = vmatprep.subr.bf16.mxu0 0
        %1705 = vmatpush1.bf16.msra.mxu0 0
        %1706 = vmatprep.subr.bf16.mxu0 0
        %1707 = vmatpush1.bf16.msra.mxu0 0
        %1708 = vmatprep.subr.bf16.mxu0 0
        %1709 = vmatpush1.bf16.msra.mxu0 %v1690
        %1710 = vmatprep.subr.bf16.mxu0 0
        %1711 = vmatpush1.bf16.msra.mxu0 %v1689
        %1712 = vmatprep.subr.bf16.mxu0 0
        %1713 = vmatpush2.bf16.msra.mxu0 0
        %1714 = vmatprep.subr.bf16.mxu0 0
        %1715 = vmatpush2.bf16.msra.mxu0 0
        %1716 = vmatprep.subr.bf16.mxu0 0
        %1717 = vmatpush2.bf16.msra.mxu0 0
        %1718 = vmatprep.subr.bf16.mxu0 0
        %1719 = vmatpush2.bf16.msra.mxu0 0
        %1720 = vmatprep.subr.bf16.mxu0 0
        %1721 = vmatpush2.bf16.msra.mxu0 0
        %1722 = vmatprep.subr.bf16.mxu0 0
        %1723 = vmatpush2.bf16.msra.mxu0 0
        %1724 = vmatprep.subr.bf16.mxu0 0
        %1725 = vmatpush2.bf16.msra.mxu0 0
        %1726 = vmatprep.subr.bf16.mxu0 0
        %1727 = vmatpush2.bf16.msra.mxu0 0
        %1728 = vmatprep.mubr.bf16.mxu0 0
        %1729 = vmatmul.mubr.bf16.gmra.mxu0 %v1694
        %v1730 = vpop.f32.mrf.mxu0
        %v1731 = vadd.f32 %v1679, %v1730
        %v1732 = vpop.f32.mrf.mxu0
        %v1733 = vpop.f32.mrf.mxu0
        %v1734 = vpop.f32.mrf.mxu0
        %1735 = vdwg.mxu0
        %v1736 = vld [vmem:[#allocation13] sm:$0xf]
        %v1737 = vld [vmem:[#allocation13 + $0x4] sm:$0xf]
        %v1738 = vld [vmem:[#allocation13 + $0x8] sm:$0xf]
        %v1739 = vld [vmem:[#allocation13 + $0xc] sm:$0xf]
        %v1740 = vld [vmem:[%s10] sm:$0x1]
        %v1742 = vlaneseq
        %v1743 = vshrl.u32 %v1742, 7
        %v1744 = vsub.s32 0, %v1743
        %v1745 = vrot.slane %v1740, %v1744
        %v1751 = vunpack.c.l.b16 %v1736
        %v1752 = vunpack.c.l.b16 %v1737
        %v1753 = vunpack.c.l.b16 %v1738
        %v1754 = vunpack.c.l.b16 %v1739
        %v1755 = vpack.c.b16 %v1752, %v1751
        %v1756 = vpack.c.b16 %v1754, %v1753
        %v1760 = vsel %vm942, %v917, 0
        %1762 = vmatprep.subr.bf16.mxu0 0
        %1763 = vmatpush1.bf16.msra.mxu0 0
        %1764 = vmatprep.subr.bf16.mxu0 0
        %1765 = vmatpush1.bf16.msra.mxu0 0
        %1766 = vmatprep.subr.bf16.mxu0 0
        %1767 = vmatpush1.bf16.msra.mxu0 0
        %1768 = vmatprep.subr.bf16.mxu0 0
        %1769 = vmatpush1.bf16.msra.mxu0 0
        %1770 = vmatprep.subr.bf16.mxu0 0
        %1771 = vmatpush1.bf16.msra.mxu0 0
        %1772 = vmatprep.subr.bf16.mxu0 0
        %1773 = vmatpush1.bf16.msra.mxu0 0
        %1774 = vmatprep.subr.bf16.mxu0 0
        %1775 = vmatpush1.bf16.msra.mxu0 %v1756
        %1776 = vmatprep.subr.bf16.mxu0 0
        %1777 = vmatpush1.bf16.msra.mxu0 %v1755
        %1778 = vmatprep.subr.bf16.mxu0 0
        %1779 = vmatpush2.bf16.msra.mxu0 0
        %1780 = vmatprep.subr.bf16.mxu0 0
        %1781 = vmatpush2.bf16.msra.mxu0 0
        %1782 = vmatprep.subr.bf16.mxu0 0
        %1783 = vmatpush2.bf16.msra.mxu0 0
        %1784 = vmatprep.subr.bf16.mxu0 0
        %1785 = vmatpush2.bf16.msra.mxu0 0
        %1786 = vmatprep.subr.bf16.mxu0 0
        %1787 = vmatpush2.bf16.msra.mxu0 0
        %1788 = vmatprep.subr.bf16.mxu0 0
        %1789 = vmatpush2.bf16.msra.mxu0 0
        %1790 = vmatprep.subr.bf16.mxu0 0
        %1791 = vmatpush2.bf16.msra.mxu0 0
        %1792 = vmatprep.subr.bf16.mxu0 0
        %1793 = vmatpush2.bf16.msra.mxu0 0
        %1794 = vmatprep.mubr.bf16.mxu0 0
        %1795 = vmatmul.mubr.bf16.gmra.mxu0 %v1760
        %v1796 = vpop.f32.mrf.mxu0
        %v1797 = vadd.f32 %v1745, %v1796
        %v1798 = vpop.f32.mrf.mxu0
        %v1799 = vpop.f32.mrf.mxu0
        %v1800 = vpop.f32.mrf.mxu0
        %1801 = vdwg.mxu0
        %v1802 = vld [vmem:[#allocation14] sm:$0xf]
        %v1803 = vld [vmem:[#allocation14 + $0x4] sm:$0xf]
        %v1804 = vld [vmem:[#allocation14 + $0x8] sm:$0xf]
        %v1805 = vld [vmem:[#allocation14 + $0xc] sm:$0xf]
        %v1806 = vpack.c.bf16 %v1731, %v1731
        %v1807 = vpack.c.bf16 %v1797, %v1797
        %v1809 = vsel %vm994, %v1806, 0
        %v1812 = vsel %vm994, %v1807, 0
        %1814 = vmatprep.subr.bf16.mxu0 0
        %1815 = vmatpush1.bf16.xpose.msra.mxu0 0
        %1816 = vmatprep.subr.bf16.mxu0 0
        %1817 = vmatpush1.bf16.xpose.msra.mxu0 0
        %1818 = vmatprep.subr.bf16.mxu0 0
        %1819 = vmatpush1.bf16.xpose.msra.mxu0 0
        %1820 = vmatprep.subr.bf16.mxu0 0
        %1821 = vmatpush1.bf16.xpose.msra.mxu0 0
        %1822 = vmatprep.subr.bf16.mxu0 0
        %1823 = vmatpush1.bf16.xpose.msra.mxu0 0
        %1824 = vmatprep.subr.bf16.mxu0 0
        %1825 = vmatpush1.bf16.xpose.msra.mxu0 0
        %1826 = vmatprep.subr.bf16.mxu0 0
        %1827 = vmatpush1.bf16.xpose.msra.mxu0 0
        %1828 = vmatprep.subr.bf16.mxu0 0
        %1829 = vmatpush1.bf16.xpose.msra.mxu0 %v1812
        %1830 = vmatprep.subr.bf16.mxu0 0
        %1831 = vmatpush2.bf16.xpose.msra.mxu0 0
        %1832 = vmatprep.subr.bf16.mxu0 0
        %1833 = vmatpush2.bf16.xpose.msra.mxu0 0
        %1834 = vmatprep.subr.bf16.mxu0 0
        %1835 = vmatpush2.bf16.xpose.msra.mxu0 0
        %1836 = vmatprep.subr.bf16.mxu0 0
        %1837 = vmatpush2.bf16.xpose.msra.mxu0 0
        %1838 = vmatprep.subr.bf16.mxu0 0
        %1839 = vmatpush2.bf16.xpose.msra.mxu0 0
        %1840 = vmatprep.subr.bf16.mxu0 0
        %1841 = vmatpush2.bf16.xpose.msra.mxu0 0
        %1842 = vmatprep.subr.bf16.mxu0 0
        %1843 = vmatpush2.bf16.xpose.msra.mxu0 0
        %1844 = vmatprep.subr.bf16.mxu0 0
        %1845 = vmatpush2.bf16.xpose.msra.mxu0 0
        %1846 = vmatprep.mubr.bf16.mxu0 0
        %1847 = vmatmul.mubr.bf16.gmra.mxu0 %v1809
        %v1848 = vpop.f32.mrf.mxu0
        %v1849 = vadd.f32 0.0, %v1848
        %v1850 = vpop.f32.mrf.mxu0
        %v1851 = vpop.f32.mrf.mxu0
        %v1852 = vpop.f32.mrf.mxu0
        %1853 = vdwg.mxu0
        %v1854 = vmul.f32 %v1849, 0.35355338
        %v1855 = vsel %vm994, %v1854, -inf
        %1856 = vmax.xlane.f32.xlu0 %v1855
        %v1857 = vpop.xlane.xlu0 %1856
        %v1858 = vsub.f32 %v1854, %v1857
        %v1859 = vmul.f32 %v1858, 1.442695
        %v1860 = vpow.pop %v1859
        %v1861 = vsel %vm994, %v1860, 0.0
        %1862 = vadd.xlane.f32.xlu0 %v1861
        %v1863 = vpop.xlane.xlu0 %1862
        %v1864 = vrcp.pop %v1863
        %v1865 = vmul.f32 %v1860, %v1864
        %v1866 = vpack.c.bf16 %v1865, %v1865
        %1868 = vrot.lane.b32.xlu0 %v1807, 96
        %v1869 = vpop.permute.xlu0 %1868
        %v1871 = vsel %vm994, %v1866, 0
        %v1874 = vsel %vm1060, %v1869, 0
        %1876 = vmatprep.subr.bf16.mxu0 0
        %1877 = vmatpush1.bf16.msra.mxu0 0
        %1878 = vmatprep.subr.bf16.mxu0 0
        %1879 = vmatpush1.bf16.msra.mxu0 0
        %1880 = vmatprep.subr.bf16.mxu0 0
        %1881 = vmatpush1.bf16.msra.mxu0 0
        %1882 = vmatprep.subr.bf16.mxu0 0
        %1883 = vmatpush1.bf16.msra.mxu0 0
        %1884 = vmatprep.subr.bf16.mxu0 0
        %1885 = vmatpush1.bf16.msra.mxu0 0
        %1886 = vmatprep.subr.bf16.mxu0 0
        %1887 = vmatpush1.bf16.msra.mxu0 0
        %1888 = vmatprep.subr.bf16.mxu0 0
        %1889 = vmatpush1.bf16.msra.mxu0 0
        %1890 = vmatprep.subr.bf16.mxu0 0
        %1891 = vmatpush1.bf16.msra.mxu0 %v1874
        %1892 = vmatprep.subr.bf16.mxu0 0
        %1893 = vmatpush2.bf16.msra.mxu0 0
        %1894 = vmatprep.subr.bf16.mxu0 0
        %1895 = vmatpush2.bf16.msra.mxu0 0
        %1896 = vmatprep.subr.bf16.mxu0 0
        %1897 = vmatpush2.bf16.msra.mxu0 0
        %1898 = vmatprep.subr.bf16.mxu0 0
        %1899 = vmatpush2.bf16.msra.mxu0 0
        %1900 = vmatprep.subr.bf16.mxu0 0
        %1901 = vmatpush2.bf16.msra.mxu0 0
        %1902 = vmatprep.subr.bf16.mxu0 0
        %1903 = vmatpush2.bf16.msra.mxu0 0
        %1904 = vmatprep.subr.bf16.mxu0 0
        %1905 = vmatpush2.bf16.msra.mxu0 0
        %1906 = vmatprep.subr.bf16.mxu0 0
        %1907 = vmatpush2.bf16.msra.mxu0 0
        %1908 = vmatprep.mubr.bf16.mxu0 0
        %1909 = vmatmul.mubr.bf16.gmra.mxu0 %v1871
        %v1910 = vpop.f32.mrf.mxu0
        %v1911 = vadd.f32 0.0, %v1910
        %v1912 = vpop.f32.mrf.mxu0
        %v1913 = vpop.f32.mrf.mxu0
        %v1914 = vpop.f32.mrf.mxu0
        %1915 = vdwg.mxu0
        %v1916 = vpack.c.bf16 %v1911, %v1911
        %1918 = vrot.lane.b32.xlu0 %v1806, 120
        %v1919 = vpop.permute.xlu0 %1918
        %1920 = vrot.lane.b32.xlu0 %v1807, 120
        %v1921 = vpop.permute.xlu0 %1920
        %v1923 = vsel %vm994, %v1919, 0
        %v1926 = vsel %vm994, %v1921, 0
        %1928 = vmatprep.subr.bf16.mxu0 0
        %1929 = vmatpush1.bf16.xpose.msra.mxu0 0
        %1930 = vmatprep.subr.bf16.mxu0 0
        %1931 = vmatpush1.bf16.xpose.msra.mxu0 0
        %1932 = vmatprep.subr.bf16.mxu0 0
        %1933 = vmatpush1.bf16.xpose.msra.mxu0 0
        %1934 = vmatprep.subr.bf16.mxu0 0
        %1935 = vmatpush1.bf16.xpose.msra.mxu0 0
        %1936 = vmatprep.subr.bf16.mxu0 0
        %1937 = vmatpush1.bf16.xpose.msra.mxu0 0
        %1938 = vmatprep.subr.bf16.mxu0 0
        %1939 = vmatpush1.bf16.xpose.msra.mxu0 0
        %1940 = vmatprep.subr.bf16.mxu0 0
        %1941 = vmatpush1.bf16.xpose.msra.mxu0 0
        %1942 = vmatprep.subr.bf16.mxu0 0
        %1943 = vmatpush1.bf16.xpose.msra.mxu0 %v1926
        %1944 = vmatprep.subr.bf16.mxu0 0
        %1945 = vmatpush2.bf16.xpose.msra.mxu0 0
        %1946 = vmatprep.subr.bf16.mxu0 0
        %1947 = vmatpush2.bf16.xpose.msra.mxu0 0
        %1948 = vmatprep.subr.bf16.mxu0 0
        %1949 = vmatpush2.bf16.xpose.msra.mxu0 0
        %1950 = vmatprep.subr.bf16.mxu0 0
        %1951 = vmatpush2.bf16.xpose.msra.mxu0 0
        %1952 = vmatprep.subr.bf16.mxu0 0
        %1953 = vmatpush2.bf16.xpose.msra.mxu0 0
        %1954 = vmatprep.subr.bf16.mxu0 0
        %1955 = vmatpush2.bf16.xpose.msra.mxu0 0
        %1956 = vmatprep.subr.bf16.mxu0 0
        %1957 = vmatpush2.bf16.xpose.msra.mxu0 0
        %1958 = vmatprep.subr.bf16.mxu0 0
        %1959 = vmatpush2.bf16.xpose.msra.mxu0 0
        %1960 = vmatprep.mubr.bf16.mxu0 0
        %1961 = vmatmul.mubr.bf16.gmra.mxu0 %v1923
        %v1962 = vpop.f32.mrf.mxu0
        %v1963 = vadd.f32 0.0, %v1962
        %v1964 = vpop.f32.mrf.mxu0
        %v1965 = vpop.f32.mrf.mxu0
        %v1966 = vpop.f32.mrf.mxu0
        %1967 = vdwg.mxu0
        %v1968 = vmul.f32 %v1963, 0.35355338
        %v1969 = vsel %vm994, %v1968, -inf
        %1970 = vmax.xlane.f32.xlu0 %v1969
        %v1971 = vpop.xlane.xlu0 %1970
        %v1972 = vsub.f32 %v1968, %v1971
        %v1973 = vmul.f32 %v1972, 1.442695
        %v1974 = vpow.pop %v1973
        %v1975 = vsel %vm994, %v1974, 0.0
        %1976 = vadd.xlane.f32.xlu0 %v1975
        %v1977 = vpop.xlane.xlu0 %1976
        %v1978 = vrcp.pop %v1977
        %v1979 = vmul.f32 %v1974, %v1978
        %v1980 = vpack.c.bf16 %v1979, %v1979
        %1981 = vrot.lane.b32.xlu0 %v1807, 88
        %v1982 = vpop.permute.xlu0 %1981
        %v1984 = vsel %vm994, %v1980, 0
        %v1987 = vsel %vm1060, %v1982, 0
        %1989 = vmatprep.subr.bf16.mxu0 0
        %1990 = vmatpush1.bf16.msra.mxu0 0
        %1991 = vmatprep.subr.bf16.mxu0 0
        %1992 = vmatpush1.bf16.msra.mxu0 0
        %1993 = vmatprep.subr.bf16.mxu0 0
        %1994 = vmatpush1.bf16.msra.mxu0 0
        %1995 = vmatprep.subr.bf16.mxu0 0
        %1996 = vmatpush1.bf16.msra.mxu0 0
        %1997 = vmatprep.subr.bf16.mxu0 0
        %1998 = vmatpush1.bf16.msra.mxu0 0
        %1999 = vmatprep.subr.bf16.mxu0 0
        %2000 = vmatpush1.bf16.msra.mxu0 0
        %2001 = vmatprep.subr.bf16.mxu0 0
        %2002 = vmatpush1.bf16.msra.mxu0 0
        %2003 = vmatprep.subr.bf16.mxu0 0
        %2004 = vmatpush1.bf16.msra.mxu0 %v1987
        %2005 = vmatprep.subr.bf16.mxu0 0
        %2006 = vmatpush2.bf16.msra.mxu0 0
        %2007 = vmatprep.subr.bf16.mxu0 0
        %2008 = vmatpush2.bf16.msra.mxu0 0
        %2009 = vmatprep.subr.bf16.mxu0 0
        %2010 = vmatpush2.bf16.msra.mxu0 0
        %2011 = vmatprep.subr.bf16.mxu0 0
        %2012 = vmatpush2.bf16.msra.mxu0 0
        %2013 = vmatprep.subr.bf16.mxu0 0
        %2014 = vmatpush2.bf16.msra.mxu0 0
        %2015 = vmatprep.subr.bf16.mxu0 0
        %2016 = vmatpush2.bf16.msra.mxu0 0
        %2017 = vmatprep.subr.bf16.mxu0 0
        %2018 = vmatpush2.bf16.msra.mxu0 0
        %2019 = vmatprep.subr.bf16.mxu0 0
        %2020 = vmatpush2.bf16.msra.mxu0 0
        %2021 = vmatprep.mubr.bf16.mxu0 0
        %2022 = vmatmul.mubr.bf16.gmra.mxu0 %v1984
        %v2023 = vpop.f32.mrf.mxu0
        %v2024 = vadd.f32 0.0, %v2023
        %v2025 = vpop.f32.mrf.mxu0
        %v2026 = vpop.f32.mrf.mxu0
        %v2027 = vpop.f32.mrf.mxu0
        %2028 = vdwg.mxu0
        %v2029 = vpack.c.bf16 %v2024, %v2024
        %v2031 = vsel %vm994, %v2029, 0
        %v2034 = vsel %vm1060, %v1803, 0
        %2036 = vmatprep.subr.bf16.mxu0 0
        %2037 = vmatpush1.bf16.msra.mxu0 0
        %2038 = vmatprep.subr.bf16.mxu0 0
        %2039 = vmatpush1.bf16.msra.mxu0 0
        %2040 = vmatprep.subr.bf16.mxu0 0
        %2041 = vmatpush1.bf16.msra.mxu0 0
        %2042 = vmatprep.subr.bf16.mxu0 0
        %2043 = vmatpush1.bf16.msra.mxu0 0
        %2044 = vmatprep.subr.bf16.mxu0 0
        %2045 = vmatpush1.bf16.msra.mxu0 0
        %2046 = vmatprep.subr.bf16.mxu0 0
        %2047 = vmatpush1.bf16.msra.mxu0 0
        %2048 = vmatprep.subr.bf16.mxu0 0
        %2049 = vmatpush1.bf16.msra.mxu0 0
        %2050 = vmatprep.subr.bf16.mxu0 0
        %2051 = vmatpush1.bf16.msra.mxu0 %v2034
        %2052 = vmatprep.subr.bf16.mxu0 0
        %2053 = vmatpush2.bf16.msra.mxu0 0
        %2054 = vmatprep.subr.bf16.mxu0 0
        %2055 = vmatpush2.bf16.msra.mxu0 0
        %2056 = vmatprep.subr.bf16.mxu0 0
        %2057 = vmatpush2.bf16.msra.mxu0 0
        %2058 = vmatprep.subr.bf16.mxu0 0
        %2059 = vmatpush2.bf16.msra.mxu0 0
        %2060 = vmatprep.subr.bf16.mxu0 0
        %2061 = vmatpush2.bf16.msra.mxu0 0
        %2062 = vmatprep.subr.bf16.mxu0 0
        %2063 = vmatpush2.bf16.msra.mxu0 0
        %2064 = vmatprep.subr.bf16.mxu0 0
        %2065 = vmatpush2.bf16.msra.mxu0 0
        %2066 = vmatprep.subr.bf16.mxu0 0
        %2067 = vmatpush2.bf16.msra.mxu0 0
        %2068 = vmatprep.mubr.bf16.mxu0 0
        %2069 = vmatmul.mubr.bf16.gmra.mxu0 %v2031
        %v2070 = vpop.f32.mrf.mxu0
        %v2071 = vadd.f32 0.0, %v2070
        %v2072 = vpop.f32.mrf.mxu0
        %v2073 = vpop.f32.mrf.mxu0
        %v2074 = vpop.f32.mrf.mxu0
        %2075 = vdwg.mxu0
        %v2077 = vsel %vm994, %v1916, 0
        %v2080 = vsel %vm1060, %v1802, 0
        %2082 = vmatprep.subr.bf16.mxu0 0
        %2083 = vmatpush1.bf16.msra.mxu0 0
        %2084 = vmatprep.subr.bf16.mxu0 0
        %2085 = vmatpush1.bf16.msra.mxu0 0
        %2086 = vmatprep.subr.bf16.mxu0 0
        %2087 = vmatpush1.bf16.msra.mxu0 0
        %2088 = vmatprep.subr.bf16.mxu0 0
        %2089 = vmatpush1.bf16.msra.mxu0 0
        %2090 = vmatprep.subr.bf16.mxu0 0
        %2091 = vmatpush1.bf16.msra.mxu0 0
        %2092 = vmatprep.subr.bf16.mxu0 0
        %2093 = vmatpush1.bf16.msra.mxu0 0
        %2094 = vmatprep.subr.bf16.mxu0 0
        %2095 = vmatpush1.bf16.msra.mxu0 0
        %2096 = vmatprep.subr.bf16.mxu0 0
        %2097 = vmatpush1.bf16.msra.mxu0 %v2080
        %2098 = vmatprep.subr.bf16.mxu0 0
        %2099 = vmatpush2.bf16.msra.mxu0 0
        %2100 = vmatprep.subr.bf16.mxu0 0
        %2101 = vmatpush2.bf16.msra.mxu0 0
        %2102 = vmatprep.subr.bf16.mxu0 0
        %2103 = vmatpush2.bf16.msra.mxu0 0
        %2104 = vmatprep.subr.bf16.mxu0 0
        %2105 = vmatpush2.bf16.msra.mxu0 0
        %2106 = vmatprep.subr.bf16.mxu0 0
        %2107 = vmatpush2.bf16.msra.mxu0 0
        %2108 = vmatprep.subr.bf16.mxu0 0
        %2109 = vmatpush2.bf16.msra.mxu0 0
        %2110 = vmatprep.subr.bf16.mxu0 0
        %2111 = vmatpush2.bf16.msra.mxu0 0
        %2112 = vmatprep.subr.bf16.mxu0 0
        %2113 = vmatpush2.bf16.msra.mxu0 0
        %2114 = vmatprep.mubr.bf16.mxu0 0
        %2115 = vmatmul.mubr.bf16.gmra.mxu0 %v2077
        %v2116 = vpop.f32.mrf.mxu0
        %v2117 = vadd.f32 %v2071, %v2116
        %v2118 = vpop.f32.mrf.mxu0
        %v2119 = vpop.f32.mrf.mxu0
        %v2120 = vpop.f32.mrf.mxu0
        %2121 = vdwg.mxu0
        %2122 = vrot.lane.b32.xlu0 %v1806, 112
        %v2123 = vpop.permute.xlu0 %2122
        %2124 = vrot.lane.b32.xlu0 %v1807, 112
        %v2125 = vpop.permute.xlu0 %2124
        %v2127 = vsel %vm994, %v2123, 0
        %v2130 = vsel %vm994, %v2125, 0
        %2132 = vmatprep.subr.bf16.mxu0 0
        %2133 = vmatpush1.bf16.xpose.msra.mxu0 0
        %2134 = vmatprep.subr.bf16.mxu0 0
        %2135 = vmatpush1.bf16.xpose.msra.mxu0 0
        %2136 = vmatprep.subr.bf16.mxu0 0
        %2137 = vmatpush1.bf16.xpose.msra.mxu0 0
        %2138 = vmatprep.subr.bf16.mxu0 0
        %2139 = vmatpush1.bf16.xpose.msra.mxu0 0
        %2140 = vmatprep.subr.bf16.mxu0 0
        %2141 = vmatpush1.bf16.xpose.msra.mxu0 0
        %2142 = vmatprep.subr.bf16.mxu0 0
        %2143 = vmatpush1.bf16.xpose.msra.mxu0 0
        %2144 = vmatprep.subr.bf16.mxu0 0
        %2145 = vmatpush1.bf16.xpose.msra.mxu0 0
        %2146 = vmatprep.subr.bf16.mxu0 0
        %2147 = vmatpush1.bf16.xpose.msra.mxu0 %v2130
        %2148 = vmatprep.subr.bf16.mxu0 0
        %2149 = vmatpush2.bf16.xpose.msra.mxu0 0
        %2150 = vmatprep.subr.bf16.mxu0 0
        %2151 = vmatpush2.bf16.xpose.msra.mxu0 0
        %2152 = vmatprep.subr.bf16.mxu0 0
        %2153 = vmatpush2.bf16.xpose.msra.mxu0 0
        %2154 = vmatprep.subr.bf16.mxu0 0
        %2155 = vmatpush2.bf16.xpose.msra.mxu0 0
        %2156 = vmatprep.subr.bf16.mxu0 0
        %2157 = vmatpush2.bf16.xpose.msra.mxu0 0
        %2158 = vmatprep.subr.bf16.mxu0 0
        %2159 = vmatpush2.bf16.xpose.msra.mxu0 0
        %2160 = vmatprep.subr.bf16.mxu0 0
        %2161 = vmatpush2.bf16.xpose.msra.mxu0 0
        %2162 = vmatprep.subr.bf16.mxu0 0
        %2163 = vmatpush2.bf16.xpose.msra.mxu0 0
        %2164 = vmatprep.mubr.bf16.mxu0 0
        %2165 = vmatmul.mubr.bf16.gmra.mxu0 %v2127
        %v2166 = vpop.f32.mrf.mxu0
        %v2167 = vadd.f32 0.0, %v2166
        %v2168 = vpop.f32.mrf.mxu0
        %v2169 = vpop.f32.mrf.mxu0
        %v2170 = vpop.f32.mrf.mxu0
        %2171 = vdwg.mxu0
        %v2172 = vmul.f32 %v2167, 0.35355338
        %v2173 = vsel %vm994, %v2172, -inf
        %2174 = vmax.xlane.f32.xlu0 %v2173
        %v2175 = vpop.xlane.xlu0 %2174
        %v2176 = vsub.f32 %v2172, %v2175
        %v2177 = vmul.f32 %v2176, 1.442695
        %v2178 = vpow.pop %v2177
        %v2179 = vsel %vm994, %v2178, 0.0
        %2180 = vadd.xlane.f32.xlu0 %v2179
        %v2181 = vpop.xlane.xlu0 %2180
        %v2182 = vrcp.pop %v2181
        %v2183 = vmul.f32 %v2178, %v2182
        %v2184 = vpack.c.bf16 %v2183, %v2183
        %2185 = vrot.lane.b32.xlu0 %v1807, 80
        %v2186 = vpop.permute.xlu0 %2185
        %v2188 = vsel %vm994, %v2184, 0
        %v2191 = vsel %vm1060, %v2186, 0
        %2193 = vmatprep.subr.bf16.mxu0 0
        %2194 = vmatpush1.bf16.msra.mxu0 0
        %2195 = vmatprep.subr.bf16.mxu0 0
        %2196 = vmatpush1.bf16.msra.mxu0 0
        %2197 = vmatprep.subr.bf16.mxu0 0
        %2198 = vmatpush1.bf16.msra.mxu0 0
        %2199 = vmatprep.subr.bf16.mxu0 0
        %2200 = vmatpush1.bf16.msra.mxu0 0
        %2201 = vmatprep.subr.bf16.mxu0 0
        %2202 = vmatpush1.bf16.msra.mxu0 0
        %2203 = vmatprep.subr.bf16.mxu0 0
        %2204 = vmatpush1.bf16.msra.mxu0 0
        %2205 = vmatprep.subr.bf16.mxu0 0
        %2206 = vmatpush1.bf16.msra.mxu0 0
        %2207 = vmatprep.subr.bf16.mxu0 0
        %2208 = vmatpush1.bf16.msra.mxu0 %v2191
        %2209 = vmatprep.subr.bf16.mxu0 0
        %2210 = vmatpush2.bf16.msra.mxu0 0
        %2211 = vmatprep.subr.bf16.mxu0 0
        %2212 = vmatpush2.bf16.msra.mxu0 0
        %2213 = vmatprep.subr.bf16.mxu0 0
        %2214 = vmatpush2.bf16.msra.mxu0 0
        %2215 = vmatprep.subr.bf16.mxu0 0
        %2216 = vmatpush2.bf16.msra.mxu0 0
        %2217 = vmatprep.subr.bf16.mxu0 0
        %2218 = vmatpush2.bf16.msra.mxu0 0
        %2219 = vmatprep.subr.bf16.mxu0 0
        %2220 = vmatpush2.bf16.msra.mxu0 0
        %2221 = vmatprep.subr.bf16.mxu0 0
        %2222 = vmatpush2.bf16.msra.mxu0 0
        %2223 = vmatprep.subr.bf16.mxu0 0
        %2224 = vmatpush2.bf16.msra.mxu0 0
        %2225 = vmatprep.mubr.bf16.mxu0 0
        %2226 = vmatmul.mubr.bf16.gmra.mxu0 %v2188
        %v2227 = vpop.f32.mrf.mxu0
        %v2228 = vadd.f32 0.0, %v2227
        %v2229 = vpop.f32.mrf.mxu0
        %v2230 = vpop.f32.mrf.mxu0
        %v2231 = vpop.f32.mrf.mxu0
        %2232 = vdwg.mxu0
        %v2233 = vpack.c.bf16 %v2228, %v2228
        %v2235 = vsel %vm994, %v2233, 0
        %v2238 = vsel %vm1060, %v1804, 0
        %2240 = vmatprep.subr.bf16.mxu0 0
        %2241 = vmatpush1.bf16.msra.mxu0 0
        %2242 = vmatprep.subr.bf16.mxu0 0
        %2243 = vmatpush1.bf16.msra.mxu0 0
        %2244 = vmatprep.subr.bf16.mxu0 0
        %2245 = vmatpush1.bf16.msra.mxu0 0
        %2246 = vmatprep.subr.bf16.mxu0 0
        %2247 = vmatpush1.bf16.msra.mxu0 0
        %2248 = vmatprep.subr.bf16.mxu0 0
        %2249 = vmatpush1.bf16.msra.mxu0 0
        %2250 = vmatprep.subr.bf16.mxu0 0
        %2251 = vmatpush1.bf16.msra.mxu0 0
        %2252 = vmatprep.subr.bf16.mxu0 0
        %2253 = vmatpush1.bf16.msra.mxu0 0
        %2254 = vmatprep.subr.bf16.mxu0 0
        %2255 = vmatpush1.bf16.msra.mxu0 %v2238
        %2256 = vmatprep.subr.bf16.mxu0 0
        %2257 = vmatpush2.bf16.msra.mxu0 0
        %2258 = vmatprep.subr.bf16.mxu0 0
        %2259 = vmatpush2.bf16.msra.mxu0 0
        %2260 = vmatprep.subr.bf16.mxu0 0
        %2261 = vmatpush2.bf16.msra.mxu0 0
        %2262 = vmatprep.subr.bf16.mxu0 0
        %2263 = vmatpush2.bf16.msra.mxu0 0
        %2264 = vmatprep.subr.bf16.mxu0 0
        %2265 = vmatpush2.bf16.msra.mxu0 0
        %2266 = vmatprep.subr.bf16.mxu0 0
        %2267 = vmatpush2.bf16.msra.mxu0 0
        %2268 = vmatprep.subr.bf16.mxu0 0
        %2269 = vmatpush2.bf16.msra.mxu0 0
        %2270 = vmatprep.subr.bf16.mxu0 0
        %2271 = vmatpush2.bf16.msra.mxu0 0
        %2272 = vmatprep.mubr.bf16.mxu0 0
        %2273 = vmatmul.mubr.bf16.gmra.mxu0 %v2235
        %v2274 = vpop.f32.mrf.mxu0
        %v2275 = vadd.f32 0.0, %v2274
        %v2276 = vpop.f32.mrf.mxu0
        %v2277 = vpop.f32.mrf.mxu0
        %v2278 = vpop.f32.mrf.mxu0
        %2279 = vdwg.mxu0
        %v2280 = vadd.f32 %v2117, %v2275
        %2281 = vrot.lane.b32.xlu0 %v1806, 104
        %v2282 = vpop.permute.xlu0 %2281
        %2283 = vrot.lane.b32.xlu0 %v1807, 104
        %v2284 = vpop.permute.xlu0 %2283
        %v2286 = vsel %vm994, %v2282, 0
        %v2289 = vsel %vm994, %v2284, 0
        %2291 = vmatprep.subr.bf16.mxu0 0
        %2292 = vmatpush1.bf16.xpose.msra.mxu0 0
        %2293 = vmatprep.subr.bf16.mxu0 0
        %2294 = vmatpush1.bf16.xpose.msra.mxu0 0
        %2295 = vmatprep.subr.bf16.mxu0 0
        %2296 = vmatpush1.bf16.xpose.msra.mxu0 0
        %2297 = vmatprep.subr.bf16.mxu0 0
        %2298 = vmatpush1.bf16.xpose.msra.mxu0 0
        %2299 = vmatprep.subr.bf16.mxu0 0
        %2300 = vmatpush1.bf16.xpose.msra.mxu0 0
        %2301 = vmatprep.subr.bf16.mxu0 0
        %2302 = vmatpush1.bf16.xpose.msra.mxu0 0
        %2303 = vmatprep.subr.bf16.mxu0 0
        %2304 = vmatpush1.bf16.xpose.msra.mxu0 0
        %2305 = vmatprep.subr.bf16.mxu0 0
        %2306 = vmatpush1.bf16.xpose.msra.mxu0 %v2289
        %2307 = vmatprep.subr.bf16.mxu0 0
        %2308 = vmatpush2.bf16.xpose.msra.mxu0 0
        %2309 = vmatprep.subr.bf16.mxu0 0
        %2310 = vmatpush2.bf16.xpose.msra.mxu0 0
        %2311 = vmatprep.subr.bf16.mxu0 0
        %2312 = vmatpush2.bf16.xpose.msra.mxu0 0
        %2313 = vmatprep.subr.bf16.mxu0 0
        %2314 = vmatpush2.bf16.xpose.msra.mxu0 0
        %2315 = vmatprep.subr.bf16.mxu0 0
        %2316 = vmatpush2.bf16.xpose.msra.mxu0 0
        %2317 = vmatprep.subr.bf16.mxu0 0
        %2318 = vmatpush2.bf16.xpose.msra.mxu0 0
        %2319 = vmatprep.subr.bf16.mxu0 0
        %2320 = vmatpush2.bf16.xpose.msra.mxu0 0
        %2321 = vmatprep.subr.bf16.mxu0 0
        %2322 = vmatpush2.bf16.xpose.msra.mxu0 0
        %2323 = vmatprep.mubr.bf16.mxu0 0
        %2324 = vmatmul.mubr.bf16.gmra.mxu0 %v2286
        %v2325 = vpop.f32.mrf.mxu0
        %v2326 = vadd.f32 0.0, %v2325
        %v2327 = vpop.f32.mrf.mxu0
        %v2328 = vpop.f32.mrf.mxu0
        %v2329 = vpop.f32.mrf.mxu0
        %2330 = vdwg.mxu0
        %v2331 = vmul.f32 %v2326, 0.35355338
        %v2332 = vsel %vm994, %v2331, -inf
        %2333 = vmax.xlane.f32.xlu0 %v2332
        %v2334 = vpop.xlane.xlu0 %2333
        %v2335 = vsub.f32 %v2331, %v2334
        %v2336 = vmul.f32 %v2335, 1.442695
        %v2337 = vpow.pop %v2336
        %v2338 = vsel %vm994, %v2337, 0.0
        %2339 = vadd.xlane.f32.xlu0 %v2338
        %v2340 = vpop.xlane.xlu0 %2339
        %v2341 = vrcp.pop %v2340
        %v2342 = vmul.f32 %v2337, %v2341
        %v2343 = vpack.c.bf16 %v2342, %v2342
        %2344 = vrot.lane.b32.xlu0 %v1807, 72
        %v2345 = vpop.permute.xlu0 %2344
        %v2347 = vsel %vm994, %v2343, 0
        %v2350 = vsel %vm1060, %v2345, 0
        %2352 = vmatprep.subr.bf16.mxu0 0
        %2353 = vmatpush1.bf16.msra.mxu0 0
        %2354 = vmatprep.subr.bf16.mxu0 0
        %2355 = vmatpush1.bf16.msra.mxu0 0
        %2356 = vmatprep.subr.bf16.mxu0 0
        %2357 = vmatpush1.bf16.msra.mxu0 0
        %2358 = vmatprep.subr.bf16.mxu0 0
        %2359 = vmatpush1.bf16.msra.mxu0 0
        %2360 = vmatprep.subr.bf16.mxu0 0
        %2361 = vmatpush1.bf16.msra.mxu0 0
        %2362 = vmatprep.subr.bf16.mxu0 0
        %2363 = vmatpush1.bf16.msra.mxu0 0
        %2364 = vmatprep.subr.bf16.mxu0 0
        %2365 = vmatpush1.bf16.msra.mxu0 0
        %2366 = vmatprep.subr.bf16.mxu0 0
        %2367 = vmatpush1.bf16.msra.mxu0 %v2350
        %2368 = vmatprep.subr.bf16.mxu0 0
        %2369 = vmatpush2.bf16.msra.mxu0 0
        %2370 = vmatprep.subr.bf16.mxu0 0
        %2371 = vmatpush2.bf16.msra.mxu0 0
        %2372 = vmatprep.subr.bf16.mxu0 0
        %2373 = vmatpush2.bf16.msra.mxu0 0
        %2374 = vmatprep.subr.bf16.mxu0 0
        %2375 = vmatpush2.bf16.msra.mxu0 0
        %2376 = vmatprep.subr.bf16.mxu0 0
        %2377 = vmatpush2.bf16.msra.mxu0 0
        %2378 = vmatprep.subr.bf16.mxu0 0
        %2379 = vmatpush2.bf16.msra.mxu0 0
        %2380 = vmatprep.subr.bf16.mxu0 0
        %2381 = vmatpush2.bf16.msra.mxu0 0
        %2382 = vmatprep.subr.bf16.mxu0 0
        %2383 = vmatpush2.bf16.msra.mxu0 0
        %2384 = vmatprep.mubr.bf16.mxu0 0
        %2385 = vmatmul.mubr.bf16.gmra.mxu0 %v2347
        %v2386 = vpop.f32.mrf.mxu0
        %v2387 = vadd.f32 0.0, %v2386
        %v2388 = vpop.f32.mrf.mxu0
        %v2389 = vpop.f32.mrf.mxu0
        %v2390 = vpop.f32.mrf.mxu0
        %2391 = vdwg.mxu0
        %v2392 = vpack.c.bf16 %v2387, %v2387
        %v2394 = vsel %vm994, %v2392, 0
        %v2397 = vsel %vm1060, %v1805, 0
        %2399 = vmatprep.subr.bf16.mxu0 0
        %2400 = vmatpush1.bf16.msra.mxu0 0
        %2401 = vmatprep.subr.bf16.mxu0 0
        %2402 = vmatpush1.bf16.msra.mxu0 0
        %2403 = vmatprep.subr.bf16.mxu0 0
        %2404 = vmatpush1.bf16.msra.mxu0 0
        %2405 = vmatprep.subr.bf16.mxu0 0
        %2406 = vmatpush1.bf16.msra.mxu0 0
        %2407 = vmatprep.subr.bf16.mxu0 0
        %2408 = vmatpush1.bf16.msra.mxu0 0
        %2409 = vmatprep.subr.bf16.mxu0 0
        %2410 = vmatpush1.bf16.msra.mxu0 0
        %2411 = vmatprep.subr.bf16.mxu0 0
        %2412 = vmatpush1.bf16.msra.mxu0 0
        %2413 = vmatprep.subr.bf16.mxu0 0
        %2414 = vmatpush1.bf16.msra.mxu0 %v2397
        %2415 = vmatprep.subr.bf16.mxu0 0
        %2416 = vmatpush2.bf16.msra.mxu0 0
        %2417 = vmatprep.subr.bf16.mxu0 0
        %2418 = vmatpush2.bf16.msra.mxu0 0
        %2419 = vmatprep.subr.bf16.mxu0 0
        %2420 = vmatpush2.bf16.msra.mxu0 0
        %2421 = vmatprep.subr.bf16.mxu0 0
        %2422 = vmatpush2.bf16.msra.mxu0 0
        %2423 = vmatprep.subr.bf16.mxu0 0
        %2424 = vmatpush2.bf16.msra.mxu0 0
        %2425 = vmatprep.subr.bf16.mxu0 0
        %2426 = vmatpush2.bf16.msra.mxu0 0
        %2427 = vmatprep.subr.bf16.mxu0 0
        %2428 = vmatpush2.bf16.msra.mxu0 0
        %2429 = vmatprep.subr.bf16.mxu0 0
        %2430 = vmatpush2.bf16.msra.mxu0 0
        %2431 = vmatprep.mubr.bf16.mxu0 0
        %2432 = vmatmul.mubr.bf16.gmra.mxu0 %v2394
        %v2433 = vpop.f32.mrf.mxu0
        %v2434 = vadd.f32 0.0, %v2433
        %v2435 = vpop.f32.mrf.mxu0
        %v2436 = vpop.f32.mrf.mxu0
        %v2437 = vpop.f32.mrf.mxu0
        %2438 = vdwg.mxu0
        %v2439 = vadd.f32 %v2280, %v2434
        %v2440 = vld [vmem:[%s12] sm:$0x1]
        %v2442 = vlaneseq
        %v2443 = vshrl.u32 %v2442, 7
        %v2444 = vsub.s32 0, %v2443
        %v2445 = vrot.slane %v2440, %v2444
        %v2447 = vadd.f32 %v2439, %v2445
        %v2448 = vadd.f32 %v1668, %v2447
        %v2449 = vld [vmem:[%s19] sm:$0x1]
        %v2450 = vld [vmem:[%s20] sm:$0x1]
        %v2451 = vsel %vm942, %v2448, 0.0
        %2452 = vadd.xlane.f32.xlu0 %v2451
        %v2453 = vpop.xlane.xlu0 %2452
        %v2454 = vmul.f32 %v2453, %v1644
        %v2455 = vsub.f32 %v2448, %v2454
        %v2456 = vmul.f32 %v2455, %v2455
        %v2457 = vsel %vm942, %v2456, 0.0
        %2458 = vadd.xlane.f32.xlu0 %v2457
        %v2459 = vpop.xlane.xlu0 %2458
        %v2460 = vmul.f32 %v2459, %v1644
        %v2461 = vadd.f32 %v2460, 1e-05
        %v2462 = vrsqrt.pop %v2461
        %v2463 = vmul.f32 %v2455, %v2462
        %v2465 = vlaneseq
        %v2466 = vshrl.u32 %v2465, 7
        %v2467 = vsub.s32 0, %v2466
        %v2468 = vrot.slane %v2449, %v2467
        %v2470 = vmul.f32 %v2463, %v2468
        %v2472 = vlaneseq
        %v2473 = vshrl.u32 %v2472, 7
        %v2474 = vsub.s32 0, %v2473
        %v2475 = vrot.slane %v2450, %v2474
        %v2477 = vadd.f32 %v2470, %v2475
        %v2478 = vpack.c.bf16 %v2477, %v2477
        %v2479 = vld [vmem:[#allocation16] sm:$0xff]
        %v2480 = vld [vmem:[#allocation16 + $0x8] sm:$0xff]
        %v2481 = vld [vmem:[#allocation16 + $0x10] sm:$0xff]
        %v2482 = vld [vmem:[#allocation16 + $0x18] sm:$0xff]
        %v2483 = vld [vmem:[#allocation16 + $0x20] sm:$0xff]
        %v2484 = vld [vmem:[#allocation16 + $0x28] sm:$0xff]
        %v2485 = vld [vmem:[#allocation16 + $0x30] sm:$0xff]
        %v2486 = vld [vmem:[#allocation16 + $0x38] sm:$0xff]
        %v2487 = vld [vmem:[#allocation16 + $0x40] sm:$0xff]
        %v2488 = vld [vmem:[#allocation16 + $0x48] sm:$0xff]
        %v2489 = vld [vmem:[#allocation16 + $0x50] sm:$0xff]
        %v2490 = vld [vmem:[#allocation16 + $0x58] sm:$0xff]
        %v2491 = vld [vmem:[#allocation16 + $0x60] sm:$0xff]
        %v2492 = vld [vmem:[#allocation16 + $0x68] sm:$0xff]
        %v2493 = vld [vmem:[#allocation16 + $0x70] sm:$0xff]
        %v2494 = vld [vmem:[#allocation16 + $0x78] sm:$0xff]
        %v2495 = vld [vmem:[#allocation16 + $0x80] sm:$0xff]
        %v2496 = vld [vmem:[#allocation16 + $0x88] sm:$0xff]
        %v2497 = vld [vmem:[#allocation16 + $0x90] sm:$0xff]
        %v2498 = vld [vmem:[#allocation16 + $0x98] sm:$0xff]
        %v2499 = vld [vmem:[#allocation16 + $0xa0] sm:$0xff]
        %v2500 = vld [vmem:[#allocation16 + $0xa8] sm:$0xff]
        %v2501 = vld [vmem:[#allocation16 + $0xb0] sm:$0xff]
        %v2502 = vld [vmem:[#allocation16 + $0xb8] sm:$0xff]
        %v2503 = vld [vmem:[#allocation16 + $0xc0] sm:$0xff]
        %v2504 = vld [vmem:[#allocation16 + $0xc8] sm:$0xff]
        %v2505 = vld [vmem:[#allocation16 + $0xd0] sm:$0xff]
        %v2506 = vld [vmem:[#allocation16 + $0xd8] sm:$0xff]
        %v2507 = vld [vmem:[#allocation16 + $0xe0] sm:$0xff]
        %v2508 = vld [vmem:[#allocation16 + $0xe8] sm:$0xff]
        %v2509 = vld [vmem:[#allocation16 + $0xf0] sm:$0xff]
        %v2510 = vld [vmem:[#allocation16 + $0xf8] sm:$0xff]
        %v2511 = vld [vmem:[#allocation17] sm:$0xff]
        %v2512 = vld [vmem:[#allocation17 + $0x8] sm:$0xff]
        %v2515 = vlaneseq
        %v2516 = vshrl.u32 %v2515, 7
        %v2517 = vsub.s32 0, %v2516
        %v2518 = vrot.slane %v2511, %v2517
        %v2519 = vlaneseq
        %v2520 = vshrl.u32 %v2519, 7
        %v2521 = vsub.s32 1, %v2520
        %v2522 = vrot.slane %v2511, %v2521
        %v2523 = vlaneseq
        %v2524 = vshrl.u32 %v2523, 7
        %v2525 = vsub.s32 2, %v2524
        %v2526 = vrot.slane %v2511, %v2525
        %v2527 = vlaneseq
        %v2528 = vshrl.u32 %v2527, 7
        %v2529 = vsub.s32 3, %v2528
        %v2530 = vrot.slane %v2511, %v2529
        %v2531 = vlaneseq
        %v2532 = vshrl.u32 %v2531, 7
        %v2533 = vsub.s32 4, %v2532
        %v2534 = vrot.slane %v2511, %v2533
        %v2535 = vlaneseq
        %v2536 = vshrl.u32 %v2535, 7
        %v2537 = vsub.s32 5, %v2536
        %v2538 = vrot.slane %v2511, %v2537
        %v2539 = vlaneseq
        %v2540 = vshrl.u32 %v2539, 7
        %v2541 = vsub.s32 6, %v2540
        %v2542 = vrot.slane %v2511, %v2541
        %v2543 = vlaneseq
        %v2544 = vshrl.u32 %v2543, 7
        %v2545 = vsub.s32 7, %v2544
        %v2546 = vrot.slane %v2511, %v2545
        %v2547 = vlaneseq
        %v2548 = vshrl.u32 %v2547, 7
        %v2549 = vsub.s32 0, %v2548
        %v2550 = vrot.slane %v2512, %v2549
        %v2551 = vlaneseq
        %v2552 = vshrl.u32 %v2551, 7
        %v2553 = vsub.s32 1, %v2552
        %v2554 = vrot.slane %v2512, %v2553
        %v2555 = vlaneseq
        %v2556 = vshrl.u32 %v2555, 7
        %v2557 = vsub.s32 2, %v2556
        %v2558 = vrot.slane %v2512, %v2557
        %v2559 = vlaneseq
        %v2560 = vshrl.u32 %v2559, 7
        %v2561 = vsub.s32 3, %v2560
        %v2562 = vrot.slane %v2512, %v2561
        %v2563 = vlaneseq
        %v2564 = vshrl.u32 %v2563, 7
        %v2565 = vsub.s32 4, %v2564
        %v2566 = vrot.slane %v2512, %v2565
        %v2567 = vlaneseq
        %v2568 = vshrl.u32 %v2567, 7
        %v2569 = vsub.s32 5, %v2568
        %v2570 = vrot.slane %v2512, %v2569
        %v2571 = vlaneseq
        %v2572 = vshrl.u32 %v2571, 7
        %v2573 = vsub.s32 6, %v2572
        %v2574 = vrot.slane %v2512, %v2573
        %v2575 = vlaneseq
        %v2576 = vshrl.u32 %v2575, 7
        %v2577 = vsub.s32 7, %v2576
        %v2578 = vrot.slane %v2512, %v2577
        %v2627 = vunpack.c.l.b16 %v2479
        %v2628 = vunpack.c.h.b16 %v2479
        %v2629 = vunpack.c.l.b16 %v2480
        %v2630 = vunpack.c.h.b16 %v2480
        %v2631 = vunpack.c.l.b16 %v2481
        %v2632 = vunpack.c.h.b16 %v2481
        %v2633 = vunpack.c.l.b16 %v2482
        %v2634 = vunpack.c.h.b16 %v2482
        %v2635 = vunpack.c.l.b16 %v2483
        %v2636 = vunpack.c.h.b16 %v2483
        %v2637 = vunpack.c.l.b16 %v2484
        %v2638 = vunpack.c.h.b16 %v2484
        %v2639 = vunpack.c.l.b16 %v2485
        %v2640 = vunpack.c.h.b16 %v2485
        %v2641 = vunpack.c.l.b16 %v2486
        %v2642 = vunpack.c.h.b16 %v2486
        %v2643 = vunpack.c.l.b16 %v2487
        %v2644 = vunpack.c.h.b16 %v2487
        %v2645 = vunpack.c.l.b16 %v2488
        %v2646 = vunpack.c.h.b16 %v2488
        %v2647 = vunpack.c.l.b16 %v2489
        %v2648 = vunpack.c.h.b16 %v2489
        %v2649 = vunpack.c.l.b16 %v2490
        %v2650 = vunpack.c.h.b16 %v2490
        %v2651 = vunpack.c.l.b16 %v2491
        %v2652 = vunpack.c.h.b16 %v2491
        %v2653 = vunpack.c.l.b16 %v2492
        %v2654 = vunpack.c.h.b16 %v2492
        %v2655 = vunpack.c.l.b16 %v2493
        %v2656 = vunpack.c.h.b16 %v2493
        %v2657 = vunpack.c.l.b16 %v2494
        %v2658 = vunpack.c.h.b16 %v2494
        %v2659 = vunpack.c.l.b16 %v2495
        %v2660 = vunpack.c.h.b16 %v2495
        %v2661 = vunpack.c.l.b16 %v2496
        %v2662 = vunpack.c.h.b16 %v2496
        %v2663 = vunpack.c.l.b16 %v2497
        %v2664 = vunpack.c.h.b16 %v2497
        %v2665 = vunpack.c.l.b16 %v2498
        %v2666 = vunpack.c.h.b16 %v2498
        %v2667 = vunpack.c.l.b16 %v2499
        %v2668 = vunpack.c.h.b16 %v2499
        %v2669 = vunpack.c.l.b16 %v2500
        %v2670 = vunpack.c.h.b16 %v2500
        %v2671 = vunpack.c.l.b16 %v2501
        %v2672 = vunpack.c.h.b16 %v2501
        %v2673 = vunpack.c.l.b16 %v2502
        %v2674 = vunpack.c.h.b16 %v2502
        %v2675 = vunpack.c.l.b16 %v2503
        %v2676 = vunpack.c.h.b16 %v2503
        %v2677 = vunpack.c.l.b16 %v2504
        %v2678 = vunpack.c.h.b16 %v2504
        %v2679 = vunpack.c.l.b16 %v2505
        %v2680 = vunpack.c.h.b16 %v2505
        %v2681 = vunpack.c.l.b16 %v2506
        %v2682 = vunpack.c.h.b16 %v2506
        %v2683 = vunpack.c.l.b16 %v2507
        %v2684 = vunpack.c.h.b16 %v2507
        %v2685 = vunpack.c.l.b16 %v2508
        %v2686 = vunpack.c.h.b16 %v2508
        %v2687 = vunpack.c.l.b16 %v2509
        %v2688 = vunpack.c.h.b16 %v2509
        %v2689 = vunpack.c.l.b16 %v2510
        %v2690 = vunpack.c.h.b16 %v2510
        %v2691 = vpack.c.b16 %v2643, %v2627
        %v2692 = vpack.c.b16 %v2644, %v2628
        %v2693 = vpack.c.b16 %v2645, %v2629
        %v2694 = vpack.c.b16 %v2646, %v2630
        %v2695 = vpack.c.b16 %v2647, %v2631
        %v2696 = vpack.c.b16 %v2648, %v2632
        %v2697 = vpack.c.b16 %v2649, %v2633
        %v2698 = vpack.c.b16 %v2650, %v2634
        %v2699 = vpack.c.b16 %v2651, %v2635
        %v2700 = vpack.c.b16 %v2652, %v2636
        %v2701 = vpack.c.b16 %v2653, %v2637
        %v2702 = vpack.c.b16 %v2654, %v2638
        %v2703 = vpack.c.b16 %v2655, %v2639
        %v2704 = vpack.c.b16 %v2656, %v2640
        %v2705 = vpack.c.b16 %v2657, %v2641
        %v2706 = vpack.c.b16 %v2658, %v2642
        %v2707 = vpack.c.b16 %v2675, %v2659
        %v2708 = vpack.c.b16 %v2676, %v2660
        %v2709 = vpack.c.b16 %v2677, %v2661
        %v2710 = vpack.c.b16 %v2678, %v2662
        %v2711 = vpack.c.b16 %v2679, %v2663
        %v2712 = vpack.c.b16 %v2680, %v2664
        %v2713 = vpack.c.b16 %v2681, %v2665
        %v2714 = vpack.c.b16 %v2682, %v2666
        %v2715 = vpack.c.b16 %v2683, %v2667
        %v2716 = vpack.c.b16 %v2684, %v2668
        %v2717 = vpack.c.b16 %v2685, %v2669
        %v2718 = vpack.c.b16 %v2686, %v2670
        %v2719 = vpack.c.b16 %v2687, %v2671
        %v2720 = vpack.c.b16 %v2688, %v2672
        %v2721 = vpack.c.b16 %v2689, %v2673
        %v2722 = vpack.c.b16 %v2690, %v2674
        %v2756 = vsel %vm942, %v2478, 0
        %2758 = vmatprep.subr.bf16.mxu0 0
        %2759 = vmatpush1.bf16.msra.mxu0 0
        %2760 = vmatprep.subr.bf16.mxu0 0
        %2761 = vmatpush1.bf16.msra.mxu0 0
        %2762 = vmatprep.subr.bf16.mxu0 0
        %2763 = vmatpush1.bf16.msra.mxu0 0
        %2764 = vmatprep.subr.bf16.mxu0 0
        %2765 = vmatpush1.bf16.msra.mxu0 0
        %2766 = vmatprep.subr.bf16.mxu0 0
        %2767 = vmatpush1.bf16.msra.mxu0 0
        %2768 = vmatprep.subr.bf16.mxu0 0
        %2769 = vmatpush1.bf16.msra.mxu0 0
        %2770 = vmatprep.subr.bf16.mxu0 %v2708
        %2771 = vmatpush1.bf16.msra.mxu0 %v2707
        %2772 = vmatprep.subr.bf16.mxu0 %v2692
        %2773 = vmatpush1.bf16.msra.mxu0 %v2691
        %2774 = vmatprep.subr.bf16.mxu0 0
        %2775 = vmatpush2.bf16.msra.mxu0 0
        %2776 = vmatprep.subr.bf16.mxu0 0
        %2777 = vmatpush2.bf16.msra.mxu0 0
        %2778 = vmatprep.subr.bf16.mxu0 0
        %2779 = vmatpush2.bf16.msra.mxu0 0
        %2780 = vmatprep.subr.bf16.mxu0 0
        %2781 = vmatpush2.bf16.msra.mxu0 0
        %2782 = vmatprep.subr.bf16.mxu0 0
        %2783 = vmatpush2.bf16.msra.mxu0 0
        %2784 = vmatprep.subr.bf16.mxu0 0
        %2785 = vmatpush2.bf16.msra.mxu0 0
        %2786 = vmatprep.subr.bf16.mxu0 0
        %2787 = vmatpush2.bf16.msra.mxu0 0
        %2788 = vmatprep.subr.bf16.mxu0 0
        %2789 = vmatpush2.bf16.msra.mxu0 0
        %2790 = vmatprep.mubr.bf16.mxu0 0
        %2791 = vmatmul.mubr.bf16.gmra.mxu0 %v2756
        %v2792 = vpop.f32.mrf.mxu0
        %v2793 = vadd.f32 %v2518, %v2792
        %v2794 = vpop.f32.mrf.mxu0
        %v2795 = vadd.f32 %v2522, %v2794
        %v2796 = vpop.f32.mrf.mxu0
        %v2797 = vpop.f32.mrf.mxu0
        %2798 = vdwg.mxu0
        %2799 = vmatprep.subr.bf16.mxu0 0
        %2800 = vmatpush1.bf16.msra.mxu0 0
        %2801 = vmatprep.subr.bf16.mxu0 0
        %2802 = vmatpush1.bf16.msra.mxu0 0
        %2803 = vmatprep.subr.bf16.mxu0 0
        %2804 = vmatpush1.bf16.msra.mxu0 0
        %2805 = vmatprep.subr.bf16.mxu0 0
        %2806 = vmatpush1.bf16.msra.mxu0 0
        %2807 = vmatprep.subr.bf16.mxu0 0
        %2808 = vmatpush1.bf16.msra.mxu0 0
        %2809 = vmatprep.subr.bf16.mxu0 0
        %2810 = vmatpush1.bf16.msra.mxu0 0
        %2811 = vmatprep.subr.bf16.mxu0 %v2710
        %2812 = vmatpush1.bf16.msra.mxu0 %v2709
        %2813 = vmatprep.subr.bf16.mxu0 %v2694
        %2814 = vmatpush1.bf16.msra.mxu0 %v2693
        %2815 = vmatprep.subr.bf16.mxu0 0
        %2816 = vmatpush2.bf16.msra.mxu0 0
        %2817 = vmatprep.subr.bf16.mxu0 0
        %2818 = vmatpush2.bf16.msra.mxu0 0
        %2819 = vmatprep.subr.bf16.mxu0 0
        %2820 = vmatpush2.bf16.msra.mxu0 0
        %2821 = vmatprep.subr.bf16.mxu0 0
        %2822 = vmatpush2.bf16.msra.mxu0 0
        %2823 = vmatprep.subr.bf16.mxu0 0
        %2824 = vmatpush2.bf16.msra.mxu0 0
        %2825 = vmatprep.subr.bf16.mxu0 0
        %2826 = vmatpush2.bf16.msra.mxu0 0
        %2827 = vmatprep.subr.bf16.mxu0 0
        %2828 = vmatpush2.bf16.msra.mxu0 0
        %2829 = vmatprep.subr.bf16.mxu0 0
        %2830 = vmatpush2.bf16.msra.mxu0 0
        %2831 = vmatprep.mubr.bf16.mxu0 0
        %2832 = vmatmul.mubr.bf16.gmra.mxu0 %v2756
        %v2833 = vpop.f32.mrf.mxu0
        %v2834 = vadd.f32 %v2526, %v2833
        %v2835 = vpop.f32.mrf.mxu0
        %v2836 = vadd.f32 %v2530, %v2835
        %v2837 = vpop.f32.mrf.mxu0
        %v2838 = vpop.f32.mrf.mxu0
        %2839 = vdwg.mxu0
        %2840 = vmatprep.subr.bf16.mxu0 0
        %2841 = vmatpush1.bf16.msra.mxu0 0
        %2842 = vmatprep.subr.bf16.mxu0 0
        %2843 = vmatpush1.bf16.msra.mxu0 0
        %2844 = vmatprep.subr.bf16.mxu0 0
        %2845 = vmatpush1.bf16.msra.mxu0 0
        %2846 = vmatprep.subr.bf16.mxu0 0
        %2847 = vmatpush1.bf16.msra.mxu0 0
        %2848 = vmatprep.subr.bf16.mxu0 0
        %2849 = vmatpush1.bf16.msra.mxu0 0
        %2850 = vmatprep.subr.bf16.mxu0 0
        %2851 = vmatpush1.bf16.msra.mxu0 0
        %2852 = vmatprep.subr.bf16.mxu0 %v2712
        %2853 = vmatpush1.bf16.msra.mxu0 %v2711
        %2854 = vmatprep.subr.bf16.mxu0 %v2696
        %2855 = vmatpush1.bf16.msra.mxu0 %v2695
        %2856 = vmatprep.subr.bf16.mxu0 0
        %2857 = vmatpush2.bf16.msra.mxu0 0
        %2858 = vmatprep.subr.bf16.mxu0 0
        %2859 = vmatpush2.bf16.msra.mxu0 0
        %2860 = vmatprep.subr.bf16.mxu0 0
        %2861 = vmatpush2.bf16.msra.mxu0 0
        %2862 = vmatprep.subr.bf16.mxu0 0
        %2863 = vmatpush2.bf16.msra.mxu0 0
        %2864 = vmatprep.subr.bf16.mxu0 0
        %2865 = vmatpush2.bf16.msra.mxu0 0
        %2866 = vmatprep.subr.bf16.mxu0 0
        %2867 = vmatpush2.bf16.msra.mxu0 0
        %2868 = vmatprep.subr.bf16.mxu0 0
        %2869 = vmatpush2.bf16.msra.mxu0 0
        %2870 = vmatprep.subr.bf16.mxu0 0
        %2871 = vmatpush2.bf16.msra.mxu0 0
        %2872 = vmatprep.mubr.bf16.mxu0 0
        %2873 = vmatmul.mubr.bf16.gmra.mxu0 %v2756
        %v2874 = vpop.f32.mrf.mxu0
        %v2875 = vadd.f32 %v2534, %v2874
        %v2876 = vpop.f32.mrf.mxu0
        %v2877 = vadd.f32 %v2538, %v2876
        %v2878 = vpop.f32.mrf.mxu0
        %v2879 = vpop.f32.mrf.mxu0
        %2880 = vdwg.mxu0
        %2881 = vmatprep.subr.bf16.mxu0 0
        %2882 = vmatpush1.bf16.msra.mxu0 0
        %2883 = vmatprep.subr.bf16.mxu0 0
        %2884 = vmatpush1.bf16.msra.mxu0 0
        %2885 = vmatprep.subr.bf16.mxu0 0
        %2886 = vmatpush1.bf16.msra.mxu0 0
        %2887 = vmatprep.subr.bf16.mxu0 0
        %2888 = vmatpush1.bf16.msra.mxu0 0
        %2889 = vmatprep.subr.bf16.mxu0 0
        %2890 = vmatpush1.bf16.msra.mxu0 0
        %2891 = vmatprep.subr.bf16.mxu0 0
        %2892 = vmatpush1.bf16.msra.mxu0 0
        %2893 = vmatprep.subr.bf16.mxu0 %v2714
        %2894 = vmatpush1.bf16.msra.mxu0 %v2713
        %2895 = vmatprep.subr.bf16.mxu0 %v2698
        %2896 = vmatpush1.bf16.msra.mxu0 %v2697
        %2897 = vmatprep.subr.bf16.mxu0 0
        %2898 = vmatpush2.bf16.msra.mxu0 0
        %2899 = vmatprep.subr.bf16.mxu0 0
        %2900 = vmatpush2.bf16.msra.mxu0 0
        %2901 = vmatprep.subr.bf16.mxu0 0
        %2902 = vmatpush2.bf16.msra.mxu0 0
        %2903 = vmatprep.subr.bf16.mxu0 0
        %2904 = vmatpush2.bf16.msra.mxu0 0
        %2905 = vmatprep.subr.bf16.mxu0 0
        %2906 = vmatpush2.bf16.msra.mxu0 0
        %2907 = vmatprep.subr.bf16.mxu0 0
        %2908 = vmatpush2.bf16.msra.mxu0 0
        %2909 = vmatprep.subr.bf16.mxu0 0
        %2910 = vmatpush2.bf16.msra.mxu0 0
        %2911 = vmatprep.subr.bf16.mxu0 0
        %2912 = vmatpush2.bf16.msra.mxu0 0
        %2913 = vmatprep.mubr.bf16.mxu0 0
        %2914 = vmatmul.mubr.bf16.gmra.mxu0 %v2756
        %v2915 = vpop.f32.mrf.mxu0
        %v2916 = vadd.f32 %v2542, %v2915
        %v2917 = vpop.f32.mrf.mxu0
        %v2918 = vadd.f32 %v2546, %v2917
        %v2919 = vpop.f32.mrf.mxu0
        %v2920 = vpop.f32.mrf.mxu0
        %2921 = vdwg.mxu0
        %2922 = vmatprep.subr.bf16.mxu0 0
        %2923 = vmatpush1.bf16.msra.mxu0 0
        %2924 = vmatprep.subr.bf16.mxu0 0
        %2925 = vmatpush1.bf16.msra.mxu0 0
        %2926 = vmatprep.subr.bf16.mxu0 0
        %2927 = vmatpush1.bf16.msra.mxu0 0
        %2928 = vmatprep.subr.bf16.mxu0 0
        %2929 = vmatpush1.bf16.msra.mxu0 0
        %2930 = vmatprep.subr.bf16.mxu0 0
        %2931 = vmatpush1.bf16.msra.mxu0 0
        %2932 = vmatprep.subr.bf16.mxu0 0
        %2933 = vmatpush1.bf16.msra.mxu0 0
        %2934 = vmatprep.subr.bf16.mxu0 %v2716
        %2935 = vmatpush1.bf16.msra.mxu0 %v2715
        %2936 = vmatprep.subr.bf16.mxu0 %v2700
        %2937 = vmatpush1.bf16.msra.mxu0 %v2699
        %2938 = vmatprep.subr.bf16.mxu0 0
        %2939 = vmatpush2.bf16.msra.mxu0 0
        %2940 = vmatprep.subr.bf16.mxu0 0
        %2941 = vmatpush2.bf16.msra.mxu0 0
        %2942 = vmatprep.subr.bf16.mxu0 0
        %2943 = vmatpush2.bf16.msra.mxu0 0
        %2944 = vmatprep.subr.bf16.mxu0 0
        %2945 = vmatpush2.bf16.msra.mxu0 0
        %2946 = vmatprep.subr.bf16.mxu0 0
        %2947 = vmatpush2.bf16.msra.mxu0 0
        %2948 = vmatprep.subr.bf16.mxu0 0
        %2949 = vmatpush2.bf16.msra.mxu0 0
        %2950 = vmatprep.subr.bf16.mxu0 0
        %2951 = vmatpush2.bf16.msra.mxu0 0
        %2952 = vmatprep.subr.bf16.mxu0 0
        %2953 = vmatpush2.bf16.msra.mxu0 0
        %2954 = vmatprep.mubr.bf16.mxu0 0
        %2955 = vmatmul.mubr.bf16.gmra.mxu0 %v2756
        %v2956 = vpop.f32.mrf.mxu0
        %v2957 = vadd.f32 %v2550, %v2956
        %v2958 = vpop.f32.mrf.mxu0
        %v2959 = vadd.f32 %v2554, %v2958
        %v2960 = vpop.f32.mrf.mxu0
        %v2961 = vpop.f32.mrf.mxu0
        %2962 = vdwg.mxu0
        %2963 = vmatprep.subr.bf16.mxu0 0
        %2964 = vmatpush1.bf16.msra.mxu0 0
        %2965 = vmatprep.subr.bf16.mxu0 0
        %2966 = vmatpush1.bf16.msra.mxu0 0
        %2967 = vmatprep.subr.bf16.mxu0 0
        %2968 = vmatpush1.bf16.msra.mxu0 0
        %2969 = vmatprep.subr.bf16.mxu0 0
        %2970 = vmatpush1.bf16.msra.mxu0 0
        %2971 = vmatprep.subr.bf16.mxu0 0
        %2972 = vmatpush1.bf16.msra.mxu0 0
        %2973 = vmatprep.subr.bf16.mxu0 0
        %2974 = vmatpush1.bf16.msra.mxu0 0
        %2975 = vmatprep.subr.bf16.mxu0 %v2718
        %2976 = vmatpush1.bf16.msra.mxu0 %v2717
        %2977 = vmatprep.subr.bf16.mxu0 %v2702
        %2978 = vmatpush1.bf16.msra.mxu0 %v2701
        %2979 = vmatprep.subr.bf16.mxu0 0
        %2980 = vmatpush2.bf16.msra.mxu0 0
        %2981 = vmatprep.subr.bf16.mxu0 0
        %2982 = vmatpush2.bf16.msra.mxu0 0
        %2983 = vmatprep.subr.bf16.mxu0 0
        %2984 = vmatpush2.bf16.msra.mxu0 0
        %2985 = vmatprep.subr.bf16.mxu0 0
        %2986 = vmatpush2.bf16.msra.mxu0 0
        %2987 = vmatprep.subr.bf16.mxu0 0
        %2988 = vmatpush2.bf16.msra.mxu0 0
        %2989 = vmatprep.subr.bf16.mxu0 0
        %2990 = vmatpush2.bf16.msra.mxu0 0
        %2991 = vmatprep.subr.bf16.mxu0 0
        %2992 = vmatpush2.bf16.msra.mxu0 0
        %2993 = vmatprep.subr.bf16.mxu0 0
        %2994 = vmatpush2.bf16.msra.mxu0 0
        %2995 = vmatprep.mubr.bf16.mxu0 0
        %2996 = vmatmul.mubr.bf16.gmra.mxu0 %v2756
        %v2997 = vpop.f32.mrf.mxu0
        %v2998 = vadd.f32 %v2558, %v2997
        %v2999 = vpop.f32.mrf.mxu0
        %v3000 = vadd.f32 %v2562, %v2999
        %v3001 = vpop.f32.mrf.mxu0
        %v3002 = vpop.f32.mrf.mxu0
        %3003 = vdwg.mxu0
        %3004 = vmatprep.subr.bf16.mxu0 0
        %3005 = vmatpush1.bf16.msra.mxu0 0
        %3006 = vmatprep.subr.bf16.mxu0 0
        %3007 = vmatpush1.bf16.msra.mxu0 0
        %3008 = vmatprep.subr.bf16.mxu0 0
        %3009 = vmatpush1.bf16.msra.mxu0 0
        %3010 = vmatprep.subr.bf16.mxu0 0
        %3011 = vmatpush1.bf16.msra.mxu0 0
        %3012 = vmatprep.subr.bf16.mxu0 0
        %3013 = vmatpush1.bf16.msra.mxu0 0
        %3014 = vmatprep.subr.bf16.mxu0 0
        %3015 = vmatpush1.bf16.msra.mxu0 0
        %3016 = vmatprep.subr.bf16.mxu0 %v2720
        %3017 = vmatpush1.bf16.msra.mxu0 %v2719
        %3018 = vmatprep.subr.bf16.mxu0 %v2704
        %3019 = vmatpush1.bf16.msra.mxu0 %v2703
        %3020 = vmatprep.subr.bf16.mxu0 0
        %3021 = vmatpush2.bf16.msra.mxu0 0
        %3022 = vmatprep.subr.bf16.mxu0 0
        %3023 = vmatpush2.bf16.msra.mxu0 0
        %3024 = vmatprep.subr.bf16.mxu0 0
        %3025 = vmatpush2.bf16.msra.mxu0 0
        %3026 = vmatprep.subr.bf16.mxu0 0
        %3027 = vmatpush2.bf16.msra.mxu0 0
        %3028 = vmatprep.subr.bf16.mxu0 0
        %3029 = vmatpush2.bf16.msra.mxu0 0
        %3030 = vmatprep.subr.bf16.mxu0 0
        %3031 = vmatpush2.bf16.msra.mxu0 0
        %3032 = vmatprep.subr.bf16.mxu0 0
        %3033 = vmatpush2.bf16.msra.mxu0 0
        %3034 = vmatprep.subr.bf16.mxu0 0
        %3035 = vmatpush2.bf16.msra.mxu0 0
        %3036 = vmatprep.mubr.bf16.mxu0 0
        %3037 = vmatmul.mubr.bf16.gmra.mxu0 %v2756
        %v3038 = vpop.f32.mrf.mxu0
        %v3039 = vadd.f32 %v2566, %v3038
        %v3040 = vpop.f32.mrf.mxu0
        %v3041 = vadd.f32 %v2570, %v3040
        %v3042 = vpop.f32.mrf.mxu0
        %v3043 = vpop.f32.mrf.mxu0
        %3044 = vdwg.mxu0
        %3045 = vmatprep.subr.bf16.mxu0 0
        %3046 = vmatpush1.bf16.msra.mxu0 0
        %3047 = vmatprep.subr.bf16.mxu0 0
        %3048 = vmatpush1.bf16.msra.mxu0 0
        %3049 = vmatprep.subr.bf16.mxu0 0
        %3050 = vmatpush1.bf16.msra.mxu0 0
        %3051 = vmatprep.subr.bf16.mxu0 0
        %3052 = vmatpush1.bf16.msra.mxu0 0
        %3053 = vmatprep.subr.bf16.mxu0 0
        %3054 = vmatpush1.bf16.msra.mxu0 0
        %3055 = vmatprep.subr.bf16.mxu0 0
        %3056 = vmatpush1.bf16.msra.mxu0 0
        %3057 = vmatprep.subr.bf16.mxu0 %v2722
        %3058 = vmatpush1.bf16.msra.mxu0 %v2721
        %3059 = vmatprep.subr.bf16.mxu0 %v2706
        %3060 = vmatpush1.bf16.msra.mxu0 %v2705
        %3061 = vmatprep.subr.bf16.mxu0 0
        %3062 = vmatpush2.bf16.msra.mxu0 0
        %3063 = vmatprep.subr.bf16.mxu0 0
        %3064 = vmatpush2.bf16.msra.mxu0 0
        %3065 = vmatprep.subr.bf16.mxu0 0
        %3066 = vmatpush2.bf16.msra.mxu0 0
        %3067 = vmatprep.subr.bf16.mxu0 0
        %3068 = vmatpush2.bf16.msra.mxu0 0
        %3069 = vmatprep.subr.bf16.mxu0 0
        %3070 = vmatpush2.bf16.msra.mxu0 0
        %3071 = vmatprep.subr.bf16.mxu0 0
        %3072 = vmatpush2.bf16.msra.mxu0 0
        %3073 = vmatprep.subr.bf16.mxu0 0
        %3074 = vmatpush2.bf16.msra.mxu0 0
        %3075 = vmatprep.subr.bf16.mxu0 0
        %3076 = vmatpush2.bf16.msra.mxu0 0
        %3077 = vmatprep.mubr.bf16.mxu0 0
        %3078 = vmatmul.mubr.bf16.gmra.mxu0 %v2756
        %v3079 = vpop.f32.mrf.mxu0
        %v3080 = vadd.f32 %v2574, %v3079
        %v3081 = vpop.f32.mrf.mxu0
        %v3082 = vadd.f32 %v2578, %v3081
        %v3083 = vpop.f32.mrf.mxu0
        %v3084 = vpop.f32.mrf.mxu0
        %3085 = vdwg.mxu0
        %v3086 = vmax.f32 %v2793, 0.0
        %v3087 = vmax.f32 %v2795, 0.0
        %v3088 = vmax.f32 %v2834, 0.0
        %v3089 = vmax.f32 %v2836, 0.0
        %v3090 = vmax.f32 %v2875, 0.0
        %v3091 = vmax.f32 %v2877, 0.0
        %v3092 = vmax.f32 %v2916, 0.0
        %v3093 = vmax.f32 %v2918, 0.0
        %v3094 = vmax.f32 %v2957, 0.0
        %v3095 = vmax.f32 %v2959, 0.0
        %v3096 = vmax.f32 %v2998, 0.0
        %v3097 = vmax.f32 %v3000, 0.0
        %v3098 = vmax.f32 %v3039, 0.0
        %v3099 = vmax.f32 %v3041, 0.0
        %v3100 = vmax.f32 %v3080, 0.0
        %v3101 = vmax.f32 %v3082, 0.0
        %v3102 = vpack.c.bf16 %v3086, %v3086
        %v3103 = vpack.c.bf16 %v3087, %v3087
        %v3104 = vpack.c.bf16 %v3088, %v3088
        %v3105 = vpack.c.bf16 %v3089, %v3089
        %v3106 = vpack.c.bf16 %v3090, %v3090
        %v3107 = vpack.c.bf16 %v3091, %v3091
        %v3108 = vpack.c.bf16 %v3092, %v3092
        %v3109 = vpack.c.bf16 %v3093, %v3093
        %v3110 = vpack.c.bf16 %v3094, %v3094
        %v3111 = vpack.c.bf16 %v3095, %v3095
        %v3112 = vpack.c.bf16 %v3096, %v3096
        %v3113 = vpack.c.bf16 %v3097, %v3097
        %v3114 = vpack.c.bf16 %v3098, %v3098
        %v3115 = vpack.c.bf16 %v3099, %v3099
        %v3116 = vpack.c.bf16 %v3100, %v3100
        %v3117 = vpack.c.bf16 %v3101, %v3101
        %v3118 = vld [vmem:[#allocation19] sm:$0xff]
        %v3119 = vld [vmem:[#allocation19 + $0x8] sm:$0xff]
        %v3120 = vld [vmem:[#allocation19 + $0x10] sm:$0xff]
        %v3121 = vld [vmem:[#allocation19 + $0x18] sm:$0xff]
        %v3122 = vld [vmem:[#allocation19 + $0x20] sm:$0xff]
        %v3123 = vld [vmem:[#allocation19 + $0x28] sm:$0xff]
        %v3124 = vld [vmem:[#allocation19 + $0x30] sm:$0xff]
        %v3125 = vld [vmem:[#allocation19 + $0x38] sm:$0xff]
        %v3126 = vld [vmem:[#allocation19 + $0x40] sm:$0xff]
        %v3127 = vld [vmem:[#allocation19 + $0x48] sm:$0xff]
        %v3128 = vld [vmem:[#allocation19 + $0x50] sm:$0xff]
        %v3129 = vld [vmem:[#allocation19 + $0x58] sm:$0xff]
        %v3130 = vld [vmem:[#allocation19 + $0x60] sm:$0xff]
        %v3131 = vld [vmem:[#allocation19 + $0x68] sm:$0xff]
        %v3132 = vld [vmem:[#allocation19 + $0x70] sm:$0xff]
        %v3133 = vld [vmem:[#allocation19 + $0x78] sm:$0xff]
        %v3134 = vld [vmem:[#allocation19 + $0x80] sm:$0xff]
        %v3135 = vld [vmem:[#allocation19 + $0x88] sm:$0xff]
        %v3136 = vld [vmem:[#allocation19 + $0x90] sm:$0xff]
        %v3137 = vld [vmem:[#allocation19 + $0x98] sm:$0xff]
        %v3138 = vld [vmem:[#allocation19 + $0xa0] sm:$0xff]
        %v3139 = vld [vmem:[#allocation19 + $0xa8] sm:$0xff]
        %v3140 = vld [vmem:[#allocation19 + $0xb0] sm:$0xff]
        %v3141 = vld [vmem:[#allocation19 + $0xb8] sm:$0xff]
        %v3142 = vld [vmem:[#allocation19 + $0xc0] sm:$0xff]
        %v3143 = vld [vmem:[#allocation19 + $0xc8] sm:$0xff]
        %v3144 = vld [vmem:[#allocation19 + $0xd0] sm:$0xff]
        %v3145 = vld [vmem:[#allocation19 + $0xd8] sm:$0xff]
        %v3146 = vld [vmem:[#allocation19 + $0xe0] sm:$0xff]
        %v3147 = vld [vmem:[#allocation19 + $0xe8] sm:$0xff]
        %v3148 = vld [vmem:[#allocation19 + $0xf0] sm:$0xff]
        %v3149 = vld [vmem:[#allocation19 + $0xf8] sm:$0xff]
        %v3150 = vld [vmem:[%s16] sm:$0x1]
        %v3152 = vlaneseq
        %v3153 = vshrl.u32 %v3152, 7
        %v3154 = vsub.s32 0, %v3153
        %v3155 = vrot.slane %v3150, %v3154
        %v3189 = vunpack.c.l.b16 %v3118
        %v3190 = vunpack.c.h.b16 %v3118
        %v3191 = vunpack.c.l.b16 %v3119
        %v3192 = vunpack.c.h.b16 %v3119
        %v3193 = vunpack.c.l.b16 %v3120
        %v3194 = vunpack.c.h.b16 %v3120
        %v3195 = vunpack.c.l.b16 %v3121
        %v3196 = vunpack.c.h.b16 %v3121
        %v3197 = vunpack.c.l.b16 %v3122
        %v3198 = vunpack.c.h.b16 %v3122
        %v3199 = vunpack.c.l.b16 %v3123
        %v3200 = vunpack.c.h.b16 %v3123
        %v3201 = vunpack.c.l.b16 %v3124
        %v3202 = vunpack.c.h.b16 %v3124
        %v3203 = vunpack.c.l.b16 %v3125
        %v3204 = vunpack.c.h.b16 %v3125
        %v3205 = vunpack.c.l.b16 %v3126
        %v3206 = vunpack.c.h.b16 %v3126
        %v3207 = vunpack.c.l.b16 %v3127
        %v3208 = vunpack.c.h.b16 %v3127
        %v3209 = vunpack.c.l.b16 %v3128
        %v3210 = vunpack.c.h.b16 %v3128
        %v3211 = vunpack.c.l.b16 %v3129
        %v3212 = vunpack.c.h.b16 %v3129
        %v3213 = vunpack.c.l.b16 %v3130
        %v3214 = vunpack.c.h.b16 %v3130
        %v3215 = vunpack.c.l.b16 %v3131
        %v3216 = vunpack.c.h.b16 %v3131
        %v3217 = vunpack.c.l.b16 %v3132
        %v3218 = vunpack.c.h.b16 %v3132
        %v3219 = vunpack.c.l.b16 %v3133
        %v3220 = vunpack.c.h.b16 %v3133
        %v3221 = vunpack.c.l.b16 %v3134
        %v3222 = vunpack.c.h.b16 %v3134
        %v3223 = vunpack.c.l.b16 %v3135
        %v3224 = vunpack.c.h.b16 %v3135
        %v3225 = vunpack.c.l.b16 %v3136
        %v3226 = vunpack.c.h.b16 %v3136
        %v3227 = vunpack.c.l.b16 %v3137
        %v3228 = vunpack.c.h.b16 %v3137
        %v3229 = vunpack.c.l.b16 %v3138
        %v3230 = vunpack.c.h.b16 %v3138
        %v3231 = vunpack.c.l.b16 %v3139
        %v3232 = vunpack.c.h.b16 %v3139
        %v3233 = vunpack.c.l.b16 %v3140
        %v3234 = vunpack.c.h.b16 %v3140
        %v3235 = vunpack.c.l.b16 %v3141
        %v3236 = vunpack.c.h.b16 %v3141
        %v3237 = vunpack.c.l.b16 %v3142
        %v3238 = vunpack.c.h.b16 %v3142
        %v3239 = vunpack.c.l.b16 %v3143
        %v3240 = vunpack.c.h.b16 %v3143
        %v3241 = vunpack.c.l.b16 %v3144
        %v3242 = vunpack.c.h.b16 %v3144
        %v3243 = vunpack.c.l.b16 %v3145
        %v3244 = vunpack.c.h.b16 %v3145
        %v3245 = vunpack.c.l.b16 %v3146
        %v3246 = vunpack.c.h.b16 %v3146
        %v3247 = vunpack.c.l.b16 %v3147
        %v3248 = vunpack.c.h.b16 %v3147
        %v3249 = vunpack.c.l.b16 %v3148
        %v3250 = vunpack.c.h.b16 %v3148
        %v3251 = vunpack.c.l.b16 %v3149
        %v3252 = vunpack.c.h.b16 %v3149
        %v3253 = vpack.c.b16 %v3205, %v3189
        %v3254 = vpack.c.b16 %v3206, %v3190
        %v3255 = vpack.c.b16 %v3207, %v3191
        %v3256 = vpack.c.b16 %v3208, %v3192
        %v3257 = vpack.c.b16 %v3209, %v3193
        %v3258 = vpack.c.b16 %v3210, %v3194
        %v3259 = vpack.c.b16 %v3211, %v3195
        %v3260 = vpack.c.b16 %v3212, %v3196
        %v3261 = vpack.c.b16 %v3213, %v3197
        %v3262 = vpack.c.b16 %v3214, %v3198
        %v3263 = vpack.c.b16 %v3215, %v3199
        %v3264 = vpack.c.b16 %v3216, %v3200
        %v3265 = vpack.c.b16 %v3217, %v3201
        %v3266 = vpack.c.b16 %v3218, %v3202
        %v3267 = vpack.c.b16 %v3219, %v3203
        %v3268 = vpack.c.b16 %v3220, %v3204
        %v3269 = vpack.c.b16 %v3237, %v3221
        %v3270 = vpack.c.b16 %v3238, %v3222
        %v3271 = vpack.c.b16 %v3239, %v3223
        %v3272 = vpack.c.b16 %v3240, %v3224
        %v3273 = vpack.c.b16 %v3241, %v3225
        %v3274 = vpack.c.b16 %v3242, %v3226
        %v3275 = vpack.c.b16 %v3243, %v3227
        %v3276 = vpack.c.b16 %v3244, %v3228
        %v3277 = vpack.c.b16 %v3245, %v3229
        %v3278 = vpack.c.b16 %v3246, %v3230
        %v3279 = vpack.c.b16 %v3247, %v3231
        %v3280 = vpack.c.b16 %v3248, %v3232
        %v3281 = vpack.c.b16 %v3249, %v3233
        %v3282 = vpack.c.b16 %v3250, %v3234
        %v3283 = vpack.c.b16 %v3251, %v3235
        %v3284 = vpack.c.b16 %v3252, %v3236
        %3317 = vmatprep.subr.bf16.mxu0 0
        %3318 = vmatpush1.bf16.xpose.msra.mxu0 0
        %3319 = vmatprep.subr.bf16.mxu0 0
        %3320 = vmatpush1.bf16.xpose.msra.mxu0 0
        %3321 = vmatprep.subr.bf16.mxu0 0
        %3322 = vmatpush1.bf16.xpose.msra.mxu0 0
        %3323 = vmatprep.subr.bf16.mxu0 0
        %3324 = vmatpush1.bf16.xpose.msra.mxu0 0
        %3325 = vmatprep.subr.bf16.mxu0 0
        %3326 = vmatpush1.bf16.xpose.msra.mxu0 0
        %3327 = vmatprep.subr.bf16.mxu0 0
        %3328 = vmatpush1.bf16.xpose.msra.mxu0 0
        %3329 = vmatprep.subr.bf16.mxu0 %v3270
        %3330 = vmatpush1.bf16.xpose.msra.mxu0 %v3269
        %3331 = vmatprep.subr.bf16.mxu0 %v3254
        %3332 = vmatpush1.bf16.xpose.msra.mxu0 %v3253
        %3333 = vmatprep.subr.bf16.mxu0 0
        %3334 = vmatpush2.bf16.xpose.msra.mxu0 0
        %3335 = vmatprep.subr.bf16.mxu0 0
        %3336 = vmatpush2.bf16.xpose.msra.mxu0 0
        %3337 = vmatprep.subr.bf16.mxu0 0
        %3338 = vmatpush2.bf16.xpose.msra.mxu0 0
        %3339 = vmatprep.subr.bf16.mxu0 0
        %3340 = vmatpush2.bf16.xpose.msra.mxu0 0
        %3341 = vmatprep.subr.bf16.mxu0 0
        %3342 = vmatpush2.bf16.xpose.msra.mxu0 0
        %3343 = vmatprep.subr.bf16.mxu0 0
        %3344 = vmatpush2.bf16.xpose.msra.mxu0 0
        %3345 = vmatprep.subr.bf16.mxu0 0
        %3346 = vmatpush2.bf16.xpose.msra.mxu0 0
        %3347 = vmatprep.subr.bf16.mxu0 0
        %3348 = vmatpush2.bf16.xpose.msra.mxu0 0
        %3349 = vmatprep.mubr.bf16.mxu0 %v3103
        %3350 = vmatmul.mubr.bf16.gmra.mxu0 %v3102
        %v3351 = vpop.f32.mrf.mxu0
        %v3352 = vadd.f32 %v3155, %v3351
        %v3353 = vpop.f32.mrf.mxu0
        %v3354 = vpop.f32.mrf.mxu0
        %v3355 = vpop.f32.mrf.mxu0
        %3356 = vdwg.mxu0
        %3357 = vmatprep.subr.bf16.mxu0 0
        %3358 = vmatpush1.bf16.xpose.msra.mxu0 0
        %3359 = vmatprep.subr.bf16.mxu0 0
        %3360 = vmatpush1.bf16.xpose.msra.mxu0 0
        %3361 = vmatprep.subr.bf16.mxu0 0
        %3362 = vmatpush1.bf16.xpose.msra.mxu0 0
        %3363 = vmatprep.subr.bf16.mxu0 0
        %3364 = vmatpush1.bf16.xpose.msra.mxu0 0
        %3365 = vmatprep.subr.bf16.mxu0 0
        %3366 = vmatpush1.bf16.xpose.msra.mxu0 0
        %3367 = vmatprep.subr.bf16.mxu0 0
        %3368 = vmatpush1.bf16.xpose.msra.mxu0 0
        %3369 = vmatprep.subr.bf16.mxu0 %v3272
        %3370 = vmatpush1.bf16.xpose.msra.mxu0 %v3271
        %3371 = vmatprep.subr.bf16.mxu0 %v3256
        %3372 = vmatpush1.bf16.xpose.msra.mxu0 %v3255
        %3373 = vmatprep.subr.bf16.mxu0 0
        %3374 = vmatpush2.bf16.xpose.msra.mxu0 0
        %3375 = vmatprep.subr.bf16.mxu0 0
        %3376 = vmatpush2.bf16.xpose.msra.mxu0 0
        %3377 = vmatprep.subr.bf16.mxu0 0
        %3378 = vmatpush2.bf16.xpose.msra.mxu0 0
        %3379 = vmatprep.subr.bf16.mxu0 0
        %3380 = vmatpush2.bf16.xpose.msra.mxu0 0
        %3381 = vmatprep.subr.bf16.mxu0 0
        %3382 = vmatpush2.bf16.xpose.msra.mxu0 0
        %3383 = vmatprep.subr.bf16.mxu0 0
        %3384 = vmatpush2.bf16.xpose.msra.mxu0 0
        %3385 = vmatprep.subr.bf16.mxu0 0
        %3386 = vmatpush2.bf16.xpose.msra.mxu0 0
        %3387 = vmatprep.subr.bf16.mxu0 0
        %3388 = vmatpush2.bf16.xpose.msra.mxu0 0
        %3389 = vmatprep.mubr.bf16.mxu0 %v3105
        %3390 = vmatmul.mubr.bf16.gmra.mxu0 %v3104
        %v3391 = vpop.f32.mrf.mxu0
        %v3392 = vadd.f32 %v3352, %v3391
        %v3393 = vpop.f32.mrf.mxu0
        %v3394 = vpop.f32.mrf.mxu0
        %v3395 = vpop.f32.mrf.mxu0
        %3396 = vdwg.mxu0
        %3397 = vmatprep.subr.bf16.mxu0 0
        %3398 = vmatpush1.bf16.xpose.msra.mxu0 0
        %3399 = vmatprep.subr.bf16.mxu0 0
        %3400 = vmatpush1.bf16.xpose.msra.mxu0 0
        %3401 = vmatprep.subr.bf16.mxu0 0
        %3402 = vmatpush1.bf16.xpose.msra.mxu0 0
        %3403 = vmatprep.subr.bf16.mxu0 0
        %3404 = vmatpush1.bf16.xpose.msra.mxu0 0
        %3405 = vmatprep.subr.bf16.mxu0 0
        %3406 = vmatpush1.bf16.xpose.msra.mxu0 0
        %3407 = vmatprep.subr.bf16.mxu0 0
        %3408 = vmatpush1.bf16.xpose.msra.mxu0 0
        %3409 = vmatprep.subr.bf16.mxu0 %v3274
        %3410 = vmatpush1.bf16.xpose.msra.mxu0 %v3273
        %3411 = vmatprep.subr.bf16.mxu0 %v3258
        %3412 = vmatpush1.bf16.xpose.msra.mxu0 %v3257
        %3413 = vmatprep.subr.bf16.mxu0 0
        %3414 = vmatpush2.bf16.xpose.msra.mxu0 0
        %3415 = vmatprep.subr.bf16.mxu0 0
        %3416 = vmatpush2.bf16.xpose.msra.mxu0 0
        %3417 = vmatprep.subr.bf16.mxu0 0
        %3418 = vmatpush2.bf16.xpose.msra.mxu0 0
        %3419 = vmatprep.subr.bf16.mxu0 0
        %3420 = vmatpush2.bf16.xpose.msra.mxu0 0
        %3421 = vmatprep.subr.bf16.mxu0 0
        %3422 = vmatpush2.bf16.xpose.msra.mxu0 0
        %3423 = vmatprep.subr.bf16.mxu0 0
        %3424 = vmatpush2.bf16.xpose.msra.mxu0 0
        %3425 = vmatprep.subr.bf16.mxu0 0
        %3426 = vmatpush2.bf16.xpose.msra.mxu0 0
        %3427 = vmatprep.subr.bf16.mxu0 0
        %3428 = vmatpush2.bf16.xpose.msra.mxu0 0
        %3429 = vmatprep.mubr.bf16.mxu0 %v3107
        %3430 = vmatmul.mubr.bf16.gmra.mxu0 %v3106
        %v3431 = vpop.f32.mrf.mxu0
        %v3432 = vadd.f32 %v3392, %v3431
        %v3433 = vpop.f32.mrf.mxu0
        %v3434 = vpop.f32.mrf.mxu0
        %v3435 = vpop.f32.mrf.mxu0
        %3436 = vdwg.mxu0
        %3437 = vmatprep.subr.bf16.mxu0 0
        %3438 = vmatpush1.bf16.xpose.msra.mxu0 0
        %3439 = vmatprep.subr.bf16.mxu0 0
        %3440 = vmatpush1.bf16.xpose.msra.mxu0 0
        %3441 = vmatprep.subr.bf16.mxu0 0
        %3442 = vmatpush1.bf16.xpose.msra.mxu0 0
        %3443 = vmatprep.subr.bf16.mxu0 0
        %3444 = vmatpush1.bf16.xpose.msra.mxu0 0
        %3445 = vmatprep.subr.bf16.mxu0 0
        %3446 = vmatpush1.bf16.xpose.msra.mxu0 0
        %3447 = vmatprep.subr.bf16.mxu0 0
        %3448 = vmatpush1.bf16.xpose.msra.mxu0 0
        %3449 = vmatprep.subr.bf16.mxu0 %v3276
        %3450 = vmatpush1.bf16.xpose.msra.mxu0 %v3275
        %3451 = vmatprep.subr.bf16.mxu0 %v3260
        %3452 = vmatpush1.bf16.xpose.msra.mxu0 %v3259
        %3453 = vmatprep.subr.bf16.mxu0 0
        %3454 = vmatpush2.bf16.xpose.msra.mxu0 0
        %3455 = vmatprep.subr.bf16.mxu0 0
        %3456 = vmatpush2.bf16.xpose.msra.mxu0 0
        %3457 = vmatprep.subr.bf16.mxu0 0
        %3458 = vmatpush2.bf16.xpose.msra.mxu0 0
        %3459 = vmatprep.subr.bf16.mxu0 0
        %3460 = vmatpush2.bf16.xpose.msra.mxu0 0
        %3461 = vmatprep.subr.bf16.mxu0 0
        %3462 = vmatpush2.bf16.xpose.msra.mxu0 0
        %3463 = vmatprep.subr.bf16.mxu0 0
        %3464 = vmatpush2.bf16.xpose.msra.mxu0 0
        %3465 = vmatprep.subr.bf16.mxu0 0
        %3466 = vmatpush2.bf16.xpose.msra.mxu0 0
        %3467 = vmatprep.subr.bf16.mxu0 0
        %3468 = vmatpush2.bf16.xpose.msra.mxu0 0
        %3469 = vmatprep.mubr.bf16.mxu0 %v3109
        %3470 = vmatmul.mubr.bf16.gmra.mxu0 %v3108
        %v3471 = vpop.f32.mrf.mxu0
        %v3472 = vadd.f32 %v3432, %v3471
        %v3473 = vpop.f32.mrf.mxu0
        %v3474 = vpop.f32.mrf.mxu0
        %v3475 = vpop.f32.mrf.mxu0
        %3476 = vdwg.mxu0
        %3477 = vmatprep.subr.bf16.mxu0 0
        %3478 = vmatpush1.bf16.xpose.msra.mxu0 0
        %3479 = vmatprep.subr.bf16.mxu0 0
        %3480 = vmatpush1.bf16.xpose.msra.mxu0 0
        %3481 = vmatprep.subr.bf16.mxu0 0
        %3482 = vmatpush1.bf16.xpose.msra.mxu0 0
        %3483 = vmatprep.subr.bf16.mxu0 0
        %3484 = vmatpush1.bf16.xpose.msra.mxu0 0
        %3485 = vmatprep.subr.bf16.mxu0 0
        %3486 = vmatpush1.bf16.xpose.msra.mxu0 0
        %3487 = vmatprep.subr.bf16.mxu0 0
        %3488 = vmatpush1.bf16.xpose.msra.mxu0 0
        %3489 = vmatprep.subr.bf16.mxu0 %v3278
        %3490 = vmatpush1.bf16.xpose.msra.mxu0 %v3277
        %3491 = vmatprep.subr.bf16.mxu0 %v3262
        %3492 = vmatpush1.bf16.xpose.msra.mxu0 %v3261
        %3493 = vmatprep.subr.bf16.mxu0 0
        %3494 = vmatpush2.bf16.xpose.msra.mxu0 0
        %3495 = vmatprep.subr.bf16.mxu0 0
        %3496 = vmatpush2.bf16.xpose.msra.mxu0 0
        %3497 = vmatprep.subr.bf16.mxu0 0
        %3498 = vmatpush2.bf16.xpose.msra.mxu0 0
        %3499 = vmatprep.subr.bf16.mxu0 0
        %3500 = vmatpush2.bf16.xpose.msra.mxu0 0
        %3501 = vmatprep.subr.bf16.mxu0 0
        %3502 = vmatpush2.bf16.xpose.msra.mxu0 0
        %3503 = vmatprep.subr.bf16.mxu0 0
        %3504 = vmatpush2.bf16.xpose.msra.mxu0 0
        %3505 = vmatprep.subr.bf16.mxu0 0
        %3506 = vmatpush2.bf16.xpose.msra.mxu0 0
        %3507 = vmatprep.subr.bf16.mxu0 0
        %3508 = vmatpush2.bf16.xpose.msra.mxu0 0
        %3509 = vmatprep.mubr.bf16.mxu0 %v3111
        %3510 = vmatmul.mubr.bf16.gmra.mxu0 %v3110
        %v3511 = vpop.f32.mrf.mxu0
        %v3512 = vadd.f32 %v3472, %v3511
        %v3513 = vpop.f32.mrf.mxu0
        %v3514 = vpop.f32.mrf.mxu0
        %v3515 = vpop.f32.mrf.mxu0
        %3516 = vdwg.mxu0
        %3517 = vmatprep.subr.bf16.mxu0 0
        %3518 = vmatpush1.bf16.xpose.msra.mxu0 0
        %3519 = vmatprep.subr.bf16.mxu0 0
        %3520 = vmatpush1.bf16.xpose.msra.mxu0 0
        %3521 = vmatprep.subr.bf16.mxu0 0
        %3522 = vmatpush1.bf16.xpose.msra.mxu0 0
        %3523 = vmatprep.subr.bf16.mxu0 0
        %3524 = vmatpush1.bf16.xpose.msra.mxu0 0
        %3525 = vmatprep.subr.bf16.mxu0 0
        %3526 = vmatpush1.bf16.xpose.msra.mxu0 0
        %3527 = vmatprep.subr.bf16.mxu0 0
        %3528 = vmatpush1.bf16.xpose.msra.mxu0 0
        %3529 = vmatprep.subr.bf16.mxu0 %v3280
        %3530 = vmatpush1.bf16.xpose.msra.mxu0 %v3279
        %3531 = vmatprep.subr.bf16.mxu0 %v3264
        %3532 = vmatpush1.bf16.xpose.msra.mxu0 %v3263
        %3533 = vmatprep.subr.bf16.mxu0 0
        %3534 = vmatpush2.bf16.xpose.msra.mxu0 0
        %3535 = vmatprep.subr.bf16.mxu0 0
        %3536 = vmatpush2.bf16.xpose.msra.mxu0 0
        %3537 = vmatprep.subr.bf16.mxu0 0
        %3538 = vmatpush2.bf16.xpose.msra.mxu0 0
        %3539 = vmatprep.subr.bf16.mxu0 0
        %3540 = vmatpush2.bf16.xpose.msra.mxu0 0
        %3541 = vmatprep.subr.bf16.mxu0 0
        %3542 = vmatpush2.bf16.xpose.msra.mxu0 0
        %3543 = vmatprep.subr.bf16.mxu0 0
        %3544 = vmatpush2.bf16.xpose.msra.mxu0 0
        %3545 = vmatprep.subr.bf16.mxu0 0
        %3546 = vmatpush2.bf16.xpose.msra.mxu0 0
        %3547 = vmatprep.subr.bf16.mxu0 0
        %3548 = vmatpush2.bf16.xpose.msra.mxu0 0
        %3549 = vmatprep.mubr.bf16.mxu0 %v3113
        %3550 = vmatmul.mubr.bf16.gmra.mxu0 %v3112
        %v3551 = vpop.f32.mrf.mxu0
        %v3552 = vadd.f32 %v3512, %v3551
        %v3553 = vpop.f32.mrf.mxu0
        %v3554 = vpop.f32.mrf.mxu0
        %v3555 = vpop.f32.mrf.mxu0
        %3556 = vdwg.mxu0
        %3557 = vmatprep.subr.bf16.mxu0 0
        %3558 = vmatpush1.bf16.xpose.msra.mxu0 0
        %3559 = vmatprep.subr.bf16.mxu0 0
        %3560 = vmatpush1.bf16.xpose.msra.mxu0 0
        %3561 = vmatprep.subr.bf16.mxu0 0
        %3562 = vmatpush1.bf16.xpose.msra.mxu0 0
        %3563 = vmatprep.subr.bf16.mxu0 0
        %3564 = vmatpush1.bf16.xpose.msra.mxu0 0
        %3565 = vmatprep.subr.bf16.mxu0 0
        %3566 = vmatpush1.bf16.xpose.msra.mxu0 0
        %3567 = vmatprep.subr.bf16.mxu0 0
        %3568 = vmatpush1.bf16.xpose.msra.mxu0 0
        %3569 = vmatprep.subr.bf16.mxu0 %v3282
        %3570 = vmatpush1.bf16.xpose.msra.mxu0 %v3281
        %3571 = vmatprep.subr.bf16.mxu0 %v3266
        %3572 = vmatpush1.bf16.xpose.msra.mxu0 %v3265
        %3573 = vmatprep.subr.bf16.mxu0 0
        %3574 = vmatpush2.bf16.xpose.msra.mxu0 0
        %3575 = vmatprep.subr.bf16.mxu0 0
        %3576 = vmatpush2.bf16.xpose.msra.mxu0 0
        %3577 = vmatprep.subr.bf16.mxu0 0
        %3578 = vmatpush2.bf16.xpose.msra.mxu0 0
        %3579 = vmatprep.subr.bf16.mxu0 0
        %3580 = vmatpush2.bf16.xpose.msra.mxu0 0
        %3581 = vmatprep.subr.bf16.mxu0 0
        %3582 = vmatpush2.bf16.xpose.msra.mxu0 0
        %3583 = vmatprep.subr.bf16.mxu0 0
        %3584 = vmatpush2.bf16.xpose.msra.mxu0 0
        %3585 = vmatprep.subr.bf16.mxu0 0
        %3586 = vmatpush2.bf16.xpose.msra.mxu0 0
        %3587 = vmatprep.subr.bf16.mxu0 0
        %3588 = vmatpush2.bf16.xpose.msra.mxu0 0
        %3589 = vmatprep.mubr.bf16.mxu0 %v3115
        %3590 = vmatmul.mubr.bf16.gmra.mxu0 %v3114
        %v3591 = vpop.f32.mrf.mxu0
        %v3592 = vadd.f32 %v3552, %v3591
        %v3593 = vpop.f32.mrf.mxu0
        %v3594 = vpop.f32.mrf.mxu0
        %v3595 = vpop.f32.mrf.mxu0
        %3596 = vdwg.mxu0
        %3597 = vmatprep.subr.bf16.mxu0 0
        %3598 = vmatpush1.bf16.xpose.msra.mxu0 0
        %3599 = vmatprep.subr.bf16.mxu0 0
        %3600 = vmatpush1.bf16.xpose.msra.mxu0 0
        %3601 = vmatprep.subr.bf16.mxu0 0
        %3602 = vmatpush1.bf16.xpose.msra.mxu0 0
        %3603 = vmatprep.subr.bf16.mxu0 0
        %3604 = vmatpush1.bf16.xpose.msra.mxu0 0
        %3605 = vmatprep.subr.bf16.mxu0 0
        %3606 = vmatpush1.bf16.xpose.msra.mxu0 0
        %3607 = vmatprep.subr.bf16.mxu0 0
        %3608 = vmatpush1.bf16.xpose.msra.mxu0 0
        %3609 = vmatprep.subr.bf16.mxu0 %v3284
        %3610 = vmatpush1.bf16.xpose.msra.mxu0 %v3283
        %3611 = vmatprep.subr.bf16.mxu0 %v3268
        %3612 = vmatpush1.bf16.xpose.msra.mxu0 %v3267
        %3613 = vmatprep.subr.bf16.mxu0 0
        %3614 = vmatpush2.bf16.xpose.msra.mxu0 0
        %3615 = vmatprep.subr.bf16.mxu0 0
        %3616 = vmatpush2.bf16.xpose.msra.mxu0 0
        %3617 = vmatprep.subr.bf16.mxu0 0
        %3618 = vmatpush2.bf16.xpose.msra.mxu0 0
        %3619 = vmatprep.subr.bf16.mxu0 0
        %3620 = vmatpush2.bf16.xpose.msra.mxu0 0
        %3621 = vmatprep.subr.bf16.mxu0 0
        %3622 = vmatpush2.bf16.xpose.msra.mxu0 0
        %3623 = vmatprep.subr.bf16.mxu0 0
        %3624 = vmatpush2.bf16.xpose.msra.mxu0 0
        %3625 = vmatprep.subr.bf16.mxu0 0
        %3626 = vmatpush2.bf16.xpose.msra.mxu0 0
        %3627 = vmatprep.subr.bf16.mxu0 0
        %3628 = vmatpush2.bf16.xpose.msra.mxu0 0
        %3629 = vmatprep.mubr.bf16.mxu0 %v3117
        %3630 = vmatmul.mubr.bf16.gmra.mxu0 %v3116
        %v3631 = vpop.f32.mrf.mxu0
        %v3632 = vadd.f32 %v3592, %v3631
        %v3633 = vpop.f32.mrf.mxu0
        %v3634 = vpop.f32.mrf.mxu0
        %v3635 = vpop.f32.mrf.mxu0
        %3636 = vdwg.mxu0
        %v3637 = vadd.f32 %v2477, %v3632
        %v3638 = vld [vmem:[%s21] sm:$0x1]
        %v3639 = vld [vmem:[%s22] sm:$0x1]
        %v3640 = vsel %vm942, %v3637, 0.0
        %3641 = vadd.xlane.f32.xlu0 %v3640
        %v3642 = vpop.xlane.xlu0 %3641
        %v3643 = vmul.f32 %v3642, %v1644
        %v3644 = vsub.f32 %v3637, %v3643
        %v3645 = vmul.f32 %v3644, %v3644
        %v3646 = vsel %vm942, %v3645, 0.0
        %3647 = vadd.xlane.f32.xlu0 %v3646
        %v3648 = vpop.xlane.xlu0 %3647
        %v3649 = vmul.f32 %v3648, %v1644
        %v3650 = vadd.f32 %v3649, 1e-05
        %v3651 = vrsqrt.pop %v3650
        %v3652 = vmul.f32 %v3644, %v3651
        %v3654 = vlaneseq
        %v3655 = vshrl.u32 %v3654, 7
        %v3656 = vsub.s32 0, %v3655
        %v3657 = vrot.slane %v3638, %v3656
        %v3659 = vmul.f32 %v3652, %v3657
        %v3661 = vlaneseq
        %v3662 = vshrl.u32 %v3661, 7
        %v3663 = vsub.s32 0, %v3662
        %v3664 = vrot.slane %v3639, %v3663
        %v3666 = vadd.f32 %v3659, %v3664
        %v3667 = vpack.c.bf16 %v3666, %v3666
        %s3668 = scalar_lea.vmem [#allocation8], 16
        %v3669 = vld [vmem:[%s3668] sm:$0xf]
        %v3670 = vld [vmem:[%s3668 + $0x4] sm:$0xf]
        %v3671 = vld [vmem:[%s3668 + $0x8] sm:$0xf]
        %v3672 = vld [vmem:[%s3668 + $0xc] sm:$0xf]
        %s3673 = scalar_lea.vmem %s4, 1
        %v3674 = vld [vmem:[%s3673] sm:$0x1]
        %v3676 = vlaneseq
        %v3677 = vshrl.u32 %v3676, 7
        %v3678 = vsub.s32 0, %v3677
        %v3679 = vrot.slane %v3674, %v3678
        %v3685 = vunpack.c.l.b16 %v3669
        %v3686 = vunpack.c.l.b16 %v3670
        %v3687 = vunpack.c.l.b16 %v3671
        %v3688 = vunpack.c.l.b16 %v3672
        %v3689 = vpack.c.b16 %v3686, %v3685
        %v3690 = vpack.c.b16 %v3688, %v3687
        %v3694 = vsel %vm942, %v3667, 0
        %3696 = vmatprep.subr.bf16.mxu0 0
        %3697 = vmatpush1.bf16.msra.mxu0 0
        %3698 = vmatprep.subr.bf16.mxu0 0
        %3699 = vmatpush1.bf16.msra.mxu0 0
        %3700 = vmatprep.subr.bf16.mxu0 0
        %3701 = vmatpush1.bf16.msra.mxu0 0
        %3702 = vmatprep.subr.bf16.mxu0 0
        %3703 = vmatpush1.bf16.msra.mxu0 0
        %3704 = vmatprep.subr.bf16.mxu0 0
        %3705 = vmatpush1.bf16.msra.mxu0 0
        %3706 = vmatprep.subr.bf16.mxu0 0
        %3707 = vmatpush1.bf16.msra.mxu0 0
        %3708 = vmatprep.subr.bf16.mxu0 0
        %3709 = vmatpush1.bf16.msra.mxu0 %v3690
        %3710 = vmatprep.subr.bf16.mxu0 0
        %3711 = vmatpush1.bf16.msra.mxu0 %v3689
        %3712 = vmatprep.subr.bf16.mxu0 0
        %3713 = vmatpush2.bf16.msra.mxu0 0
        %3714 = vmatprep.subr.bf16.mxu0 0
        %3715 = vmatpush2.bf16.msra.mxu0 0
        %3716 = vmatprep.subr.bf16.mxu0 0
        %3717 = vmatpush2.bf16.msra.mxu0 0
        %3718 = vmatprep.subr.bf16.mxu0 0
        %3719 = vmatpush2.bf16.msra.mxu0 0
        %3720 = vmatprep.subr.bf16.mxu0 0
        %3721 = vmatpush2.bf16.msra.mxu0 0
        %3722 = vmatprep.subr.bf16.mxu0 0
        %3723 = vmatpush2.bf16.msra.mxu0 0
        %3724 = vmatprep.subr.bf16.mxu0 0
        %3725 = vmatpush2.bf16.msra.mxu0 0
        %3726 = vmatprep.subr.bf16.mxu0 0
        %3727 = vmatpush2.bf16.msra.mxu0 0
        %3728 = vmatprep.mubr.bf16.mxu0 0
        %3729 = vmatmul.mubr.bf16.gmra.mxu0 %v3694
        %v3730 = vpop.f32.mrf.mxu0
        %v3731 = vadd.f32 %v3679, %v3730
        %v3732 = vpop.f32.mrf.mxu0
        %v3733 = vpop.f32.mrf.mxu0
        %v3734 = vpop.f32.mrf.mxu0
        %3735 = vdwg.mxu0
        %s3736 = scalar_lea.vmem [#allocation10], 16
        %v3737 = vld [vmem:[%s3736] sm:$0xf]
        %v3738 = vld [vmem:[%s3736 + $0x4] sm:$0xf]
        %v3739 = vld [vmem:[%s3736 + $0x8] sm:$0xf]
        %v3740 = vld [vmem:[%s3736 + $0xc] sm:$0xf]
        %v3741 = vpack.c.bf16 %v3731, %v3731
        %3743 = vrot.lane.b32.xlu0 %v3741, 96
        %v3744 = vpop.permute.xlu0 %3743
        %v3746 = vsel %vm994, %v3741, 0
        %v3749 = vsel %vm994, %v3744, 0
        %3751 = vmatprep.subr.bf16.mxu0 0
        %3752 = vmatpush1.bf16.xpose.msra.mxu0 0
        %3753 = vmatprep.subr.bf16.mxu0 0
        %3754 = vmatpush1.bf16.xpose.msra.mxu0 0
        %3755 = vmatprep.subr.bf16.mxu0 0
        %3756 = vmatpush1.bf16.xpose.msra.mxu0 0
        %3757 = vmatprep.subr.bf16.mxu0 0
        %3758 = vmatpush1.bf16.xpose.msra.mxu0 0
        %3759 = vmatprep.subr.bf16.mxu0 0
        %3760 = vmatpush1.bf16.xpose.msra.mxu0 0
        %3761 = vmatprep.subr.bf16.mxu0 0
        %3762 = vmatpush1.bf16.xpose.msra.mxu0 0
        %3763 = vmatprep.subr.bf16.mxu0 0
        %3764 = vmatpush1.bf16.xpose.msra.mxu0 0
        %3765 = vmatprep.subr.bf16.mxu0 0
        %3766 = vmatpush1.bf16.xpose.msra.mxu0 %v3749
        %3767 = vmatprep.subr.bf16.mxu0 0
        %3768 = vmatpush2.bf16.xpose.msra.mxu0 0
        %3769 = vmatprep.subr.bf16.mxu0 0
        %3770 = vmatpush2.bf16.xpose.msra.mxu0 0
        %3771 = vmatprep.subr.bf16.mxu0 0
        %3772 = vmatpush2.bf16.xpose.msra.mxu0 0
        %3773 = vmatprep.subr.bf16.mxu0 0
        %3774 = vmatpush2.bf16.xpose.msra.mxu0 0
        %3775 = vmatprep.subr.bf16.mxu0 0
        %3776 = vmatpush2.bf16.xpose.msra.mxu0 0
        %3777 = vmatprep.subr.bf16.mxu0 0
        %3778 = vmatpush2.bf16.xpose.msra.mxu0 0
        %3779 = vmatprep.subr.bf16.mxu0 0
        %3780 = vmatpush2.bf16.xpose.msra.mxu0 0
        %3781 = vmatprep.subr.bf16.mxu0 0
        %3782 = vmatpush2.bf16.xpose.msra.mxu0 0
        %3783 = vmatprep.mubr.bf16.mxu0 0
        %3784 = vmatmul.mubr.bf16.gmra.mxu0 %v3746
        %v3785 = vpop.f32.mrf.mxu0
        %v3786 = vadd.f32 0.0, %v3785
        %v3787 = vpop.f32.mrf.mxu0
        %v3788 = vpop.f32.mrf.mxu0
        %v3789 = vpop.f32.mrf.mxu0
        %3790 = vdwg.mxu0
        %v3791 = vmul.f32 %v3786, 0.35355338
        %v3792 = vadd.f32 %v3791, %v916
        %v3793 = vsel %vm994, %v3792, -inf
        %3794 = vmax.xlane.f32.xlu0 %v3793
        %v3795 = vpop.xlane.xlu0 %3794
        %v3796 = vsub.f32 %v3792, %v3795
        %v3797 = vmul.f32 %v3796, 1.442695
        %v3798 = vpow.pop %v3797
        %v3799 = vsel %vm994, %v3798, 0.0
        %3800 = vadd.xlane.f32.xlu0 %v3799
        %v3801 = vpop.xlane.xlu0 %3800
        %v3802 = vrcp.pop %v3801
        %v3803 = vmul.f32 %v3798, %v3802
        %v3804 = vpack.c.bf16 %v3803, %v3803
        %3805 = vrot.lane.b32.xlu0 %v3741, 64
        %v3806 = vpop.permute.xlu0 %3805
        %v3808 = vsel %vm994, %v3804, 0
        %v3811 = vsel %vm1060, %v3806, 0
        %3813 = vmatprep.subr.bf16.mxu0 0
        %3814 = vmatpush1.bf16.msra.mxu0 0
        %3815 = vmatprep.subr.bf16.mxu0 0
        %3816 = vmatpush1.bf16.msra.mxu0 0
        %3817 = vmatprep.subr.bf16.mxu0 0
        %3818 = vmatpush1.bf16.msra.mxu0 0
        %3819 = vmatprep.subr.bf16.mxu0 0
        %3820 = vmatpush1.bf16.msra.mxu0 0
        %3821 = vmatprep.subr.bf16.mxu0 0
        %3822 = vmatpush1.bf16.msra.mxu0 0
        %3823 = vmatprep.subr.bf16.mxu0 0
        %3824 = vmatpush1.bf16.msra.mxu0 0
        %3825 = vmatprep.subr.bf16.mxu0 0
        %3826 = vmatpush1.bf16.msra.mxu0 0
        %3827 = vmatprep.subr.bf16.mxu0 0
        %3828 = vmatpush1.bf16.msra.mxu0 %v3811
        %3829 = vmatprep.subr.bf16.mxu0 0
        %3830 = vmatpush2.bf16.msra.mxu0 0
        %3831 = vmatprep.subr.bf16.mxu0 0
        %3832 = vmatpush2.bf16.msra.mxu0 0
        %3833 = vmatprep.subr.bf16.mxu0 0
        %3834 = vmatpush2.bf16.msra.mxu0 0
        %3835 = vmatprep.subr.bf16.mxu0 0
        %3836 = vmatpush2.bf16.msra.mxu0 0
        %3837 = vmatprep.subr.bf16.mxu0 0
        %3838 = vmatpush2.bf16.msra.mxu0 0
        %3839 = vmatprep.subr.bf16.mxu0 0
        %3840 = vmatpush2.bf16.msra.mxu0 0
        %3841 = vmatprep.subr.bf16.mxu0 0
        %3842 = vmatpush2.bf16.msra.mxu0 0
        %3843 = vmatprep.subr.bf16.mxu0 0
        %3844 = vmatpush2.bf16.msra.mxu0 0
        %3845 = vmatprep.mubr.bf16.mxu0 0
        %3846 = vmatmul.mubr.bf16.gmra.mxu0 %v3808
        %v3847 = vpop.f32.mrf.mxu0
        %v3848 = vadd.f32 0.0, %v3847
        %v3849 = vpop.f32.mrf.mxu0
        %v3850 = vpop.f32.mrf.mxu0
        %v3851 = vpop.f32.mrf.mxu0
        %3852 = vdwg.mxu0
        %v3853 = vpack.c.bf16 %v3848, %v3848
        %3854 = vrot.lane.b32.xlu0 %v3741, 120
        %v3855 = vpop.permute.xlu0 %3854
        %3856 = vrot.lane.b32.xlu0 %v3741, 88
        %v3857 = vpop.permute.xlu0 %3856
        %v3859 = vsel %vm994, %v3855, 0
        %v3862 = vsel %vm994, %v3857, 0
        %3864 = vmatprep.subr.bf16.mxu0 0
        %3865 = vmatpush1.bf16.xpose.msra.mxu0 0
        %3866 = vmatprep.subr.bf16.mxu0 0
        %3867 = vmatpush1.bf16.xpose.msra.mxu0 0
        %3868 = vmatprep.subr.bf16.mxu0 0
        %3869 = vmatpush1.bf16.xpose.msra.mxu0 0
        %3870 = vmatprep.subr.bf16.mxu0 0
        %3871 = vmatpush1.bf16.xpose.msra.mxu0 0
        %3872 = vmatprep.subr.bf16.mxu0 0
        %3873 = vmatpush1.bf16.xpose.msra.mxu0 0
        %3874 = vmatprep.subr.bf16.mxu0 0
        %3875 = vmatpush1.bf16.xpose.msra.mxu0 0
        %3876 = vmatprep.subr.bf16.mxu0 0
        %3877 = vmatpush1.bf16.xpose.msra.mxu0 0
        %3878 = vmatprep.subr.bf16.mxu0 0
        %3879 = vmatpush1.bf16.xpose.msra.mxu0 %v3862
        %3880 = vmatprep.subr.bf16.mxu0 0
        %3881 = vmatpush2.bf16.xpose.msra.mxu0 0
        %3882 = vmatprep.subr.bf16.mxu0 0
        %3883 = vmatpush2.bf16.xpose.msra.mxu0 0
        %3884 = vmatprep.subr.bf16.mxu0 0
        %3885 = vmatpush2.bf16.xpose.msra.mxu0 0
        %3886 = vmatprep.subr.bf16.mxu0 0
        %3887 = vmatpush2.bf16.xpose.msra.mxu0 0
        %3888 = vmatprep.subr.bf16.mxu0 0
        %3889 = vmatpush2.bf16.xpose.msra.mxu0 0
        %3890 = vmatprep.subr.bf16.mxu0 0
        %3891 = vmatpush2.bf16.xpose.msra.mxu0 0
        %3892 = vmatprep.subr.bf16.mxu0 0
        %3893 = vmatpush2.bf16.xpose.msra.mxu0 0
        %3894 = vmatprep.subr.bf16.mxu0 0
        %3895 = vmatpush2.bf16.xpose.msra.mxu0 0
        %3896 = vmatprep.mubr.bf16.mxu0 0
        %3897 = vmatmul.mubr.bf16.gmra.mxu0 %v3859
        %v3898 = vpop.f32.mrf.mxu0
        %v3899 = vadd.f32 0.0, %v3898
        %v3900 = vpop.f32.mrf.mxu0
        %v3901 = vpop.f32.mrf.mxu0
        %v3902 = vpop.f32.mrf.mxu0
        %3903 = vdwg.mxu0
        %v3904 = vmul.f32 %v3899, 0.35355338
        %v3905 = vadd.f32 %v3904, %v916
        %v3906 = vsel %vm994, %v3905, -inf
        %3907 = vmax.xlane.f32.xlu0 %v3906
        %v3908 = vpop.xlane.xlu0 %3907
        %v3909 = vsub.f32 %v3905, %v3908
        %v3910 = vmul.f32 %v3909, 1.442695
        %v3911 = vpow.pop %v3910
        %v3912 = vsel %vm994, %v3911, 0.0
        %3913 = vadd.xlane.f32.xlu0 %v3912
        %v3914 = vpop.xlane.xlu0 %3913
        %v3915 = vrcp.pop %v3914
        %v3916 = vmul.f32 %v3911, %v3915
        %v3917 = vpack.c.bf16 %v3916, %v3916
        %3918 = vrot.lane.b32.xlu0 %v3741, 56
        %v3919 = vpop.permute.xlu0 %3918
        %v3921 = vsel %vm994, %v3917, 0
        %v3924 = vsel %vm1060, %v3919, 0
        %3926 = vmatprep.subr.bf16.mxu0 0
        %3927 = vmatpush1.bf16.msra.mxu0 0
        %3928 = vmatprep.subr.bf16.mxu0 0
        %3929 = vmatpush1.bf16.msra.mxu0 0
        %3930 = vmatprep.subr.bf16.mxu0 0
        %3931 = vmatpush1.bf16.msra.mxu0 0
        %3932 = vmatprep.subr.bf16.mxu0 0
        %3933 = vmatpush1.bf16.msra.mxu0 0
        %3934 = vmatprep.subr.bf16.mxu0 0
        %3935 = vmatpush1.bf16.msra.mxu0 0
        %3936 = vmatprep.subr.bf16.mxu0 0
        %3937 = vmatpush1.bf16.msra.mxu0 0
        %3938 = vmatprep.subr.bf16.mxu0 0
        %3939 = vmatpush1.bf16.msra.mxu0 0
        %3940 = vmatprep.subr.bf16.mxu0 0
        %3941 = vmatpush1.bf16.msra.mxu0 %v3924
        %3942 = vmatprep.subr.bf16.mxu0 0
        %3943 = vmatpush2.bf16.msra.mxu0 0
        %3944 = vmatprep.subr.bf16.mxu0 0
        %3945 = vmatpush2.bf16.msra.mxu0 0
        %3946 = vmatprep.subr.bf16.mxu0 0
        %3947 = vmatpush2.bf16.msra.mxu0 0
        %3948 = vmatprep.subr.bf16.mxu0 0
        %3949 = vmatpush2.bf16.msra.mxu0 0
        %3950 = vmatprep.subr.bf16.mxu0 0
        %3951 = vmatpush2.bf16.msra.mxu0 0
        %3952 = vmatprep.subr.bf16.mxu0 0
        %3953 = vmatpush2.bf16.msra.mxu0 0
        %3954 = vmatprep.subr.bf16.mxu0 0
        %3955 = vmatpush2.bf16.msra.mxu0 0
        %3956 = vmatprep.subr.bf16.mxu0 0
        %3957 = vmatpush2.bf16.msra.mxu0 0
        %3958 = vmatprep.mubr.bf16.mxu0 0
        %3959 = vmatmul.mubr.bf16.gmra.mxu0 %v3921
        %v3960 = vpop.f32.mrf.mxu0
        %v3961 = vadd.f32 0.0, %v3960
        %v3962 = vpop.f32.mrf.mxu0
        %v3963 = vpop.f32.mrf.mxu0
        %v3964 = vpop.f32.mrf.mxu0
        %3965 = vdwg.mxu0
        %v3966 = vpack.c.bf16 %v3961, %v3961
        %v3968 = vsel %vm994, %v3966, 0
        %v3971 = vsel %vm1060, %v3738, 0
        %3973 = vmatprep.subr.bf16.mxu0 0
        %3974 = vmatpush1.bf16.msra.mxu0 0
        %3975 = vmatprep.subr.bf16.mxu0 0
        %3976 = vmatpush1.bf16.msra.mxu0 0
        %3977 = vmatprep.subr.bf16.mxu0 0
        %3978 = vmatpush1.bf16.msra.mxu0 0
        %3979 = vmatprep.subr.bf16.mxu0 0
        %3980 = vmatpush1.bf16.msra.mxu0 0
        %3981 = vmatprep.subr.bf16.mxu0 0
        %3982 = vmatpush1.bf16.msra.mxu0 0
        %3983 = vmatprep.subr.bf16.mxu0 0
        %3984 = vmatpush1.bf16.msra.mxu0 0
        %3985 = vmatprep.subr.bf16.mxu0 0
        %3986 = vmatpush1.bf16.msra.mxu0 0
        %3987 = vmatprep.subr.bf16.mxu0 0
        %3988 = vmatpush1.bf16.msra.mxu0 %v3971
        %3989 = vmatprep.subr.bf16.mxu0 0
        %3990 = vmatpush2.bf16.msra.mxu0 0
        %3991 = vmatprep.subr.bf16.mxu0 0
        %3992 = vmatpush2.bf16.msra.mxu0 0
        %3993 = vmatprep.subr.bf16.mxu0 0
        %3994 = vmatpush2.bf16.msra.mxu0 0
        %3995 = vmatprep.subr.bf16.mxu0 0
        %3996 = vmatpush2.bf16.msra.mxu0 0
        %3997 = vmatprep.subr.bf16.mxu0 0
        %3998 = vmatpush2.bf16.msra.mxu0 0
        %3999 = vmatprep.subr.bf16.mxu0 0
        %4000 = vmatpush2.bf16.msra.mxu0 0
        %4001 = vmatprep.subr.bf16.mxu0 0
        %4002 = vmatpush2.bf16.msra.mxu0 0
        %4003 = vmatprep.subr.bf16.mxu0 0
        %4004 = vmatpush2.bf16.msra.mxu0 0
        %4005 = vmatprep.mubr.bf16.mxu0 0
        %4006 = vmatmul.mubr.bf16.gmra.mxu0 %v3968
        %v4007 = vpop.f32.mrf.mxu0
        %v4008 = vadd.f32 0.0, %v4007
        %v4009 = vpop.f32.mrf.mxu0
        %v4010 = vpop.f32.mrf.mxu0
        %v4011 = vpop.f32.mrf.mxu0
        %4012 = vdwg.mxu0
        %v4014 = vsel %vm994, %v3853, 0
        %v4017 = vsel %vm1060, %v3737, 0
        %4019 = vmatprep.subr.bf16.mxu0 0
        %4020 = vmatpush1.bf16.msra.mxu0 0
        %4021 = vmatprep.subr.bf16.mxu0 0
        %4022 = vmatpush1.bf16.msra.mxu0 0
        %4023 = vmatprep.subr.bf16.mxu0 0
        %4024 = vmatpush1.bf16.msra.mxu0 0
        %4025 = vmatprep.subr.bf16.mxu0 0
        %4026 = vmatpush1.bf16.msra.mxu0 0
        %4027 = vmatprep.subr.bf16.mxu0 0
        %4028 = vmatpush1.bf16.msra.mxu0 0
        %4029 = vmatprep.subr.bf16.mxu0 0
        %4030 = vmatpush1.bf16.msra.mxu0 0
        %4031 = vmatprep.subr.bf16.mxu0 0
        %4032 = vmatpush1.bf16.msra.mxu0 0
        %4033 = vmatprep.subr.bf16.mxu0 0
        %4034 = vmatpush1.bf16.msra.mxu0 %v4017
        %4035 = vmatprep.subr.bf16.mxu0 0
        %4036 = vmatpush2.bf16.msra.mxu0 0
        %4037 = vmatprep.subr.bf16.mxu0 0
        %4038 = vmatpush2.bf16.msra.mxu0 0
        %4039 = vmatprep.subr.bf16.mxu0 0
        %4040 = vmatpush2.bf16.msra.mxu0 0
        %4041 = vmatprep.subr.bf16.mxu0 0
        %4042 = vmatpush2.bf16.msra.mxu0 0
        %4043 = vmatprep.subr.bf16.mxu0 0
        %4044 = vmatpush2.bf16.msra.mxu0 0
        %4045 = vmatprep.subr.bf16.mxu0 0
        %4046 = vmatpush2.bf16.msra.mxu0 0
        %4047 = vmatprep.subr.bf16.mxu0 0
        %4048 = vmatpush2.bf16.msra.mxu0 0
        %4049 = vmatprep.subr.bf16.mxu0 0
        %4050 = vmatpush2.bf16.msra.mxu0 0
        %4051 = vmatprep.mubr.bf16.mxu0 0
        %4052 = vmatmul.mubr.bf16.gmra.mxu0 %v4014
        %v4053 = vpop.f32.mrf.mxu0
        %v4054 = vadd.f32 %v4008, %v4053
        %v4055 = vpop.f32.mrf.mxu0
        %v4056 = vpop.f32.mrf.mxu0
        %v4057 = vpop.f32.mrf.mxu0
        %4058 = vdwg.mxu0
        %4059 = vrot.lane.b32.xlu0 %v3741, 112
        %v4060 = vpop.permute.xlu0 %4059
        %4061 = vrot.lane.b32.xlu0 %v3741, 80
        %v4062 = vpop.permute.xlu0 %4061
        %v4064 = vsel %vm994, %v4060, 0
        %v4067 = vsel %vm994, %v4062, 0
        %4069 = vmatprep.subr.bf16.mxu0 0
        %4070 = vmatpush1.bf16.xpose.msra.mxu0 0
        %4071 = vmatprep.subr.bf16.mxu0 0
        %4072 = vmatpush1.bf16.xpose.msra.mxu0 0
        %4073 = vmatprep.subr.bf16.mxu0 0
        %4074 = vmatpush1.bf16.xpose.msra.mxu0 0
        %4075 = vmatprep.subr.bf16.mxu0 0
        %4076 = vmatpush1.bf16.xpose.msra.mxu0 0
        %4077 = vmatprep.subr.bf16.mxu0 0
        %4078 = vmatpush1.bf16.xpose.msra.mxu0 0
        %4079 = vmatprep.subr.bf16.mxu0 0
        %4080 = vmatpush1.bf16.xpose.msra.mxu0 0
        %4081 = vmatprep.subr.bf16.mxu0 0
        %4082 = vmatpush1.bf16.xpose.msra.mxu0 0
        %4083 = vmatprep.subr.bf16.mxu0 0
        %4084 = vmatpush1.bf16.xpose.msra.mxu0 %v4067
        %4085 = vmatprep.subr.bf16.mxu0 0
        %4086 = vmatpush2.bf16.xpose.msra.mxu0 0
        %4087 = vmatprep.subr.bf16.mxu0 0
        %4088 = vmatpush2.bf16.xpose.msra.mxu0 0
        %4089 = vmatprep.subr.bf16.mxu0 0
        %4090 = vmatpush2.bf16.xpose.msra.mxu0 0
        %4091 = vmatprep.subr.bf16.mxu0 0
        %4092 = vmatpush2.bf16.xpose.msra.mxu0 0
        %4093 = vmatprep.subr.bf16.mxu0 0
        %4094 = vmatpush2.bf16.xpose.msra.mxu0 0
        %4095 = vmatprep.subr.bf16.mxu0 0
        %4096 = vmatpush2.bf16.xpose.msra.mxu0 0
        %4097 = vmatprep.subr.bf16.mxu0 0
        %4098 = vmatpush2.bf16.xpose.msra.mxu0 0
        %4099 = vmatprep.subr.bf16.mxu0 0
        %4100 = vmatpush2.bf16.xpose.msra.mxu0 0
        %4101 = vmatprep.mubr.bf16.mxu0 0
        %4102 = vmatmul.mubr.bf16.gmra.mxu0 %v4064
        %v4103 = vpop.f32.mrf.mxu0
        %v4104 = vadd.f32 0.0, %v4103
        %v4105 = vpop.f32.mrf.mxu0
        %v4106 = vpop.f32.mrf.mxu0
        %v4107 = vpop.f32.mrf.mxu0
        %4108 = vdwg.mxu0
        %v4109 = vmul.f32 %v4104, 0.35355338
        %v4110 = vadd.f32 %v4109, %v916
        %v4111 = vsel %vm994, %v4110, -inf
        %4112 = vmax.xlane.f32.xlu0 %v4111
        %v4113 = vpop.xlane.xlu0 %4112
        %v4114 = vsub.f32 %v4110, %v4113
        %v4115 = vmul.f32 %v4114, 1.442695
        %v4116 = vpow.pop %v4115
        %v4117 = vsel %vm994, %v4116, 0.0
        %4118 = vadd.xlane.f32.xlu0 %v4117
        %v4119 = vpop.xlane.xlu0 %4118
        %v4120 = vrcp.pop %v4119
        %v4121 = vmul.f32 %v4116, %v4120
        %v4122 = vpack.c.bf16 %v4121, %v4121
        %4123 = vrot.lane.b32.xlu0 %v3741, 48
        %v4124 = vpop.permute.xlu0 %4123
        %v4126 = vsel %vm994, %v4122, 0
        %v4129 = vsel %vm1060, %v4124, 0
        %4131 = vmatprep.subr.bf16.mxu0 0
        %4132 = vmatpush1.bf16.msra.mxu0 0
        %4133 = vmatprep.subr.bf16.mxu0 0
        %4134 = vmatpush1.bf16.msra.mxu0 0
        %4135 = vmatprep.subr.bf16.mxu0 0
        %4136 = vmatpush1.bf16.msra.mxu0 0
        %4137 = vmatprep.subr.bf16.mxu0 0
        %4138 = vmatpush1.bf16.msra.mxu0 0
        %4139 = vmatprep.subr.bf16.mxu0 0
        %4140 = vmatpush1.bf16.msra.mxu0 0
        %4141 = vmatprep.subr.bf16.mxu0 0
        %4142 = vmatpush1.bf16.msra.mxu0 0
        %4143 = vmatprep.subr.bf16.mxu0 0
        %4144 = vmatpush1.bf16.msra.mxu0 0
        %4145 = vmatprep.subr.bf16.mxu0 0
        %4146 = vmatpush1.bf16.msra.mxu0 %v4129
        %4147 = vmatprep.subr.bf16.mxu0 0
        %4148 = vmatpush2.bf16.msra.mxu0 0
        %4149 = vmatprep.subr.bf16.mxu0 0
        %4150 = vmatpush2.bf16.msra.mxu0 0
        %4151 = vmatprep.subr.bf16.mxu0 0
        %4152 = vmatpush2.bf16.msra.mxu0 0
        %4153 = vmatprep.subr.bf16.mxu0 0
        %4154 = vmatpush2.bf16.msra.mxu0 0
        %4155 = vmatprep.subr.bf16.mxu0 0
        %4156 = vmatpush2.bf16.msra.mxu0 0
        %4157 = vmatprep.subr.bf16.mxu0 0
        %4158 = vmatpush2.bf16.msra.mxu0 0
        %4159 = vmatprep.subr.bf16.mxu0 0
        %4160 = vmatpush2.bf16.msra.mxu0 0
        %4161 = vmatprep.subr.bf16.mxu0 0
        %4162 = vmatpush2.bf16.msra.mxu0 0
        %4163 = vmatprep.mubr.bf16.mxu0 0
        %4164 = vmatmul.mubr.bf16.gmra.mxu0 %v4126
        %v4165 = vpop.f32.mrf.mxu0
        %v4166 = vadd.f32 0.0, %v4165
        %v4167 = vpop.f32.mrf.mxu0
        %v4168 = vpop.f32.mrf.mxu0
        %v4169 = vpop.f32.mrf.mxu0
        %4170 = vdwg.mxu0
        %v4171 = vpack.c.bf16 %v4166, %v4166
        %v4173 = vsel %vm994, %v4171, 0
        %v4176 = vsel %vm1060, %v3739, 0
        %4178 = vmatprep.subr.bf16.mxu0 0
        %4179 = vmatpush1.bf16.msra.mxu0 0
        %4180 = vmatprep.subr.bf16.mxu0 0
        %4181 = vmatpush1.bf16.msra.mxu0 0
        %4182 = vmatprep.subr.bf16.mxu0 0
        %4183 = vmatpush1.bf16.msra.mxu0 0
        %4184 = vmatprep.subr.bf16.mxu0 0
        %4185 = vmatpush1.bf16.msra.mxu0 0
        %4186 = vmatprep.subr.bf16.mxu0 0
        %4187 = vmatpush1.bf16.msra.mxu0 0
        %4188 = vmatprep.subr.bf16.mxu0 0
        %4189 = vmatpush1.bf16.msra.mxu0 0
        %4190 = vmatprep.subr.bf16.mxu0 0
        %4191 = vmatpush1.bf16.msra.mxu0 0
        %4192 = vmatprep.subr.bf16.mxu0 0
        %4193 = vmatpush1.bf16.msra.mxu0 %v4176
        %4194 = vmatprep.subr.bf16.mxu0 0
        %4195 = vmatpush2.bf16.msra.mxu0 0
        %4196 = vmatprep.subr.bf16.mxu0 0
        %4197 = vmatpush2.bf16.msra.mxu0 0
        %4198 = vmatprep.subr.bf16.mxu0 0
        %4199 = vmatpush2.bf16.msra.mxu0 0
        %4200 = vmatprep.subr.bf16.mxu0 0
        %4201 = vmatpush2.bf16.msra.mxu0 0
        %4202 = vmatprep.subr.bf16.mxu0 0
        %4203 = vmatpush2.bf16.msra.mxu0 0
        %4204 = vmatprep.subr.bf16.mxu0 0
        %4205 = vmatpush2.bf16.msra.mxu0 0
        %4206 = vmatprep.subr.bf16.mxu0 0
        %4207 = vmatpush2.bf16.msra.mxu0 0
        %4208 = vmatprep.subr.bf16.mxu0 0
        %4209 = vmatpush2.bf16.msra.mxu0 0
        %4210 = vmatprep.mubr.bf16.mxu0 0
        %4211 = vmatmul.mubr.bf16.gmra.mxu0 %v4173
        %v4212 = vpop.f32.mrf.mxu0
        %v4213 = vadd.f32 0.0, %v4212
        %v4214 = vpop.f32.mrf.mxu0
        %v4215 = vpop.f32.mrf.mxu0
        %v4216 = vpop.f32.mrf.mxu0
        %4217 = vdwg.mxu0
        %v4218 = vadd.f32 %v4054, %v4213
        %4219 = vrot.lane.b32.xlu0 %v3741, 104
        %v4220 = vpop.permute.xlu0 %4219
        %4221 = vrot.lane.b32.xlu0 %v3741, 72
        %v4222 = vpop.permute.xlu0 %4221
        %v4224 = vsel %vm994, %v4220, 0
        %v4227 = vsel %vm994, %v4222, 0
        %4229 = vmatprep.subr.bf16.mxu0 0
        %4230 = vmatpush1.bf16.xpose.msra.mxu0 0
        %4231 = vmatprep.subr.bf16.mxu0 0
        %4232 = vmatpush1.bf16.xpose.msra.mxu0 0
        %4233 = vmatprep.subr.bf16.mxu0 0
        %4234 = vmatpush1.bf16.xpose.msra.mxu0 0
        %4235 = vmatprep.subr.bf16.mxu0 0
        %4236 = vmatpush1.bf16.xpose.msra.mxu0 0
        %4237 = vmatprep.subr.bf16.mxu0 0
        %4238 = vmatpush1.bf16.xpose.msra.mxu0 0
        %4239 = vmatprep.subr.bf16.mxu0 0
        %4240 = vmatpush1.bf16.xpose.msra.mxu0 0
        %4241 = vmatprep.subr.bf16.mxu0 0
        %4242 = vmatpush1.bf16.xpose.msra.mxu0 0
        %4243 = vmatprep.subr.bf16.mxu0 0
        %4244 = vmatpush1.bf16.xpose.msra.mxu0 %v4227
        %4245 = vmatprep.subr.bf16.mxu0 0
        %4246 = vmatpush2.bf16.xpose.msra.mxu0 0
        %4247 = vmatprep.subr.bf16.mxu0 0
        %4248 = vmatpush2.bf16.xpose.msra.mxu0 0
        %4249 = vmatprep.subr.bf16.mxu0 0
        %4250 = vmatpush2.bf16.xpose.msra.mxu0 0
        %4251 = vmatprep.subr.bf16.mxu0 0
        %4252 = vmatpush2.bf16.xpose.msra.mxu0 0
        %4253 = vmatprep.subr.bf16.mxu0 0
        %4254 = vmatpush2.bf16.xpose.msra.mxu0 0
        %4255 = vmatprep.subr.bf16.mxu0 0
        %4256 = vmatpush2.bf16.xpose.msra.mxu0 0
        %4257 = vmatprep.subr.bf16.mxu0 0
        %4258 = vmatpush2.bf16.xpose.msra.mxu0 0
        %4259 = vmatprep.subr.bf16.mxu0 0
        %4260 = vmatpush2.bf16.xpose.msra.mxu0 0
        %4261 = vmatprep.mubr.bf16.mxu0 0
        %4262 = vmatmul.mubr.bf16.gmra.mxu0 %v4224
        %v4263 = vpop.f32.mrf.mxu0
        %v4264 = vadd.f32 0.0, %v4263
        %v4265 = vpop.f32.mrf.mxu0
        %v4266 = vpop.f32.mrf.mxu0
        %v4267 = vpop.f32.mrf.mxu0
        %4268 = vdwg.mxu0
        %v4269 = vmul.f32 %v4264, 0.35355338
        %v4270 = vadd.f32 %v4269, %v916
        %v4271 = vsel %vm994, %v4270, -inf
        %4272 = vmax.xlane.f32.xlu0 %v4271
        %v4273 = vpop.xlane.xlu0 %4272
        %v4274 = vsub.f32 %v4270, %v4273
        %v4275 = vmul.f32 %v4274, 1.442695
        %v4276 = vpow.pop %v4275
        %v4277 = vsel %vm994, %v4276, 0.0
        %4278 = vadd.xlane.f32.xlu0 %v4277
        %v4279 = vpop.xlane.xlu0 %4278
        %v4280 = vrcp.pop %v4279
        %v4281 = vmul.f32 %v4276, %v4280
        %v4282 = vpack.c.bf16 %v4281, %v4281
        %4283 = vrot.lane.b32.xlu0 %v3741, 40
        %v4284 = vpop.permute.xlu0 %4283
        %v4286 = vsel %vm994, %v4282, 0
        %v4289 = vsel %vm1060, %v4284, 0
        %4291 = vmatprep.subr.bf16.mxu0 0
        %4292 = vmatpush1.bf16.msra.mxu0 0
        %4293 = vmatprep.subr.bf16.mxu0 0
        %4294 = vmatpush1.bf16.msra.mxu0 0
        %4295 = vmatprep.subr.bf16.mxu0 0
        %4296 = vmatpush1.bf16.msra.mxu0 0
        %4297 = vmatprep.subr.bf16.mxu0 0
        %4298 = vmatpush1.bf16.msra.mxu0 0
        %4299 = vmatprep.subr.bf16.mxu0 0
        %4300 = vmatpush1.bf16.msra.mxu0 0
        %4301 = vmatprep.subr.bf16.mxu0 0
        %4302 = vmatpush1.bf16.msra.mxu0 0
        %4303 = vmatprep.subr.bf16.mxu0 0
        %4304 = vmatpush1.bf16.msra.mxu0 0
        %4305 = vmatprep.subr.bf16.mxu0 0
        %4306 = vmatpush1.bf16.msra.mxu0 %v4289
        %4307 = vmatprep.subr.bf16.mxu0 0
        %4308 = vmatpush2.bf16.msra.mxu0 0
        %4309 = vmatprep.subr.bf16.mxu0 0
        %4310 = vmatpush2.bf16.msra.mxu0 0
        %4311 = vmatprep.subr.bf16.mxu0 0
        %4312 = vmatpush2.bf16.msra.mxu0 0
        %4313 = vmatprep.subr.bf16.mxu0 0
        %4314 = vmatpush2.bf16.msra.mxu0 0
        %4315 = vmatprep.subr.bf16.mxu0 0
        %4316 = vmatpush2.bf16.msra.mxu0 0
        %4317 = vmatprep.subr.bf16.mxu0 0
        %4318 = vmatpush2.bf16.msra.mxu0 0
        %4319 = vmatprep.subr.bf16.mxu0 0
        %4320 = vmatpush2.bf16.msra.mxu0 0
        %4321 = vmatprep.subr.bf16.mxu0 0
        %4322 = vmatpush2.bf16.msra.mxu0 0
        %4323 = vmatprep.mubr.bf16.mxu0 0
        %4324 = vmatmul.mubr.bf16.gmra.mxu0 %v4286
        %v4325 = vpop.f32.mrf.mxu0
        %v4326 = vadd.f32 0.0, %v4325
        %v4327 = vpop.f32.mrf.mxu0
        %v4328 = vpop.f32.mrf.mxu0
        %v4329 = vpop.f32.mrf.mxu0
        %4330 = vdwg.mxu0
        %v4331 = vpack.c.bf16 %v4326, %v4326
        %v4333 = vsel %vm994, %v4331, 0
        %v4336 = vsel %vm1060, %v3740, 0
        %4338 = vmatprep.subr.bf16.mxu0 0
        %4339 = vmatpush1.bf16.msra.mxu0 0
        %4340 = vmatprep.subr.bf16.mxu0 0
        %4341 = vmatpush1.bf16.msra.mxu0 0
        %4342 = vmatprep.subr.bf16.mxu0 0
        %4343 = vmatpush1.bf16.msra.mxu0 0
        %4344 = vmatprep.subr.bf16.mxu0 0
        %4345 = vmatpush1.bf16.msra.mxu0 0
        %4346 = vmatprep.subr.bf16.mxu0 0
        %4347 = vmatpush1.bf16.msra.mxu0 0
        %4348 = vmatprep.subr.bf16.mxu0 0
        %4349 = vmatpush1.bf16.msra.mxu0 0
        %4350 = vmatprep.subr.bf16.mxu0 0
        %4351 = vmatpush1.bf16.msra.mxu0 0
        %4352 = vmatprep.subr.bf16.mxu0 0
        %4353 = vmatpush1.bf16.msra.mxu0 %v4336
        %4354 = vmatprep.subr.bf16.mxu0 0
        %4355 = vmatpush2.bf16.msra.mxu0 0
        %4356 = vmatprep.subr.bf16.mxu0 0
        %4357 = vmatpush2.bf16.msra.mxu0 0
        %4358 = vmatprep.subr.bf16.mxu0 0
        %4359 = vmatpush2.bf16.msra.mxu0 0
        %4360 = vmatprep.subr.bf16.mxu0 0
        %4361 = vmatpush2.bf16.msra.mxu0 0
        %4362 = vmatprep.subr.bf16.mxu0 0
        %4363 = vmatpush2.bf16.msra.mxu0 0
        %4364 = vmatprep.subr.bf16.mxu0 0
        %4365 = vmatpush2.bf16.msra.mxu0 0
        %4366 = vmatprep.subr.bf16.mxu0 0
        %4367 = vmatpush2.bf16.msra.mxu0 0
        %4368 = vmatprep.subr.bf16.mxu0 0
        %4369 = vmatpush2.bf16.msra.mxu0 0
        %4370 = vmatprep.mubr.bf16.mxu0 0
        %4371 = vmatmul.mubr.bf16.gmra.mxu0 %v4333
        %v4372 = vpop.f32.mrf.mxu0
        %v4373 = vadd.f32 0.0, %v4372
        %v4374 = vpop.f32.mrf.mxu0
        %v4375 = vpop.f32.mrf.mxu0
        %v4376 = vpop.f32.mrf.mxu0
        %4377 = vdwg.mxu0
        %v4378 = vadd.f32 %v4218, %v4373
        %s4379 = scalar_lea.vmem %s6, 1
        %v4380 = vld [vmem:[%s4379] sm:$0x1]
        %v4382 = vlaneseq
        %v4383 = vshrl.u32 %v4382, 7
        %v4384 = vsub.s32 0, %v4383
        %v4385 = vrot.slane %v4380, %v4384
        %v4387 = vadd.f32 %v4378, %v4385
        %v4388 = vadd.f32 %v3666, %v4387
        %s4389 = scalar_lea.vmem %s17, 1
        %v4390 = vld [vmem:[%s4389] sm:$0x1]
        %s4391 = scalar_lea.vmem %s18, 1
        %v4392 = vld [vmem:[%s4391] sm:$0x1]
        %v4393 = vsel %vm942, %v4388, 0.0
        %4394 = vadd.xlane.f32.xlu0 %v4393
        %v4395 = vpop.xlane.xlu0 %4394
        %v4396 = vmul.f32 %v4395, %v1644
        %v4397 = vsub.f32 %v4388, %v4396
        %v4398 = vmul.f32 %v4397, %v4397
        %v4399 = vsel %vm942, %v4398, 0.0
        %4400 = vadd.xlane.f32.xlu0 %v4399
        %v4401 = vpop.xlane.xlu0 %4400
        %v4402 = vmul.f32 %v4401, %v1644
        %v4403 = vadd.f32 %v4402, 1e-05
        %v4404 = vrsqrt.pop %v4403
        %v4405 = vmul.f32 %v4397, %v4404
        %v4407 = vlaneseq
        %v4408 = vshrl.u32 %v4407, 7
        %v4409 = vsub.s32 0, %v4408
        %v4410 = vrot.slane %v4390, %v4409
        %v4412 = vmul.f32 %v4405, %v4410
        %v4414 = vlaneseq
        %v4415 = vshrl.u32 %v4414, 7
        %v4416 = vsub.s32 0, %v4415
        %v4417 = vrot.slane %v4392, %v4416
        %v4419 = vadd.f32 %v4412, %v4417
        %v4420 = vpack.c.bf16 %v4419, %v4419
        %s4421 = scalar_lea.vmem [#allocation11], 16
        %v4422 = vld [vmem:[%s4421] sm:$0xf]
        %v4423 = vld [vmem:[%s4421 + $0x4] sm:$0xf]
        %v4424 = vld [vmem:[%s4421 + $0x8] sm:$0xf]
        %v4425 = vld [vmem:[%s4421 + $0xc] sm:$0xf]
        %s4426 = scalar_lea.vmem %s8, 1
        %v4427 = vld [vmem:[%s4426] sm:$0x1]
        %v4429 = vlaneseq
        %v4430 = vshrl.u32 %v4429, 7
        %v4431 = vsub.s32 0, %v4430
        %v4432 = vrot.slane %v4427, %v4431
        %v4438 = vunpack.c.l.b16 %v4422
        %v4439 = vunpack.c.l.b16 %v4423
        %v4440 = vunpack.c.l.b16 %v4424
        %v4441 = vunpack.c.l.b16 %v4425
        %v4442 = vpack.c.b16 %v4439, %v4438
        %v4443 = vpack.c.b16 %v4441, %v4440
        %v4447 = vsel %vm942, %v4420, 0
        %4449 = vmatprep.subr.bf16.mxu0 0
        %4450 = vmatpush1.bf16.msra.mxu0 0
        %4451 = vmatprep.subr.bf16.mxu0 0
        %4452 = vmatpush1.bf16.msra.mxu0 0
        %4453 = vmatprep.subr.bf16.mxu0 0
        %4454 = vmatpush1.bf16.msra.mxu0 0
        %4455 = vmatprep.subr.bf16.mxu0 0
        %4456 = vmatpush1.bf16.msra.mxu0 0
        %4457 = vmatprep.subr.bf16.mxu0 0
        %4458 = vmatpush1.bf16.msra.mxu0 0
        %4459 = vmatprep.subr.bf16.mxu0 0
        %4460 = vmatpush1.bf16.msra.mxu0 0
        %4461 = vmatprep.subr.bf16.mxu0 0
        %4462 = vmatpush1.bf16.msra.mxu0 %v4443
        %4463 = vmatprep.subr.bf16.mxu0 0
        %4464 = vmatpush1.bf16.msra.mxu0 %v4442
        %4465 = vmatprep.subr.bf16.mxu0 0
        %4466 = vmatpush2.bf16.msra.mxu0 0
        %4467 = vmatprep.subr.bf16.mxu0 0
        %4468 = vmatpush2.bf16.msra.mxu0 0
        %4469 = vmatprep.subr.bf16.mxu0 0
        %4470 = vmatpush2.bf16.msra.mxu0 0
        %4471 = vmatprep.subr.bf16.mxu0 0
        %4472 = vmatpush2.bf16.msra.mxu0 0
        %4473 = vmatprep.subr.bf16.mxu0 0
        %4474 = vmatpush2.bf16.msra.mxu0 0
        %4475 = vmatprep.subr.bf16.mxu0 0
        %4476 = vmatpush2.bf16.msra.mxu0 0
        %4477 = vmatprep.subr.bf16.mxu0 0
        %4478 = vmatpush2.bf16.msra.mxu0 0
        %4479 = vmatprep.subr.bf16.mxu0 0
        %4480 = vmatpush2.bf16.msra.mxu0 0
        %4481 = vmatprep.mubr.bf16.mxu0 0
        %4482 = vmatmul.mubr.bf16.gmra.mxu0 %v4447
        %v4483 = vpop.f32.mrf.mxu0
        %v4484 = vadd.f32 %v4432, %v4483
        %v4485 = vpop.f32.mrf.mxu0
        %v4486 = vpop.f32.mrf.mxu0
        %v4487 = vpop.f32.mrf.mxu0
        %4488 = vdwg.mxu0
        %s4489 = scalar_lea.vmem [#allocation13], 16
        %v4490 = vld [vmem:[%s4489] sm:$0xf]
        %v4491 = vld [vmem:[%s4489 + $0x4] sm:$0xf]
        %v4492 = vld [vmem:[%s4489 + $0x8] sm:$0xf]
        %v4493 = vld [vmem:[%s4489 + $0xc] sm:$0xf]
        %s4494 = scalar_lea.vmem %s10, 1
        %v4495 = vld [vmem:[%s4494] sm:$0x1]
        %v4497 = vlaneseq
        %v4498 = vshrl.u32 %v4497, 7
        %v4499 = vsub.s32 0, %v4498
        %v4500 = vrot.slane %v4495, %v4499
        %v4506 = vunpack.c.l.b16 %v4490
        %v4507 = vunpack.c.l.b16 %v4491
        %v4508 = vunpack.c.l.b16 %v4492
        %v4509 = vunpack.c.l.b16 %v4493
        %v4510 = vpack.c.b16 %v4507, %v4506
        %v4511 = vpack.c.b16 %v4509, %v4508
        %4514 = vmatprep.subr.bf16.mxu0 0
        %4515 = vmatpush1.bf16.msra.mxu0 0
        %4516 = vmatprep.subr.bf16.mxu0 0
        %4517 = vmatpush1.bf16.msra.mxu0 0
        %4518 = vmatprep.subr.bf16.mxu0 0
        %4519 = vmatpush1.bf16.msra.mxu0 0
        %4520 = vmatprep.subr.bf16.mxu0 0
        %4521 = vmatpush1.bf16.msra.mxu0 0
        %4522 = vmatprep.subr.bf16.mxu0 0
        %4523 = vmatpush1.bf16.msra.mxu0 0
        %4524 = vmatprep.subr.bf16.mxu0 0
        %4525 = vmatpush1.bf16.msra.mxu0 0
        %4526 = vmatprep.subr.bf16.mxu0 0
        %4527 = vmatpush1.bf16.msra.mxu0 %v4511
        %4528 = vmatprep.subr.bf16.mxu0 0
        %4529 = vmatpush1.bf16.msra.mxu0 %v4510
        %4530 = vmatprep.subr.bf16.mxu0 0
        %4531 = vmatpush2.bf16.msra.mxu0 0
        %4532 = vmatprep.subr.bf16.mxu0 0
        %4533 = vmatpush2.bf16.msra.mxu0 0
        %4534 = vmatprep.subr.bf16.mxu0 0
        %4535 = vmatpush2.bf16.msra.mxu0 0
        %4536 = vmatprep.subr.bf16.mxu0 0
        %4537 = vmatpush2.bf16.msra.mxu0 0
        %4538 = vmatprep.subr.bf16.mxu0 0
        %4539 = vmatpush2.bf16.msra.mxu0 0
        %4540 = vmatprep.subr.bf16.mxu0 0
        %4541 = vmatpush2.bf16.msra.mxu0 0
        %4542 = vmatprep.subr.bf16.mxu0 0
        %4543 = vmatpush2.bf16.msra.mxu0 0
        %4544 = vmatprep.subr.bf16.mxu0 0
        %4545 = vmatpush2.bf16.msra.mxu0 0
        %4546 = vmatprep.mubr.bf16.mxu0 0
        %4547 = vmatmul.mubr.bf16.gmra.mxu0 %v1760
        %v4548 = vpop.f32.mrf.mxu0
        %v4549 = vadd.f32 %v4500, %v4548
        %v4550 = vpop.f32.mrf.mxu0
        %v4551 = vpop.f32.mrf.mxu0
        %v4552 = vpop.f32.mrf.mxu0
        %4553 = vdwg.mxu0
        %s4554 = scalar_lea.vmem [#allocation14], 16
        %v4555 = vld [vmem:[%s4554] sm:$0xf]
        %v4556 = vld [vmem:[%s4554 + $0x4] sm:$0xf]
        %v4557 = vld [vmem:[%s4554 + $0x8] sm:$0xf]
        %v4558 = vld [vmem:[%s4554 + $0xc] sm:$0xf]
        %v4559 = vpack.c.bf16 %v4484, %v4484
        %v4560 = vpack.c.bf16 %v4549, %v4549
        %v4562 = vsel %vm994, %v4559, 0
        %v4565 = vsel %vm994, %v4560, 0
        %4567 = vmatprep.subr.bf16.mxu0 0
        %4568 = vmatpush1.bf16.xpose.msra.mxu0 0
        %4569 = vmatprep.subr.bf16.mxu0 0
        %4570 = vmatpush1.bf16.xpose.msra.mxu0 0
        %4571 = vmatprep.subr.bf16.mxu0 0
        %4572 = vmatpush1.bf16.xpose.msra.mxu0 0
        %4573 = vmatprep.subr.bf16.mxu0 0
        %4574 = vmatpush1.bf16.xpose.msra.mxu0 0
        %4575 = vmatprep.subr.bf16.mxu0 0
        %4576 = vmatpush1.bf16.xpose.msra.mxu0 0
        %4577 = vmatprep.subr.bf16.mxu0 0
        %4578 = vmatpush1.bf16.xpose.msra.mxu0 0
        %4579 = vmatprep.subr.bf16.mxu0 0
        %4580 = vmatpush1.bf16.xpose.msra.mxu0 0
        %4581 = vmatprep.subr.bf16.mxu0 0
        %4582 = vmatpush1.bf16.xpose.msra.mxu0 %v4565
        %4583 = vmatprep.subr.bf16.mxu0 0
        %4584 = vmatpush2.bf16.xpose.msra.mxu0 0
        %4585 = vmatprep.subr.bf16.mxu0 0
        %4586 = vmatpush2.bf16.xpose.msra.mxu0 0
        %4587 = vmatprep.subr.bf16.mxu0 0
        %4588 = vmatpush2.bf16.xpose.msra.mxu0 0
        %4589 = vmatprep.subr.bf16.mxu0 0
        %4590 = vmatpush2.bf16.xpose.msra.mxu0 0
        %4591 = vmatprep.subr.bf16.mxu0 0
        %4592 = vmatpush2.bf16.xpose.msra.mxu0 0
        %4593 = vmatprep.subr.bf16.mxu0 0
        %4594 = vmatpush2.bf16.xpose.msra.mxu0 0
        %4595 = vmatprep.subr.bf16.mxu0 0
        %4596 = vmatpush2.bf16.xpose.msra.mxu0 0
        %4597 = vmatprep.subr.bf16.mxu0 0
        %4598 = vmatpush2.bf16.xpose.msra.mxu0 0
        %4599 = vmatprep.mubr.bf16.mxu0 0
        %4600 = vmatmul.mubr.bf16.gmra.mxu0 %v4562
        %v4601 = vpop.f32.mrf.mxu0
        %v4602 = vadd.f32 0.0, %v4601
        %v4603 = vpop.f32.mrf.mxu0
        %v4604 = vpop.f32.mrf.mxu0
        %v4605 = vpop.f32.mrf.mxu0
        %4606 = vdwg.mxu0
        %v4607 = vmul.f32 %v4602, 0.35355338
        %v4608 = vsel %vm994, %v4607, -inf
        %4609 = vmax.xlane.f32.xlu0 %v4608
        %v4610 = vpop.xlane.xlu0 %4609
        %v4611 = vsub.f32 %v4607, %v4610
        %v4612 = vmul.f32 %v4611, 1.442695
        %v4613 = vpow.pop %v4612
        %v4614 = vsel %vm994, %v4613, 0.0
        %4615 = vadd.xlane.f32.xlu0 %v4614
        %v4616 = vpop.xlane.xlu0 %4615
        %v4617 = vrcp.pop %v4616
        %v4618 = vmul.f32 %v4613, %v4617
        %v4619 = vpack.c.bf16 %v4618, %v4618
        %4621 = vrot.lane.b32.xlu0 %v4560, 96
        %v4622 = vpop.permute.xlu0 %4621
        %v4624 = vsel %vm994, %v4619, 0
        %v4627 = vsel %vm1060, %v4622, 0
        %4629 = vmatprep.subr.bf16.mxu0 0
        %4630 = vmatpush1.bf16.msra.mxu0 0
        %4631 = vmatprep.subr.bf16.mxu0 0
        %4632 = vmatpush1.bf16.msra.mxu0 0
        %4633 = vmatprep.subr.bf16.mxu0 0
        %4634 = vmatpush1.bf16.msra.mxu0 0
        %4635 = vmatprep.subr.bf16.mxu0 0
        %4636 = vmatpush1.bf16.msra.mxu0 0
        %4637 = vmatprep.subr.bf16.mxu0 0
        %4638 = vmatpush1.bf16.msra.mxu0 0
        %4639 = vmatprep.subr.bf16.mxu0 0
        %4640 = vmatpush1.bf16.msra.mxu0 0
        %4641 = vmatprep.subr.bf16.mxu0 0
        %4642 = vmatpush1.bf16.msra.mxu0 0
        %4643 = vmatprep.subr.bf16.mxu0 0
        %4644 = vmatpush1.bf16.msra.mxu0 %v4627
        %4645 = vmatprep.subr.bf16.mxu0 0
        %4646 = vmatpush2.bf16.msra.mxu0 0
        %4647 = vmatprep.subr.bf16.mxu0 0
        %4648 = vmatpush2.bf16.msra.mxu0 0
        %4649 = vmatprep.subr.bf16.mxu0 0
        %4650 = vmatpush2.bf16.msra.mxu0 0
        %4651 = vmatprep.subr.bf16.mxu0 0
        %4652 = vmatpush2.bf16.msra.mxu0 0
        %4653 = vmatprep.subr.bf16.mxu0 0
        %4654 = vmatpush2.bf16.msra.mxu0 0
        %4655 = vmatprep.subr.bf16.mxu0 0
        %4656 = vmatpush2.bf16.msra.mxu0 0
        %4657 = vmatprep.subr.bf16.mxu0 0
        %4658 = vmatpush2.bf16.msra.mxu0 0
        %4659 = vmatprep.subr.bf16.mxu0 0
        %4660 = vmatpush2.bf16.msra.mxu0 0
        %4661 = vmatprep.mubr.bf16.mxu0 0
        %4662 = vmatmul.mubr.bf16.gmra.mxu0 %v4624
        %v4663 = vpop.f32.mrf.mxu0
        %v4664 = vadd.f32 0.0, %v4663
        %v4665 = vpop.f32.mrf.mxu0
        %v4666 = vpop.f32.mrf.mxu0
        %v4667 = vpop.f32.mrf.mxu0
        %4668 = vdwg.mxu0
        %v4669 = vpack.c.bf16 %v4664, %v4664
        %4671 = vrot.lane.b32.xlu0 %v4559, 120
        %v4672 = vpop.permute.xlu0 %4671
        %4673 = vrot.lane.b32.xlu0 %v4560, 120
        %v4674 = vpop.permute.xlu0 %4673
        %v4676 = vsel %vm994, %v4672, 0
        %v4679 = vsel %vm994, %v4674, 0
        %4681 = vmatprep.subr.bf16.mxu0 0
        %4682 = vmatpush1.bf16.xpose.msra.mxu0 0
        %4683 = vmatprep.subr.bf16.mxu0 0
        %4684 = vmatpush1.bf16.xpose.msra.mxu0 0
        %4685 = vmatprep.subr.bf16.mxu0 0
        %4686 = vmatpush1.bf16.xpose.msra.mxu0 0
        %4687 = vmatprep.subr.bf16.mxu0 0
        %4688 = vmatpush1.bf16.xpose.msra.mxu0 0
        %4689 = vmatprep.subr.bf16.mxu0 0
        %4690 = vmatpush1.bf16.xpose.msra.mxu0 0
        %4691 = vmatprep.subr.bf16.mxu0 0
        %4692 = vmatpush1.bf16.xpose.msra.mxu0 0
        %4693 = vmatprep.subr.bf16.mxu0 0
        %4694 = vmatpush1.bf16.xpose.msra.mxu0 0
        %4695 = vmatprep.subr.bf16.mxu0 0
        %4696 = vmatpush1.bf16.xpose.msra.mxu0 %v4679
        %4697 = vmatprep.subr.bf16.mxu0 0
        %4698 = vmatpush2.bf16.xpose.msra.mxu0 0
        %4699 = vmatprep.subr.bf16.mxu0 0
        %4700 = vmatpush2.bf16.xpose.msra.mxu0 0
        %4701 = vmatprep.subr.bf16.mxu0 0
        %4702 = vmatpush2.bf16.xpose.msra.mxu0 0
        %4703 = vmatprep.subr.bf16.mxu0 0
        %4704 = vmatpush2.bf16.xpose.msra.mxu0 0
        %4705 = vmatprep.subr.bf16.mxu0 0
        %4706 = vmatpush2.bf16.xpose.msra.mxu0 0
        %4707 = vmatprep.subr.bf16.mxu0 0
        %4708 = vmatpush2.bf16.xpose.msra.mxu0 0
        %4709 = vmatprep.subr.bf16.mxu0 0
        %4710 = vmatpush2.bf16.xpose.msra.mxu0 0
        %4711 = vmatprep.subr.bf16.mxu0 0
        %4712 = vmatpush2.bf16.xpose.msra.mxu0 0
        %4713 = vmatprep.mubr.bf16.mxu0 0
        %4714 = vmatmul.mubr.bf16.gmra.mxu0 %v4676
        %v4715 = vpop.f32.mrf.mxu0
        %v4716 = vadd.f32 0.0, %v4715
        %v4717 = vpop.f32.mrf.mxu0
        %v4718 = vpop.f32.mrf.mxu0
        %v4719 = vpop.f32.mrf.mxu0
        %4720 = vdwg.mxu0
        %v4721 = vmul.f32 %v4716, 0.35355338
        %v4722 = vsel %vm994, %v4721, -inf
        %4723 = vmax.xlane.f32.xlu0 %v4722
        %v4724 = vpop.xlane.xlu0 %4723
        %v4725 = vsub.f32 %v4721, %v4724
        %v4726 = vmul.f32 %v4725, 1.442695
        %v4727 = vpow.pop %v4726
        %v4728 = vsel %vm994, %v4727, 0.0
        %4729 = vadd.xlane.f32.xlu0 %v4728
        %v4730 = vpop.xlane.xlu0 %4729
        %v4731 = vrcp.pop %v4730
        %v4732 = vmul.f32 %v4727, %v4731
        %v4733 = vpack.c.bf16 %v4732, %v4732
        %4734 = vrot.lane.b32.xlu0 %v4560, 88
        %v4735 = vpop.permute.xlu0 %4734
        %v4737 = vsel %vm994, %v4733, 0
        %v4740 = vsel %vm1060, %v4735, 0
        %4742 = vmatprep.subr.bf16.mxu0 0
        %4743 = vmatpush1.bf16.msra.mxu0 0
        %4744 = vmatprep.subr.bf16.mxu0 0
        %4745 = vmatpush1.bf16.msra.mxu0 0
        %4746 = vmatprep.subr.bf16.mxu0 0
        %4747 = vmatpush1.bf16.msra.mxu0 0
        %4748 = vmatprep.subr.bf16.mxu0 0
        %4749 = vmatpush1.bf16.msra.mxu0 0
        %4750 = vmatprep.subr.bf16.mxu0 0
        %4751 = vmatpush1.bf16.msra.mxu0 0
        %4752 = vmatprep.subr.bf16.mxu0 0
        %4753 = vmatpush1.bf16.msra.mxu0 0
        %4754 = vmatprep.subr.bf16.mxu0 0
        %4755 = vmatpush1.bf16.msra.mxu0 0
        %4756 = vmatprep.subr.bf16.mxu0 0
        %4757 = vmatpush1.bf16.msra.mxu0 %v4740
        %4758 = vmatprep.subr.bf16.mxu0 0
        %4759 = vmatpush2.bf16.msra.mxu0 0
        %4760 = vmatprep.subr.bf16.mxu0 0
        %4761 = vmatpush2.bf16.msra.mxu0 0
        %4762 = vmatprep.subr.bf16.mxu0 0
        %4763 = vmatpush2.bf16.msra.mxu0 0
        %4764 = vmatprep.subr.bf16.mxu0 0
        %4765 = vmatpush2.bf16.msra.mxu0 0
        %4766 = vmatprep.subr.bf16.mxu0 0
        %4767 = vmatpush2.bf16.msra.mxu0 0
        %4768 = vmatprep.subr.bf16.mxu0 0
        %4769 = vmatpush2.bf16.msra.mxu0 0
        %4770 = vmatprep.subr.bf16.mxu0 0
        %4771 = vmatpush2.bf16.msra.mxu0 0
        %4772 = vmatprep.subr.bf16.mxu0 0
        %4773 = vmatpush2.bf16.msra.mxu0 0
        %4774 = vmatprep.mubr.bf16.mxu0 0
        %4775 = vmatmul.mubr.bf16.gmra.mxu0 %v4737
        %v4776 = vpop.f32.mrf.mxu0
        %v4777 = vadd.f32 0.0, %v4776
        %v4778 = vpop.f32.mrf.mxu0
        %v4779 = vpop.f32.mrf.mxu0
        %v4780 = vpop.f32.mrf.mxu0
        %4781 = vdwg.mxu0
        %v4782 = vpack.c.bf16 %v4777, %v4777
        %v4784 = vsel %vm994, %v4782, 0
        %v4787 = vsel %vm1060, %v4556, 0
        %4789 = vmatprep.subr.bf16.mxu0 0
        %4790 = vmatpush1.bf16.msra.mxu0 0
        %4791 = vmatprep.subr.bf16.mxu0 0
        %4792 = vmatpush1.bf16.msra.mxu0 0
        %4793 = vmatprep.subr.bf16.mxu0 0
        %4794 = vmatpush1.bf16.msra.mxu0 0
        %4795 = vmatprep.subr.bf16.mxu0 0
        %4796 = vmatpush1.bf16.msra.mxu0 0
        %4797 = vmatprep.subr.bf16.mxu0 0
        %4798 = vmatpush1.bf16.msra.mxu0 0
        %4799 = vmatprep.subr.bf16.mxu0 0
        %4800 = vmatpush1.bf16.msra.mxu0 0
        %4801 = vmatprep.subr.bf16.mxu0 0
        %4802 = vmatpush1.bf16.msra.mxu0 0
        %4803 = vmatprep.subr.bf16.mxu0 0
        %4804 = vmatpush1.bf16.msra.mxu0 %v4787
        %4805 = vmatprep.subr.bf16.mxu0 0
        %4806 = vmatpush2.bf16.msra.mxu0 0
        %4807 = vmatprep.subr.bf16.mxu0 0
        %4808 = vmatpush2.bf16.msra.mxu0 0
        %4809 = vmatprep.subr.bf16.mxu0 0
        %4810 = vmatpush2.bf16.msra.mxu0 0
        %4811 = vmatprep.subr.bf16.mxu0 0
        %4812 = vmatpush2.bf16.msra.mxu0 0
        %4813 = vmatprep.subr.bf16.mxu0 0
        %4814 = vmatpush2.bf16.msra.mxu0 0
        %4815 = vmatprep.subr.bf16.mxu0 0
        %4816 = vmatpush2.bf16.msra.mxu0 0
        %4817 = vmatprep.subr.bf16.mxu0 0
        %4818 = vmatpush2.bf16.msra.mxu0 0
        %4819 = vmatprep.subr.bf16.mxu0 0
        %4820 = vmatpush2.bf16.msra.mxu0 0
        %4821 = vmatprep.mubr.bf16.mxu0 0
        %4822 = vmatmul.mubr.bf16.gmra.mxu0 %v4784
        %v4823 = vpop.f32.mrf.mxu0
        %v4824 = vadd.f32 0.0, %v4823
        %v4825 = vpop.f32.mrf.mxu0
        %v4826 = vpop.f32.mrf.mxu0
        %v4827 = vpop.f32.mrf.mxu0
        %4828 = vdwg.mxu0
        %v4830 = vsel %vm994, %v4669, 0
        %v4833 = vsel %vm1060, %v4555, 0
        %4835 = vmatprep.subr.bf16.mxu0 0
        %4836 = vmatpush1.bf16.msra.mxu0 0
        %4837 = vmatprep.subr.bf16.mxu0 0
        %4838 = vmatpush1.bf16.msra.mxu0 0
        %4839 = vmatprep.subr.bf16.mxu0 0
        %4840 = vmatpush1.bf16.msra.mxu0 0
        %4841 = vmatprep.subr.bf16.mxu0 0
        %4842 = vmatpush1.bf16.msra.mxu0 0
        %4843 = vmatprep.subr.bf16.mxu0 0
        %4844 = vmatpush1.bf16.msra.mxu0 0
        %4845 = vmatprep.subr.bf16.mxu0 0
        %4846 = vmatpush1.bf16.msra.mxu0 0
        %4847 = vmatprep.subr.bf16.mxu0 0
        %4848 = vmatpush1.bf16.msra.mxu0 0
        %4849 = vmatprep.subr.bf16.mxu0 0
        %4850 = vmatpush1.bf16.msra.mxu0 %v4833
        %4851 = vmatprep.subr.bf16.mxu0 0
        %4852 = vmatpush2.bf16.msra.mxu0 0
        %4853 = vmatprep.subr.bf16.mxu0 0
        %4854 = vmatpush2.bf16.msra.mxu0 0
        %4855 = vmatprep.subr.bf16.mxu0 0
        %4856 = vmatpush2.bf16.msra.mxu0 0
        %4857 = vmatprep.subr.bf16.mxu0 0
        %4858 = vmatpush2.bf16.msra.mxu0 0
        %4859 = vmatprep.subr.bf16.mxu0 0
        %4860 = vmatpush2.bf16.msra.mxu0 0
        %4861 = vmatprep.subr.bf16.mxu0 0
        %4862 = vmatpush2.bf16.msra.mxu0 0
        %4863 = vmatprep.subr.bf16.mxu0 0
        %4864 = vmatpush2.bf16.msra.mxu0 0
        %4865 = vmatprep.subr.bf16.mxu0 0
        %4866 = vmatpush2.bf16.msra.mxu0 0
        %4867 = vmatprep.mubr.bf16.mxu0 0
        %4868 = vmatmul.mubr.bf16.gmra.mxu0 %v4830
        %v4869 = vpop.f32.mrf.mxu0
        %v4870 = vadd.f32 %v4824, %v4869
        %v4871 = vpop.f32.mrf.mxu0
        %v4872 = vpop.f32.mrf.mxu0
        %v4873 = vpop.f32.mrf.mxu0
        %4874 = vdwg.mxu0
        %4875 = vrot.lane.b32.xlu0 %v4559, 112
        %v4876 = vpop.permute.xlu0 %4875
        %4877 = vrot.lane.b32.xlu0 %v4560, 112
        %v4878 = vpop.permute.xlu0 %4877
        %v4880 = vsel %vm994, %v4876, 0
        %v4883 = vsel %vm994, %v4878, 0
        %4885 = vmatprep.subr.bf16.mxu0 0
        %4886 = vmatpush1.bf16.xpose.msra.mxu0 0
        %4887 = vmatprep.subr.bf16.mxu0 0
        %4888 = vmatpush1.bf16.xpose.msra.mxu0 0
        %4889 = vmatprep.subr.bf16.mxu0 0
        %4890 = vmatpush1.bf16.xpose.msra.mxu0 0
        %4891 = vmatprep.subr.bf16.mxu0 0
        %4892 = vmatpush1.bf16.xpose.msra.mxu0 0
        %4893 = vmatprep.subr.bf16.mxu0 0
        %4894 = vmatpush1.bf16.xpose.msra.mxu0 0
        %4895 = vmatprep.subr.bf16.mxu0 0
        %4896 = vmatpush1.bf16.xpose.msra.mxu0 0
        %4897 = vmatprep.subr.bf16.mxu0 0
        %4898 = vmatpush1.bf16.xpose.msra.mxu0 0
        %4899 = vmatprep.subr.bf16.mxu0 0
        %4900 = vmatpush1.bf16.xpose.msra.mxu0 %v4883
        %4901 = vmatprep.subr.bf16.mxu0 0
        %4902 = vmatpush2.bf16.xpose.msra.mxu0 0
        %4903 = vmatprep.subr.bf16.mxu0 0
        %4904 = vmatpush2.bf16.xpose.msra.mxu0 0
        %4905 = vmatprep.subr.bf16.mxu0 0
        %4906 = vmatpush2.bf16.xpose.msra.mxu0 0
        %4907 = vmatprep.subr.bf16.mxu0 0
        %4908 = vmatpush2.bf16.xpose.msra.mxu0 0
        %4909 = vmatprep.subr.bf16.mxu0 0
        %4910 = vmatpush2.bf16.xpose.msra.mxu0 0
        %4911 = vmatprep.subr.bf16.mxu0 0
        %4912 = vmatpush2.bf16.xpose.msra.mxu0 0
        %4913 = vmatprep.subr.bf16.mxu0 0
        %4914 = vmatpush2.bf16.xpose.msra.mxu0 0
        %4915 = vmatprep.subr.bf16.mxu0 0
        %4916 = vmatpush2.bf16.xpose.msra.mxu0 0
        %4917 = vmatprep.mubr.bf16.mxu0 0
        %4918 = vmatmul.mubr.bf16.gmra.mxu0 %v4880
        %v4919 = vpop.f32.mrf.mxu0
        %v4920 = vadd.f32 0.0, %v4919
        %v4921 = vpop.f32.mrf.mxu0
        %v4922 = vpop.f32.mrf.mxu0
        %v4923 = vpop.f32.mrf.mxu0
        %4924 = vdwg.mxu0
        %v4925 = vmul.f32 %v4920, 0.35355338
        %v4926 = vsel %vm994, %v4925, -inf
        %4927 = vmax.xlane.f32.xlu0 %v4926
        %v4928 = vpop.xlane.xlu0 %4927
        %v4929 = vsub.f32 %v4925, %v4928
        %v4930 = vmul.f32 %v4929, 1.442695
        %v4931 = vpow.pop %v4930
        %v4932 = vsel %vm994, %v4931, 0.0
        %4933 = vadd.xlane.f32.xlu0 %v4932
        %v4934 = vpop.xlane.xlu0 %4933
        %v4935 = vrcp.pop %v4934
        %v4936 = vmul.f32 %v4931, %v4935
        %v4937 = vpack.c.bf16 %v4936, %v4936
        %4938 = vrot.lane.b32.xlu0 %v4560, 80
        %v4939 = vpop.permute.xlu0 %4938
        %v4941 = vsel %vm994, %v4937, 0
        %v4944 = vsel %vm1060, %v4939, 0
        %4946 = vmatprep.subr.bf16.mxu0 0
        %4947 = vmatpush1.bf16.msra.mxu0 0
        %4948 = vmatprep.subr.bf16.mxu0 0
        %4949 = vmatpush1.bf16.msra.mxu0 0
        %4950 = vmatprep.subr.bf16.mxu0 0
        %4951 = vmatpush1.bf16.msra.mxu0 0
        %4952 = vmatprep.subr.bf16.mxu0 0
        %4953 = vmatpush1.bf16.msra.mxu0 0
        %4954 = vmatprep.subr.bf16.mxu0 0
        %4955 = vmatpush1.bf16.msra.mxu0 0
        %4956 = vmatprep.subr.bf16.mxu0 0
        %4957 = vmatpush1.bf16.msra.mxu0 0
        %4958 = vmatprep.subr.bf16.mxu0 0
        %4959 = vmatpush1.bf16.msra.mxu0 0
        %4960 = vmatprep.subr.bf16.mxu0 0
        %4961 = vmatpush1.bf16.msra.mxu0 %v4944
        %4962 = vmatprep.subr.bf16.mxu0 0
        %4963 = vmatpush2.bf16.msra.mxu0 0
        %4964 = vmatprep.subr.bf16.mxu0 0
        %4965 = vmatpush2.bf16.msra.mxu0 0
        %4966 = vmatprep.subr.bf16.mxu0 0
        %4967 = vmatpush2.bf16.msra.mxu0 0
        %4968 = vmatprep.subr.bf16.mxu0 0
        %4969 = vmatpush2.bf16.msra.mxu0 0
        %4970 = vmatprep.subr.bf16.mxu0 0
        %4971 = vmatpush2.bf16.msra.mxu0 0
        %4972 = vmatprep.subr.bf16.mxu0 0
        %4973 = vmatpush2.bf16.msra.mxu0 0
        %4974 = vmatprep.subr.bf16.mxu0 0
        %4975 = vmatpush2.bf16.msra.mxu0 0
        %4976 = vmatprep.subr.bf16.mxu0 0
        %4977 = vmatpush2.bf16.msra.mxu0 0
        %4978 = vmatprep.mubr.bf16.mxu0 0
        %4979 = vmatmul.mubr.bf16.gmra.mxu0 %v4941
        %v4980 = vpop.f32.mrf.mxu0
        %v4981 = vadd.f32 0.0, %v4980
        %v4982 = vpop.f32.mrf.mxu0
        %v4983 = vpop.f32.mrf.mxu0
        %v4984 = vpop.f32.mrf.mxu0
        %4985 = vdwg.mxu0
        %v4986 = vpack.c.bf16 %v4981, %v4981
        %v4988 = vsel %vm994, %v4986, 0
        %v4991 = vsel %vm1060, %v4557, 0
        %4993 = vmatprep.subr.bf16.mxu0 0
        %4994 = vmatpush1.bf16.msra.mxu0 0
        %4995 = vmatprep.subr.bf16.mxu0 0
        %4996 = vmatpush1.bf16.msra.mxu0 0
        %4997 = vmatprep.subr.bf16.mxu0 0
        %4998 = vmatpush1.bf16.msra.mxu0 0
        %4999 = vmatprep.subr.bf16.mxu0 0
        %5000 = vmatpush1.bf16.msra.mxu0 0
        %5001 = vmatprep.subr.bf16.mxu0 0
        %5002 = vmatpush1.bf16.msra.mxu0 0
        %5003 = vmatprep.subr.bf16.mxu0 0
        %5004 = vmatpush1.bf16.msra.mxu0 0
        %5005 = vmatprep.subr.bf16.mxu0 0
        %5006 = vmatpush1.bf16.msra.mxu0 0
        %5007 = vmatprep.subr.bf16.mxu0 0
        %5008 = vmatpush1.bf16.msra.mxu0 %v4991
        %5009 = vmatprep.subr.bf16.mxu0 0
        %5010 = vmatpush2.bf16.msra.mxu0 0
        %5011 = vmatprep.subr.bf16.mxu0 0
        %5012 = vmatpush2.bf16.msra.mxu0 0
        %5013 = vmatprep.subr.bf16.mxu0 0
        %5014 = vmatpush2.bf16.msra.mxu0 0
        %5015 = vmatprep.subr.bf16.mxu0 0
        %5016 = vmatpush2.bf16.msra.mxu0 0
        %5017 = vmatprep.subr.bf16.mxu0 0
        %5018 = vmatpush2.bf16.msra.mxu0 0
        %5019 = vmatprep.subr.bf16.mxu0 0
        %5020 = vmatpush2.bf16.msra.mxu0 0
        %5021 = vmatprep.subr.bf16.mxu0 0
        %5022 = vmatpush2.bf16.msra.mxu0 0
        %5023 = vmatprep.subr.bf16.mxu0 0
        %5024 = vmatpush2.bf16.msra.mxu0 0
        %5025 = vmatprep.mubr.bf16.mxu0 0
        %5026 = vmatmul.mubr.bf16.gmra.mxu0 %v4988
        %v5027 = vpop.f32.mrf.mxu0
        %v5028 = vadd.f32 0.0, %v5027
        %v5029 = vpop.f32.mrf.mxu0
        %v5030 = vpop.f32.mrf.mxu0
        %v5031 = vpop.f32.mrf.mxu0
        %5032 = vdwg.mxu0
        %v5033 = vadd.f32 %v4870, %v5028
        %5034 = vrot.lane.b32.xlu0 %v4559, 104
        %v5035 = vpop.permute.xlu0 %5034
        %5036 = vrot.lane.b32.xlu0 %v4560, 104
        %v5037 = vpop.permute.xlu0 %5036
        %v5039 = vsel %vm994, %v5035, 0
        %v5042 = vsel %vm994, %v5037, 0
        %5044 = vmatprep.subr.bf16.mxu0 0
        %5045 = vmatpush1.bf16.xpose.msra.mxu0 0
        %5046 = vmatprep.subr.bf16.mxu0 0
        %5047 = vmatpush1.bf16.xpose.msra.mxu0 0
        %5048 = vmatprep.subr.bf16.mxu0 0
        %5049 = vmatpush1.bf16.xpose.msra.mxu0 0
        %5050 = vmatprep.subr.bf16.mxu0 0
        %5051 = vmatpush1.bf16.xpose.msra.mxu0 0
        %5052 = vmatprep.subr.bf16.mxu0 0
        %5053 = vmatpush1.bf16.xpose.msra.mxu0 0
        %5054 = vmatprep.subr.bf16.mxu0 0
        %5055 = vmatpush1.bf16.xpose.msra.mxu0 0
        %5056 = vmatprep.subr.bf16.mxu0 0
        %5057 = vmatpush1.bf16.xpose.msra.mxu0 0
        %5058 = vmatprep.subr.bf16.mxu0 0
        %5059 = vmatpush1.bf16.xpose.msra.mxu0 %v5042
        %5060 = vmatprep.subr.bf16.mxu0 0
        %5061 = vmatpush2.bf16.xpose.msra.mxu0 0
        %5062 = vmatprep.subr.bf16.mxu0 0
        %5063 = vmatpush2.bf16.xpose.msra.mxu0 0
        %5064 = vmatprep.subr.bf16.mxu0 0
        %5065 = vmatpush2.bf16.xpose.msra.mxu0 0
        %5066 = vmatprep.subr.bf16.mxu0 0
        %5067 = vmatpush2.bf16.xpose.msra.mxu0 0
        %5068 = vmatprep.subr.bf16.mxu0 0
        %5069 = vmatpush2.bf16.xpose.msra.mxu0 0
        %5070 = vmatprep.subr.bf16.mxu0 0
        %5071 = vmatpush2.bf16.xpose.msra.mxu0 0
        %5072 = vmatprep.subr.bf16.mxu0 0
        %5073 = vmatpush2.bf16.xpose.msra.mxu0 0
        %5074 = vmatprep.subr.bf16.mxu0 0
        %5075 = vmatpush2.bf16.xpose.msra.mxu0 0
        %5076 = vmatprep.mubr.bf16.mxu0 0
        %5077 = vmatmul.mubr.bf16.gmra.mxu0 %v5039
        %v5078 = vpop.f32.mrf.mxu0
        %v5079 = vadd.f32 0.0, %v5078
        %v5080 = vpop.f32.mrf.mxu0
        %v5081 = vpop.f32.mrf.mxu0
        %v5082 = vpop.f32.mrf.mxu0
        %5083 = vdwg.mxu0
        %v5084 = vmul.f32 %v5079, 0.35355338
        %v5085 = vsel %vm994, %v5084, -inf
        %5086 = vmax.xlane.f32.xlu0 %v5085
        %v5087 = vpop.xlane.xlu0 %5086
        %v5088 = vsub.f32 %v5084, %v5087
        %v5089 = vmul.f32 %v5088, 1.442695
        %v5090 = vpow.pop %v5089
        %v5091 = vsel %vm994, %v5090, 0.0
        %5092 = vadd.xlane.f32.xlu0 %v5091
        %v5093 = vpop.xlane.xlu0 %5092
        %v5094 = vrcp.pop %v5093
        %v5095 = vmul.f32 %v5090, %v5094
        %v5096 = vpack.c.bf16 %v5095, %v5095
        %5097 = vrot.lane.b32.xlu0 %v4560, 72
        %v5098 = vpop.permute.xlu0 %5097
        %v5100 = vsel %vm994, %v5096, 0
        %v5103 = vsel %vm1060, %v5098, 0
        %5105 = vmatprep.subr.bf16.mxu0 0
        %5106 = vmatpush1.bf16.msra.mxu0 0
        %5107 = vmatprep.subr.bf16.mxu0 0
        %5108 = vmatpush1.bf16.msra.mxu0 0
        %5109 = vmatprep.subr.bf16.mxu0 0
        %5110 = vmatpush1.bf16.msra.mxu0 0
        %5111 = vmatprep.subr.bf16.mxu0 0
        %5112 = vmatpush1.bf16.msra.mxu0 0
        %5113 = vmatprep.subr.bf16.mxu0 0
        %5114 = vmatpush1.bf16.msra.mxu0 0
        %5115 = vmatprep.subr.bf16.mxu0 0
        %5116 = vmatpush1.bf16.msra.mxu0 0
        %5117 = vmatprep.subr.bf16.mxu0 0
        %5118 = vmatpush1.bf16.msra.mxu0 0
        %5119 = vmatprep.subr.bf16.mxu0 0
        %5120 = vmatpush1.bf16.msra.mxu0 %v5103
        %5121 = vmatprep.subr.bf16.mxu0 0
        %5122 = vmatpush2.bf16.msra.mxu0 0
        %5123 = vmatprep.subr.bf16.mxu0 0
        %5124 = vmatpush2.bf16.msra.mxu0 0
        %5125 = vmatprep.subr.bf16.mxu0 0
        %5126 = vmatpush2.bf16.msra.mxu0 0
        %5127 = vmatprep.subr.bf16.mxu0 0
        %5128 = vmatpush2.bf16.msra.mxu0 0
        %5129 = vmatprep.subr.bf16.mxu0 0
        %5130 = vmatpush2.bf16.msra.mxu0 0
        %5131 = vmatprep.subr.bf16.mxu0 0
        %5132 = vmatpush2.bf16.msra.mxu0 0
        %5133 = vmatprep.subr.bf16.mxu0 0
        %5134 = vmatpush2.bf16.msra.mxu0 0
        %5135 = vmatprep.subr.bf16.mxu0 0
        %5136 = vmatpush2.bf16.msra.mxu0 0
        %5137 = vmatprep.mubr.bf16.mxu0 0
        %5138 = vmatmul.mubr.bf16.gmra.mxu0 %v5100
        %v5139 = vpop.f32.mrf.mxu0
        %v5140 = vadd.f32 0.0, %v5139
        %v5141 = vpop.f32.mrf.mxu0
        %v5142 = vpop.f32.mrf.mxu0
        %v5143 = vpop.f32.mrf.mxu0
        %5144 = vdwg.mxu0
        %v5145 = vpack.c.bf16 %v5140, %v5140
        %v5147 = vsel %vm994, %v5145, 0
        %v5150 = vsel %vm1060, %v4558, 0
        %5152 = vmatprep.subr.bf16.mxu0 0
        %5153 = vmatpush1.bf16.msra.mxu0 0
        %5154 = vmatprep.subr.bf16.mxu0 0
        %5155 = vmatpush1.bf16.msra.mxu0 0
        %5156 = vmatprep.subr.bf16.mxu0 0
        %5157 = vmatpush1.bf16.msra.mxu0 0
        %5158 = vmatprep.subr.bf16.mxu0 0
        %5159 = vmatpush1.bf16.msra.mxu0 0
        %5160 = vmatprep.subr.bf16.mxu0 0
        %5161 = vmatpush1.bf16.msra.mxu0 0
        %5162 = vmatprep.subr.bf16.mxu0 0
        %5163 = vmatpush1.bf16.msra.mxu0 0
        %5164 = vmatprep.subr.bf16.mxu0 0
        %5165 = vmatpush1.bf16.msra.mxu0 0
        %5166 = vmatprep.subr.bf16.mxu0 0
        %5167 = vmatpush1.bf16.msra.mxu0 %v5150
        %5168 = vmatprep.subr.bf16.mxu0 0
        %5169 = vmatpush2.bf16.msra.mxu0 0
        %5170 = vmatprep.subr.bf16.mxu0 0
        %5171 = vmatpush2.bf16.msra.mxu0 0
        %5172 = vmatprep.subr.bf16.mxu0 0
        %5173 = vmatpush2.bf16.msra.mxu0 0
        %5174 = vmatprep.subr.bf16.mxu0 0
        %5175 = vmatpush2.bf16.msra.mxu0 0
        %5176 = vmatprep.subr.bf16.mxu0 0
        %5177 = vmatpush2.bf16.msra.mxu0 0
        %5178 = vmatprep.subr.bf16.mxu0 0
        %5179 = vmatpush2.bf16.msra.mxu0 0
        %5180 = vmatprep.subr.bf16.mxu0 0
        %5181 = vmatpush2.bf16.msra.mxu0 0
        %5182 = vmatprep.subr.bf16.mxu0 0
        %5183 = vmatpush2.bf16.msra.mxu0 0
        %5184 = vmatprep.mubr.bf16.mxu0 0
        %5185 = vmatmul.mubr.bf16.gmra.mxu0 %v5147
        %v5186 = vpop.f32.mrf.mxu0
        %v5187 = vadd.f32 0.0, %v5186
        %v5188 = vpop.f32.mrf.mxu0
        %v5189 = vpop.f32.mrf.mxu0
        %v5190 = vpop.f32.mrf.mxu0
        %5191 = vdwg.mxu0
        %v5192 = vadd.f32 %v5033, %v5187
        %s5193 = scalar_lea.vmem %s12, 1
        %v5194 = vld [vmem:[%s5193] sm:$0x1]
        %v5196 = vlaneseq
        %v5197 = vshrl.u32 %v5196, 7
        %v5198 = vsub.s32 0, %v5197
        %v5199 = vrot.slane %v5194, %v5198
        %v5201 = vadd.f32 %v5192, %v5199
        %v5202 = vadd.f32 %v4419, %v5201
        %s5203 = scalar_lea.vmem %s19, 1
        %v5204 = vld [vmem:[%s5203] sm:$0x1]
        %s5205 = scalar_lea.vmem %s20, 1
        %v5206 = vld [vmem:[%s5205] sm:$0x1]
        %v5207 = vsel %vm942, %v5202, 0.0
        %5208 = vadd.xlane.f32.xlu0 %v5207
        %v5209 = vpop.xlane.xlu0 %5208
        %v5210 = vmul.f32 %v5209, %v1644
        %v5211 = vsub.f32 %v5202, %v5210
        %v5212 = vmul.f32 %v5211, %v5211
        %v5213 = vsel %vm942, %v5212, 0.0
        %5214 = vadd.xlane.f32.xlu0 %v5213
        %v5215 = vpop.xlane.xlu0 %5214
        %v5216 = vmul.f32 %v5215, %v1644
        %v5217 = vadd.f32 %v5216, 1e-05
        %v5218 = vrsqrt.pop %v5217
        %v5219 = vmul.f32 %v5211, %v5218
        %v5221 = vlaneseq
        %v5222 = vshrl.u32 %v5221, 7
        %v5223 = vsub.s32 0, %v5222
        %v5224 = vrot.slane %v5204, %v5223
        %v5226 = vmul.f32 %v5219, %v5224
        %v5228 = vlaneseq
        %v5229 = vshrl.u32 %v5228, 7
        %v5230 = vsub.s32 0, %v5229
        %v5231 = vrot.slane %v5206, %v5230
        %v5233 = vadd.f32 %v5226, %v5231
        %v5234 = vpack.c.bf16 %v5233, %v5233
        %s5235 = scalar_lea.vmem [#allocation16], 256
        %v5236 = vld [vmem:[%s5235] sm:$0xff]
        %v5237 = vld [vmem:[%s5235 + $0x8] sm:$0xff]
        %v5238 = vld [vmem:[%s5235 + $0x10] sm:$0xff]
        %v5239 = vld [vmem:[%s5235 + $0x18] sm:$0xff]
        %v5240 = vld [vmem:[%s5235 + $0x20] sm:$0xff]
        %v5241 = vld [vmem:[%s5235 + $0x28] sm:$0xff]
        %v5242 = vld [vmem:[%s5235 + $0x30] sm:$0xff]
        %v5243 = vld [vmem:[%s5235 + $0x38] sm:$0xff]
        %v5244 = vld [vmem:[%s5235 + $0x40] sm:$0xff]
        %v5245 = vld [vmem:[%s5235 + $0x48] sm:$0xff]
        %v5246 = vld [vmem:[%s5235 + $0x50] sm:$0xff]
        %v5247 = vld [vmem:[%s5235 + $0x58] sm:$0xff]
        %v5248 = vld [vmem:[%s5235 + $0x60] sm:$0xff]
        %v5249 = vld [vmem:[%s5235 + $0x68] sm:$0xff]
        %v5250 = vld [vmem:[%s5235 + $0x70] sm:$0xff]
        %v5251 = vld [vmem:[%s5235 + $0x78] sm:$0xff]
        %v5252 = vld [vmem:[%s5235 + $0x80] sm:$0xff]
        %v5253 = vld [vmem:[%s5235 + $0x88] sm:$0xff]
        %v5254 = vld [vmem:[%s5235 + $0x90] sm:$0xff]
        %v5255 = vld [vmem:[%s5235 + $0x98] sm:$0xff]
        %v5256 = vld [vmem:[%s5235 + $0xa0] sm:$0xff]
        %v5257 = vld [vmem:[%s5235 + $0xa8] sm:$0xff]
        %v5258 = vld [vmem:[%s5235 + $0xb0] sm:$0xff]
        %v5259 = vld [vmem:[%s5235 + $0xb8] sm:$0xff]
        %v5260 = vld [vmem:[%s5235 + $0xc0] sm:$0xff]
        %v5261 = vld [vmem:[%s5235 + $0xc8] sm:$0xff]
        %v5262 = vld [vmem:[%s5235 + $0xd0] sm:$0xff]
        %v5263 = vld [vmem:[%s5235 + $0xd8] sm:$0xff]
        %v5264 = vld [vmem:[%s5235 + $0xe0] sm:$0xff]
        %v5265 = vld [vmem:[%s5235 + $0xe8] sm:$0xff]
        %v5266 = vld [vmem:[%s5235 + $0xf0] sm:$0xff]
        %v5267 = vld [vmem:[%s5235 + $0xf8] sm:$0xff]
        %s5268 = scalar_lea.vmem [#allocation17], 16
        %v5269 = vld [vmem:[%s5268] sm:$0xff]
        %v5270 = vld [vmem:[%s5268 + $0x8] sm:$0xff]
        %v5273 = vlaneseq
        %v5274 = vshrl.u32 %v5273, 7
        %v5275 = vsub.s32 0, %v5274
        %v5276 = vrot.slane %v5269, %v5275
        %v5277 = vlaneseq
        %v5278 = vshrl.u32 %v5277, 7
        %v5279 = vsub.s32 1, %v5278
        %v5280 = vrot.slane %v5269, %v5279
        %v5281 = vlaneseq
        %v5282 = vshrl.u32 %v5281, 7
        %v5283 = vsub.s32 2, %v5282
        %v5284 = vrot.slane %v5269, %v5283
        %v5285 = vlaneseq
        %v5286 = vshrl.u32 %v5285, 7
        %v5287 = vsub.s32 3, %v5286
        %v5288 = vrot.slane %v5269, %v5287
        %v5289 = vlaneseq
        %v5290 = vshrl.u32 %v5289, 7
        %v5291 = vsub.s32 4, %v5290
        %v5292 = vrot.slane %v5269, %v5291
        %v5293 = vlaneseq
        %v5294 = vshrl.u32 %v5293, 7
        %v5295 = vsub.s32 5, %v5294
        %v5296 = vrot.slane %v5269, %v5295
        %v5297 = vlaneseq
        %v5298 = vshrl.u32 %v5297, 7
        %v5299 = vsub.s32 6, %v5298
        %v5300 = vrot.slane %v5269, %v5299
        %v5301 = vlaneseq
        %v5302 = vshrl.u32 %v5301, 7
        %v5303 = vsub.s32 7, %v5302
        %v5304 = vrot.slane %v5269, %v5303
        %v5305 = vlaneseq
        %v5306 = vshrl.u32 %v5305, 7
        %v5307 = vsub.s32 0, %v5306
        %v5308 = vrot.slane %v5270, %v5307
        %v5309 = vlaneseq
        %v5310 = vshrl.u32 %v5309, 7
        %v5311 = vsub.s32 1, %v5310
        %v5312 = vrot.slane %v5270, %v5311
        %v5313 = vlaneseq
        %v5314 = vshrl.u32 %v5313, 7
        %v5315 = vsub.s32 2, %v5314
        %v5316 = vrot.slane %v5270, %v5315
        %v5317 = vlaneseq
        %v5318 = vshrl.u32 %v5317, 7
        %v5319 = vsub.s32 3, %v5318
        %v5320 = vrot.slane %v5270, %v5319
        %v5321 = vlaneseq
        %v5322 = vshrl.u32 %v5321, 7
        %v5323 = vsub.s32 4, %v5322
        %v5324 = vrot.slane %v5270, %v5323
        %v5325 = vlaneseq
        %v5326 = vshrl.u32 %v5325, 7
        %v5327 = vsub.s32 5, %v5326
        %v5328 = vrot.slane %v5270, %v5327
        %v5329 = vlaneseq
        %v5330 = vshrl.u32 %v5329, 7
        %v5331 = vsub.s32 6, %v5330
        %v5332 = vrot.slane %v5270, %v5331
        %v5333 = vlaneseq
        %v5334 = vshrl.u32 %v5333, 7
        %v5335 = vsub.s32 7, %v5334
        %v5336 = vrot.slane %v5270, %v5335
        %v5385 = vunpack.c.l.b16 %v5236
        %v5386 = vunpack.c.h.b16 %v5236
        %v5387 = vunpack.c.l.b16 %v5237
        %v5388 = vunpack.c.h.b16 %v5237
        %v5389 = vunpack.c.l.b16 %v5238
        %v5390 = vunpack.c.h.b16 %v5238
        %v5391 = vunpack.c.l.b16 %v5239
        %v5392 = vunpack.c.h.b16 %v5239
        %v5393 = vunpack.c.l.b16 %v5240
        %v5394 = vunpack.c.h.b16 %v5240
        %v5395 = vunpack.c.l.b16 %v5241
        %v5396 = vunpack.c.h.b16 %v5241
        %v5397 = vunpack.c.l.b16 %v5242
        %v5398 = vunpack.c.h.b16 %v5242
        %v5399 = vunpack.c.l.b16 %v5243
        %v5400 = vunpack.c.h.b16 %v5243
        %v5401 = vunpack.c.l.b16 %v5244
        %v5402 = vunpack.c.h.b16 %v5244
        %v5403 = vunpack.c.l.b16 %v5245
        %v5404 = vunpack.c.h.b16 %v5245
        %v5405 = vunpack.c.l.b16 %v5246
        %v5406 = vunpack.c.h.b16 %v5246
        %v5407 = vunpack.c.l.b16 %v5247
        %v5408 = vunpack.c.h.b16 %v5247
        %v5409 = vunpack.c.l.b16 %v5248
        %v5410 = vunpack.c.h.b16 %v5248
        %v5411 = vunpack.c.l.b16 %v5249
        %v5412 = vunpack.c.h.b16 %v5249
        %v5413 = vunpack.c.l.b16 %v5250
        %v5414 = vunpack.c.h.b16 %v5250
        %v5415 = vunpack.c.l.b16 %v5251
        %v5416 = vunpack.c.h.b16 %v5251
        %v5417 = vunpack.c.l.b16 %v5252
        %v5418 = vunpack.c.h.b16 %v5252
        %v5419 = vunpack.c.l.b16 %v5253
        %v5420 = vunpack.c.h.b16 %v5253
        %v5421 = vunpack.c.l.b16 %v5254
        %v5422 = vunpack.c.h.b16 %v5254
        %v5423 = vunpack.c.l.b16 %v5255
        %v5424 = vunpack.c.h.b16 %v5255
        %v5425 = vunpack.c.l.b16 %v5256
        %v5426 = vunpack.c.h.b16 %v5256
        %v5427 = vunpack.c.l.b16 %v5257
        %v5428 = vunpack.c.h.b16 %v5257
        %v5429 = vunpack.c.l.b16 %v5258
        %v5430 = vunpack.c.h.b16 %v5258
        %v5431 = vunpack.c.l.b16 %v5259
        %v5432 = vunpack.c.h.b16 %v5259
        %v5433 = vunpack.c.l.b16 %v5260
        %v5434 = vunpack.c.h.b16 %v5260
        %v5435 = vunpack.c.l.b16 %v5261
        %v5436 = vunpack.c.h.b16 %v5261
        %v5437 = vunpack.c.l.b16 %v5262
        %v5438 = vunpack.c.h.b16 %v5262
        %v5439 = vunpack.c.l.b16 %v5263
        %v5440 = vunpack.c.h.b16 %v5263
        %v5441 = vunpack.c.l.b16 %v5264
        %v5442 = vunpack.c.h.b16 %v5264
        %v5443 = vunpack.c.l.b16 %v5265
        %v5444 = vunpack.c.h.b16 %v5265
        %v5445 = vunpack.c.l.b16 %v5266
        %v5446 = vunpack.c.h.b16 %v5266
        %v5447 = vunpack.c.l.b16 %v5267
        %v5448 = vunpack.c.h.b16 %v5267
        %v5449 = vpack.c.b16 %v5401, %v5385
        %v5450 = vpack.c.b16 %v5402, %v5386
        %v5451 = vpack.c.b16 %v5403, %v5387
        %v5452 = vpack.c.b16 %v5404, %v5388
        %v5453 = vpack.c.b16 %v5405, %v5389
        %v5454 = vpack.c.b16 %v5406, %v5390
        %v5455 = vpack.c.b16 %v5407, %v5391
        %v5456 = vpack.c.b16 %v5408, %v5392
        %v5457 = vpack.c.b16 %v5409, %v5393
        %v5458 = vpack.c.b16 %v5410, %v5394
        %v5459 = vpack.c.b16 %v5411, %v5395
        %v5460 = vpack.c.b16 %v5412, %v5396
        %v5461 = vpack.c.b16 %v5413, %v5397
        %v5462 = vpack.c.b16 %v5414, %v5398
        %v5463 = vpack.c.b16 %v5415, %v5399
        %v5464 = vpack.c.b16 %v5416, %v5400
        %v5465 = vpack.c.b16 %v5433, %v5417
        %v5466 = vpack.c.b16 %v5434, %v5418
        %v5467 = vpack.c.b16 %v5435, %v5419
        %v5468 = vpack.c.b16 %v5436, %v5420
        %v5469 = vpack.c.b16 %v5437, %v5421
        %v5470 = vpack.c.b16 %v5438, %v5422
        %v5471 = vpack.c.b16 %v5439, %v5423
        %v5472 = vpack.c.b16 %v5440, %v5424
        %v5473 = vpack.c.b16 %v5441, %v5425
        %v5474 = vpack.c.b16 %v5442, %v5426
        %v5475 = vpack.c.b16 %v5443, %v5427
        %v5476 = vpack.c.b16 %v5444, %v5428
        %v5477 = vpack.c.b16 %v5445, %v5429
        %v5478 = vpack.c.b16 %v5446, %v5430
        %v5479 = vpack.c.b16 %v5447, %v5431
        %v5480 = vpack.c.b16 %v5448, %v5432
        %v5514 = vsel %vm942, %v5234, 0
        %5516 = vmatprep.subr.bf16.mxu0 0
        %5517 = vmatpush1.bf16.msra.mxu0 0
        %5518 = vmatprep.subr.bf16.mxu0 0
        %5519 = vmatpush1.bf16.msra.mxu0 0
        %5520 = vmatprep.subr.bf16.mxu0 0
        %5521 = vmatpush1.bf16.msra.mxu0 0
        %5522 = vmatprep.subr.bf16.mxu0 0
        %5523 = vmatpush1.bf16.msra.mxu0 0
        %5524 = vmatprep.subr.bf16.mxu0 0
        %5525 = vmatpush1.bf16.msra.mxu0 0
        %5526 = vmatprep.subr.bf16.mxu0 0
        %5527 = vmatpush1.bf16.msra.mxu0 0
        %5528 = vmatprep.subr.bf16.mxu0 %v5466
        %5529 = vmatpush1.bf16.msra.mxu0 %v5465
        %5530 = vmatprep.subr.bf16.mxu0 %v5450
        %5531 = vmatpush1.bf16.msra.mxu0 %v5449
        %5532 = vmatprep.subr.bf16.mxu0 0
        %5533 = vmatpush2.bf16.msra.mxu0 0
        %5534 = vmatprep.subr.bf16.mxu0 0
        %5535 = vmatpush2.bf16.msra.mxu0 0
        %5536 = vmatprep.subr.bf16.mxu0 0
        %5537 = vmatpush2.bf16.msra.mxu0 0
        %5538 = vmatprep.subr.bf16.mxu0 0
        %5539 = vmatpush2.bf16.msra.mxu0 0
        %5540 = vmatprep.subr.bf16.mxu0 0
        %5541 = vmatpush2.bf16.msra.mxu0 0
        %5542 = vmatprep.subr.bf16.mxu0 0
        %5543 = vmatpush2.bf16.msra.mxu0 0
        %5544 = vmatprep.subr.bf16.mxu0 0
        %5545 = vmatpush2.bf16.msra.mxu0 0
        %5546 = vmatprep.subr.bf16.mxu0 0
        %5547 = vmatpush2.bf16.msra.mxu0 0
        %5548 = vmatprep.mubr.bf16.mxu0 0
        %5549 = vmatmul.mubr.bf16.gmra.mxu0 %v5514
        %v5550 = vpop.f32.mrf.mxu0
        %v5551 = vadd.f32 %v5276, %v5550
        %v5552 = vpop.f32.mrf.mxu0
        %v5553 = vadd.f32 %v5280, %v5552
        %v5554 = vpop.f32.mrf.mxu0
        %v5555 = vpop.f32.mrf.mxu0
        %5556 = vdwg.mxu0
        %5557 = vmatprep.subr.bf16.mxu0 0
        %5558 = vmatpush1.bf16.msra.mxu0 0
        %5559 = vmatprep.subr.bf16.mxu0 0
        %5560 = vmatpush1.bf16.msra.mxu0 0
        %5561 = vmatprep.subr.bf16.mxu0 0
        %5562 = vmatpush1.bf16.msra.mxu0 0
        %5563 = vmatprep.subr.bf16.mxu0 0
        %5564 = vmatpush1.bf16.msra.mxu0 0
        %5565 = vmatprep.subr.bf16.mxu0 0
        %5566 = vmatpush1.bf16.msra.mxu0 0
        %5567 = vmatprep.subr.bf16.mxu0 0
        %5568 = vmatpush1.bf16.msra.mxu0 0
        %5569 = vmatprep.subr.bf16.mxu0 %v5468
        %5570 = vmatpush1.bf16.msra.mxu0 %v5467
        %5571 = vmatprep.subr.bf16.mxu0 %v5452
        %5572 = vmatpush1.bf16.msra.mxu0 %v5451
        %5573 = vmatprep.subr.bf16.mxu0 0
        %5574 = vmatpush2.bf16.msra.mxu0 0
        %5575 = vmatprep.subr.bf16.mxu0 0
        %5576 = vmatpush2.bf16.msra.mxu0 0
        %5577 = vmatprep.subr.bf16.mxu0 0
        %5578 = vmatpush2.bf16.msra.mxu0 0
        %5579 = vmatprep.subr.bf16.mxu0 0
        %5580 = vmatpush2.bf16.msra.mxu0 0
        %5581 = vmatprep.subr.bf16.mxu0 0
        %5582 = vmatpush2.bf16.msra.mxu0 0
        %5583 = vmatprep.subr.bf16.mxu0 0
        %5584 = vmatpush2.bf16.msra.mxu0 0
        %5585 = vmatprep.subr.bf16.mxu0 0
        %5586 = vmatpush2.bf16.msra.mxu0 0
        %5587 = vmatprep.subr.bf16.mxu0 0
        %5588 = vmatpush2.bf16.msra.mxu0 0
        %5589 = vmatprep.mubr.bf16.mxu0 0
        %5590 = vmatmul.mubr.bf16.gmra.mxu0 %v5514
        %v5591 = vpop.f32.mrf.mxu0
        %v5592 = vadd.f32 %v5284, %v5591
        %v5593 = vpop.f32.mrf.mxu0
        %v5594 = vadd.f32 %v5288, %v5593
        %v5595 = vpop.f32.mrf.mxu0
        %v5596 = vpop.f32.mrf.mxu0
        %5597 = vdwg.mxu0
        %5598 = vmatprep.subr.bf16.mxu0 0
        %5599 = vmatpush1.bf16.msra.mxu0 0
        %5600 = vmatprep.subr.bf16.mxu0 0
        %5601 = vmatpush1.bf16.msra.mxu0 0
        %5602 = vmatprep.subr.bf16.mxu0 0
        %5603 = vmatpush1.bf16.msra.mxu0 0
        %5604 = vmatprep.subr.bf16.mxu0 0
        %5605 = vmatpush1.bf16.msra.mxu0 0
        %5606 = vmatprep.subr.bf16.mxu0 0
        %5607 = vmatpush1.bf16.msra.mxu0 0
        %5608 = vmatprep.subr.bf16.mxu0 0
        %5609 = vmatpush1.bf16.msra.mxu0 0
        %5610 = vmatprep.subr.bf16.mxu0 %v5470
        %5611 = vmatpush1.bf16.msra.mxu0 %v5469
        %5612 = vmatprep.subr.bf16.mxu0 %v5454
        %5613 = vmatpush1.bf16.msra.mxu0 %v5453
        %5614 = vmatprep.subr.bf16.mxu0 0
        %5615 = vmatpush2.bf16.msra.mxu0 0
        %5616 = vmatprep.subr.bf16.mxu0 0
        %5617 = vmatpush2.bf16.msra.mxu0 0
        %5618 = vmatprep.subr.bf16.mxu0 0
        %5619 = vmatpush2.bf16.msra.mxu0 0
        %5620 = vmatprep.subr.bf16.mxu0 0
        %5621 = vmatpush2.bf16.msra.mxu0 0
        %5622 = vmatprep.subr.bf16.mxu0 0
        %5623 = vmatpush2.bf16.msra.mxu0 0
        %5624 = vmatprep.subr.bf16.mxu0 0
        %5625 = vmatpush2.bf16.msra.mxu0 0
        %5626 = vmatprep.subr.bf16.mxu0 0
        %5627 = vmatpush2.bf16.msra.mxu0 0
        %5628 = vmatprep.subr.bf16.mxu0 0
        %5629 = vmatpush2.bf16.msra.mxu0 0
        %5630 = vmatprep.mubr.bf16.mxu0 0
        %5631 = vmatmul.mubr.bf16.gmra.mxu0 %v5514
        %v5632 = vpop.f32.mrf.mxu0
        %v5633 = vadd.f32 %v5292, %v5632
        %v5634 = vpop.f32.mrf.mxu0
        %v5635 = vadd.f32 %v5296, %v5634
        %v5636 = vpop.f32.mrf.mxu0
        %v5637 = vpop.f32.mrf.mxu0
        %5638 = vdwg.mxu0
        %5639 = vmatprep.subr.bf16.mxu0 0
        %5640 = vmatpush1.bf16.msra.mxu0 0
        %5641 = vmatprep.subr.bf16.mxu0 0
        %5642 = vmatpush1.bf16.msra.mxu0 0
        %5643 = vmatprep.subr.bf16.mxu0 0
        %5644 = vmatpush1.bf16.msra.mxu0 0
        %5645 = vmatprep.subr.bf16.mxu0 0
        %5646 = vmatpush1.bf16.msra.mxu0 0
        %5647 = vmatprep.subr.bf16.mxu0 0
        %5648 = vmatpush1.bf16.msra.mxu0 0
        %5649 = vmatprep.subr.bf16.mxu0 0
        %5650 = vmatpush1.bf16.msra.mxu0 0
        %5651 = vmatprep.subr.bf16.mxu0 %v5472
        %5652 = vmatpush1.bf16.msra.mxu0 %v5471
        %5653 = vmatprep.subr.bf16.mxu0 %v5456
        %5654 = vmatpush1.bf16.msra.mxu0 %v5455
        %5655 = vmatprep.subr.bf16.mxu0 0
        %5656 = vmatpush2.bf16.msra.mxu0 0
        %5657 = vmatprep.subr.bf16.mxu0 0
        %5658 = vmatpush2.bf16.msra.mxu0 0
        %5659 = vmatprep.subr.bf16.mxu0 0
        %5660 = vmatpush2.bf16.msra.mxu0 0
        %5661 = vmatprep.subr.bf16.mxu0 0
        %5662 = vmatpush2.bf16.msra.mxu0 0
        %5663 = vmatprep.subr.bf16.mxu0 0
        %5664 = vmatpush2.bf16.msra.mxu0 0
        %5665 = vmatprep.subr.bf16.mxu0 0
        %5666 = vmatpush2.bf16.msra.mxu0 0
        %5667 = vmatprep.subr.bf16.mxu0 0
        %5668 = vmatpush2.bf16.msra.mxu0 0
        %5669 = vmatprep.subr.bf16.mxu0 0
        %5670 = vmatpush2.bf16.msra.mxu0 0
        %5671 = vmatprep.mubr.bf16.mxu0 0
        %5672 = vmatmul.mubr.bf16.gmra.mxu0 %v5514
        %v5673 = vpop.f32.mrf.mxu0
        %v5674 = vadd.f32 %v5300, %v5673
        %v5675 = vpop.f32.mrf.mxu0
        %v5676 = vadd.f32 %v5304, %v5675
        %v5677 = vpop.f32.mrf.mxu0
        %v5678 = vpop.f32.mrf.mxu0
        %5679 = vdwg.mxu0
        %5680 = vmatprep.subr.bf16.mxu0 0
        %5681 = vmatpush1.bf16.msra.mxu0 0
        %5682 = vmatprep.subr.bf16.mxu0 0
        %5683 = vmatpush1.bf16.msra.mxu0 0
        %5684 = vmatprep.subr.bf16.mxu0 0
        %5685 = vmatpush1.bf16.msra.mxu0 0
        %5686 = vmatprep.subr.bf16.mxu0 0
        %5687 = vmatpush1.bf16.msra.mxu0 0
        %5688 = vmatprep.subr.bf16.mxu0 0
        %5689 = vmatpush1.bf16.msra.mxu0 0
        %5690 = vmatprep.subr.bf16.mxu0 0
        %5691 = vmatpush1.bf16.msra.mxu0 0
        %5692 = vmatprep.subr.bf16.mxu0 %v5474
        %5693 = vmatpush1.bf16.msra.mxu0 %v5473
        %5694 = vmatprep.subr.bf16.mxu0 %v5458
        %5695 = vmatpush1.bf16.msra.mxu0 %v5457
        %5696 = vmatprep.subr.bf16.mxu0 0
        %5697 = vmatpush2.bf16.msra.mxu0 0
        %5698 = vmatprep.subr.bf16.mxu0 0
        %5699 = vmatpush2.bf16.msra.mxu0 0
        %5700 = vmatprep.subr.bf16.mxu0 0
        %5701 = vmatpush2.bf16.msra.mxu0 0
        %5702 = vmatprep.subr.bf16.mxu0 0
        %5703 = vmatpush2.bf16.msra.mxu0 0
        %5704 = vmatprep.subr.bf16.mxu0 0
        %5705 = vmatpush2.bf16.msra.mxu0 0
        %5706 = vmatprep.subr.bf16.mxu0 0
        %5707 = vmatpush2.bf16.msra.mxu0 0
        %5708 = vmatprep.subr.bf16.mxu0 0
        %5709 = vmatpush2.bf16.msra.mxu0 0
        %5710 = vmatprep.subr.bf16.mxu0 0
        %5711 = vmatpush2.bf16.msra.mxu0 0
        %5712 = vmatprep.mubr.bf16.mxu0 0
        %5713 = vmatmul.mubr.bf16.gmra.mxu0 %v5514
        %v5714 = vpop.f32.mrf.mxu0
        %v5715 = vadd.f32 %v5308, %v5714
        %v5716 = vpop.f32.mrf.mxu0
        %v5717 = vadd.f32 %v5312, %v5716
        %v5718 = vpop.f32.mrf.mxu0
        %v5719 = vpop.f32.mrf.mxu0
        %5720 = vdwg.mxu0
        %5721 = vmatprep.subr.bf16.mxu0 0
        %5722 = vmatpush1.bf16.msra.mxu0 0
        %5723 = vmatprep.subr.bf16.mxu0 0
        %5724 = vmatpush1.bf16.msra.mxu0 0
        %5725 = vmatprep.subr.bf16.mxu0 0
        %5726 = vmatpush1.bf16.msra.mxu0 0
        %5727 = vmatprep.subr.bf16.mxu0 0
        %5728 = vmatpush1.bf16.msra.mxu0 0
        %5729 = vmatprep.subr.bf16.mxu0 0
        %5730 = vmatpush1.bf16.msra.mxu0 0
        %5731 = vmatprep.subr.bf16.mxu0 0
        %5732 = vmatpush1.bf16.msra.mxu0 0
        %5733 = vmatprep.subr.bf16.mxu0 %v5476
        %5734 = vmatpush1.bf16.msra.mxu0 %v5475
        %5735 = vmatprep.subr.bf16.mxu0 %v5460
        %5736 = vmatpush1.bf16.msra.mxu0 %v5459
        %5737 = vmatprep.subr.bf16.mxu0 0
        %5738 = vmatpush2.bf16.msra.mxu0 0
        %5739 = vmatprep.subr.bf16.mxu0 0
        %5740 = vmatpush2.bf16.msra.mxu0 0
        %5741 = vmatprep.subr.bf16.mxu0 0
        %5742 = vmatpush2.bf16.msra.mxu0 0
        %5743 = vmatprep.subr.bf16.mxu0 0
        %5744 = vmatpush2.bf16.msra.mxu0 0
        %5745 = vmatprep.subr.bf16.mxu0 0
        %5746 = vmatpush2.bf16.msra.mxu0 0
        %5747 = vmatprep.subr.bf16.mxu0 0
        %5748 = vmatpush2.bf16.msra.mxu0 0
        %5749 = vmatprep.subr.bf16.mxu0 0
        %5750 = vmatpush2.bf16.msra.mxu0 0
        %5751 = vmatprep.subr.bf16.mxu0 0
        %5752 = vmatpush2.bf16.msra.mxu0 0
        %5753 = vmatprep.mubr.bf16.mxu0 0
        %5754 = vmatmul.mubr.bf16.gmra.mxu0 %v5514
        %v5755 = vpop.f32.mrf.mxu0
        %v5756 = vadd.f32 %v5316, %v5755
        %v5757 = vpop.f32.mrf.mxu0
        %v5758 = vadd.f32 %v5320, %v5757
        %v5759 = vpop.f32.mrf.mxu0
        %v5760 = vpop.f32.mrf.mxu0
        %5761 = vdwg.mxu0
        %5762 = vmatprep.subr.bf16.mxu0 0
        %5763 = vmatpush1.bf16.msra.mxu0 0
        %5764 = vmatprep.subr.bf16.mxu0 0
        %5765 = vmatpush1.bf16.msra.mxu0 0
        %5766 = vmatprep.subr.bf16.mxu0 0
        %5767 = vmatpush1.bf16.msra.mxu0 0
        %5768 = vmatprep.subr.bf16.mxu0 0
        %5769 = vmatpush1.bf16.msra.mxu0 0
        %5770 = vmatprep.subr.bf16.mxu0 0
        %5771 = vmatpush1.bf16.msra.mxu0 0
        %5772 = vmatprep.subr.bf16.mxu0 0
        %5773 = vmatpush1.bf16.msra.mxu0 0
        %5774 = vmatprep.subr.bf16.mxu0 %v5478
        %5775 = vmatpush1.bf16.msra.mxu0 %v5477
        %5776 = vmatprep.subr.bf16.mxu0 %v5462
        %5777 = vmatpush1.bf16.msra.mxu0 %v5461
        %5778 = vmatprep.subr.bf16.mxu0 0
        %5779 = vmatpush2.bf16.msra.mxu0 0
        %5780 = vmatprep.subr.bf16.mxu0 0
        %5781 = vmatpush2.bf16.msra.mxu0 0
        %5782 = vmatprep.subr.bf16.mxu0 0
        %5783 = vmatpush2.bf16.msra.mxu0 0
        %5784 = vmatprep.subr.bf16.mxu0 0
        %5785 = vmatpush2.bf16.msra.mxu0 0
        %5786 = vmatprep.subr.bf16.mxu0 0
        %5787 = vmatpush2.bf16.msra.mxu0 0
        %5788 = vmatprep.subr.bf16.mxu0 0
        %5789 = vmatpush2.bf16.msra.mxu0 0
        %5790 = vmatprep.subr.bf16.mxu0 0
        %5791 = vmatpush2.bf16.msra.mxu0 0
        %5792 = vmatprep.subr.bf16.mxu0 0
        %5793 = vmatpush2.bf16.msra.mxu0 0
        %5794 = vmatprep.mubr.bf16.mxu0 0
        %5795 = vmatmul.mubr.bf16.gmra.mxu0 %v5514
        %v5796 = vpop.f32.mrf.mxu0
        %v5797 = vadd.f32 %v5324, %v5796
        %v5798 = vpop.f32.mrf.mxu0
        %v5799 = vadd.f32 %v5328, %v5798
        %v5800 = vpop.f32.mrf.mxu0
        %v5801 = vpop.f32.mrf.mxu0
        %5802 = vdwg.mxu0
        %5803 = vmatprep.subr.bf16.mxu0 0
        %5804 = vmatpush1.bf16.msra.mxu0 0
        %5805 = vmatprep.subr.bf16.mxu0 0
        %5806 = vmatpush1.bf16.msra.mxu0 0
        %5807 = vmatprep.subr.bf16.mxu0 0
        %5808 = vmatpush1.bf16.msra.mxu0 0
        %5809 = vmatprep.subr.bf16.mxu0 0
        %5810 = vmatpush1.bf16.msra.mxu0 0
        %5811 = vmatprep.subr.bf16.mxu0 0
        %5812 = vmatpush1.bf16.msra.mxu0 0
        %5813 = vmatprep.subr.bf16.mxu0 0
        %5814 = vmatpush1.bf16.msra.mxu0 0
        %5815 = vmatprep.subr.bf16.mxu0 %v5480
        %5816 = vmatpush1.bf16.msra.mxu0 %v5479
        %5817 = vmatprep.subr.bf16.mxu0 %v5464
        %5818 = vmatpush1.bf16.msra.mxu0 %v5463
        %5819 = vmatprep.subr.bf16.mxu0 0
        %5820 = vmatpush2.bf16.msra.mxu0 0
        %5821 = vmatprep.subr.bf16.mxu0 0
        %5822 = vmatpush2.bf16.msra.mxu0 0
        %5823 = vmatprep.subr.bf16.mxu0 0
        %5824 = vmatpush2.bf16.msra.mxu0 0
        %5825 = vmatprep.subr.bf16.mxu0 0
        %5826 = vmatpush2.bf16.msra.mxu0 0
        %5827 = vmatprep.subr.bf16.mxu0 0
        %5828 = vmatpush2.bf16.msra.mxu0 0
        %5829 = vmatprep.subr.bf16.mxu0 0
        %5830 = vmatpush2.bf16.msra.mxu0 0
        %5831 = vmatprep.subr.bf16.mxu0 0
        %5832 = vmatpush2.bf16.msra.mxu0 0
        %5833 = vmatprep.subr.bf16.mxu0 0
        %5834 = vmatpush2.bf16.msra.mxu0 0
        %5835 = vmatprep.mubr.bf16.mxu0 0
        %5836 = vmatmul.mubr.bf16.gmra.mxu0 %v5514
        %v5837 = vpop.f32.mrf.mxu0
        %v5838 = vadd.f32 %v5332, %v5837
        %v5839 = vpop.f32.mrf.mxu0
        %v5840 = vadd.f32 %v5336, %v5839
        %v5841 = vpop.f32.mrf.mxu0
        %v5842 = vpop.f32.mrf.mxu0
        %5843 = vdwg.mxu0
        %v5844 = vmax.f32 %v5551, 0.0
        %v5845 = vmax.f32 %v5553, 0.0
        %v5846 = vmax.f32 %v5592, 0.0
        %v5847 = vmax.f32 %v5594, 0.0
        %v5848 = vmax.f32 %v5633, 0.0
        %v5849 = vmax.f32 %v5635, 0.0
        %v5850 = vmax.f32 %v5674, 0.0
        %v5851 = vmax.f32 %v5676, 0.0
        %v5852 = vmax.f32 %v5715, 0.0
        %v5853 = vmax.f32 %v5717, 0.0
        %v5854 = vmax.f32 %v5756, 0.0
        %v5855 = vmax.f32 %v5758, 0.0
        %v5856 = vmax.f32 %v5797, 0.0
        %v5857 = vmax.f32 %v5799, 0.0
        %v5858 = vmax.f32 %v5838, 0.0
        %v5859 = vmax.f32 %v5840, 0.0
        %v5860 = vpack.c.bf16 %v5844, %v5844
        %v5861 = vpack.c.bf16 %v5845, %v5845
        %v5862 = vpack.c.bf16 %v5846, %v5846
        %v5863 = vpack.c.bf16 %v5847, %v5847
        %v5864 = vpack.c.bf16 %v5848, %v5848
        %v5865 = vpack.c.bf16 %v5849, %v5849
        %v5866 = vpack.c.bf16 %v5850, %v5850
        %v5867 = vpack.c.bf16 %v5851, %v5851
        %v5868 = vpack.c.bf16 %v5852, %v5852
        %v5869 = vpack.c.bf16 %v5853, %v5853
        %v5870 = vpack.c.bf16 %v5854, %v5854
        %v5871 = vpack.c.bf16 %v5855, %v5855
        %v5872 = vpack.c.bf16 %v5856, %v5856
        %v5873 = vpack.c.bf16 %v5857, %v5857
        %v5874 = vpack.c.bf16 %v5858, %v5858
        %v5875 = vpack.c.bf16 %v5859, %v5859
        %s5876 = scalar_lea.vmem [#allocation19], 256
        %v5877 = vld [vmem:[%s5876] sm:$0xff]
        %v5878 = vld [vmem:[%s5876 + $0x8] sm:$0xff]
        %v5879 = vld [vmem:[%s5876 + $0x10] sm:$0xff]
        %v5880 = vld [vmem:[%s5876 + $0x18] sm:$0xff]
        %v5881 = vld [vmem:[%s5876 + $0x20] sm:$0xff]
        %v5882 = vld [vmem:[%s5876 + $0x28] sm:$0xff]
        %v5883 = vld [vmem:[%s5876 + $0x30] sm:$0xff]
        %v5884 = vld [vmem:[%s5876 + $0x38] sm:$0xff]
        %v5885 = vld [vmem:[%s5876 + $0x40] sm:$0xff]
        %v5886 = vld [vmem:[%s5876 + $0x48] sm:$0xff]
        %v5887 = vld [vmem:[%s5876 + $0x50] sm:$0xff]
        %v5888 = vld [vmem:[%s5876 + $0x58] sm:$0xff]
        %v5889 = vld [vmem:[%s5876 + $0x60] sm:$0xff]
        %v5890 = vld [vmem:[%s5876 + $0x68] sm:$0xff]
        %v5891 = vld [vmem:[%s5876 + $0x70] sm:$0xff]
        %v5892 = vld [vmem:[%s5876 + $0x78] sm:$0xff]
        %v5893 = vld [vmem:[%s5876 + $0x80] sm:$0xff]
        %v5894 = vld [vmem:[%s5876 + $0x88] sm:$0xff]
        %v5895 = vld [vmem:[%s5876 + $0x90] sm:$0xff]
        %v5896 = vld [vmem:[%s5876 + $0x98] sm:$0xff]
        %v5897 = vld [vmem:[%s5876 + $0xa0] sm:$0xff]
        %v5898 = vld [vmem:[%s5876 + $0xa8] sm:$0xff]
        %v5899 = vld [vmem:[%s5876 + $0xb0] sm:$0xff]
        %v5900 = vld [vmem:[%s5876 + $0xb8] sm:$0xff]
        %v5901 = vld [vmem:[%s5876 + $0xc0] sm:$0xff]
        %v5902 = vld [vmem:[%s5876 + $0xc8] sm:$0xff]
        %v5903 = vld [vmem:[%s5876 + $0xd0] sm:$0xff]
        %v5904 = vld [vmem:[%s5876 + $0xd8] sm:$0xff]
        %v5905 = vld [vmem:[%s5876 + $0xe0] sm:$0xff]
        %v5906 = vld [vmem:[%s5876 + $0xe8] sm:$0xff]
        %v5907 = vld [vmem:[%s5876 + $0xf0] sm:$0xff]
        %v5908 = vld [vmem:[%s5876 + $0xf8] sm:$0xff]
        %s5909 = scalar_lea.vmem %s16, 1
        %v5910 = vld [vmem:[%s5909] sm:$0x1]
        %v5912 = vlaneseq
        %v5913 = vshrl.u32 %v5912, 7
        %v5914 = vsub.s32 0, %v5913
        %v5915 = vrot.slane %v5910, %v5914
        %v5949 = vunpack.c.l.b16 %v5877
        %v5950 = vunpack.c.h.b16 %v5877
        %v5951 = vunpack.c.l.b16 %v5878
        %v5952 = vunpack.c.h.b16 %v5878
        %v5953 = vunpack.c.l.b16 %v5879
        %v5954 = vunpack.c.h.b16 %v5879
        %v5955 = vunpack.c.l.b16 %v5880
        %v5956 = vunpack.c.h.b16 %v5880
        %v5957 = vunpack.c.l.b16 %v5881
        %v5958 = vunpack.c.h.b16 %v5881
        %v5959 = vunpack.c.l.b16 %v5882
        %v5960 = vunpack.c.h.b16 %v5882
        %v5961 = vunpack.c.l.b16 %v5883
        %v5962 = vunpack.c.h.b16 %v5883
        %v5963 = vunpack.c.l.b16 %v5884
        %v5964 = vunpack.c.h.b16 %v5884
        %v5965 = vunpack.c.l.b16 %v5885
        %v5966 = vunpack.c.h.b16 %v5885
        %v5967 = vunpack.c.l.b16 %v5886
        %v5968 = vunpack.c.h.b16 %v5886
        %v5969 = vunpack.c.l.b16 %v5887
        %v5970 = vunpack.c.h.b16 %v5887
        %v5971 = vunpack.c.l.b16 %v5888
        %v5972 = vunpack.c.h.b16 %v5888
        %v5973 = vunpack.c.l.b16 %v5889
        %v5974 = vunpack.c.h.b16 %v5889
        %v5975 = vunpack.c.l.b16 %v5890
        %v5976 = vunpack.c.h.b16 %v5890
        %v5977 = vunpack.c.l.b16 %v5891
        %v5978 = vunpack.c.h.b16 %v5891
        %v5979 = vunpack.c.l.b16 %v5892
        %v5980 = vunpack.c.h.b16 %v5892
        %v5981 = vunpack.c.l.b16 %v5893
        %v5982 = vunpack.c.h.b16 %v5893
        %v5983 = vunpack.c.l.b16 %v5894
        %v5984 = vunpack.c.h.b16 %v5894
        %v5985 = vunpack.c.l.b16 %v5895
        %v5986 = vunpack.c.h.b16 %v5895
        %v5987 = vunpack.c.l.b16 %v5896
        %v5988 = vunpack.c.h.b16 %v5896
        %v5989 = vunpack.c.l.b16 %v5897
        %v5990 = vunpack.c.h.b16 %v5897
        %v5991 = vunpack.c.l.b16 %v5898
        %v5992 = vunpack.c.h.b16 %v5898
        %v5993 = vunpack.c.l.b16 %v5899
        %v5994 = vunpack.c.h.b16 %v5899
        %v5995 = vunpack.c.l.b16 %v5900
        %v5996 = vunpack.c.h.b16 %v5900
        %v5997 = vunpack.c.l.b16 %v5901
        %v5998 = vunpack.c.h.b16 %v5901
        %v5999 = vunpack.c.l.b16 %v5902
        %v6000 = vunpack.c.h.b16 %v5902
        %v6001 = vunpack.c.l.b16 %v5903
        %v6002 = vunpack.c.h.b16 %v5903
        %v6003 = vunpack.c.l.b16 %v5904
        %v6004 = vunpack.c.h.b16 %v5904
        %v6005 = vunpack.c.l.b16 %v5905
        %v6006 = vunpack.c.h.b16 %v5905
        %v6007 = vunpack.c.l.b16 %v5906
        %v6008 = vunpack.c.h.b16 %v5906
        %v6009 = vunpack.c.l.b16 %v5907
        %v6010 = vunpack.c.h.b16 %v5907
        %v6011 = vunpack.c.l.b16 %v5908
        %v6012 = vunpack.c.h.b16 %v5908
        %v6013 = vpack.c.b16 %v5965, %v5949
        %v6014 = vpack.c.b16 %v5966, %v5950
        %v6015 = vpack.c.b16 %v5967, %v5951
        %v6016 = vpack.c.b16 %v5968, %v5952
        %v6017 = vpack.c.b16 %v5969, %v5953
        %v6018 = vpack.c.b16 %v5970, %v5954
        %v6019 = vpack.c.b16 %v5971, %v5955
        %v6020 = vpack.c.b16 %v5972, %v5956
        %v6021 = vpack.c.b16 %v5973, %v5957
        %v6022 = vpack.c.b16 %v5974, %v5958
        %v6023 = vpack.c.b16 %v5975, %v5959
        %v6024 = vpack.c.b16 %v5976, %v5960
        %v6025 = vpack.c.b16 %v5977, %v5961
        %v6026 = vpack.c.b16 %v5978, %v5962
        %v6027 = vpack.c.b16 %v5979, %v5963
        %v6028 = vpack.c.b16 %v5980, %v5964
        %v6029 = vpack.c.b16 %v5997, %v5981
        %v6030 = vpack.c.b16 %v5998, %v5982
        %v6031 = vpack.c.b16 %v5999, %v5983
        %v6032 = vpack.c.b16 %v6000, %v5984
        %v6033 = vpack.c.b16 %v6001, %v5985
        %v6034 = vpack.c.b16 %v6002, %v5986
        %v6035 = vpack.c.b16 %v6003, %v5987
        %v6036 = vpack.c.b16 %v6004, %v5988
        %v6037 = vpack.c.b16 %v6005, %v5989
        %v6038 = vpack.c.b16 %v6006, %v5990
        %v6039 = vpack.c.b16 %v6007, %v5991
        %v6040 = vpack.c.b16 %v6008, %v5992
        %v6041 = vpack.c.b16 %v6009, %v5993
        %v6042 = vpack.c.b16 %v6010, %v5994
        %v6043 = vpack.c.b16 %v6011, %v5995
        %v6044 = vpack.c.b16 %v6012, %v5996
        %6077 = vmatprep.subr.bf16.mxu0 0
        %6078 = vmatpush1.bf16.xpose.msra.mxu0 0
        %6079 = vmatprep.subr.bf16.mxu0 0
        %6080 = vmatpush1.bf16.xpose.msra.mxu0 0
        %6081 = vmatprep.subr.bf16.mxu0 0
        %6082 = vmatpush1.bf16.xpose.msra.mxu0 0
        %6083 = vmatprep.subr.bf16.mxu0 0
        %6084 = vmatpush1.bf16.xpose.msra.mxu0 0
        %6085 = vmatprep.subr.bf16.mxu0 0
        %6086 = vmatpush1.bf16.xpose.msra.mxu0 0
        %6087 = vmatprep.subr.bf16.mxu0 0
        %6088 = vmatpush1.bf16.xpose.msra.mxu0 0
        %6089 = vmatprep.subr.bf16.mxu0 %v6030
        %6090 = vmatpush1.bf16.xpose.msra.mxu0 %v6029
        %6091 = vmatprep.subr.bf16.mxu0 %v6014
        %6092 = vmatpush1.bf16.xpose.msra.mxu0 %v6013
        %6093 = vmatprep.subr.bf16.mxu0 0
        %6094 = vmatpush2.bf16.xpose.msra.mxu0 0
        %6095 = vmatprep.subr.bf16.mxu0 0
        %6096 = vmatpush2.bf16.xpose.msra.mxu0 0
        %6097 = vmatprep.subr.bf16.mxu0 0
        %6098 = vmatpush2.bf16.xpose.msra.mxu0 0
        %6099 = vmatprep.subr.bf16.mxu0 0
        %6100 = vmatpush2.bf16.xpose.msra.mxu0 0
        %6101 = vmatprep.subr.bf16.mxu0 0
        %6102 = vmatpush2.bf16.xpose.msra.mxu0 0
        %6103 = vmatprep.subr.bf16.mxu0 0
        %6104 = vmatpush2.bf16.xpose.msra.mxu0 0
        %6105 = vmatprep.subr.bf16.mxu0 0
        %6106 = vmatpush2.bf16.xpose.msra.mxu0 0
        %6107 = vmatprep.subr.bf16.mxu0 0
        %6108 = vmatpush2.bf16.xpose.msra.mxu0 0
        %6109 = vmatprep.mubr.bf16.mxu0 %v5861
        %6110 = vmatmul.mubr.bf16.gmra.mxu0 %v5860
        %v6111 = vpop.f32.mrf.mxu0
        %v6112 = vadd.f32 %v5915, %v6111
        %v6113 = vpop.f32.mrf.mxu0
        %v6114 = vpop.f32.mrf.mxu0
        %v6115 = vpop.f32.mrf.mxu0
        %6116 = vdwg.mxu0
        %6117 = vmatprep.subr.bf16.mxu0 0
        %6118 = vmatpush1.bf16.xpose.msra.mxu0 0
        %6119 = vmatprep.subr.bf16.mxu0 0
        %6120 = vmatpush1.bf16.xpose.msra.mxu0 0
        %6121 = vmatprep.subr.bf16.mxu0 0
        %6122 = vmatpush1.bf16.xpose.msra.mxu0 0
        %6123 = vmatprep.subr.bf16.mxu0 0
        %6124 = vmatpush1.bf16.xpose.msra.mxu0 0
        %6125 = vmatprep.subr.bf16.mxu0 0
        %6126 = vmatpush1.bf16.xpose.msra.mxu0 0
        %6127 = vmatprep.subr.bf16.mxu0 0
        %6128 = vmatpush1.bf16.xpose.msra.mxu0 0
        %6129 = vmatprep.subr.bf16.mxu0 %v6032
        %6130 = vmatpush1.bf16.xpose.msra.mxu0 %v6031
        %6131 = vmatprep.subr.bf16.mxu0 %v6016
        %6132 = vmatpush1.bf16.xpose.msra.mxu0 %v6015
        %6133 = vmatprep.subr.bf16.mxu0 0
        %6134 = vmatpush2.bf16.xpose.msra.mxu0 0
        %6135 = vmatprep.subr.bf16.mxu0 0
        %6136 = vmatpush2.bf16.xpose.msra.mxu0 0
        %6137 = vmatprep.subr.bf16.mxu0 0
        %6138 = vmatpush2.bf16.xpose.msra.mxu0 0
        %6139 = vmatprep.subr.bf16.mxu0 0
        %6140 = vmatpush2.bf16.xpose.msra.mxu0 0
        %6141 = vmatprep.subr.bf16.mxu0 0
        %6142 = vmatpush2.bf16.xpose.msra.mxu0 0
        %6143 = vmatprep.subr.bf16.mxu0 0
        %6144 = vmatpush2.bf16.xpose.msra.mxu0 0
        %6145 = vmatprep.subr.bf16.mxu0 0
        %6146 = vmatpush2.bf16.xpose.msra.mxu0 0
        %6147 = vmatprep.subr.bf16.mxu0 0
        %6148 = vmatpush2.bf16.xpose.msra.mxu0 0
        %6149 = vmatprep.mubr.bf16.mxu0 %v5863
        %6150 = vmatmul.mubr.bf16.gmra.mxu0 %v5862
        %v6151 = vpop.f32.mrf.mxu0
        %v6152 = vadd.f32 %v6112, %v6151
        %v6153 = vpop.f32.mrf.mxu0
        %v6154 = vpop.f32.mrf.mxu0
        %v6155 = vpop.f32.mrf.mxu0
        %6156 = vdwg.mxu0
        %6157 = vmatprep.subr.bf16.mxu0 0
        %6158 = vmatpush1.bf16.xpose.msra.mxu0 0
        %6159 = vmatprep.subr.bf16.mxu0 0
        %6160 = vmatpush1.bf16.xpose.msra.mxu0 0
        %6161 = vmatprep.subr.bf16.mxu0 0
        %6162 = vmatpush1.bf16.xpose.msra.mxu0 0
        %6163 = vmatprep.subr.bf16.mxu0 0
        %6164 = vmatpush1.bf16.xpose.msra.mxu0 0
        %6165 = vmatprep.subr.bf16.mxu0 0
        %6166 = vmatpush1.bf16.xpose.msra.mxu0 0
        %6167 = vmatprep.subr.bf16.mxu0 0
        %6168 = vmatpush1.bf16.xpose.msra.mxu0 0
        %6169 = vmatprep.subr.bf16.mxu0 %v6034
        %6170 = vmatpush1.bf16.xpose.msra.mxu0 %v6033
        %6171 = vmatprep.subr.bf16.mxu0 %v6018
        %6172 = vmatpush1.bf16.xpose.msra.mxu0 %v6017
        %6173 = vmatprep.subr.bf16.mxu0 0
        %6174 = vmatpush2.bf16.xpose.msra.mxu0 0
        %6175 = vmatprep.subr.bf16.mxu0 0
        %6176 = vmatpush2.bf16.xpose.msra.mxu0 0
        %6177 = vmatprep.subr.bf16.mxu0 0
        %6178 = vmatpush2.bf16.xpose.msra.mxu0 0
        %6179 = vmatprep.subr.bf16.mxu0 0
        %6180 = vmatpush2.bf16.xpose.msra.mxu0 0
        %6181 = vmatprep.subr.bf16.mxu0 0
        %6182 = vmatpush2.bf16.xpose.msra.mxu0 0
        %6183 = vmatprep.subr.bf16.mxu0 0
        %6184 = vmatpush2.bf16.xpose.msra.mxu0 0
        %6185 = vmatprep.subr.bf16.mxu0 0
        %6186 = vmatpush2.bf16.xpose.msra.mxu0 0
        %6187 = vmatprep.subr.bf16.mxu0 0
        %6188 = vmatpush2.bf16.xpose.msra.mxu0 0
        %6189 = vmatprep.mubr.bf16.mxu0 %v5865
        %6190 = vmatmul.mubr.bf16.gmra.mxu0 %v5864
        %v6191 = vpop.f32.mrf.mxu0
        %v6192 = vadd.f32 %v6152, %v6191
        %v6193 = vpop.f32.mrf.mxu0
        %v6194 = vpop.f32.mrf.mxu0
        %v6195 = vpop.f32.mrf.mxu0
        %6196 = vdwg.mxu0
        %6197 = vmatprep.subr.bf16.mxu0 0
        %6198 = vmatpush1.bf16.xpose.msra.mxu0 0
        %6199 = vmatprep.subr.bf16.mxu0 0
        %6200 = vmatpush1.bf16.xpose.msra.mxu0 0
        %6201 = vmatprep.subr.bf16.mxu0 0
        %6202 = vmatpush1.bf16.xpose.msra.mxu0 0
        %6203 = vmatprep.subr.bf16.mxu0 0
        %6204 = vmatpush1.bf16.xpose.msra.mxu0 0
        %6205 = vmatprep.subr.bf16.mxu0 0
        %6206 = vmatpush1.bf16.xpose.msra.mxu0 0
        %6207 = vmatprep.subr.bf16.mxu0 0
        %6208 = vmatpush1.bf16.xpose.msra.mxu0 0
        %6209 = vmatprep.subr.bf16.mxu0 %v6036
        %6210 = vmatpush1.bf16.xpose.msra.mxu0 %v6035
        %6211 = vmatprep.subr.bf16.mxu0 %v6020
        %6212 = vmatpush1.bf16.xpose.msra.mxu0 %v6019
        %6213 = vmatprep.subr.bf16.mxu0 0
        %6214 = vmatpush2.bf16.xpose.msra.mxu0 0
        %6215 = vmatprep.subr.bf16.mxu0 0
        %6216 = vmatpush2.bf16.xpose.msra.mxu0 0
        %6217 = vmatprep.subr.bf16.mxu0 0
        %6218 = vmatpush2.bf16.xpose.msra.mxu0 0
        %6219 = vmatprep.subr.bf16.mxu0 0
        %6220 = vmatpush2.bf16.xpose.msra.mxu0 0
        %6221 = vmatprep.subr.bf16.mxu0 0
        %6222 = vmatpush2.bf16.xpose.msra.mxu0 0
        %6223 = vmatprep.subr.bf16.mxu0 0
        %6224 = vmatpush2.bf16.xpose.msra.mxu0 0
        %6225 = vmatprep.subr.bf16.mxu0 0
        %6226 = vmatpush2.bf16.xpose.msra.mxu0 0
        %6227 = vmatprep.subr.bf16.mxu0 0
        %6228 = vmatpush2.bf16.xpose.msra.mxu0 0
        %6229 = vmatprep.mubr.bf16.mxu0 %v5867
        %6230 = vmatmul.mubr.bf16.gmra.mxu0 %v5866
        %v6231 = vpop.f32.mrf.mxu0
        %v6232 = vadd.f32 %v6192, %v6231
        %v6233 = vpop.f32.mrf.mxu0
        %v6234 = vpop.f32.mrf.mxu0
        %v6235 = vpop.f32.mrf.mxu0
        %6236 = vdwg.mxu0
        %6237 = vmatprep.subr.bf16.mxu0 0
        %6238 = vmatpush1.bf16.xpose.msra.mxu0 0
        %6239 = vmatprep.subr.bf16.mxu0 0
        %6240 = vmatpush1.bf16.xpose.msra.mxu0 0
        %6241 = vmatprep.subr.bf16.mxu0 0
        %6242 = vmatpush1.bf16.xpose.msra.mxu0 0
        %6243 = vmatprep.subr.bf16.mxu0 0
        %6244 = vmatpush1.bf16.xpose.msra.mxu0 0
        %6245 = vmatprep.subr.bf16.mxu0 0
        %6246 = vmatpush1.bf16.xpose.msra.mxu0 0
        %6247 = vmatprep.subr.bf16.mxu0 0
        %6248 = vmatpush1.bf16.xpose.msra.mxu0 0
        %6249 = vmatprep.subr.bf16.mxu0 %v6038
        %6250 = vmatpush1.bf16.xpose.msra.mxu0 %v6037
        %6251 = vmatprep.subr.bf16.mxu0 %v6022
        %6252 = vmatpush1.bf16.xpose.msra.mxu0 %v6021
        %6253 = vmatprep.subr.bf16.mxu0 0
        %6254 = vmatpush2.bf16.xpose.msra.mxu0 0
        %6255 = vmatprep.subr.bf16.mxu0 0
        %6256 = vmatpush2.bf16.xpose.msra.mxu0 0
        %6257 = vmatprep.subr.bf16.mxu0 0
        %6258 = vmatpush2.bf16.xpose.msra.mxu0 0
        %6259 = vmatprep.subr.bf16.mxu0 0
        %6260 = vmatpush2.bf16.xpose.msra.mxu0 0
        %6261 = vmatprep.subr.bf16.mxu0 0
        %6262 = vmatpush2.bf16.xpose.msra.mxu0 0
        %6263 = vmatprep.subr.bf16.mxu0 0
        %6264 = vmatpush2.bf16.xpose.msra.mxu0 0
        %6265 = vmatprep.subr.bf16.mxu0 0
        %6266 = vmatpush2.bf16.xpose.msra.mxu0 0
        %6267 = vmatprep.subr.bf16.mxu0 0
        %6268 = vmatpush2.bf16.xpose.msra.mxu0 0
        %6269 = vmatprep.mubr.bf16.mxu0 %v5869
        %6270 = vmatmul.mubr.bf16.gmra.mxu0 %v5868
        %v6271 = vpop.f32.mrf.mxu0
        %v6272 = vadd.f32 %v6232, %v6271
        %v6273 = vpop.f32.mrf.mxu0
        %v6274 = vpop.f32.mrf.mxu0
        %v6275 = vpop.f32.mrf.mxu0
        %6276 = vdwg.mxu0
        %6277 = vmatprep.subr.bf16.mxu0 0
        %6278 = vmatpush1.bf16.xpose.msra.mxu0 0
        %6279 = vmatprep.subr.bf16.mxu0 0
        %6280 = vmatpush1.bf16.xpose.msra.mxu0 0
        %6281 = vmatprep.subr.bf16.mxu0 0
        %6282 = vmatpush1.bf16.xpose.msra.mxu0 0
        %6283 = vmatprep.subr.bf16.mxu0 0
        %6284 = vmatpush1.bf16.xpose.msra.mxu0 0
        %6285 = vmatprep.subr.bf16.mxu0 0
        %6286 = vmatpush1.bf16.xpose.msra.mxu0 0
        %6287 = vmatprep.subr.bf16.mxu0 0
        %6288 = vmatpush1.bf16.xpose.msra.mxu0 0
        %6289 = vmatprep.subr.bf16.mxu0 %v6040
        %6290 = vmatpush1.bf16.xpose.msra.mxu0 %v6039
        %6291 = vmatprep.subr.bf16.mxu0 %v6024
        %6292 = vmatpush1.bf16.xpose.msra.mxu0 %v6023
        %6293 = vmatprep.subr.bf16.mxu0 0
        %6294 = vmatpush2.bf16.xpose.msra.mxu0 0
        %6295 = vmatprep.subr.bf16.mxu0 0
        %6296 = vmatpush2.bf16.xpose.msra.mxu0 0
        %6297 = vmatprep.subr.bf16.mxu0 0
        %6298 = vmatpush2.bf16.xpose.msra.mxu0 0
        %6299 = vmatprep.subr.bf16.mxu0 0
        %6300 = vmatpush2.bf16.xpose.msra.mxu0 0
        %6301 = vmatprep.subr.bf16.mxu0 0
        %6302 = vmatpush2.bf16.xpose.msra.mxu0 0
        %6303 = vmatprep.subr.bf16.mxu0 0
        %6304 = vmatpush2.bf16.xpose.msra.mxu0 0
        %6305 = vmatprep.subr.bf16.mxu0 0
        %6306 = vmatpush2.bf16.xpose.msra.mxu0 0
        %6307 = vmatprep.subr.bf16.mxu0 0
        %6308 = vmatpush2.bf16.xpose.msra.mxu0 0
        %6309 = vmatprep.mubr.bf16.mxu0 %v5871
        %6310 = vmatmul.mubr.bf16.gmra.mxu0 %v5870
        %v6311 = vpop.f32.mrf.mxu0
        %v6312 = vadd.f32 %v6272, %v6311
        %v6313 = vpop.f32.mrf.mxu0
        %v6314 = vpop.f32.mrf.mxu0
        %v6315 = vpop.f32.mrf.mxu0
        %6316 = vdwg.mxu0
        %6317 = vmatprep.subr.bf16.mxu0 0
        %6318 = vmatpush1.bf16.xpose.msra.mxu0 0
        %6319 = vmatprep.subr.bf16.mxu0 0
        %6320 = vmatpush1.bf16.xpose.msra.mxu0 0
        %6321 = vmatprep.subr.bf16.mxu0 0
        %6322 = vmatpush1.bf16.xpose.msra.mxu0 0
        %6323 = vmatprep.subr.bf16.mxu0 0
        %6324 = vmatpush1.bf16.xpose.msra.mxu0 0
        %6325 = vmatprep.subr.bf16.mxu0 0
        %6326 = vmatpush1.bf16.xpose.msra.mxu0 0
        %6327 = vmatprep.subr.bf16.mxu0 0
        %6328 = vmatpush1.bf16.xpose.msra.mxu0 0
        %6329 = vmatprep.subr.bf16.mxu0 %v6042
        %6330 = vmatpush1.bf16.xpose.msra.mxu0 %v6041
        %6331 = vmatprep.subr.bf16.mxu0 %v6026
        %6332 = vmatpush1.bf16.xpose.msra.mxu0 %v6025
        %6333 = vmatprep.subr.bf16.mxu0 0
        %6334 = vmatpush2.bf16.xpose.msra.mxu0 0
        %6335 = vmatprep.subr.bf16.mxu0 0
        %6336 = vmatpush2.bf16.xpose.msra.mxu0 0
        %6337 = vmatprep.subr.bf16.mxu0 0
        %6338 = vmatpush2.bf16.xpose.msra.mxu0 0
        %6339 = vmatprep.subr.bf16.mxu0 0
        %6340 = vmatpush2.bf16.xpose.msra.mxu0 0
        %6341 = vmatprep.subr.bf16.mxu0 0
        %6342 = vmatpush2.bf16.xpose.msra.mxu0 0
        %6343 = vmatprep.subr.bf16.mxu0 0
        %6344 = vmatpush2.bf16.xpose.msra.mxu0 0
        %6345 = vmatprep.subr.bf16.mxu0 0
        %6346 = vmatpush2.bf16.xpose.msra.mxu0 0
        %6347 = vmatprep.subr.bf16.mxu0 0
        %6348 = vmatpush2.bf16.xpose.msra.mxu0 0
        %6349 = vmatprep.mubr.bf16.mxu0 %v5873
        %6350 = vmatmul.mubr.bf16.gmra.mxu0 %v5872
        %v6351 = vpop.f32.mrf.mxu0
        %v6352 = vadd.f32 %v6312, %v6351
        %v6353 = vpop.f32.mrf.mxu0
        %v6354 = vpop.f32.mrf.mxu0
        %v6355 = vpop.f32.mrf.mxu0
        %6356 = vdwg.mxu0
        %6357 = vmatprep.subr.bf16.mxu0 0
        %6358 = vmatpush1.bf16.xpose.msra.mxu0 0
        %6359 = vmatprep.subr.bf16.mxu0 0
        %6360 = vmatpush1.bf16.xpose.msra.mxu0 0
        %6361 = vmatprep.subr.bf16.mxu0 0
        %6362 = vmatpush1.bf16.xpose.msra.mxu0 0
        %6363 = vmatprep.subr.bf16.mxu0 0
        %6364 = vmatpush1.bf16.xpose.msra.mxu0 0
        %6365 = vmatprep.subr.bf16.mxu0 0
        %6366 = vmatpush1.bf16.xpose.msra.mxu0 0
        %6367 = vmatprep.subr.bf16.mxu0 0
        %6368 = vmatpush1.bf16.xpose.msra.mxu0 0
        %6369 = vmatprep.subr.bf16.mxu0 %v6044
        %6370 = vmatpush1.bf16.xpose.msra.mxu0 %v6043
        %6371 = vmatprep.subr.bf16.mxu0 %v6028
        %6372 = vmatpush1.bf16.xpose.msra.mxu0 %v6027
        %6373 = vmatprep.subr.bf16.mxu0 0
        %6374 = vmatpush2.bf16.xpose.msra.mxu0 0
        %6375 = vmatprep.subr.bf16.mxu0 0
        %6376 = vmatpush2.bf16.xpose.msra.mxu0 0
        %6377 = vmatprep.subr.bf16.mxu0 0
        %6378 = vmatpush2.bf16.xpose.msra.mxu0 0
        %6379 = vmatprep.subr.bf16.mxu0 0
        %6380 = vmatpush2.bf16.xpose.msra.mxu0 0
        %6381 = vmatprep.subr.bf16.mxu0 0
        %6382 = vmatpush2.bf16.xpose.msra.mxu0 0
        %6383 = vmatprep.subr.bf16.mxu0 0
        %6384 = vmatpush2.bf16.xpose.msra.mxu0 0
        %6385 = vmatprep.subr.bf16.mxu0 0
        %6386 = vmatpush2.bf16.xpose.msra.mxu0 0
        %6387 = vmatprep.subr.bf16.mxu0 0
        %6388 = vmatpush2.bf16.xpose.msra.mxu0 0
        %6389 = vmatprep.mubr.bf16.mxu0 %v5875
        %6390 = vmatmul.mubr.bf16.gmra.mxu0 %v5874
        %v6391 = vpop.f32.mrf.mxu0
        %v6392 = vadd.f32 %v6352, %v6391
        %v6393 = vpop.f32.mrf.mxu0
        %v6394 = vpop.f32.mrf.mxu0
        %v6395 = vpop.f32.mrf.mxu0
        %6396 = vdwg.mxu0
        %v6397 = vadd.f32 %v5233, %v6392
        %s6398 = scalar_lea.vmem %s21, 1
        %v6399 = vld [vmem:[%s6398] sm:$0x1]
        %s6400 = scalar_lea.vmem %s22, 1
        %v6401 = vld [vmem:[%s6400] sm:$0x1]
        %v6402 = vsel %vm942, %v6397, 0.0
        %6403 = vadd.xlane.f32.xlu0 %v6402
        %v6404 = vpop.xlane.xlu0 %6403
        %v6405 = vmul.f32 %v6404, %v1644
        %v6406 = vsub.f32 %v6397, %v6405
        %v6407 = vmul.f32 %v6406, %v6406
        %v6408 = vsel %vm942, %v6407, 0.0
        %6409 = vadd.xlane.f32.xlu0 %v6408
        %v6410 = vpop.xlane.xlu0 %6409
        %v6411 = vmul.f32 %v6410, %v1644
        %v6412 = vadd.f32 %v6411, 1e-05
        %v6413 = vrsqrt.pop %v6412
        %v6414 = vmul.f32 %v6406, %v6413
        %v6416 = vlaneseq
        %v6417 = vshrl.u32 %v6416, 7
        %v6418 = vsub.s32 0, %v6417
        %v6419 = vrot.slane %v6399, %v6418
        %v6421 = vmul.f32 %v6414, %v6419
        %v6423 = vlaneseq
        %v6424 = vshrl.u32 %v6423, 7
        %v6425 = vsub.s32 0, %v6424
        %v6426 = vrot.slane %v6401, %v6425
        %v6428 = vadd.f32 %v6421, %v6426
        %6429 = vst.msk [vmem:[%s912] sm:$0xff] %vm942, %v6428
        %s6430 = sand.u32 %s553, 1
        %s6431 = scalar_lea.sflag [#allocation4], %s6430
        %s6432 = sand.u32 %s553, 1
        %s6433 = smul.addr %s6432, 8
        %s6434 = scalar_lea.vmem [#allocation20], %s6433
        // Predicated region
        $region157: #{tpu_custom_call.1} parent=111 // pred_check
          %p6435 = pneg %p563
        $region158: #{tpu_custom_call.1} parent=111 // pred_check_branch
          %6437 = sbr.rel (%p6435) target = $region160
        $region159: #{tpu_custom_call.1} parent=111 // pred_region
          %s6439 = ssub.s32 128, 128
          %6440 = vsyncadd %s6431, %s6439
          %s6441 = smul.addr %s47, 128
          %s6442 = scalar_lea.hbm %s23, %s6441
          %s6444 = sshll.u32 %s6434, 4
          %s6445 = int_to_ptr.vmem [resolvable:$true] %s6444
          %6447 = dma.vmem_to_hbm [thread:$0]  %s6445, 128, %s6442, %s6431
        $region160: #{tpu_custom_call.1} parent=111 // pred_fallthru
          _
      $region112: #{tpu_custom_call.1} parent=5 // pred_fallthru
        _
      %p6448 = scmp.le.s32.totalorder 2, %s42
      // Predicated region
      $region161: #{tpu_custom_call.1} parent=5 // pred_check
        %p6449 = pneg %p6448
      $region162: #{tpu_custom_call.1} parent=5 // pred_check_branch
        %6451 = sbr.rel (%p6449) target = $region164
      $region163: #{tpu_custom_call.1} parent=5 // pred_region
        %s6452 = ssub.s32 %s42, 2
        // Predicated region
        $region165: #{tpu_custom_call.1} parent=163 // pred_check
          %p6453 = pneg %p569
        $region166: #{tpu_custom_call.1} parent=163 // pred_check_branch
          %6455 = sbr.rel (%p6453) target = $region168
        $region167: #{tpu_custom_call.1} parent=163 // pred_region
          %s6456 = sand.u32 %s554, 1
          %s6457 = scalar_lea.sflag [#allocation4], %s6456
          %s6458 = sand.u32 %s554, 1
          %s6459 = smul.addr %s6458, 8
          %s6460 = scalar_lea.vmem [#allocation20], %s6459
          %6461 = dma.done %s6457, 128
        $region168: #{tpu_custom_call.1} parent=163 // pred_fallthru
          _
      $region164: #{tpu_custom_call.1} parent=5 // pred_fallthru
        _
    $region6: #{tpu_custom_call.1} parent=1 // loop_footer
      %s46 = sadd.s32 1, %s42
    $region7: #{tpu_custom_call.1} parent=1 // loop_footer_branch
      %41 = sbr.rel target = $region3
    $region8: #{tpu_custom_call.1} parent=1 // loop_exit
      _
    %6462 = vsyncpa [#allocation3], 1
    %s6463 = scalar_lea.sflag [#allocation3], 1
    %6464 = vsyncpa %s6463, 1
    %6465 = vsyncpa [#allocation6], 1
    %s6466 = scalar_lea.sflag [#allocation6], 1
    %6467 = vsyncpa %s6466, 1
    %6468 = vsyncpa [#allocation9], 1
    %6469 = vsyncpa [#allocation12], 1
    %6470 = vsyncpa [#allocation15], 1
    %6471 = vsyncpa [#allocation18], 1
    %6472 = vsyncpa [#allocation4], 1
    %s6473 = scalar_lea.sflag [#allocation4], 1
    %6474 = vsyncpa %s6473, 1

</llo_original>
